<compile_context>
chip_gen: v6e
topology: v6e:2x2x1
jax: 0.10.0
libtpu: 0.0.40
codegen_flags: <defaults>
</compile_context>

<pallas_src>
import jax
import jax.numpy as jnp
import numpy as np
from jax import lax
from jax.experimental import pallas as pl
from jax.experimental.pallas import tpu as pltpu


def _noise_removal_kernel(xg_ref,      # (T, B, 4H)  precomputed x*w1x + b1 (cand cols x2)
                          wblk_ref,    # (2H, 8H)    block-diag fused recurrent weight
                          b2_ref,      # (1, 4H)     LSTM2 bias (cand cols x2)
                          wlin_ref,    # (1, H)      head weight
                          blin_ref,    # (1, 1)      head bias
                          out_ref,     # (S, B)
                          h2_ref, c2_ref,   # (B, H) scratch: LSTM2 state
                          h2seq_ref):       # (S, B, H) scratch: LSTM2 outputs (head input)
    T, B, fourH = xg_ref.shape
    H = fourH // 4
    S = out_ref.shape[0]
    shift = T - S

    # Zero initial LSTM2 state (matches _init_hidden_state).  LSTM1 state is
    # carried in registers via the fori_loop carry below.
    h2_ref[...] = jnp.zeros_like(h2_ref)
    c2_ref[...] = jnp.zeros_like(c2_ref)

    # Hoist weight loads out of the unrolled loop (pin in vregs).
    wblk = wblk_ref[...]          # (2H, 8H)
    b2 = b2_ref[...]              # (1, 4H)

    def lstm_gates(gates, c_prev):
        # gate column order from torch.chunk: candidate, forget, input, output.
        sg = jax.nn.sigmoid(gates)                 # one EUP pass over (B, 4H)
        # candidate columns were pre-scaled x2, so tanh(z) = 2*sigmoid(2z) - 1
        cand = 2.0 * sg[:, 0:H] - 1.0              # VPU only, no extra EUP push
        c_new = sg[:, H:2 * H] * c_prev + sg[:, 2 * H:3 * H] * cand
        h_new = sg[:, 3 * H:4 * H] * jnp.tanh(c_new)
        return h_new, c_new

    def step(t, carry):
        h1, c1 = carry

        # One fused block-diagonal MXU dot for BOTH layers' recurrent matmuls.
        lhs = jnp.concatenate([h1, h2_ref[...]], axis=1)              # (B, 2H)
        g = jnp.dot(lhs, wblk, preferred_element_type=jnp.float32)    # (B, 8H)

        # ---- LSTM1 step t ----
        h1n, c1n = lstm_gates(xg_ref[t] + g[:, 0:fourH], c1)

        # ---- LSTM2 step (t - shift - 1), consumes h1 from the carry ----
        @pl.when(t >= shift + 1)
        def _():
            h2n, c2n = lstm_gates(g[:, fourH:] + b2, c2_ref[...])
            h2_ref[...] = h2n
            c2_ref[...] = c2n
            h2seq_ref[pl.ds(t - shift - 1, 1), :, :] = h2n[None]

        return (h1n, c1n)

    zeros = jnp.zeros((B, H), jnp.float32)
    h1_f, _ = lax.fori_loop(0, T, step, (zeros, zeros), unroll=True)

    # Final (skewed-out) LSTM2 step t' = S-1, consuming the last LSTM1 output.
    lhs = jnp.concatenate([h1_f, h2_ref[...]], axis=1)
    g = jnp.dot(lhs, wblk, preferred_element_type=jnp.float32)
    h2n, _ = lstm_gates(g[:, fourH:] + b2, c2_ref[...])
    h2seq_ref[pl.ds(S - 1, 1), :, :] = h2n[None]

    # Deferred Linear(H -> 1) head: one slab multiply + lane reduce, one store.
    y = jnp.sum(h2seq_ref[...] * wlin_ref[...][None, :, :], axis=-1) + blin_ref[...]
    out_ref[...] = y


def noise_removal_forward(x, params, shift):
    """x: (B, S, 1) float32 -> (B, S, 1) float32."""
    B, S, _ = x.shape
    H = params["wblk"].shape[0] // 2
    T = S + shift

    # pad with `shift` zeros at the end, drop feature dim, go time-major
    x_pad = jnp.concatenate([x[..., 0], jnp.zeros((B, shift), x.dtype)], axis=1)  # (B, T)
    x_tm = x_pad.T                                                                # (T, B)

    # LSTM1 input projection + bias for every timestep (off the serial chain).
    xg = (x_tm[:, :, None] * params["w1x_s"][None, :, :]
          + params["b1_s"][None, :, :])                                           # (T, B, 4H)

    vmem = pl.BlockSpec(memory_space=pltpu.MemorySpace.VMEM)
    out_sb = pl.pallas_call(
        _noise_removal_kernel,
        out_shape=jax.ShapeDtypeStruct((S, B), jnp.float32),
        in_specs=[vmem] * 5,
        out_specs=vmem,
        scratch_shapes=[
            pltpu.VMEM((B, H), jnp.float32),       # h2
            pltpu.VMEM((B, H), jnp.float32),       # c2
            pltpu.VMEM((S, B, H), jnp.float32),    # h2 sequence (head input)
        ],
    )(xg, params["wblk"], params["b2_s"], params["wlin"], params["blin"])

    # (S, B) -> (B, S, 1) in the wrapper (free layout plumbing)
    return out_sb.T[:, :, None]


def init_params(key, H):
    """PyTorch-style (uniform +-1/sqrt(fan_in)) init + kernel-side weight prep."""
    ks = jax.random.split(key, 3)

    def linear_init(kk, fan_in, fan_out):
        bound = 1.0 / np.sqrt(fan_in)
        kw, kb = jax.random.split(kk)
        w = jax.random.uniform(kw, (fan_in, fan_out), jnp.float32, -bound, bound)
        b = jax.random.uniform(kb, (fan_out,), jnp.float32, -bound, bound)
        return w, b

    w1, b1 = linear_init(ks[0], 1 + H, 4 * H)   # LSTM1 linear (stored as W.T of torch)
    w2, b2 = linear_init(ks[1], 2 * H, 4 * H)   # LSTM2 linear
    wl, bl = linear_init(ks[2], H, 1)           # final Linear(H, 1)

    # Pre-scale candidate-gate columns (first H of 4H) by 2 so the kernel can
    # use tanh(z) = 2*sigmoid(2z) - 1 off the already-taken full-width sigmoid.
    scale = jnp.concatenate([jnp.full((H,), 2.0, jnp.float32),
                             jnp.ones((3 * H,), jnp.float32)])
    w1_s, b1_s = w1 * scale, b1 * scale
    w2_s, b2_s = w2 * scale, b2 * scale

    # Block-diagonal fused recurrent weight: cols 0:4H -> gates1, 4H:8H -> gates2.
    wblk = jnp.zeros((2 * H, 8 * H), jnp.float32)
    wblk = wblk.at[0:H, 0:4 * H].set(w1_s[1:])           # w1h
    wblk = wblk.at[0:H, 4 * H:8 * H].set(w2_s[0:H])      # w2x
    wblk = wblk.at[H:2 * H, 4 * H:8 * H].set(w2_s[H:])   # w2h

    return dict(
        # kernel-side prepped layouts
        w1x_s=w1_s[:1], b1_s=b1_s[None, :],
        wblk=wblk, b2_s=b2_s[None, :],
        wlin=wl.T, blin=bl[None, :],
        # unscaled full matrices for the pure-JAX reference
        w1=w1, b1_full=b1, w2=w2, b2_full=b2, wl=wl, bl=bl,
    )


# ------------------------- pure-JAX reference -------------------------
def _lstm_ref(x_seq, w, b, H):
    B = x_seq.shape[0]

    def step(carry, x_t):
        h, c = carry
        gates = jnp.concatenate([x_t, h], axis=1) @ w + b
        cand, forget, inp, outg = jnp.split(gates, 4, axis=1)
        c_new = jax.nn.sigmoid(forget) * c + jax.nn.sigmoid(inp) * jnp.tanh(cand)
        h_new = jax.nn.sigmoid(outg) * jnp.tanh(c_new)
        return (h_new, c_new), h_new

    init = (jnp.zeros((B, H), jnp.float32), jnp.zeros((B, H), jnp.float32))
    _, hs = jax.lax.scan(step, init, jnp.swapaxes(x_seq, 0, 1))
    return jnp.swapaxes(hs, 0, 1)


def reference_forward(x, p, shift, H):
    B, S, _ = x.shape
    x_pad = jnp.concatenate([x, jnp.zeros((B, shift, 1), x.dtype)], axis=1)
    h1 = _lstm_ref(x_pad, p["w1"], p["b1_full"], H)[:, shift:, :]
    h2 = _lstm_ref(h1, p["w2"], p["b2_full"], H)
    return h2 @ p["wl"] + p["bl"]


if __name__ == "__main__":
    B, S, H, SHIFT = 2, 16, 32, 10
    key = jax.random.PRNGKey(0)
    kx, kp = jax.random.split(key)

    x = jax.random.normal(kx, (B, S, 1), jnp.float32)
    params = init_params(kp, H)

    out = noise_removal_forward(x, params, SHIFT)
    out = jax.block_until_ready(out)
    assert out.shape == (B, S, 1)

    ref = reference_forward(x, params, SHIFT, H)
    np.testing.assert_allclose(np.asarray(out), np.asarray(ref), rtol=1e-2, atol=1e-3)

    print("KERNEL_OK")
</pallas_src>

<mosaic_0001>
module attributes {stable_mosaic.version = 11 : i64} {
  func.func @_noise_removal_kernel(%arg0: memref<26x2x128xf32, #tpu.memory_space<vmem>>, %arg1: memref<64x256xf32, #tpu.memory_space<vmem>>, %arg2: memref<1x128xf32, #tpu.memory_space<vmem>>, %arg3: memref<1x32xf32, #tpu.memory_space<vmem>>, %arg4: memref<1x1xf32, #tpu.memory_space<vmem>>, %arg5: memref<16x2xf32, #tpu.memory_space<vmem>>, %arg6: memref<2x32xf32, #tpu.memory_space<vmem>>, %arg7: memref<2x32xf32, #tpu.memory_space<vmem>>, %arg8: memref<16x2x32xf32, #tpu.memory_space<vmem>>) attributes {dimension_semantics = [], scalar_prefetch = 0 : i64, scratch_operands = 3 : i64, tpu.core_type = #tpu.core_type<tc>} {
    %cst = arith.constant 0.000000e+00 : f32
    %0 = vector.broadcast %cst : f32 to vector<2x32xf32>
    %c0 = arith.constant 0 : index
    %c0_0 = arith.constant 0 : index
    %1 = vector.load %arg6[%c0, %c0_0] : memref<2x32xf32, #tpu.memory_space<vmem>>, vector<2x32xf32>
    tpu.vector_store %arg6[%c0, %c0_0], %0 {strides = array<i32>} : memref<2x32xf32, #tpu.memory_space<vmem>>, vector<2x32xf32>,
    %cst_1 = arith.constant 0.000000e+00 : f32
    %2 = vector.broadcast %cst_1 : f32 to vector<2x32xf32>
    %c0_2 = arith.constant 0 : index
    %c0_3 = arith.constant 0 : index
    %3 = vector.load %arg7[%c0_2, %c0_3] : memref<2x32xf32, #tpu.memory_space<vmem>>, vector<2x32xf32>
    tpu.vector_store %arg7[%c0_2, %c0_3], %2 {strides = array<i32>} : memref<2x32xf32, #tpu.memory_space<vmem>>, vector<2x32xf32>,
    %c0_4 = arith.constant 0 : index
    %c0_5 = arith.constant 0 : index
    %4 = vector.load %arg1[%c0_4, %c0_5] : memref<64x256xf32, #tpu.memory_space<vmem>>, vector<64x256xf32>
    %c0_6 = arith.constant 0 : index
    %c0_7 = arith.constant 0 : index
    %5 = vector.load %arg2[%c0_6, %c0_7] : memref<1x128xf32, #tpu.memory_space<vmem>>, vector<1x128xf32>
    %cst_8 = arith.constant 0.000000e+00 : f32
    %6 = vector.broadcast %cst_8 : f32 to vector<2x32xf32>
    %c0_i32 = arith.constant 0 : i32
    %c0_9 = arith.constant 0 : index
    %c0_10 = arith.constant 0 : index
    %7 = vector.load %arg6[%c0_9, %c0_10] : memref<2x32xf32, #tpu.memory_space<vmem>>, vector<2x32xf32>
    %8 = tpu.concatenate %6, %7 in 1 : vector<2x32xf32>, vector<2x32xf32> -> vector<2x64xf32>
    %cst_11 = arith.constant dense<0.000000e+00> : vector<2x256xf32>
    %9 = tpu.matmul %8, %4, %cst_11 {dimension_numbers = #tpu.dot_dimension_numbers<[1], [0], [0], [1], [0, 0, 1, 1], [], []>} : vector<2x64xf32>, vector<64x256xf32>, vector<2x256xf32> -> vector<2x256xf32>
    %10 = arith.index_cast %c0_i32 : i32 to index
    %c0_12 = arith.constant 0 : index
    %c0_13 = arith.constant 0 : index
    %11 = vector.load %arg0[%10, %c0_12, %c0_13] : memref<26x2x128xf32, #tpu.memory_space<vmem>>, vector<1x2x128xf32>
    %12 = vector.shape_cast %11 : vector<1x2x128xf32> to vector<2x128xf32>
    %13 = vector.extract_strided_slice %9 {offsets = [0, 0], sizes = [2, 128], strides = [1, 1]} : vector<2x256xf32> to vector<2x128xf32>
    %14 = arith.addf %12, %13 : vector<2x128xf32>
    %15 = arith.negf %14 : vector<2x128xf32>
    %16 = math.exp %15 : vector<2x128xf32>
    %cst_14 = arith.constant 1.000000e+00 : f32
    %17 = vector.broadcast %cst_14 : f32 to vector<2x128xf32>
    %18 = arith.addf %17, %16 : vector<2x128xf32>
    %19 = arith.divf %17, %18 : vector<2x128xf32>
    %20 = vector.extract_strided_slice %19 {offsets = [0, 0], sizes = [2, 32], strides = [1, 1]} : vector<2x128xf32> to vector<2x32xf32>
    %cst_15 = arith.constant 2.000000e+00 : f32
    %21 = vector.broadcast %cst_15 : f32 to vector<2x32xf32>
    %22 = arith.mulf %21, %20 : vector<2x32xf32>
    %cst_16 = arith.constant 1.000000e+00 : f32
    %23 = vector.broadcast %cst_16 : f32 to vector<2x32xf32>
    %24 = arith.subf %22, %23 : vector<2x32xf32>
    %25 = vector.extract_strided_slice %19 {offsets = [0, 32], sizes = [2, 32], strides = [1, 1]} : vector<2x128xf32> to vector<2x32xf32>
    %26 = arith.mulf %25, %6 : vector<2x32xf32>
    %27 = vector.extract_strided_slice %19 {offsets = [0, 64], sizes = [2, 32], strides = [1, 1]} : vector<2x128xf32> to vector<2x32xf32>
    %28 = arith.mulf %27, %24 : vector<2x32xf32>
    %29 = arith.addf %26, %28 : vector<2x32xf32>
    %30 = vector.extract_strided_slice %19 {offsets = [0, 96], sizes = [2, 32], strides = [1, 1]} : vector<2x128xf32> to vector<2x32xf32>
    %31 = math.tanh %29 : vector<2x32xf32>
    %32 = arith.mulf %30, %31 : vector<2x32xf32>
    %c11_i32 = arith.constant 11 : i32
    %33 = arith.cmpi sge, %c0_i32, %c11_i32 : i32
    %34 = arith.extui %33 : i1 to i32
    %c0_i32_17 = arith.constant 0 : i32
    %35 = arith.cmpi ne, %34, %c0_i32_17 : i32
    scf.if %35 {
      %798 = vector.extract_strided_slice %9 {offsets = [0, 128], sizes = [2, 128], strides = [1, 1]} : vector<2x256xf32> to vector<2x128xf32>
      %799 = vector.broadcast %5 : vector<1x128xf32> to vector<2x128xf32>
      %800 = arith.addf %798, %799 : vector<2x128xf32>
      %c0_289 = arith.constant 0 : index
      %c0_290 = arith.constant 0 : index
      %801 = vector.load %arg7[%c0_289, %c0_290] : memref<2x32xf32, #tpu.memory_space<vmem>>, vector<2x32xf32>
      %802 = arith.negf %800 : vector<2x128xf32>
      %803 = math.exp %802 : vector<2x128xf32>
      %cst_291 = arith.constant 1.000000e+00 : f32
      %804 = vector.broadcast %cst_291 : f32 to vector<2x128xf32>
      %805 = arith.addf %804, %803 : vector<2x128xf32>
      %806 = arith.divf %804, %805 : vector<2x128xf32>
      %807 = vector.extract_strided_slice %806 {offsets = [0, 0], sizes = [2, 32], strides = [1, 1]} : vector<2x128xf32> to vector<2x32xf32>
      %cst_292 = arith.constant 2.000000e+00 : f32
      %808 = vector.broadcast %cst_292 : f32 to vector<2x32xf32>
      %809 = arith.mulf %808, %807 : vector<2x32xf32>
      %cst_293 = arith.constant 1.000000e+00 : f32
      %810 = vector.broadcast %cst_293 : f32 to vector<2x32xf32>
      %811 = arith.subf %809, %810 : vector<2x32xf32>
      %812 = vector.extract_strided_slice %806 {offsets = [0, 32], sizes = [2, 32], strides = [1, 1]} : vector<2x128xf32> to vector<2x32xf32>
      %813 = arith.mulf %812, %801 : vector<2x32xf32>
      %814 = vector.extract_strided_slice %806 {offsets = [0, 64], sizes = [2, 32], strides = [1, 1]} : vector<2x128xf32> to vector<2x32xf32>
      %815 = arith.mulf %814, %811 : vector<2x32xf32>
      %816 = arith.addf %813, %815 : vector<2x32xf32>
      %817 = vector.extract_strided_slice %806 {offsets = [0, 96], sizes = [2, 32], strides = [1, 1]} : vector<2x128xf32> to vector<2x32xf32>
      %818 = math.tanh %816 : vector<2x32xf32>
      %819 = arith.mulf %817, %818 : vector<2x32xf32>
      %c0_294 = arith.constant 0 : index
      %c0_295 = arith.constant 0 : index
      %820 = vector.load %arg6[%c0_294, %c0_295] : memref<2x32xf32, #tpu.memory_space<vmem>>, vector<2x32xf32>
      tpu.vector_store %arg6[%c0_294, %c0_295], %819 {strides = array<i32>} : memref<2x32xf32, #tpu.memory_space<vmem>>, vector<2x32xf32>,
      %c0_296 = arith.constant 0 : index
      %c0_297 = arith.constant 0 : index
      %821 = vector.load %arg7[%c0_296, %c0_297] : memref<2x32xf32, #tpu.memory_space<vmem>>, vector<2x32xf32>
      tpu.vector_store %arg7[%c0_296, %c0_297], %816 {strides = array<i32>} : memref<2x32xf32, #tpu.memory_space<vmem>>, vector<2x32xf32>,
      %822 = vector.shape_cast %819 : vector<2x32xf32> to vector<1x2x32xf32>
      %c10_i32_298 = arith.constant 10 : i32
      %823 = arith.subi %c0_i32, %c10_i32_298 : i32
      %c1_i32_299 = arith.constant 1 : i32
      %824 = arith.subi %823, %c1_i32_299 : i32
      %825 = arith.index_cast %824 : i32 to index
      %c0_300 = arith.constant 0 : index
      %c0_301 = arith.constant 0 : index
      %826 = vector.load %arg8[%825, %c0_300, %c0_301] : memref<16x2x32xf32, #tpu.memory_space<vmem>>, vector<1x2x32xf32>
      tpu.vector_store %arg8[%825, %c0_300, %c0_301], %822 {strides = array<i32>} : memref<16x2x32xf32, #tpu.memory_space<vmem>>, vector<1x2x32xf32>,
    } else {
    }
    %c1_i32 = arith.constant 1 : i32
    %c0_18 = arith.constant 0 : index
    %c0_19 = arith.constant 0 : index
    %36 = vector.load %arg6[%c0_18, %c0_19] : memref<2x32xf32, #tpu.memory_space<vmem>>, vector<2x32xf32>
    %37 = tpu.concatenate %32, %36 in 1 : vector<2x32xf32>, vector<2x32xf32> -> vector<2x64xf32>
    %cst_20 = arith.constant dense<0.000000e+00> : vector<2x256xf32>
    %38 = tpu.matmul %37, %4, %cst_20 {dimension_numbers = #tpu.dot_dimension_numbers<[1], [0], [0], [1], [0, 0, 1, 1], [], []>} : vector<2x64xf32>, vector<64x256xf32>, vector<2x256xf32> -> vector<2x256xf32>
    %39 = arith.index_cast %c1_i32 : i32 to index
    %c0_21 = arith.constant 0 : index
    %c0_22 = arith.constant 0 : index
    %40 = vector.load %arg0[%39, %c0_21, %c0_22] : memref<26x2x128xf32, #tpu.memory_space<vmem>>, vector<1x2x128xf32>
    %41 = vector.shape_cast %40 : vector<1x2x128xf32> to vector<2x128xf32>
    %42 = vector.extract_strided_slice %38 {offsets = [0, 0], sizes = [2, 128], strides = [1, 1]} : vector<2x256xf32> to vector<2x128xf32>
    %43 = arith.addf %41, %42 : vector<2x128xf32>
    %44 = arith.negf %43 : vector<2x128xf32>
    %45 = math.exp %44 : vector<2x128xf32>
    %cst_23 = arith.constant 1.000000e+00 : f32
    %46 = vector.broadcast %cst_23 : f32 to vector<2x128xf32>
    %47 = arith.addf %46, %45 : vector<2x128xf32>
    %48 = arith.divf %46, %47 : vector<2x128xf32>
    %49 = vector.extract_strided_slice %48 {offsets = [0, 0], sizes = [2, 32], strides = [1, 1]} : vector<2x128xf32> to vector<2x32xf32>
    %cst_24 = arith.constant 2.000000e+00 : f32
    %50 = vector.broadcast %cst_24 : f32 to vector<2x32xf32>
    %51 = arith.mulf %50, %49 : vector<2x32xf32>
    %cst_25 = arith.constant 1.000000e+00 : f32
    %52 = vector.broadcast %cst_25 : f32 to vector<2x32xf32>
    %53 = arith.subf %51, %52 : vector<2x32xf32>
    %54 = vector.extract_strided_slice %48 {offsets = [0, 32], sizes = [2, 32], strides = [1, 1]} : vector<2x128xf32> to vector<2x32xf32>
    %55 = arith.mulf %54, %29 : vector<2x32xf32>
    %56 = vector.extract_strided_slice %48 {offsets = [0, 64], sizes = [2, 32], strides = [1, 1]} : vector<2x128xf32> to vector<2x32xf32>
    %57 = arith.mulf %56, %53 : vector<2x32xf32>
    %58 = arith.addf %55, %57 : vector<2x32xf32>
    %59 = vector.extract_strided_slice %48 {offsets = [0, 96], sizes = [2, 32], strides = [1, 1]} : vector<2x128xf32> to vector<2x32xf32>
    %60 = math.tanh %58 : vector<2x32xf32>
    %61 = arith.mulf %59, %60 : vector<2x32xf32>
    %c11_i32_26 = arith.constant 11 : i32
    %62 = arith.cmpi sge, %c1_i32, %c11_i32_26 : i32
    %63 = arith.extui %62 : i1 to i32
    %c0_i32_27 = arith.constant 0 : i32
    %64 = arith.cmpi ne, %63, %c0_i32_27 : i32
    scf.if %64 {
      %798 = vector.extract_strided_slice %38 {offsets = [0, 128], sizes = [2, 128], strides = [1, 1]} : vector<2x256xf32> to vector<2x128xf32>
      %799 = vector.broadcast %5 : vector<1x128xf32> to vector<2x128xf32>
      %800 = arith.addf %798, %799 : vector<2x128xf32>
      %c0_289 = arith.constant 0 : index
      %c0_290 = arith.constant 0 : index
      %801 = vector.load %arg7[%c0_289, %c0_290] : memref<2x32xf32, #tpu.memory_space<vmem>>, vector<2x32xf32>
      %802 = arith.negf %800 : vector<2x128xf32>
      %803 = math.exp %802 : vector<2x128xf32>
      %cst_291 = arith.constant 1.000000e+00 : f32
      %804 = vector.broadcast %cst_291 : f32 to vector<2x128xf32>
      %805 = arith.addf %804, %803 : vector<2x128xf32>
      %806 = arith.divf %804, %805 : vector<2x128xf32>
      %807 = vector.extract_strided_slice %806 {offsets = [0, 0], sizes = [2, 32], strides = [1, 1]} : vector<2x128xf32> to vector<2x32xf32>
      %cst_292 = arith.constant 2.000000e+00 : f32
      %808 = vector.broadcast %cst_292 : f32 to vector<2x32xf32>
      %809 = arith.mulf %808, %807 : vector<2x32xf32>
      %cst_293 = arith.constant 1.000000e+00 : f32
      %810 = vector.broadcast %cst_293 : f32 to vector<2x32xf32>
      %811 = arith.subf %809, %810 : vector<2x32xf32>
      %812 = vector.extract_strided_slice %806 {offsets = [0, 32], sizes = [2, 32], strides = [1, 1]} : vector<2x128xf32> to vector<2x32xf32>
      %813 = arith.mulf %812, %801 : vector<2x32xf32>
      %814 = vector.extract_strided_slice %806 {offsets = [0, 64], sizes = [2, 32], strides = [1, 1]} : vector<2x128xf32> to vector<2x32xf32>
      %815 = arith.mulf %814, %811 : vector<2x32xf32>
      %816 = arith.addf %813, %815 : vector<2x32xf32>
      %817 = vector.extract_strided_slice %806 {offsets = [0, 96], sizes = [2, 32], strides = [1, 1]} : vector<2x128xf32> to vector<2x32xf32>
      %818 = math.tanh %816 : vector<2x32xf32>
      %819 = arith.mulf %817, %818 : vector<2x32xf32>
      %c0_294 = arith.constant 0 : index
      %c0_295 = arith.constant 0 : index
      %820 = vector.load %arg6[%c0_294, %c0_295] : memref<2x32xf32, #tpu.memory_space<vmem>>, vector<2x32xf32>
      tpu.vector_store %arg6[%c0_294, %c0_295], %819 {strides = array<i32>} : memref<2x32xf32, #tpu.memory_space<vmem>>, vector<2x32xf32>,
      %c0_296 = arith.constant 0 : index
      %c0_297 = arith.constant 0 : index
      %821 = vector.load %arg7[%c0_296, %c0_297] : memref<2x32xf32, #tpu.memory_space<vmem>>, vector<2x32xf32>
      tpu.vector_store %arg7[%c0_296, %c0_297], %816 {strides = array<i32>} : memref<2x32xf32, #tpu.memory_space<vmem>>, vector<2x32xf32>,
      %822 = vector.shape_cast %819 : vector<2x32xf32> to vector<1x2x32xf32>
      %c10_i32_298 = arith.constant 10 : i32
      %823 = arith.subi %c1_i32, %c10_i32_298 : i32
      %c1_i32_299 = arith.constant 1 : i32
      %824 = arith.subi %823, %c1_i32_299 : i32
      %825 = arith.index_cast %824 : i32 to index
      %c0_300 = arith.constant 0 : index
      %c0_301 = arith.constant 0 : index
      %826 = vector.load %arg8[%825, %c0_300, %c0_301] : memref<16x2x32xf32, #tpu.memory_space<vmem>>, vector<1x2x32xf32>
      tpu.vector_store %arg8[%825, %c0_300, %c0_301], %822 {strides = array<i32>} : memref<16x2x32xf32, #tpu.memory_space<vmem>>, vector<1x2x32xf32>,
    } else {
    }
    %c2_i32 = arith.constant 2 : i32
    %c0_28 = arith.constant 0 : index
    %c0_29 = arith.constant 0 : index
    %65 = vector.load %arg6[%c0_28, %c0_29] : memref<2x32xf32, #tpu.memory_space<vmem>>, vector<2x32xf32>
    %66 = tpu.concatenate %61, %65 in 1 : vector<2x32xf32>, vector<2x32xf32> -> vector<2x64xf32>
    %cst_30 = arith.constant dense<0.000000e+00> : vector<2x256xf32>
    %67 = tpu.matmul %66, %4, %cst_30 {dimension_numbers = #tpu.dot_dimension_numbers<[1], [0], [0], [1], [0, 0, 1, 1], [], []>} : vector<2x64xf32>, vector<64x256xf32>, vector<2x256xf32> -> vector<2x256xf32>
    %68 = arith.index_cast %c2_i32 : i32 to index
    %c0_31 = arith.constant 0 : index
    %c0_32 = arith.constant 0 : index
    %69 = vector.load %arg0[%68, %c0_31, %c0_32] : memref<26x2x128xf32, #tpu.memory_space<vmem>>, vector<1x2x128xf32>
    %70 = vector.shape_cast %69 : vector<1x2x128xf32> to vector<2x128xf32>
    %71 = vector.extract_strided_slice %67 {offsets = [0, 0], sizes = [2, 128], strides = [1, 1]} : vector<2x256xf32> to vector<2x128xf32>
    %72 = arith.addf %70, %71 : vector<2x128xf32>
    %73 = arith.negf %72 : vector<2x128xf32>
    %74 = math.exp %73 : vector<2x128xf32>
    %cst_33 = arith.constant 1.000000e+00 : f32
    %75 = vector.broadcast %cst_33 : f32 to vector<2x128xf32>
    %76 = arith.addf %75, %74 : vector<2x128xf32>
    %77 = arith.divf %75, %76 : vector<2x128xf32>
    %78 = vector.extract_strided_slice %77 {offsets = [0, 0], sizes = [2, 32], strides = [1, 1]} : vector<2x128xf32> to vector<2x32xf32>
    %cst_34 = arith.constant 2.000000e+00 : f32
    %79 = vector.broadcast %cst_34 : f32 to vector<2x32xf32>
    %80 = arith.mulf %79, %78 : vector<2x32xf32>
    %cst_35 = arith.constant 1.000000e+00 : f32
    %81 = vector.broadcast %cst_35 : f32 to vector<2x32xf32>
    %82 = arith.subf %80, %81 : vector<2x32xf32>
    %83 = vector.extract_strided_slice %77 {offsets = [0, 32], sizes = [2, 32], strides = [1, 1]} : vector<2x128xf32> to vector<2x32xf32>
    %84 = arith.mulf %83, %58 : vector<2x32xf32>
    %85 = vector.extract_strided_slice %77 {offsets = [0, 64], sizes = [2, 32], strides = [1, 1]} : vector<2x128xf32> to vector<2x32xf32>
    %86 = arith.mulf %85, %82 : vector<2x32xf32>
    %87 = arith.addf %84, %86 : vector<2x32xf32>
    %88 = vector.extract_strided_slice %77 {offsets = [0, 96], sizes = [2, 32], strides = [1, 1]} : vector<2x128xf32> to vector<2x32xf32>
    %89 = math.tanh %87 : vector<2x32xf32>
    %90 = arith.mulf %88, %89 : vector<2x32xf32>
    %c11_i32_36 = arith.constant 11 : i32
    %91 = arith.cmpi sge, %c2_i32, %c11_i32_36 : i32
    %92 = arith.extui %91 : i1 to i32
    %c0_i32_37 = arith.constant 0 : i32
    %93 = arith.cmpi ne, %92, %c0_i32_37 : i32
    scf.if %93 {
      %798 = vector.extract_strided_slice %67 {offsets = [0, 128], sizes = [2, 128], strides = [1, 1]} : vector<2x256xf32> to vector<2x128xf32>
      %799 = vector.broadcast %5 : vector<1x128xf32> to vector<2x128xf32>
      %800 = arith.addf %798, %799 : vector<2x128xf32>
      %c0_289 = arith.constant 0 : index
      %c0_290 = arith.constant 0 : index
      %801 = vector.load %arg7[%c0_289, %c0_290] : memref<2x32xf32, #tpu.memory_space<vmem>>, vector<2x32xf32>
      %802 = arith.negf %800 : vector<2x128xf32>
      %803 = math.exp %802 : vector<2x128xf32>
      %cst_291 = arith.constant 1.000000e+00 : f32
      %804 = vector.broadcast %cst_291 : f32 to vector<2x128xf32>
      %805 = arith.addf %804, %803 : vector<2x128xf32>
      %806 = arith.divf %804, %805 : vector<2x128xf32>
      %807 = vector.extract_strided_slice %806 {offsets = [0, 0], sizes = [2, 32], strides = [1, 1]} : vector<2x128xf32> to vector<2x32xf32>
      %cst_292 = arith.constant 2.000000e+00 : f32
      %808 = vector.broadcast %cst_292 : f32 to vector<2x32xf32>
      %809 = arith.mulf %808, %807 : vector<2x32xf32>
      %cst_293 = arith.constant 1.000000e+00 : f32
      %810 = vector.broadcast %cst_293 : f32 to vector<2x32xf32>
      %811 = arith.subf %809, %810 : vector<2x32xf32>
      %812 = vector.extract_strided_slice %806 {offsets = [0, 32], sizes = [2, 32], strides = [1, 1]} : vector<2x128xf32> to vector<2x32xf32>
      %813 = arith.mulf %812, %801 : vector<2x32xf32>
      %814 = vector.extract_strided_slice %806 {offsets = [0, 64], sizes = [2, 32], strides = [1, 1]} : vector<2x128xf32> to vector<2x32xf32>
      %815 = arith.mulf %814, %811 : vector<2x32xf32>
      %816 = arith.addf %813, %815 : vector<2x32xf32>
      %817 = vector.extract_strided_slice %806 {offsets = [0, 96], sizes = [2, 32], strides = [1, 1]} : vector<2x128xf32> to vector<2x32xf32>
      %818 = math.tanh %816 : vector<2x32xf32>
      %819 = arith.mulf %817, %818 : vector<2x32xf32>
      %c0_294 = arith.constant 0 : index
      %c0_295 = arith.constant 0 : index
      %820 = vector.load %arg6[%c0_294, %c0_295] : memref<2x32xf32, #tpu.memory_space<vmem>>, vector<2x32xf32>
      tpu.vector_store %arg6[%c0_294, %c0_295], %819 {strides = array<i32>} : memref<2x32xf32, #tpu.memory_space<vmem>>, vector<2x32xf32>,
      %c0_296 = arith.constant 0 : index
      %c0_297 = arith.constant 0 : index
      %821 = vector.load %arg7[%c0_296, %c0_297] : memref<2x32xf32, #tpu.memory_space<vmem>>, vector<2x32xf32>
      tpu.vector_store %arg7[%c0_296, %c0_297], %816 {strides = array<i32>} : memref<2x32xf32, #tpu.memory_space<vmem>>, vector<2x32xf32>,
      %822 = vector.shape_cast %819 : vector<2x32xf32> to vector<1x2x32xf32>
      %c10_i32_298 = arith.constant 10 : i32
      %823 = arith.subi %c2_i32, %c10_i32_298 : i32
      %c1_i32_299 = arith.constant 1 : i32
      %824 = arith.subi %823, %c1_i32_299 : i32
      %825 = arith.index_cast %824 : i32 to index
      %c0_300 = arith.constant 0 : index
      %c0_301 = arith.constant 0 : index
      %826 = vector.load %arg8[%825, %c0_300, %c0_301] : memref<16x2x32xf32, #tpu.memory_space<vmem>>, vector<1x2x32xf32>
      tpu.vector_store %arg8[%825, %c0_300, %c0_301], %822 {strides = array<i32>} : memref<16x2x32xf32, #tpu.memory_space<vmem>>, vector<1x2x32xf32>,
    } else {
    }
    %c3_i32 = arith.constant 3 : i32
    %c0_38 = arith.constant 0 : index
    %c0_39 = arith.constant 0 : index
    %94 = vector.load %arg6[%c0_38, %c0_39] : memref<2x32xf32, #tpu.memory_space<vmem>>, vector<2x32xf32>
    %95 = tpu.concatenate %90, %94 in 1 : vector<2x32xf32>, vector<2x32xf32> -> vector<2x64xf32>
    %cst_40 = arith.constant dense<0.000000e+00> : vector<2x256xf32>
    %96 = tpu.matmul %95, %4, %cst_40 {dimension_numbers = #tpu.dot_dimension_numbers<[1], [0], [0], [1], [0, 0, 1, 1], [], []>} : vector<2x64xf32>, vector<64x256xf32>, vector<2x256xf32> -> vector<2x256xf32>
    %97 = arith.index_cast %c3_i32 : i32 to index
    %c0_41 = arith.constant 0 : index
    %c0_42 = arith.constant 0 : index
    %98 = vector.load %arg0[%97, %c0_41, %c0_42] : memref<26x2x128xf32, #tpu.memory_space<vmem>>, vector<1x2x128xf32>
    %99 = vector.shape_cast %98 : vector<1x2x128xf32> to vector<2x128xf32>
    %100 = vector.extract_strided_slice %96 {offsets = [0, 0], sizes = [2, 128], strides = [1, 1]} : vector<2x256xf32> to vector<2x128xf32>
    %101 = arith.addf %99, %100 : vector<2x128xf32>
    %102 = arith.negf %101 : vector<2x128xf32>
    %103 = math.exp %102 : vector<2x128xf32>
    %cst_43 = arith.constant 1.000000e+00 : f32
    %104 = vector.broadcast %cst_43 : f32 to vector<2x128xf32>
    %105 = arith.addf %104, %103 : vector<2x128xf32>
    %106 = arith.divf %104, %105 : vector<2x128xf32>
    %107 = vector.extract_strided_slice %106 {offsets = [0, 0], sizes = [2, 32], strides = [1, 1]} : vector<2x128xf32> to vector<2x32xf32>
    %cst_44 = arith.constant 2.000000e+00 : f32
    %108 = vector.broadcast %cst_44 : f32 to vector<2x32xf32>
    %109 = arith.mulf %108, %107 : vector<2x32xf32>
    %cst_45 = arith.constant 1.000000e+00 : f32
    %110 = vector.broadcast %cst_45 : f32 to vector<2x32xf32>
    %111 = arith.subf %109, %110 : vector<2x32xf32>
    %112 = vector.extract_strided_slice %106 {offsets = [0, 32], sizes = [2, 32], strides = [1, 1]} : vector<2x128xf32> to vector<2x32xf32>
    %113 = arith.mulf %112, %87 : vector<2x32xf32>
    %114 = vector.extract_strided_slice %106 {offsets = [0, 64], sizes = [2, 32], strides = [1, 1]} : vector<2x128xf32> to vector<2x32xf32>
    %115 = arith.mulf %114, %111 : vector<2x32xf32>
    %116 = arith.addf %113, %115 : vector<2x32xf32>
    %117 = vector.extract_strided_slice %106 {offsets = [0, 96], sizes = [2, 32], strides = [1, 1]} : vector<2x128xf32> to vector<2x32xf32>
    %118 = math.tanh %116 : vector<2x32xf32>
    %119 = arith.mulf %117, %118 : vector<2x32xf32>
    %c11_i32_46 = arith.constant 11 : i32
    %120 = arith.cmpi sge, %c3_i32, %c11_i32_46 : i32
    %121 = arith.extui %120 : i1 to i32
    %c0_i32_47 = arith.constant 0 : i32
    %122 = arith.cmpi ne, %121, %c0_i32_47 : i32
    scf.if %122 {
      %798 = vector.extract_strided_slice %96 {offsets = [0, 128], sizes = [2, 128], strides = [1, 1]} : vector<2x256xf32> to vector<2x128xf32>
      %799 = vector.broadcast %5 : vector<1x128xf32> to vector<2x128xf32>
      %800 = arith.addf %798, %799 : vector<2x128xf32>
      %c0_289 = arith.constant 0 : index
      %c0_290 = arith.constant 0 : index
      %801 = vector.load %arg7[%c0_289, %c0_290] : memref<2x32xf32, #tpu.memory_space<vmem>>, vector<2x32xf32>
      %802 = arith.negf %800 : vector<2x128xf32>
      %803 = math.exp %802 : vector<2x128xf32>
      %cst_291 = arith.constant 1.000000e+00 : f32
      %804 = vector.broadcast %cst_291 : f32 to vector<2x128xf32>
      %805 = arith.addf %804, %803 : vector<2x128xf32>
      %806 = arith.divf %804, %805 : vector<2x128xf32>
      %807 = vector.extract_strided_slice %806 {offsets = [0, 0], sizes = [2, 32], strides = [1, 1]} : vector<2x128xf32> to vector<2x32xf32>
      %cst_292 = arith.constant 2.000000e+00 : f32
      %808 = vector.broadcast %cst_292 : f32 to vector<2x32xf32>
      %809 = arith.mulf %808, %807 : vector<2x32xf32>
      %cst_293 = arith.constant 1.000000e+00 : f32
      %810 = vector.broadcast %cst_293 : f32 to vector<2x32xf32>
      %811 = arith.subf %809, %810 : vector<2x32xf32>
      %812 = vector.extract_strided_slice %806 {offsets = [0, 32], sizes = [2, 32], strides = [1, 1]} : vector<2x128xf32> to vector<2x32xf32>
      %813 = arith.mulf %812, %801 : vector<2x32xf32>
      %814 = vector.extract_strided_slice %806 {offsets = [0, 64], sizes = [2, 32], strides = [1, 1]} : vector<2x128xf32> to vector<2x32xf32>
      %815 = arith.mulf %814, %811 : vector<2x32xf32>
      %816 = arith.addf %813, %815 : vector<2x32xf32>
      %817 = vector.extract_strided_slice %806 {offsets = [0, 96], sizes = [2, 32], strides = [1, 1]} : vector<2x128xf32> to vector<2x32xf32>
      %818 = math.tanh %816 : vector<2x32xf32>
      %819 = arith.mulf %817, %818 : vector<2x32xf32>
      %c0_294 = arith.constant 0 : index
      %c0_295 = arith.constant 0 : index
      %820 = vector.load %arg6[%c0_294, %c0_295] : memref<2x32xf32, #tpu.memory_space<vmem>>, vector<2x32xf32>
      tpu.vector_store %arg6[%c0_294, %c0_295], %819 {strides = array<i32>} : memref<2x32xf32, #tpu.memory_space<vmem>>, vector<2x32xf32>,
      %c0_296 = arith.constant 0 : index
      %c0_297 = arith.constant 0 : index
      %821 = vector.load %arg7[%c0_296, %c0_297] : memref<2x32xf32, #tpu.memory_space<vmem>>, vector<2x32xf32>
      tpu.vector_store %arg7[%c0_296, %c0_297], %816 {strides = array<i32>} : memref<2x32xf32, #tpu.memory_space<vmem>>, vector<2x32xf32>,
      %822 = vector.shape_cast %819 : vector<2x32xf32> to vector<1x2x32xf32>
      %c10_i32_298 = arith.constant 10 : i32
      %823 = arith.subi %c3_i32, %c10_i32_298 : i32
      %c1_i32_299 = arith.constant 1 : i32
      %824 = arith.subi %823, %c1_i32_299 : i32
      %825 = arith.index_cast %824 : i32 to index
      %c0_300 = arith.constant 0 : index
      %c0_301 = arith.constant 0 : index
      %826 = vector.load %arg8[%825, %c0_300, %c0_301] : memref<16x2x32xf32, #tpu.memory_space<vmem>>, vector<1x2x32xf32>
      tpu.vector_store %arg8[%825, %c0_300, %c0_301], %822 {strides = array<i32>} : memref<16x2x32xf32, #tpu.memory_space<vmem>>, vector<1x2x32xf32>,
    } else {
    }
    %c4_i32 = arith.constant 4 : i32
    %c0_48 = arith.constant 0 : index
    %c0_49 = arith.constant 0 : index
    %123 = vector.load %arg6[%c0_48, %c0_49] : memref<2x32xf32, #tpu.memory_space<vmem>>, vector<2x32xf32>
    %124 = tpu.concatenate %119, %123 in 1 : vector<2x32xf32>, vector<2x32xf32> -> vector<2x64xf32>
    %cst_50 = arith.constant dense<0.000000e+00> : vector<2x256xf32>
    %125 = tpu.matmul %124, %4, %cst_50 {dimension_numbers = #tpu.dot_dimension_numbers<[1], [0], [0], [1], [0, 0, 1, 1], [], []>} : vector<2x64xf32>, vector<64x256xf32>, vector<2x256xf32> -> vector<2x256xf32>
    %126 = arith.index_cast %c4_i32 : i32 to index
    %c0_51 = arith.constant 0 : index
    %c0_52 = arith.constant 0 : index
    %127 = vector.load %arg0[%126, %c0_51, %c0_52] : memref<26x2x128xf32, #tpu.memory_space<vmem>>, vector<1x2x128xf32>
    %128 = vector.shape_cast %127 : vector<1x2x128xf32> to vector<2x128xf32>
    %129 = vector.extract_strided_slice %125 {offsets = [0, 0], sizes = [2, 128], strides = [1, 1]} : vector<2x256xf32> to vector<2x128xf32>
    %130 = arith.addf %128, %129 : vector<2x128xf32>
    %131 = arith.negf %130 : vector<2x128xf32>
    %132 = math.exp %131 : vector<2x128xf32>
    %cst_53 = arith.constant 1.000000e+00 : f32
    %133 = vector.broadcast %cst_53 : f32 to vector<2x128xf32>
    %134 = arith.addf %133, %132 : vector<2x128xf32>
    %135 = arith.divf %133, %134 : vector<2x128xf32>
    %136 = vector.extract_strided_slice %135 {offsets = [0, 0], sizes = [2, 32], strides = [1, 1]} : vector<2x128xf32> to vector<2x32xf32>
    %cst_54 = arith.constant 2.000000e+00 : f32
    %137 = vector.broadcast %cst_54 : f32 to vector<2x32xf32>
    %138 = arith.mulf %137, %136 : vector<2x32xf32>
    %cst_55 = arith.constant 1.000000e+00 : f32
    %139 = vector.broadcast %cst_55 : f32 to vector<2x32xf32>
    %140 = arith.subf %138, %139 : vector<2x32xf32>
    %141 = vector.extract_strided_slice %135 {offsets = [0, 32], sizes = [2, 32], strides = [1, 1]} : vector<2x128xf32> to vector<2x32xf32>
    %142 = arith.mulf %141, %116 : vector<2x32xf32>
    %143 = vector.extract_strided_slice %135 {offsets = [0, 64], sizes = [2, 32], strides = [1, 1]} : vector<2x128xf32> to vector<2x32xf32>
    %144 = arith.mulf %143, %140 : vector<2x32xf32>
    %145 = arith.addf %142, %144 : vector<2x32xf32>
    %146 = vector.extract_strided_slice %135 {offsets = [0, 96], sizes = [2, 32], strides = [1, 1]} : vector<2x128xf32> to vector<2x32xf32>
    %147 = math.tanh %145 : vector<2x32xf32>
    %148 = arith.mulf %146, %147 : vector<2x32xf32>
    %c11_i32_56 = arith.constant 11 : i32
    %149 = arith.cmpi sge, %c4_i32, %c11_i32_56 : i32
    %150 = arith.extui %149 : i1 to i32
    %c0_i32_57 = arith.constant 0 : i32
    %151 = arith.cmpi ne, %150, %c0_i32_57 : i32
    scf.if %151 {
      %798 = vector.extract_strided_slice %125 {offsets = [0, 128], sizes = [2, 128], strides = [1, 1]} : vector<2x256xf32> to vector<2x128xf32>
      %799 = vector.broadcast %5 : vector<1x128xf32> to vector<2x128xf32>
      %800 = arith.addf %798, %799 : vector<2x128xf32>
      %c0_289 = arith.constant 0 : index
      %c0_290 = arith.constant 0 : index
      %801 = vector.load %arg7[%c0_289, %c0_290] : memref<2x32xf32, #tpu.memory_space<vmem>>, vector<2x32xf32>
      %802 = arith.negf %800 : vector<2x128xf32>
      %803 = math.exp %802 : vector<2x128xf32>
      %cst_291 = arith.constant 1.000000e+00 : f32
      %804 = vector.broadcast %cst_291 : f32 to vector<2x128xf32>
      %805 = arith.addf %804, %803 : vector<2x128xf32>
      %806 = arith.divf %804, %805 : vector<2x128xf32>
      %807 = vector.extract_strided_slice %806 {offsets = [0, 0], sizes = [2, 32], strides = [1, 1]} : vector<2x128xf32> to vector<2x32xf32>
      %cst_292 = arith.constant 2.000000e+00 : f32
      %808 = vector.broadcast %cst_292 : f32 to vector<2x32xf32>
      %809 = arith.mulf %808, %807 : vector<2x32xf32>
      %cst_293 = arith.constant 1.000000e+00 : f32
      %810 = vector.broadcast %cst_293 : f32 to vector<2x32xf32>
      %811 = arith.subf %809, %810 : vector<2x32xf32>
      %812 = vector.extract_strided_slice %806 {offsets = [0, 32], sizes = [2, 32], strides = [1, 1]} : vector<2x128xf32> to vector<2x32xf32>
      %813 = arith.mulf %812, %801 : vector<2x32xf32>
      %814 = vector.extract_strided_slice %806 {offsets = [0, 64], sizes = [2, 32], strides = [1, 1]} : vector<2x128xf32> to vector<2x32xf32>
      %815 = arith.mulf %814, %811 : vector<2x32xf32>
      %816 = arith.addf %813, %815 : vector<2x32xf32>
      %817 = vector.extract_strided_slice %806 {offsets = [0, 96], sizes = [2, 32], strides = [1, 1]} : vector<2x128xf32> to vector<2x32xf32>
      %818 = math.tanh %816 : vector<2x32xf32>
      %819 = arith.mulf %817, %818 : vector<2x32xf32>
      %c0_294 = arith.constant 0 : index
      %c0_295 = arith.constant 0 : index
      %820 = vector.load %arg6[%c0_294, %c0_295] : memref<2x32xf32, #tpu.memory_space<vmem>>, vector<2x32xf32>
      tpu.vector_store %arg6[%c0_294, %c0_295], %819 {strides = array<i32>} : memref<2x32xf32, #tpu.memory_space<vmem>>, vector<2x32xf32>,
      %c0_296 = arith.constant 0 : index
      %c0_297 = arith.constant 0 : index
      %821 = vector.load %arg7[%c0_296, %c0_297] : memref<2x32xf32, #tpu.memory_space<vmem>>, vector<2x32xf32>
      tpu.vector_store %arg7[%c0_296, %c0_297], %816 {strides = array<i32>} : memref<2x32xf32, #tpu.memory_space<vmem>>, vector<2x32xf32>,
      %822 = vector.shape_cast %819 : vector<2x32xf32> to vector<1x2x32xf32>
      %c10_i32_298 = arith.constant 10 : i32
      %823 = arith.subi %c4_i32, %c10_i32_298 : i32
      %c1_i32_299 = arith.constant 1 : i32
      %824 = arith.subi %823, %c1_i32_299 : i32
      %825 = arith.index_cast %824 : i32 to index
      %c0_300 = arith.constant 0 : index
      %c0_301 = arith.constant 0 : index
      %826 = vector.load %arg8[%825, %c0_300, %c0_301] : memref<16x2x32xf32, #tpu.memory_space<vmem>>, vector<1x2x32xf32>
      tpu.vector_store %arg8[%825, %c0_300, %c0_301], %822 {strides = array<i32>} : memref<16x2x32xf32, #tpu.memory_space<vmem>>, vector<1x2x32xf32>,
    } else {
    }
    %c5_i32 = arith.constant 5 : i32
    %c0_58 = arith.constant 0 : index
    %c0_59 = arith.constant 0 : index
    %152 = vector.load %arg6[%c0_58, %c0_59] : memref<2x32xf32, #tpu.memory_space<vmem>>, vector<2x32xf32>
    %153 = tpu.concatenate %148, %152 in 1 : vector<2x32xf32>, vector<2x32xf32> -> vector<2x64xf32>
    %cst_60 = arith.constant dense<0.000000e+00> : vector<2x256xf32>
    %154 = tpu.matmul %153, %4, %cst_60 {dimension_numbers = #tpu.dot_dimension_numbers<[1], [0], [0], [1], [0, 0, 1, 1], [], []>} : vector<2x64xf32>, vector<64x256xf32>, vector<2x256xf32> -> vector<2x256xf32>
    %155 = arith.index_cast %c5_i32 : i32 to index
    %c0_61 = arith.constant 0 : index
    %c0_62 = arith.constant 0 : index
    %156 = vector.load %arg0[%155, %c0_61, %c0_62] : memref<26x2x128xf32, #tpu.memory_space<vmem>>, vector<1x2x128xf32>
    %157 = vector.shape_cast %156 : vector<1x2x128xf32> to vector<2x128xf32>
    %158 = vector.extract_strided_slice %154 {offsets = [0, 0], sizes = [2, 128], strides = [1, 1]} : vector<2x256xf32> to vector<2x128xf32>
    %159 = arith.addf %157, %158 : vector<2x128xf32>
    %160 = arith.negf %159 : vector<2x128xf32>
    %161 = math.exp %160 : vector<2x128xf32>
    %cst_63 = arith.constant 1.000000e+00 : f32
    %162 = vector.broadcast %cst_63 : f32 to vector<2x128xf32>
    %163 = arith.addf %162, %161 : vector<2x128xf32>
    %164 = arith.divf %162, %163 : vector<2x128xf32>
    %165 = vector.extract_strided_slice %164 {offsets = [0, 0], sizes = [2, 32], strides = [1, 1]} : vector<2x128xf32> to vector<2x32xf32>
    %cst_64 = arith.constant 2.000000e+00 : f32
    %166 = vector.broadcast %cst_64 : f32 to vector<2x32xf32>
    %167 = arith.mulf %166, %165 : vector<2x32xf32>
    %cst_65 = arith.constant 1.000000e+00 : f32
    %168 = vector.broadcast %cst_65 : f32 to vector<2x32xf32>
    %169 = arith.subf %167, %168 : vector<2x32xf32>
    %170 = vector.extract_strided_slice %164 {offsets = [0, 32], sizes = [2, 32], strides = [1, 1]} : vector<2x128xf32> to vector<2x32xf32>
    %171 = arith.mulf %170, %145 : vector<2x32xf32>
    %172 = vector.extract_strided_slice %164 {offsets = [0, 64], sizes = [2, 32], strides = [1, 1]} : vector<2x128xf32> to vector<2x32xf32>
    %173 = arith.mulf %172, %169 : vector<2x32xf32>
    %174 = arith.addf %171, %173 : vector<2x32xf32>
    %175 = vector.extract_strided_slice %164 {offsets = [0, 96], sizes = [2, 32], strides = [1, 1]} : vector<2x128xf32> to vector<2x32xf32>
    %176 = math.tanh %174 : vector<2x32xf32>
    %177 = arith.mulf %175, %176 : vector<2x32xf32>
    %c11_i32_66 = arith.constant 11 : i32
    %178 = arith.cmpi sge, %c5_i32, %c11_i32_66 : i32
    %179 = arith.extui %178 : i1 to i32
    %c0_i32_67 = arith.constant 0 : i32
    %180 = arith.cmpi ne, %179, %c0_i32_67 : i32
    scf.if %180 {
      %798 = vector.extract_strided_slice %154 {offsets = [0, 128], sizes = [2, 128], strides = [1, 1]} : vector<2x256xf32> to vector<2x128xf32>
      %799 = vector.broadcast %5 : vector<1x128xf32> to vector<2x128xf32>
      %800 = arith.addf %798, %799 : vector<2x128xf32>
      %c0_289 = arith.constant 0 : index
      %c0_290 = arith.constant 0 : index
      %801 = vector.load %arg7[%c0_289, %c0_290] : memref<2x32xf32, #tpu.memory_space<vmem>>, vector<2x32xf32>
      %802 = arith.negf %800 : vector<2x128xf32>
      %803 = math.exp %802 : vector<2x128xf32>
      %cst_291 = arith.constant 1.000000e+00 : f32
      %804 = vector.broadcast %cst_291 : f32 to vector<2x128xf32>
      %805 = arith.addf %804, %803 : vector<2x128xf32>
      %806 = arith.divf %804, %805 : vector<2x128xf32>
      %807 = vector.extract_strided_slice %806 {offsets = [0, 0], sizes = [2, 32], strides = [1, 1]} : vector<2x128xf32> to vector<2x32xf32>
      %cst_292 = arith.constant 2.000000e+00 : f32
      %808 = vector.broadcast %cst_292 : f32 to vector<2x32xf32>
      %809 = arith.mulf %808, %807 : vector<2x32xf32>
      %cst_293 = arith.constant 1.000000e+00 : f32
      %810 = vector.broadcast %cst_293 : f32 to vector<2x32xf32>
      %811 = arith.subf %809, %810 : vector<2x32xf32>
      %812 = vector.extract_strided_slice %806 {offsets = [0, 32], sizes = [2, 32], strides = [1, 1]} : vector<2x128xf32> to vector<2x32xf32>
      %813 = arith.mulf %812, %801 : vector<2x32xf32>
      %814 = vector.extract_strided_slice %806 {offsets = [0, 64], sizes = [2, 32], strides = [1, 1]} : vector<2x128xf32> to vector<2x32xf32>
      %815 = arith.mulf %814, %811 : vector<2x32xf32>
      %816 = arith.addf %813, %815 : vector<2x32xf32>
      %817 = vector.extract_strided_slice %806 {offsets = [0, 96], sizes = [2, 32], strides = [1, 1]} : vector<2x128xf32> to vector<2x32xf32>
      %818 = math.tanh %816 : vector<2x32xf32>
      %819 = arith.mulf %817, %818 : vector<2x32xf32>
      %c0_294 = arith.constant 0 : index
      %c0_295 = arith.constant 0 : index
      %820 = vector.load %arg6[%c0_294, %c0_295] : memref<2x32xf32, #tpu.memory_space<vmem>>, vector<2x32xf32>
      tpu.vector_store %arg6[%c0_294, %c0_295], %819 {strides = array<i32>} : memref<2x32xf32, #tpu.memory_space<vmem>>, vector<2x32xf32>,
      %c0_296 = arith.constant 0 : index
      %c0_297 = arith.constant 0 : index
      %821 = vector.load %arg7[%c0_296, %c0_297] : memref<2x32xf32, #tpu.memory_space<vmem>>, vector<2x32xf32>
      tpu.vector_store %arg7[%c0_296, %c0_297], %816 {strides = array<i32>} : memref<2x32xf32, #tpu.memory_space<vmem>>, vector<2x32xf32>,
      %822 = vector.shape_cast %819 : vector<2x32xf32> to vector<1x2x32xf32>
      %c10_i32_298 = arith.constant 10 : i32
      %823 = arith.subi %c5_i32, %c10_i32_298 : i32
      %c1_i32_299 = arith.constant 1 : i32
      %824 = arith.subi %823, %c1_i32_299 : i32
      %825 = arith.index_cast %824 : i32 to index
      %c0_300 = arith.constant 0 : index
      %c0_301 = arith.constant 0 : index
      %826 = vector.load %arg8[%825, %c0_300, %c0_301] : memref<16x2x32xf32, #tpu.memory_space<vmem>>, vector<1x2x32xf32>
      tpu.vector_store %arg8[%825, %c0_300, %c0_301], %822 {strides = array<i32>} : memref<16x2x32xf32, #tpu.memory_space<vmem>>, vector<1x2x32xf32>,
    } else {
    }
    %c6_i32 = arith.constant 6 : i32
    %c0_68 = arith.constant 0 : index
    %c0_69 = arith.constant 0 : index
    %181 = vector.load %arg6[%c0_68, %c0_69] : memref<2x32xf32, #tpu.memory_space<vmem>>, vector<2x32xf32>
    %182 = tpu.concatenate %177, %181 in 1 : vector<2x32xf32>, vector<2x32xf32> -> vector<2x64xf32>
    %cst_70 = arith.constant dense<0.000000e+00> : vector<2x256xf32>
    %183 = tpu.matmul %182, %4, %cst_70 {dimension_numbers = #tpu.dot_dimension_numbers<[1], [0], [0], [1], [0, 0, 1, 1], [], []>} : vector<2x64xf32>, vector<64x256xf32>, vector<2x256xf32> -> vector<2x256xf32>
    %184 = arith.index_cast %c6_i32 : i32 to index
    %c0_71 = arith.constant 0 : index
    %c0_72 = arith.constant 0 : index
    %185 = vector.load %arg0[%184, %c0_71, %c0_72] : memref<26x2x128xf32, #tpu.memory_space<vmem>>, vector<1x2x128xf32>
    %186 = vector.shape_cast %185 : vector<1x2x128xf32> to vector<2x128xf32>
    %187 = vector.extract_strided_slice %183 {offsets = [0, 0], sizes = [2, 128], strides = [1, 1]} : vector<2x256xf32> to vector<2x128xf32>
    %188 = arith.addf %186, %187 : vector<2x128xf32>
    %189 = arith.negf %188 : vector<2x128xf32>
    %190 = math.exp %189 : vector<2x128xf32>
    %cst_73 = arith.constant 1.000000e+00 : f32
    %191 = vector.broadcast %cst_73 : f32 to vector<2x128xf32>
    %192 = arith.addf %191, %190 : vector<2x128xf32>
    %193 = arith.divf %191, %192 : vector<2x128xf32>
    %194 = vector.extract_strided_slice %193 {offsets = [0, 0], sizes = [2, 32], strides = [1, 1]} : vector<2x128xf32> to vector<2x32xf32>
    %cst_74 = arith.constant 2.000000e+00 : f32
    %195 = vector.broadcast %cst_74 : f32 to vector<2x32xf32>
    %196 = arith.mulf %195, %194 : vector<2x32xf32>
    %cst_75 = arith.constant 1.000000e+00 : f32
    %197 = vector.broadcast %cst_75 : f32 to vector<2x32xf32>
    %198 = arith.subf %196, %197 : vector<2x32xf32>
    %199 = vector.extract_strided_slice %193 {offsets = [0, 32], sizes = [2, 32], strides = [1, 1]} : vector<2x128xf32> to vector<2x32xf32>
    %200 = arith.mulf %199, %174 : vector<2x32xf32>
    %201 = vector.extract_strided_slice %193 {offsets = [0, 64], sizes = [2, 32], strides = [1, 1]} : vector<2x128xf32> to vector<2x32xf32>
    %202 = arith.mulf %201, %198 : vector<2x32xf32>
    %203 = arith.addf %200, %202 : vector<2x32xf32>
    %204 = vector.extract_strided_slice %193 {offsets = [0, 96], sizes = [2, 32], strides = [1, 1]} : vector<2x128xf32> to vector<2x32xf32>
    %205 = math.tanh %203 : vector<2x32xf32>
    %206 = arith.mulf %204, %205 : vector<2x32xf32>
    %c11_i32_76 = arith.constant 11 : i32
    %207 = arith.cmpi sge, %c6_i32, %c11_i32_76 : i32
    %208 = arith.extui %207 : i1 to i32
    %c0_i32_77 = arith.constant 0 : i32
    %209 = arith.cmpi ne, %208, %c0_i32_77 : i32
    scf.if %209 {
      %798 = vector.extract_strided_slice %183 {offsets = [0, 128], sizes = [2, 128], strides = [1, 1]} : vector<2x256xf32> to vector<2x128xf32>
      %799 = vector.broadcast %5 : vector<1x128xf32> to vector<2x128xf32>
      %800 = arith.addf %798, %799 : vector<2x128xf32>
      %c0_289 = arith.constant 0 : index
      %c0_290 = arith.constant 0 : index
      %801 = vector.load %arg7[%c0_289, %c0_290] : memref<2x32xf32, #tpu.memory_space<vmem>>, vector<2x32xf32>
      %802 = arith.negf %800 : vector<2x128xf32>
      %803 = math.exp %802 : vector<2x128xf32>
      %cst_291 = arith.constant 1.000000e+00 : f32
      %804 = vector.broadcast %cst_291 : f32 to vector<2x128xf32>
      %805 = arith.addf %804, %803 : vector<2x128xf32>
      %806 = arith.divf %804, %805 : vector<2x128xf32>
      %807 = vector.extract_strided_slice %806 {offsets = [0, 0], sizes = [2, 32], strides = [1, 1]} : vector<2x128xf32> to vector<2x32xf32>
      %cst_292 = arith.constant 2.000000e+00 : f32
      %808 = vector.broadcast %cst_292 : f32 to vector<2x32xf32>
      %809 = arith.mulf %808, %807 : vector<2x32xf32>
      %cst_293 = arith.constant 1.000000e+00 : f32
      %810 = vector.broadcast %cst_293 : f32 to vector<2x32xf32>
      %811 = arith.subf %809, %810 : vector<2x32xf32>
      %812 = vector.extract_strided_slice %806 {offsets = [0, 32], sizes = [2, 32], strides = [1, 1]} : vector<2x128xf32> to vector<2x32xf32>
      %813 = arith.mulf %812, %801 : vector<2x32xf32>
      %814 = vector.extract_strided_slice %806 {offsets = [0, 64], sizes = [2, 32], strides = [1, 1]} : vector<2x128xf32> to vector<2x32xf32>
      %815 = arith.mulf %814, %811 : vector<2x32xf32>
      %816 = arith.addf %813, %815 : vector<2x32xf32>
      %817 = vector.extract_strided_slice %806 {offsets = [0, 96], sizes = [2, 32], strides = [1, 1]} : vector<2x128xf32> to vector<2x32xf32>
      %818 = math.tanh %816 : vector<2x32xf32>
      %819 = arith.mulf %817, %818 : vector<2x32xf32>
      %c0_294 = arith.constant 0 : index
      %c0_295 = arith.constant 0 : index
      %820 = vector.load %arg6[%c0_294, %c0_295] : memref<2x32xf32, #tpu.memory_space<vmem>>, vector<2x32xf32>
      tpu.vector_store %arg6[%c0_294, %c0_295], %819 {strides = array<i32>} : memref<2x32xf32, #tpu.memory_space<vmem>>, vector<2x32xf32>,
      %c0_296 = arith.constant 0 : index
      %c0_297 = arith.constant 0 : index
      %821 = vector.load %arg7[%c0_296, %c0_297] : memref<2x32xf32, #tpu.memory_space<vmem>>, vector<2x32xf32>
      tpu.vector_store %arg7[%c0_296, %c0_297], %816 {strides = array<i32>} : memref<2x32xf32, #tpu.memory_space<vmem>>, vector<2x32xf32>,
      %822 = vector.shape_cast %819 : vector<2x32xf32> to vector<1x2x32xf32>
      %c10_i32_298 = arith.constant 10 : i32
      %823 = arith.subi %c6_i32, %c10_i32_298 : i32
      %c1_i32_299 = arith.constant 1 : i32
      %824 = arith.subi %823, %c1_i32_299 : i32
      %825 = arith.index_cast %824 : i32 to index
      %c0_300 = arith.constant 0 : index
      %c0_301 = arith.constant 0 : index
      %826 = vector.load %arg8[%825, %c0_300, %c0_301] : memref<16x2x32xf32, #tpu.memory_space<vmem>>, vector<1x2x32xf32>
      tpu.vector_store %arg8[%825, %c0_300, %c0_301], %822 {strides = array<i32>} : memref<16x2x32xf32, #tpu.memory_space<vmem>>, vector<1x2x32xf32>,
    } else {
    }
    %c7_i32 = arith.constant 7 : i32
    %c0_78 = arith.constant 0 : index
    %c0_79 = arith.constant 0 : index
    %210 = vector.load %arg6[%c0_78, %c0_79] : memref<2x32xf32, #tpu.memory_space<vmem>>, vector<2x32xf32>
    %211 = tpu.concatenate %206, %210 in 1 : vector<2x32xf32>, vector<2x32xf32> -> vector<2x64xf32>
    %cst_80 = arith.constant dense<0.000000e+00> : vector<2x256xf32>
    %212 = tpu.matmul %211, %4, %cst_80 {dimension_numbers = #tpu.dot_dimension_numbers<[1], [0], [0], [1], [0, 0, 1, 1], [], []>} : vector<2x64xf32>, vector<64x256xf32>, vector<2x256xf32> -> vector<2x256xf32>
    %213 = arith.index_cast %c7_i32 : i32 to index
    %c0_81 = arith.constant 0 : index
    %c0_82 = arith.constant 0 : index
    %214 = vector.load %arg0[%213, %c0_81, %c0_82] : memref<26x2x128xf32, #tpu.memory_space<vmem>>, vector<1x2x128xf32>
    %215 = vector.shape_cast %214 : vector<1x2x128xf32> to vector<2x128xf32>
    %216 = vector.extract_strided_slice %212 {offsets = [0, 0], sizes = [2, 128], strides = [1, 1]} : vector<2x256xf32> to vector<2x128xf32>
    %217 = arith.addf %215, %216 : vector<2x128xf32>
    %218 = arith.negf %217 : vector<2x128xf32>
    %219 = math.exp %218 : vector<2x128xf32>
    %cst_83 = arith.constant 1.000000e+00 : f32
    %220 = vector.broadcast %cst_83 : f32 to vector<2x128xf32>
    %221 = arith.addf %220, %219 : vector<2x128xf32>
    %222 = arith.divf %220, %221 : vector<2x128xf32>
    %223 = vector.extract_strided_slice %222 {offsets = [0, 0], sizes = [2, 32], strides = [1, 1]} : vector<2x128xf32> to vector<2x32xf32>
    %cst_84 = arith.constant 2.000000e+00 : f32
    %224 = vector.broadcast %cst_84 : f32 to vector<2x32xf32>
    %225 = arith.mulf %224, %223 : vector<2x32xf32>
    %cst_85 = arith.constant 1.000000e+00 : f32
    %226 = vector.broadcast %cst_85 : f32 to vector<2x32xf32>
    %227 = arith.subf %225, %226 : vector<2x32xf32>
    %228 = vector.extract_strided_slice %222 {offsets = [0, 32], sizes = [2, 32], strides = [1, 1]} : vector<2x128xf32> to vector<2x32xf32>
    %229 = arith.mulf %228, %203 : vector<2x32xf32>
    %230 = vector.extract_strided_slice %222 {offsets = [0, 64], sizes = [2, 32], strides = [1, 1]} : vector<2x128xf32> to vector<2x32xf32>
    %231 = arith.mulf %230, %227 : vector<2x32xf32>
    %232 = arith.addf %229, %231 : vector<2x32xf32>
    %233 = vector.extract_strided_slice %222 {offsets = [0, 96], sizes = [2, 32], strides = [1, 1]} : vector<2x128xf32> to vector<2x32xf32>
    %234 = math.tanh %232 : vector<2x32xf32>
    %235 = arith.mulf %233, %234 : vector<2x32xf32>
    %c11_i32_86 = arith.constant 11 : i32
    %236 = arith.cmpi sge, %c7_i32, %c11_i32_86 : i32
    %237 = arith.extui %236 : i1 to i32
    %c0_i32_87 = arith.constant 0 : i32
    %238 = arith.cmpi ne, %237, %c0_i32_87 : i32
    scf.if %238 {
      %798 = vector.extract_strided_slice %212 {offsets = [0, 128], sizes = [2, 128], strides = [1, 1]} : vector<2x256xf32> to vector<2x128xf32>
      %799 = vector.broadcast %5 : vector<1x128xf32> to vector<2x128xf32>
      %800 = arith.addf %798, %799 : vector<2x128xf32>
      %c0_289 = arith.constant 0 : index
      %c0_290 = arith.constant 0 : index
      %801 = vector.load %arg7[%c0_289, %c0_290] : memref<2x32xf32, #tpu.memory_space<vmem>>, vector<2x32xf32>
      %802 = arith.negf %800 : vector<2x128xf32>
      %803 = math.exp %802 : vector<2x128xf32>
      %cst_291 = arith.constant 1.000000e+00 : f32
      %804 = vector.broadcast %cst_291 : f32 to vector<2x128xf32>
      %805 = arith.addf %804, %803 : vector<2x128xf32>
      %806 = arith.divf %804, %805 : vector<2x128xf32>
      %807 = vector.extract_strided_slice %806 {offsets = [0, 0], sizes = [2, 32], strides = [1, 1]} : vector<2x128xf32> to vector<2x32xf32>
      %cst_292 = arith.constant 2.000000e+00 : f32
      %808 = vector.broadcast %cst_292 : f32 to vector<2x32xf32>
      %809 = arith.mulf %808, %807 : vector<2x32xf32>
      %cst_293 = arith.constant 1.000000e+00 : f32
      %810 = vector.broadcast %cst_293 : f32 to vector<2x32xf32>
      %811 = arith.subf %809, %810 : vector<2x32xf32>
      %812 = vector.extract_strided_slice %806 {offsets = [0, 32], sizes = [2, 32], strides = [1, 1]} : vector<2x128xf32> to vector<2x32xf32>
      %813 = arith.mulf %812, %801 : vector<2x32xf32>
      %814 = vector.extract_strided_slice %806 {offsets = [0, 64], sizes = [2, 32], strides = [1, 1]} : vector<2x128xf32> to vector<2x32xf32>
      %815 = arith.mulf %814, %811 : vector<2x32xf32>
      %816 = arith.addf %813, %815 : vector<2x32xf32>
      %817 = vector.extract_strided_slice %806 {offsets = [0, 96], sizes = [2, 32], strides = [1, 1]} : vector<2x128xf32> to vector<2x32xf32>
      %818 = math.tanh %816 : vector<2x32xf32>
      %819 = arith.mulf %817, %818 : vector<2x32xf32>
      %c0_294 = arith.constant 0 : index
      %c0_295 = arith.constant 0 : index
      %820 = vector.load %arg6[%c0_294, %c0_295] : memref<2x32xf32, #tpu.memory_space<vmem>>, vector<2x32xf32>
      tpu.vector_store %arg6[%c0_294, %c0_295], %819 {strides = array<i32>} : memref<2x32xf32, #tpu.memory_space<vmem>>, vector<2x32xf32>,
      %c0_296 = arith.constant 0 : index
      %c0_297 = arith.constant 0 : index
      %821 = vector.load %arg7[%c0_296, %c0_297] : memref<2x32xf32, #tpu.memory_space<vmem>>, vector<2x32xf32>
      tpu.vector_store %arg7[%c0_296, %c0_297], %816 {strides = array<i32>} : memref<2x32xf32, #tpu.memory_space<vmem>>, vector<2x32xf32>,
      %822 = vector.shape_cast %819 : vector<2x32xf32> to vector<1x2x32xf32>
      %c10_i32_298 = arith.constant 10 : i32
      %823 = arith.subi %c7_i32, %c10_i32_298 : i32
      %c1_i32_299 = arith.constant 1 : i32
      %824 = arith.subi %823, %c1_i32_299 : i32
      %825 = arith.index_cast %824 : i32 to index
      %c0_300 = arith.constant 0 : index
      %c0_301 = arith.constant 0 : index
      %826 = vector.load %arg8[%825, %c0_300, %c0_301] : memref<16x2x32xf32, #tpu.memory_space<vmem>>, vector<1x2x32xf32>
      tpu.vector_store %arg8[%825, %c0_300, %c0_301], %822 {strides = array<i32>} : memref<16x2x32xf32, #tpu.memory_space<vmem>>, vector<1x2x32xf32>,
    } else {
    }
    %c8_i32 = arith.constant 8 : i32
    %c0_88 = arith.constant 0 : index
    %c0_89 = arith.constant 0 : index
    %239 = vector.load %arg6[%c0_88, %c0_89] : memref<2x32xf32, #tpu.memory_space<vmem>>, vector<2x32xf32>
    %240 = tpu.concatenate %235, %239 in 1 : vector<2x32xf32>, vector<2x32xf32> -> vector<2x64xf32>
    %cst_90 = arith.constant dense<0.000000e+00> : vector<2x256xf32>
    %241 = tpu.matmul %240, %4, %cst_90 {dimension_numbers = #tpu.dot_dimension_numbers<[1], [0], [0], [1], [0, 0, 1, 1], [], []>} : vector<2x64xf32>, vector<64x256xf32>, vector<2x256xf32> -> vector<2x256xf32>
    %242 = arith.index_cast %c8_i32 : i32 to index
    %c0_91 = arith.constant 0 : index
    %c0_92 = arith.constant 0 : index
    %243 = vector.load %arg0[%242, %c0_91, %c0_92] : memref<26x2x128xf32, #tpu.memory_space<vmem>>, vector<1x2x128xf32>
    %244 = vector.shape_cast %243 : vector<1x2x128xf32> to vector<2x128xf32>
    %245 = vector.extract_strided_slice %241 {offsets = [0, 0], sizes = [2, 128], strides = [1, 1]} : vector<2x256xf32> to vector<2x128xf32>
    %246 = arith.addf %244, %245 : vector<2x128xf32>
    %247 = arith.negf %246 : vector<2x128xf32>
    %248 = math.exp %247 : vector<2x128xf32>
    %cst_93 = arith.constant 1.000000e+00 : f32
    %249 = vector.broadcast %cst_93 : f32 to vector<2x128xf32>
    %250 = arith.addf %249, %248 : vector<2x128xf32>
    %251 = arith.divf %249, %250 : vector<2x128xf32>
    %252 = vector.extract_strided_slice %251 {offsets = [0, 0], sizes = [2, 32], strides = [1, 1]} : vector<2x128xf32> to vector<2x32xf32>
    %cst_94 = arith.constant 2.000000e+00 : f32
    %253 = vector.broadcast %cst_94 : f32 to vector<2x32xf32>
    %254 = arith.mulf %253, %252 : vector<2x32xf32>
    %cst_95 = arith.constant 1.000000e+00 : f32
    %255 = vector.broadcast %cst_95 : f32 to vector<2x32xf32>
    %256 = arith.subf %254, %255 : vector<2x32xf32>
    %257 = vector.extract_strided_slice %251 {offsets = [0, 32], sizes = [2, 32], strides = [1, 1]} : vector<2x128xf32> to vector<2x32xf32>
    %258 = arith.mulf %257, %232 : vector<2x32xf32>
    %259 = vector.extract_strided_slice %251 {offsets = [0, 64], sizes = [2, 32], strides = [1, 1]} : vector<2x128xf32> to vector<2x32xf32>
    %260 = arith.mulf %259, %256 : vector<2x32xf32>
    %261 = arith.addf %258, %260 : vector<2x32xf32>
    %262 = vector.extract_strided_slice %251 {offsets = [0, 96], sizes = [2, 32], strides = [1, 1]} : vector<2x128xf32> to vector<2x32xf32>
    %263 = math.tanh %261 : vector<2x32xf32>
    %264 = arith.mulf %262, %263 : vector<2x32xf32>
    %c11_i32_96 = arith.constant 11 : i32
    %265 = arith.cmpi sge, %c8_i32, %c11_i32_96 : i32
    %266 = arith.extui %265 : i1 to i32
    %c0_i32_97 = arith.constant 0 : i32
    %267 = arith.cmpi ne, %266, %c0_i32_97 : i32
    scf.if %267 {
      %798 = vector.extract_strided_slice %241 {offsets = [0, 128], sizes = [2, 128], strides = [1, 1]} : vector<2x256xf32> to vector<2x128xf32>
      %799 = vector.broadcast %5 : vector<1x128xf32> to vector<2x128xf32>
      %800 = arith.addf %798, %799 : vector<2x128xf32>
      %c0_289 = arith.constant 0 : index
      %c0_290 = arith.constant 0 : index
      %801 = vector.load %arg7[%c0_289, %c0_290] : memref<2x32xf32, #tpu.memory_space<vmem>>, vector<2x32xf32>
      %802 = arith.negf %800 : vector<2x128xf32>
      %803 = math.exp %802 : vector<2x128xf32>
      %cst_291 = arith.constant 1.000000e+00 : f32
      %804 = vector.broadcast %cst_291 : f32 to vector<2x128xf32>
      %805 = arith.addf %804, %803 : vector<2x128xf32>
      %806 = arith.divf %804, %805 : vector<2x128xf32>
      %807 = vector.extract_strided_slice %806 {offsets = [0, 0], sizes = [2, 32], strides = [1, 1]} : vector<2x128xf32> to vector<2x32xf32>
      %cst_292 = arith.constant 2.000000e+00 : f32
      %808 = vector.broadcast %cst_292 : f32 to vector<2x32xf32>
      %809 = arith.mulf %808, %807 : vector<2x32xf32>
      %cst_293 = arith.constant 1.000000e+00 : f32
      %810 = vector.broadcast %cst_293 : f32 to vector<2x32xf32>
      %811 = arith.subf %809, %810 : vector<2x32xf32>
      %812 = vector.extract_strided_slice %806 {offsets = [0, 32], sizes = [2, 32], strides = [1, 1]} : vector<2x128xf32> to vector<2x32xf32>
      %813 = arith.mulf %812, %801 : vector<2x32xf32>
      %814 = vector.extract_strided_slice %806 {offsets = [0, 64], sizes = [2, 32], strides = [1, 1]} : vector<2x128xf32> to vector<2x32xf32>
      %815 = arith.mulf %814, %811 : vector<2x32xf32>
      %816 = arith.addf %813, %815 : vector<2x32xf32>
      %817 = vector.extract_strided_slice %806 {offsets = [0, 96], sizes = [2, 32], strides = [1, 1]} : vector<2x128xf32> to vector<2x32xf32>
      %818 = math.tanh %816 : vector<2x32xf32>
      %819 = arith.mulf %817, %818 : vector<2x32xf32>
      %c0_294 = arith.constant 0 : index
      %c0_295 = arith.constant 0 : index
      %820 = vector.load %arg6[%c0_294, %c0_295] : memref<2x32xf32, #tpu.memory_space<vmem>>, vector<2x32xf32>
      tpu.vector_store %arg6[%c0_294, %c0_295], %819 {strides = array<i32>} : memref<2x32xf32, #tpu.memory_space<vmem>>, vector<2x32xf32>,
      %c0_296 = arith.constant 0 : index
      %c0_297 = arith.constant 0 : index
      %821 = vector.load %arg7[%c0_296, %c0_297] : memref<2x32xf32, #tpu.memory_space<vmem>>, vector<2x32xf32>
      tpu.vector_store %arg7[%c0_296, %c0_297], %816 {strides = array<i32>} : memref<2x32xf32, #tpu.memory_space<vmem>>, vector<2x32xf32>,
      %822 = vector.shape_cast %819 : vector<2x32xf32> to vector<1x2x32xf32>
      %c10_i32_298 = arith.constant 10 : i32
      %823 = arith.subi %c8_i32, %c10_i32_298 : i32
      %c1_i32_299 = arith.constant 1 : i32
      %824 = arith.subi %823, %c1_i32_299 : i32
      %825 = arith.index_cast %824 : i32 to index
      %c0_300 = arith.constant 0 : index
      %c0_301 = arith.constant 0 : index
      %826 = vector.load %arg8[%825, %c0_300, %c0_301] : memref<16x2x32xf32, #tpu.memory_space<vmem>>, vector<1x2x32xf32>
      tpu.vector_store %arg8[%825, %c0_300, %c0_301], %822 {strides = array<i32>} : memref<16x2x32xf32, #tpu.memory_space<vmem>>, vector<1x2x32xf32>,
    } else {
    }
    %c9_i32 = arith.constant 9 : i32
    %c0_98 = arith.constant 0 : index
    %c0_99 = arith.constant 0 : index
    %268 = vector.load %arg6[%c0_98, %c0_99] : memref<2x32xf32, #tpu.memory_space<vmem>>, vector<2x32xf32>
    %269 = tpu.concatenate %264, %268 in 1 : vector<2x32xf32>, vector<2x32xf32> -> vector<2x64xf32>
    %cst_100 = arith.constant dense<0.000000e+00> : vector<2x256xf32>
    %270 = tpu.matmul %269, %4, %cst_100 {dimension_numbers = #tpu.dot_dimension_numbers<[1], [0], [0], [1], [0, 0, 1, 1], [], []>} : vector<2x64xf32>, vector<64x256xf32>, vector<2x256xf32> -> vector<2x256xf32>
    %271 = arith.index_cast %c9_i32 : i32 to index
    %c0_101 = arith.constant 0 : index
    %c0_102 = arith.constant 0 : index
    %272 = vector.load %arg0[%271, %c0_101, %c0_102] : memref<26x2x128xf32, #tpu.memory_space<vmem>>, vector<1x2x128xf32>
    %273 = vector.shape_cast %272 : vector<1x2x128xf32> to vector<2x128xf32>
    %274 = vector.extract_strided_slice %270 {offsets = [0, 0], sizes = [2, 128], strides = [1, 1]} : vector<2x256xf32> to vector<2x128xf32>
    %275 = arith.addf %273, %274 : vector<2x128xf32>
    %276 = arith.negf %275 : vector<2x128xf32>
    %277 = math.exp %276 : vector<2x128xf32>
    %cst_103 = arith.constant 1.000000e+00 : f32
    %278 = vector.broadcast %cst_103 : f32 to vector<2x128xf32>
    %279 = arith.addf %278, %277 : vector<2x128xf32>
    %280 = arith.divf %278, %279 : vector<2x128xf32>
    %281 = vector.extract_strided_slice %280 {offsets = [0, 0], sizes = [2, 32], strides = [1, 1]} : vector<2x128xf32> to vector<2x32xf32>
    %cst_104 = arith.constant 2.000000e+00 : f32
    %282 = vector.broadcast %cst_104 : f32 to vector<2x32xf32>
    %283 = arith.mulf %282, %281 : vector<2x32xf32>
    %cst_105 = arith.constant 1.000000e+00 : f32
    %284 = vector.broadcast %cst_105 : f32 to vector<2x32xf32>
    %285 = arith.subf %283, %284 : vector<2x32xf32>
    %286 = vector.extract_strided_slice %280 {offsets = [0, 32], sizes = [2, 32], strides = [1, 1]} : vector<2x128xf32> to vector<2x32xf32>
    %287 = arith.mulf %286, %261 : vector<2x32xf32>
    %288 = vector.extract_strided_slice %280 {offsets = [0, 64], sizes = [2, 32], strides = [1, 1]} : vector<2x128xf32> to vector<2x32xf32>
    %289 = arith.mulf %288, %285 : vector<2x32xf32>
    %290 = arith.addf %287, %289 : vector<2x32xf32>
    %291 = vector.extract_strided_slice %280 {offsets = [0, 96], sizes = [2, 32], strides = [1, 1]} : vector<2x128xf32> to vector<2x32xf32>
    %292 = math.tanh %290 : vector<2x32xf32>
    %293 = arith.mulf %291, %292 : vector<2x32xf32>
    %c11_i32_106 = arith.constant 11 : i32
    %294 = arith.cmpi sge, %c9_i32, %c11_i32_106 : i32
    %295 = arith.extui %294 : i1 to i32
    %c0_i32_107 = arith.constant 0 : i32
    %296 = arith.cmpi ne, %295, %c0_i32_107 : i32
    scf.if %296 {
      %798 = vector.extract_strided_slice %270 {offsets = [0, 128], sizes = [2, 128], strides = [1, 1]} : vector<2x256xf32> to vector<2x128xf32>
      %799 = vector.broadcast %5 : vector<1x128xf32> to vector<2x128xf32>
      %800 = arith.addf %798, %799 : vector<2x128xf32>
      %c0_289 = arith.constant 0 : index
      %c0_290 = arith.constant 0 : index
      %801 = vector.load %arg7[%c0_289, %c0_290] : memref<2x32xf32, #tpu.memory_space<vmem>>, vector<2x32xf32>
      %802 = arith.negf %800 : vector<2x128xf32>
      %803 = math.exp %802 : vector<2x128xf32>
      %cst_291 = arith.constant 1.000000e+00 : f32
      %804 = vector.broadcast %cst_291 : f32 to vector<2x128xf32>
      %805 = arith.addf %804, %803 : vector<2x128xf32>
      %806 = arith.divf %804, %805 : vector<2x128xf32>
      %807 = vector.extract_strided_slice %806 {offsets = [0, 0], sizes = [2, 32], strides = [1, 1]} : vector<2x128xf32> to vector<2x32xf32>
      %cst_292 = arith.constant 2.000000e+00 : f32
      %808 = vector.broadcast %cst_292 : f32 to vector<2x32xf32>
      %809 = arith.mulf %808, %807 : vector<2x32xf32>
      %cst_293 = arith.constant 1.000000e+00 : f32
      %810 = vector.broadcast %cst_293 : f32 to vector<2x32xf32>
      %811 = arith.subf %809, %810 : vector<2x32xf32>
      %812 = vector.extract_strided_slice %806 {offsets = [0, 32], sizes = [2, 32], strides = [1, 1]} : vector<2x128xf32> to vector<2x32xf32>
      %813 = arith.mulf %812, %801 : vector<2x32xf32>
      %814 = vector.extract_strided_slice %806 {offsets = [0, 64], sizes = [2, 32], strides = [1, 1]} : vector<2x128xf32> to vector<2x32xf32>
      %815 = arith.mulf %814, %811 : vector<2x32xf32>
      %816 = arith.addf %813, %815 : vector<2x32xf32>
      %817 = vector.extract_strided_slice %806 {offsets = [0, 96], sizes = [2, 32], strides = [1, 1]} : vector<2x128xf32> to vector<2x32xf32>
      %818 = math.tanh %816 : vector<2x32xf32>
      %819 = arith.mulf %817, %818 : vector<2x32xf32>
      %c0_294 = arith.constant 0 : index
      %c0_295 = arith.constant 0 : index
      %820 = vector.load %arg6[%c0_294, %c0_295] : memref<2x32xf32, #tpu.memory_space<vmem>>, vector<2x32xf32>
      tpu.vector_store %arg6[%c0_294, %c0_295], %819 {strides = array<i32>} : memref<2x32xf32, #tpu.memory_space<vmem>>, vector<2x32xf32>,
      %c0_296 = arith.constant 0 : index
      %c0_297 = arith.constant 0 : index
      %821 = vector.load %arg7[%c0_296, %c0_297] : memref<2x32xf32, #tpu.memory_space<vmem>>, vector<2x32xf32>
      tpu.vector_store %arg7[%c0_296, %c0_297], %816 {strides = array<i32>} : memref<2x32xf32, #tpu.memory_space<vmem>>, vector<2x32xf32>,
      %822 = vector.shape_cast %819 : vector<2x32xf32> to vector<1x2x32xf32>
      %c10_i32_298 = arith.constant 10 : i32
      %823 = arith.subi %c9_i32, %c10_i32_298 : i32
      %c1_i32_299 = arith.constant 1 : i32
      %824 = arith.subi %823, %c1_i32_299 : i32
      %825 = arith.index_cast %824 : i32 to index
      %c0_300 = arith.constant 0 : index
      %c0_301 = arith.constant 0 : index
      %826 = vector.load %arg8[%825, %c0_300, %c0_301] : memref<16x2x32xf32, #tpu.memory_space<vmem>>, vector<1x2x32xf32>
      tpu.vector_store %arg8[%825, %c0_300, %c0_301], %822 {strides = array<i32>} : memref<16x2x32xf32, #tpu.memory_space<vmem>>, vector<1x2x32xf32>,
    } else {
    }
    %c10_i32 = arith.constant 10 : i32
    %c0_108 = arith.constant 0 : index
    %c0_109 = arith.constant 0 : index
    %297 = vector.load %arg6[%c0_108, %c0_109] : memref<2x32xf32, #tpu.memory_space<vmem>>, vector<2x32xf32>
    %298 = tpu.concatenate %293, %297 in 1 : vector<2x32xf32>, vector<2x32xf32> -> vector<2x64xf32>
    %cst_110 = arith.constant dense<0.000000e+00> : vector<2x256xf32>
    %299 = tpu.matmul %298, %4, %cst_110 {dimension_numbers = #tpu.dot_dimension_numbers<[1], [0], [0], [1], [0, 0, 1, 1], [], []>} : vector<2x64xf32>, vector<64x256xf32>, vector<2x256xf32> -> vector<2x256xf32>
    %300 = arith.index_cast %c10_i32 : i32 to index
    %c0_111 = arith.constant 0 : index
    %c0_112 = arith.constant 0 : index
    %301 = vector.load %arg0[%300, %c0_111, %c0_112] : memref<26x2x128xf32, #tpu.memory_space<vmem>>, vector<1x2x128xf32>
    %302 = vector.shape_cast %301 : vector<1x2x128xf32> to vector<2x128xf32>
    %303 = vector.extract_strided_slice %299 {offsets = [0, 0], sizes = [2, 128], strides = [1, 1]} : vector<2x256xf32> to vector<2x128xf32>
    %304 = arith.addf %302, %303 : vector<2x128xf32>
    %305 = arith.negf %304 : vector<2x128xf32>
    %306 = math.exp %305 : vector<2x128xf32>
    %cst_113 = arith.constant 1.000000e+00 : f32
    %307 = vector.broadcast %cst_113 : f32 to vector<2x128xf32>
    %308 = arith.addf %307, %306 : vector<2x128xf32>
    %309 = arith.divf %307, %308 : vector<2x128xf32>
    %310 = vector.extract_strided_slice %309 {offsets = [0, 0], sizes = [2, 32], strides = [1, 1]} : vector<2x128xf32> to vector<2x32xf32>
    %cst_114 = arith.constant 2.000000e+00 : f32
    %311 = vector.broadcast %cst_114 : f32 to vector<2x32xf32>
    %312 = arith.mulf %311, %310 : vector<2x32xf32>
    %cst_115 = arith.constant 1.000000e+00 : f32
    %313 = vector.broadcast %cst_115 : f32 to vector<2x32xf32>
    %314 = arith.subf %312, %313 : vector<2x32xf32>
    %315 = vector.extract_strided_slice %309 {offsets = [0, 32], sizes = [2, 32], strides = [1, 1]} : vector<2x128xf32> to vector<2x32xf32>
    %316 = arith.mulf %315, %290 : vector<2x32xf32>
    %317 = vector.extract_strided_slice %309 {offsets = [0, 64], sizes = [2, 32], strides = [1, 1]} : vector<2x128xf32> to vector<2x32xf32>
    %318 = arith.mulf %317, %314 : vector<2x32xf32>
    %319 = arith.addf %316, %318 : vector<2x32xf32>
    %320 = vector.extract_strided_slice %309 {offsets = [0, 96], sizes = [2, 32], strides = [1, 1]} : vector<2x128xf32> to vector<2x32xf32>
    %321 = math.tanh %319 : vector<2x32xf32>
    %322 = arith.mulf %320, %321 : vector<2x32xf32>
    %c11_i32_116 = arith.constant 11 : i32
    %323 = arith.cmpi sge, %c10_i32, %c11_i32_116 : i32
    %324 = arith.extui %323 : i1 to i32
    %c0_i32_117 = arith.constant 0 : i32
    %325 = arith.cmpi ne, %324, %c0_i32_117 : i32
    scf.if %325 {
      %798 = vector.extract_strided_slice %299 {offsets = [0, 128], sizes = [2, 128], strides = [1, 1]} : vector<2x256xf32> to vector<2x128xf32>
      %799 = vector.broadcast %5 : vector<1x128xf32> to vector<2x128xf32>
      %800 = arith.addf %798, %799 : vector<2x128xf32>
      %c0_289 = arith.constant 0 : index
      %c0_290 = arith.constant 0 : index
      %801 = vector.load %arg7[%c0_289, %c0_290] : memref<2x32xf32, #tpu.memory_space<vmem>>, vector<2x32xf32>
      %802 = arith.negf %800 : vector<2x128xf32>
      %803 = math.exp %802 : vector<2x128xf32>
      %cst_291 = arith.constant 1.000000e+00 : f32
      %804 = vector.broadcast %cst_291 : f32 to vector<2x128xf32>
      %805 = arith.addf %804, %803 : vector<2x128xf32>
      %806 = arith.divf %804, %805 : vector<2x128xf32>
      %807 = vector.extract_strided_slice %806 {offsets = [0, 0], sizes = [2, 32], strides = [1, 1]} : vector<2x128xf32> to vector<2x32xf32>
      %cst_292 = arith.constant 2.000000e+00 : f32
      %808 = vector.broadcast %cst_292 : f32 to vector<2x32xf32>
      %809 = arith.mulf %808, %807 : vector<2x32xf32>
      %cst_293 = arith.constant 1.000000e+00 : f32
      %810 = vector.broadcast %cst_293 : f32 to vector<2x32xf32>
      %811 = arith.subf %809, %810 : vector<2x32xf32>
      %812 = vector.extract_strided_slice %806 {offsets = [0, 32], sizes = [2, 32], strides = [1, 1]} : vector<2x128xf32> to vector<2x32xf32>
      %813 = arith.mulf %812, %801 : vector<2x32xf32>
      %814 = vector.extract_strided_slice %806 {offsets = [0, 64], sizes = [2, 32], strides = [1, 1]} : vector<2x128xf32> to vector<2x32xf32>
      %815 = arith.mulf %814, %811 : vector<2x32xf32>
      %816 = arith.addf %813, %815 : vector<2x32xf32>
      %817 = vector.extract_strided_slice %806 {offsets = [0, 96], sizes = [2, 32], strides = [1, 1]} : vector<2x128xf32> to vector<2x32xf32>
      %818 = math.tanh %816 : vector<2x32xf32>
      %819 = arith.mulf %817, %818 : vector<2x32xf32>
      %c0_294 = arith.constant 0 : index
      %c0_295 = arith.constant 0 : index
      %820 = vector.load %arg6[%c0_294, %c0_295] : memref<2x32xf32, #tpu.memory_space<vmem>>, vector<2x32xf32>
      tpu.vector_store %arg6[%c0_294, %c0_295], %819 {strides = array<i32>} : memref<2x32xf32, #tpu.memory_space<vmem>>, vector<2x32xf32>,
      %c0_296 = arith.constant 0 : index
      %c0_297 = arith.constant 0 : index
      %821 = vector.load %arg7[%c0_296, %c0_297] : memref<2x32xf32, #tpu.memory_space<vmem>>, vector<2x32xf32>
      tpu.vector_store %arg7[%c0_296, %c0_297], %816 {strides = array<i32>} : memref<2x32xf32, #tpu.memory_space<vmem>>, vector<2x32xf32>,
      %822 = vector.shape_cast %819 : vector<2x32xf32> to vector<1x2x32xf32>
      %c10_i32_298 = arith.constant 10 : i32
      %823 = arith.subi %c10_i32, %c10_i32_298 : i32
      %c1_i32_299 = arith.constant 1 : i32
      %824 = arith.subi %823, %c1_i32_299 : i32
      %825 = arith.index_cast %824 : i32 to index
      %c0_300 = arith.constant 0 : index
      %c0_301 = arith.constant 0 : index
      %826 = vector.load %arg8[%825, %c0_300, %c0_301] : memref<16x2x32xf32, #tpu.memory_space<vmem>>, vector<1x2x32xf32>
      tpu.vector_store %arg8[%825, %c0_300, %c0_301], %822 {strides = array<i32>} : memref<16x2x32xf32, #tpu.memory_space<vmem>>, vector<1x2x32xf32>,
    } else {
    }
    %c11_i32_118 = arith.constant 11 : i32
    %c0_119 = arith.constant 0 : index
    %c0_120 = arith.constant 0 : index
    %326 = vector.load %arg6[%c0_119, %c0_120] : memref<2x32xf32, #tpu.memory_space<vmem>>, vector<2x32xf32>
    %327 = tpu.concatenate %322, %326 in 1 : vector<2x32xf32>, vector<2x32xf32> -> vector<2x64xf32>
    %cst_121 = arith.constant dense<0.000000e+00> : vector<2x256xf32>
    %328 = tpu.matmul %327, %4, %cst_121 {dimension_numbers = #tpu.dot_dimension_numbers<[1], [0], [0], [1], [0, 0, 1, 1], [], []>} : vector<2x64xf32>, vector<64x256xf32>, vector<2x256xf32> -> vector<2x256xf32>
    %329 = arith.index_cast %c11_i32_118 : i32 to index
    %c0_122 = arith.constant 0 : index
    %c0_123 = arith.constant 0 : index
    %330 = vector.load %arg0[%329, %c0_122, %c0_123] : memref<26x2x128xf32, #tpu.memory_space<vmem>>, vector<1x2x128xf32>
    %331 = vector.shape_cast %330 : vector<1x2x128xf32> to vector<2x128xf32>
    %332 = vector.extract_strided_slice %328 {offsets = [0, 0], sizes = [2, 128], strides = [1, 1]} : vector<2x256xf32> to vector<2x128xf32>
    %333 = arith.addf %331, %332 : vector<2x128xf32>
    %334 = arith.negf %333 : vector<2x128xf32>
    %335 = math.exp %334 : vector<2x128xf32>
    %cst_124 = arith.constant 1.000000e+00 : f32
    %336 = vector.broadcast %cst_124 : f32 to vector<2x128xf32>
    %337 = arith.addf %336, %335 : vector<2x128xf32>
    %338 = arith.divf %336, %337 : vector<2x128xf32>
    %339 = vector.extract_strided_slice %338 {offsets = [0, 0], sizes = [2, 32], strides = [1, 1]} : vector<2x128xf32> to vector<2x32xf32>
    %cst_125 = arith.constant 2.000000e+00 : f32
    %340 = vector.broadcast %cst_125 : f32 to vector<2x32xf32>
    %341 = arith.mulf %340, %339 : vector<2x32xf32>
    %cst_126 = arith.constant 1.000000e+00 : f32
    %342 = vector.broadcast %cst_126 : f32 to vector<2x32xf32>
    %343 = arith.subf %341, %342 : vector<2x32xf32>
    %344 = vector.extract_strided_slice %338 {offsets = [0, 32], sizes = [2, 32], strides = [1, 1]} : vector<2x128xf32> to vector<2x32xf32>
    %345 = arith.mulf %344, %319 : vector<2x32xf32>
    %346 = vector.extract_strided_slice %338 {offsets = [0, 64], sizes = [2, 32], strides = [1, 1]} : vector<2x128xf32> to vector<2x32xf32>
    %347 = arith.mulf %346, %343 : vector<2x32xf32>
    %348 = arith.addf %345, %347 : vector<2x32xf32>
    %349 = vector.extract_strided_slice %338 {offsets = [0, 96], sizes = [2, 32], strides = [1, 1]} : vector<2x128xf32> to vector<2x32xf32>
    %350 = math.tanh %348 : vector<2x32xf32>
    %351 = arith.mulf %349, %350 : vector<2x32xf32>
    %c11_i32_127 = arith.constant 11 : i32
    %352 = arith.cmpi sge, %c11_i32_118, %c11_i32_127 : i32
    %353 = arith.extui %352 : i1 to i32
    %c0_i32_128 = arith.constant 0 : i32
    %354 = arith.cmpi ne, %353, %c0_i32_128 : i32
    scf.if %354 {
      %798 = vector.extract_strided_slice %328 {offsets = [0, 128], sizes = [2, 128], strides = [1, 1]} : vector<2x256xf32> to vector<2x128xf32>
      %799 = vector.broadcast %5 : vector<1x128xf32> to vector<2x128xf32>
      %800 = arith.addf %798, %799 : vector<2x128xf32>
      %c0_289 = arith.constant 0 : index
      %c0_290 = arith.constant 0 : index
      %801 = vector.load %arg7[%c0_289, %c0_290] : memref<2x32xf32, #tpu.memory_space<vmem>>, vector<2x32xf32>
      %802 = arith.negf %800 : vector<2x128xf32>
      %803 = math.exp %802 : vector<2x128xf32>
      %cst_291 = arith.constant 1.000000e+00 : f32
      %804 = vector.broadcast %cst_291 : f32 to vector<2x128xf32>
      %805 = arith.addf %804, %803 : vector<2x128xf32>
      %806 = arith.divf %804, %805 : vector<2x128xf32>
      %807 = vector.extract_strided_slice %806 {offsets = [0, 0], sizes = [2, 32], strides = [1, 1]} : vector<2x128xf32> to vector<2x32xf32>
      %cst_292 = arith.constant 2.000000e+00 : f32
      %808 = vector.broadcast %cst_292 : f32 to vector<2x32xf32>
      %809 = arith.mulf %808, %807 : vector<2x32xf32>
      %cst_293 = arith.constant 1.000000e+00 : f32
      %810 = vector.broadcast %cst_293 : f32 to vector<2x32xf32>
      %811 = arith.subf %809, %810 : vector<2x32xf32>
      %812 = vector.extract_strided_slice %806 {offsets = [0, 32], sizes = [2, 32], strides = [1, 1]} : vector<2x128xf32> to vector<2x32xf32>
      %813 = arith.mulf %812, %801 : vector<2x32xf32>
      %814 = vector.extract_strided_slice %806 {offsets = [0, 64], sizes = [2, 32], strides = [1, 1]} : vector<2x128xf32> to vector<2x32xf32>
      %815 = arith.mulf %814, %811 : vector<2x32xf32>
      %816 = arith.addf %813, %815 : vector<2x32xf32>
      %817 = vector.extract_strided_slice %806 {offsets = [0, 96], sizes = [2, 32], strides = [1, 1]} : vector<2x128xf32> to vector<2x32xf32>
      %818 = math.tanh %816 : vector<2x32xf32>
      %819 = arith.mulf %817, %818 : vector<2x32xf32>
      %c0_294 = arith.constant 0 : index
      %c0_295 = arith.constant 0 : index
      %820 = vector.load %arg6[%c0_294, %c0_295] : memref<2x32xf32, #tpu.memory_space<vmem>>, vector<2x32xf32>
      tpu.vector_store %arg6[%c0_294, %c0_295], %819 {strides = array<i32>} : memref<2x32xf32, #tpu.memory_space<vmem>>, vector<2x32xf32>,
      %c0_296 = arith.constant 0 : index
      %c0_297 = arith.constant 0 : index
      %821 = vector.load %arg7[%c0_296, %c0_297] : memref<2x32xf32, #tpu.memory_space<vmem>>, vector<2x32xf32>
      tpu.vector_store %arg7[%c0_296, %c0_297], %816 {strides = array<i32>} : memref<2x32xf32, #tpu.memory_space<vmem>>, vector<2x32xf32>,
      %822 = vector.shape_cast %819 : vector<2x32xf32> to vector<1x2x32xf32>
      %c10_i32_298 = arith.constant 10 : i32
      %823 = arith.subi %c11_i32_118, %c10_i32_298 : i32
      %c1_i32_299 = arith.constant 1 : i32
      %824 = arith.subi %823, %c1_i32_299 : i32
      %825 = arith.index_cast %824 : i32 to index
      %c0_300 = arith.constant 0 : index
      %c0_301 = arith.constant 0 : index
      %826 = vector.load %arg8[%825, %c0_300, %c0_301] : memref<16x2x32xf32, #tpu.memory_space<vmem>>, vector<1x2x32xf32>
      tpu.vector_store %arg8[%825, %c0_300, %c0_301], %822 {strides = array<i32>} : memref<16x2x32xf32, #tpu.memory_space<vmem>>, vector<1x2x32xf32>,
    } else {
    }
    %c12_i32 = arith.constant 12 : i32
    %c0_129 = arith.constant 0 : index
    %c0_130 = arith.constant 0 : index
    %355 = vector.load %arg6[%c0_129, %c0_130] : memref<2x32xf32, #tpu.memory_space<vmem>>, vector<2x32xf32>
    %356 = tpu.concatenate %351, %355 in 1 : vector<2x32xf32>, vector<2x32xf32> -> vector<2x64xf32>
    %cst_131 = arith.constant dense<0.000000e+00> : vector<2x256xf32>
    %357 = tpu.matmul %356, %4, %cst_131 {dimension_numbers = #tpu.dot_dimension_numbers<[1], [0], [0], [1], [0, 0, 1, 1], [], []>} : vector<2x64xf32>, vector<64x256xf32>, vector<2x256xf32> -> vector<2x256xf32>
    %358 = arith.index_cast %c12_i32 : i32 to index
    %c0_132 = arith.constant 0 : index
    %c0_133 = arith.constant 0 : index
    %359 = vector.load %arg0[%358, %c0_132, %c0_133] : memref<26x2x128xf32, #tpu.memory_space<vmem>>, vector<1x2x128xf32>
    %360 = vector.shape_cast %359 : vector<1x2x128xf32> to vector<2x128xf32>
    %361 = vector.extract_strided_slice %357 {offsets = [0, 0], sizes = [2, 128], strides = [1, 1]} : vector<2x256xf32> to vector<2x128xf32>
    %362 = arith.addf %360, %361 : vector<2x128xf32>
    %363 = arith.negf %362 : vector<2x128xf32>
    %364 = math.exp %363 : vector<2x128xf32>
    %cst_134 = arith.constant 1.000000e+00 : f32
    %365 = vector.broadcast %cst_134 : f32 to vector<2x128xf32>
    %366 = arith.addf %365, %364 : vector<2x128xf32>
    %367 = arith.divf %365, %366 : vector<2x128xf32>
    %368 = vector.extract_strided_slice %367 {offsets = [0, 0], sizes = [2, 32], strides = [1, 1]} : vector<2x128xf32> to vector<2x32xf32>
    %cst_135 = arith.constant 2.000000e+00 : f32
    %369 = vector.broadcast %cst_135 : f32 to vector<2x32xf32>
    %370 = arith.mulf %369, %368 : vector<2x32xf32>
    %cst_136 = arith.constant 1.000000e+00 : f32
    %371 = vector.broadcast %cst_136 : f32 to vector<2x32xf32>
    %372 = arith.subf %370, %371 : vector<2x32xf32>
    %373 = vector.extract_strided_slice %367 {offsets = [0, 32], sizes = [2, 32], strides = [1, 1]} : vector<2x128xf32> to vector<2x32xf32>
    %374 = arith.mulf %373, %348 : vector<2x32xf32>
    %375 = vector.extract_strided_slice %367 {offsets = [0, 64], sizes = [2, 32], strides = [1, 1]} : vector<2x128xf32> to vector<2x32xf32>
    %376 = arith.mulf %375, %372 : vector<2x32xf32>
    %377 = arith.addf %374, %376 : vector<2x32xf32>
    %378 = vector.extract_strided_slice %367 {offsets = [0, 96], sizes = [2, 32], strides = [1, 1]} : vector<2x128xf32> to vector<2x32xf32>
    %379 = math.tanh %377 : vector<2x32xf32>
    %380 = arith.mulf %378, %379 : vector<2x32xf32>
    %c11_i32_137 = arith.constant 11 : i32
    %381 = arith.cmpi sge, %c12_i32, %c11_i32_137 : i32
    %382 = arith.extui %381 : i1 to i32
    %c0_i32_138 = arith.constant 0 : i32
    %383 = arith.cmpi ne, %382, %c0_i32_138 : i32
    scf.if %383 {
      %798 = vector.extract_strided_slice %357 {offsets = [0, 128], sizes = [2, 128], strides = [1, 1]} : vector<2x256xf32> to vector<2x128xf32>
      %799 = vector.broadcast %5 : vector<1x128xf32> to vector<2x128xf32>
      %800 = arith.addf %798, %799 : vector<2x128xf32>
      %c0_289 = arith.constant 0 : index
      %c0_290 = arith.constant 0 : index
      %801 = vector.load %arg7[%c0_289, %c0_290] : memref<2x32xf32, #tpu.memory_space<vmem>>, vector<2x32xf32>
      %802 = arith.negf %800 : vector<2x128xf32>
      %803 = math.exp %802 : vector<2x128xf32>
      %cst_291 = arith.constant 1.000000e+00 : f32
      %804 = vector.broadcast %cst_291 : f32 to vector<2x128xf32>
      %805 = arith.addf %804, %803 : vector<2x128xf32>
      %806 = arith.divf %804, %805 : vector<2x128xf32>
      %807 = vector.extract_strided_slice %806 {offsets = [0, 0], sizes = [2, 32], strides = [1, 1]} : vector<2x128xf32> to vector<2x32xf32>
      %cst_292 = arith.constant 2.000000e+00 : f32
      %808 = vector.broadcast %cst_292 : f32 to vector<2x32xf32>
      %809 = arith.mulf %808, %807 : vector<2x32xf32>
      %cst_293 = arith.constant 1.000000e+00 : f32
      %810 = vector.broadcast %cst_293 : f32 to vector<2x32xf32>
      %811 = arith.subf %809, %810 : vector<2x32xf32>
      %812 = vector.extract_strided_slice %806 {offsets = [0, 32], sizes = [2, 32], strides = [1, 1]} : vector<2x128xf32> to vector<2x32xf32>
      %813 = arith.mulf %812, %801 : vector<2x32xf32>
      %814 = vector.extract_strided_slice %806 {offsets = [0, 64], sizes = [2, 32], strides = [1, 1]} : vector<2x128xf32> to vector<2x32xf32>
      %815 = arith.mulf %814, %811 : vector<2x32xf32>
      %816 = arith.addf %813, %815 : vector<2x32xf32>
      %817 = vector.extract_strided_slice %806 {offsets = [0, 96], sizes = [2, 32], strides = [1, 1]} : vector<2x128xf32> to vector<2x32xf32>
      %818 = math.tanh %816 : vector<2x32xf32>
      %819 = arith.mulf %817, %818 : vector<2x32xf32>
      %c0_294 = arith.constant 0 : index
      %c0_295 = arith.constant 0 : index
      %820 = vector.load %arg6[%c0_294, %c0_295] : memref<2x32xf32, #tpu.memory_space<vmem>>, vector<2x32xf32>
      tpu.vector_store %arg6[%c0_294, %c0_295], %819 {strides = array<i32>} : memref<2x32xf32, #tpu.memory_space<vmem>>, vector<2x32xf32>,
      %c0_296 = arith.constant 0 : index
      %c0_297 = arith.constant 0 : index
      %821 = vector.load %arg7[%c0_296, %c0_297] : memref<2x32xf32, #tpu.memory_space<vmem>>, vector<2x32xf32>
      tpu.vector_store %arg7[%c0_296, %c0_297], %816 {strides = array<i32>} : memref<2x32xf32, #tpu.memory_space<vmem>>, vector<2x32xf32>,
      %822 = vector.shape_cast %819 : vector<2x32xf32> to vector<1x2x32xf32>
      %c10_i32_298 = arith.constant 10 : i32
      %823 = arith.subi %c12_i32, %c10_i32_298 : i32
      %c1_i32_299 = arith.constant 1 : i32
      %824 = arith.subi %823, %c1_i32_299 : i32
      %825 = arith.index_cast %824 : i32 to index
      %c0_300 = arith.constant 0 : index
      %c0_301 = arith.constant 0 : index
      %826 = vector.load %arg8[%825, %c0_300, %c0_301] : memref<16x2x32xf32, #tpu.memory_space<vmem>>, vector<1x2x32xf32>
      tpu.vector_store %arg8[%825, %c0_300, %c0_301], %822 {strides = array<i32>} : memref<16x2x32xf32, #tpu.memory_space<vmem>>, vector<1x2x32xf32>,
    } else {
    }
    %c13_i32 = arith.constant 13 : i32
    %c0_139 = arith.constant 0 : index
    %c0_140 = arith.constant 0 : index
    %384 = vector.load %arg6[%c0_139, %c0_140] : memref<2x32xf32, #tpu.memory_space<vmem>>, vector<2x32xf32>
    %385 = tpu.concatenate %380, %384 in 1 : vector<2x32xf32>, vector<2x32xf32> -> vector<2x64xf32>
    %cst_141 = arith.constant dense<0.000000e+00> : vector<2x256xf32>
    %386 = tpu.matmul %385, %4, %cst_141 {dimension_numbers = #tpu.dot_dimension_numbers<[1], [0], [0], [1], [0, 0, 1, 1], [], []>} : vector<2x64xf32>, vector<64x256xf32>, vector<2x256xf32> -> vector<2x256xf32>
    %387 = arith.index_cast %c13_i32 : i32 to index
    %c0_142 = arith.constant 0 : index
    %c0_143 = arith.constant 0 : index
    %388 = vector.load %arg0[%387, %c0_142, %c0_143] : memref<26x2x128xf32, #tpu.memory_space<vmem>>, vector<1x2x128xf32>
    %389 = vector.shape_cast %388 : vector<1x2x128xf32> to vector<2x128xf32>
    %390 = vector.extract_strided_slice %386 {offsets = [0, 0], sizes = [2, 128], strides = [1, 1]} : vector<2x256xf32> to vector<2x128xf32>
    %391 = arith.addf %389, %390 : vector<2x128xf32>
    %392 = arith.negf %391 : vector<2x128xf32>
    %393 = math.exp %392 : vector<2x128xf32>
    %cst_144 = arith.constant 1.000000e+00 : f32
    %394 = vector.broadcast %cst_144 : f32 to vector<2x128xf32>
    %395 = arith.addf %394, %393 : vector<2x128xf32>
    %396 = arith.divf %394, %395 : vector<2x128xf32>
    %397 = vector.extract_strided_slice %396 {offsets = [0, 0], sizes = [2, 32], strides = [1, 1]} : vector<2x128xf32> to vector<2x32xf32>
    %cst_145 = arith.constant 2.000000e+00 : f32
    %398 = vector.broadcast %cst_145 : f32 to vector<2x32xf32>
    %399 = arith.mulf %398, %397 : vector<2x32xf32>
    %cst_146 = arith.constant 1.000000e+00 : f32
    %400 = vector.broadcast %cst_146 : f32 to vector<2x32xf32>
    %401 = arith.subf %399, %400 : vector<2x32xf32>
    %402 = vector.extract_strided_slice %396 {offsets = [0, 32], sizes = [2, 32], strides = [1, 1]} : vector<2x128xf32> to vector<2x32xf32>
    %403 = arith.mulf %402, %377 : vector<2x32xf32>
    %404 = vector.extract_strided_slice %396 {offsets = [0, 64], sizes = [2, 32], strides = [1, 1]} : vector<2x128xf32> to vector<2x32xf32>
    %405 = arith.mulf %404, %401 : vector<2x32xf32>
    %406 = arith.addf %403, %405 : vector<2x32xf32>
    %407 = vector.extract_strided_slice %396 {offsets = [0, 96], sizes = [2, 32], strides = [1, 1]} : vector<2x128xf32> to vector<2x32xf32>
    %408 = math.tanh %406 : vector<2x32xf32>
    %409 = arith.mulf %407, %408 : vector<2x32xf32>
    %c11_i32_147 = arith.constant 11 : i32
    %410 = arith.cmpi sge, %c13_i32, %c11_i32_147 : i32
    %411 = arith.extui %410 : i1 to i32
    %c0_i32_148 = arith.constant 0 : i32
    %412 = arith.cmpi ne, %411, %c0_i32_148 : i32
    scf.if %412 {
      %798 = vector.extract_strided_slice %386 {offsets = [0, 128], sizes = [2, 128], strides = [1, 1]} : vector<2x256xf32> to vector<2x128xf32>
      %799 = vector.broadcast %5 : vector<1x128xf32> to vector<2x128xf32>
      %800 = arith.addf %798, %799 : vector<2x128xf32>
      %c0_289 = arith.constant 0 : index
      %c0_290 = arith.constant 0 : index
      %801 = vector.load %arg7[%c0_289, %c0_290] : memref<2x32xf32, #tpu.memory_space<vmem>>, vector<2x32xf32>
      %802 = arith.negf %800 : vector<2x128xf32>
      %803 = math.exp %802 : vector<2x128xf32>
      %cst_291 = arith.constant 1.000000e+00 : f32
      %804 = vector.broadcast %cst_291 : f32 to vector<2x128xf32>
      %805 = arith.addf %804, %803 : vector<2x128xf32>
      %806 = arith.divf %804, %805 : vector<2x128xf32>
      %807 = vector.extract_strided_slice %806 {offsets = [0, 0], sizes = [2, 32], strides = [1, 1]} : vector<2x128xf32> to vector<2x32xf32>
      %cst_292 = arith.constant 2.000000e+00 : f32
      %808 = vector.broadcast %cst_292 : f32 to vector<2x32xf32>
      %809 = arith.mulf %808, %807 : vector<2x32xf32>
      %cst_293 = arith.constant 1.000000e+00 : f32
      %810 = vector.broadcast %cst_293 : f32 to vector<2x32xf32>
      %811 = arith.subf %809, %810 : vector<2x32xf32>
      %812 = vector.extract_strided_slice %806 {offsets = [0, 32], sizes = [2, 32], strides = [1, 1]} : vector<2x128xf32> to vector<2x32xf32>
      %813 = arith.mulf %812, %801 : vector<2x32xf32>
      %814 = vector.extract_strided_slice %806 {offsets = [0, 64], sizes = [2, 32], strides = [1, 1]} : vector<2x128xf32> to vector<2x32xf32>
      %815 = arith.mulf %814, %811 : vector<2x32xf32>
      %816 = arith.addf %813, %815 : vector<2x32xf32>
      %817 = vector.extract_strided_slice %806 {offsets = [0, 96], sizes = [2, 32], strides = [1, 1]} : vector<2x128xf32> to vector<2x32xf32>
      %818 = math.tanh %816 : vector<2x32xf32>
      %819 = arith.mulf %817, %818 : vector<2x32xf32>
      %c0_294 = arith.constant 0 : index
      %c0_295 = arith.constant 0 : index
      %820 = vector.load %arg6[%c0_294, %c0_295] : memref<2x32xf32, #tpu.memory_space<vmem>>, vector<2x32xf32>
      tpu.vector_store %arg6[%c0_294, %c0_295], %819 {strides = array<i32>} : memref<2x32xf32, #tpu.memory_space<vmem>>, vector<2x32xf32>,
      %c0_296 = arith.constant 0 : index
      %c0_297 = arith.constant 0 : index
      %821 = vector.load %arg7[%c0_296, %c0_297] : memref<2x32xf32, #tpu.memory_space<vmem>>, vector<2x32xf32>
      tpu.vector_store %arg7[%c0_296, %c0_297], %816 {strides = array<i32>} : memref<2x32xf32, #tpu.memory_space<vmem>>, vector<2x32xf32>,
      %822 = vector.shape_cast %819 : vector<2x32xf32> to vector<1x2x32xf32>
      %c10_i32_298 = arith.constant 10 : i32
      %823 = arith.subi %c13_i32, %c10_i32_298 : i32
      %c1_i32_299 = arith.constant 1 : i32
      %824 = arith.subi %823, %c1_i32_299 : i32
      %825 = arith.index_cast %824 : i32 to index
      %c0_300 = arith.constant 0 : index
      %c0_301 = arith.constant 0 : index
      %826 = vector.load %arg8[%825, %c0_300, %c0_301] : memref<16x2x32xf32, #tpu.memory_space<vmem>>, vector<1x2x32xf32>
      tpu.vector_store %arg8[%825, %c0_300, %c0_301], %822 {strides = array<i32>} : memref<16x2x32xf32, #tpu.memory_space<vmem>>, vector<1x2x32xf32>,
    } else {
    }
    %c14_i32 = arith.constant 14 : i32
    %c0_149 = arith.constant 0 : index
    %c0_150 = arith.constant 0 : index
    %413 = vector.load %arg6[%c0_149, %c0_150] : memref<2x32xf32, #tpu.memory_space<vmem>>, vector<2x32xf32>
    %414 = tpu.concatenate %409, %413 in 1 : vector<2x32xf32>, vector<2x32xf32> -> vector<2x64xf32>
    %cst_151 = arith.constant dense<0.000000e+00> : vector<2x256xf32>
    %415 = tpu.matmul %414, %4, %cst_151 {dimension_numbers = #tpu.dot_dimension_numbers<[1], [0], [0], [1], [0, 0, 1, 1], [], []>} : vector<2x64xf32>, vector<64x256xf32>, vector<2x256xf32> -> vector<2x256xf32>
    %416 = arith.index_cast %c14_i32 : i32 to index
    %c0_152 = arith.constant 0 : index
    %c0_153 = arith.constant 0 : index
    %417 = vector.load %arg0[%416, %c0_152, %c0_153] : memref<26x2x128xf32, #tpu.memory_space<vmem>>, vector<1x2x128xf32>
    %418 = vector.shape_cast %417 : vector<1x2x128xf32> to vector<2x128xf32>
    %419 = vector.extract_strided_slice %415 {offsets = [0, 0], sizes = [2, 128], strides = [1, 1]} : vector<2x256xf32> to vector<2x128xf32>
    %420 = arith.addf %418, %419 : vector<2x128xf32>
    %421 = arith.negf %420 : vector<2x128xf32>
    %422 = math.exp %421 : vector<2x128xf32>
    %cst_154 = arith.constant 1.000000e+00 : f32
    %423 = vector.broadcast %cst_154 : f32 to vector<2x128xf32>
    %424 = arith.addf %423, %422 : vector<2x128xf32>
    %425 = arith.divf %423, %424 : vector<2x128xf32>
    %426 = vector.extract_strided_slice %425 {offsets = [0, 0], sizes = [2, 32], strides = [1, 1]} : vector<2x128xf32> to vector<2x32xf32>
    %cst_155 = arith.constant 2.000000e+00 : f32
    %427 = vector.broadcast %cst_155 : f32 to vector<2x32xf32>
    %428 = arith.mulf %427, %426 : vector<2x32xf32>
    %cst_156 = arith.constant 1.000000e+00 : f32
    %429 = vector.broadcast %cst_156 : f32 to vector<2x32xf32>
    %430 = arith.subf %428, %429 : vector<2x32xf32>
    %431 = vector.extract_strided_slice %425 {offsets = [0, 32], sizes = [2, 32], strides = [1, 1]} : vector<2x128xf32> to vector<2x32xf32>
    %432 = arith.mulf %431, %406 : vector<2x32xf32>
    %433 = vector.extract_strided_slice %425 {offsets = [0, 64], sizes = [2, 32], strides = [1, 1]} : vector<2x128xf32> to vector<2x32xf32>
    %434 = arith.mulf %433, %430 : vector<2x32xf32>
    %435 = arith.addf %432, %434 : vector<2x32xf32>
    %436 = vector.extract_strided_slice %425 {offsets = [0, 96], sizes = [2, 32], strides = [1, 1]} : vector<2x128xf32> to vector<2x32xf32>
    %437 = math.tanh %435 : vector<2x32xf32>
    %438 = arith.mulf %436, %437 : vector<2x32xf32>
    %c11_i32_157 = arith.constant 11 : i32
    %439 = arith.cmpi sge, %c14_i32, %c11_i32_157 : i32
    %440 = arith.extui %439 : i1 to i32
    %c0_i32_158 = arith.constant 0 : i32
    %441 = arith.cmpi ne, %440, %c0_i32_158 : i32
    scf.if %441 {
      %798 = vector.extract_strided_slice %415 {offsets = [0, 128], sizes = [2, 128], strides = [1, 1]} : vector<2x256xf32> to vector<2x128xf32>
      %799 = vector.broadcast %5 : vector<1x128xf32> to vector<2x128xf32>
      %800 = arith.addf %798, %799 : vector<2x128xf32>
      %c0_289 = arith.constant 0 : index
      %c0_290 = arith.constant 0 : index
      %801 = vector.load %arg7[%c0_289, %c0_290] : memref<2x32xf32, #tpu.memory_space<vmem>>, vector<2x32xf32>
      %802 = arith.negf %800 : vector<2x128xf32>
      %803 = math.exp %802 : vector<2x128xf32>
      %cst_291 = arith.constant 1.000000e+00 : f32
      %804 = vector.broadcast %cst_291 : f32 to vector<2x128xf32>
      %805 = arith.addf %804, %803 : vector<2x128xf32>
      %806 = arith.divf %804, %805 : vector<2x128xf32>
      %807 = vector.extract_strided_slice %806 {offsets = [0, 0], sizes = [2, 32], strides = [1, 1]} : vector<2x128xf32> to vector<2x32xf32>
      %cst_292 = arith.constant 2.000000e+00 : f32
      %808 = vector.broadcast %cst_292 : f32 to vector<2x32xf32>
      %809 = arith.mulf %808, %807 : vector<2x32xf32>
      %cst_293 = arith.constant 1.000000e+00 : f32
      %810 = vector.broadcast %cst_293 : f32 to vector<2x32xf32>
      %811 = arith.subf %809, %810 : vector<2x32xf32>
      %812 = vector.extract_strided_slice %806 {offsets = [0, 32], sizes = [2, 32], strides = [1, 1]} : vector<2x128xf32> to vector<2x32xf32>
      %813 = arith.mulf %812, %801 : vector<2x32xf32>
      %814 = vector.extract_strided_slice %806 {offsets = [0, 64], sizes = [2, 32], strides = [1, 1]} : vector<2x128xf32> to vector<2x32xf32>
      %815 = arith.mulf %814, %811 : vector<2x32xf32>
      %816 = arith.addf %813, %815 : vector<2x32xf32>
      %817 = vector.extract_strided_slice %806 {offsets = [0, 96], sizes = [2, 32], strides = [1, 1]} : vector<2x128xf32> to vector<2x32xf32>
      %818 = math.tanh %816 : vector<2x32xf32>
      %819 = arith.mulf %817, %818 : vector<2x32xf32>
      %c0_294 = arith.constant 0 : index
      %c0_295 = arith.constant 0 : index
      %820 = vector.load %arg6[%c0_294, %c0_295] : memref<2x32xf32, #tpu.memory_space<vmem>>, vector<2x32xf32>
      tpu.vector_store %arg6[%c0_294, %c0_295], %819 {strides = array<i32>} : memref<2x32xf32, #tpu.memory_space<vmem>>, vector<2x32xf32>,
      %c0_296 = arith.constant 0 : index
      %c0_297 = arith.constant 0 : index
      %821 = vector.load %arg7[%c0_296, %c0_297] : memref<2x32xf32, #tpu.memory_space<vmem>>, vector<2x32xf32>
      tpu.vector_store %arg7[%c0_296, %c0_297], %816 {strides = array<i32>} : memref<2x32xf32, #tpu.memory_space<vmem>>, vector<2x32xf32>,
      %822 = vector.shape_cast %819 : vector<2x32xf32> to vector<1x2x32xf32>
      %c10_i32_298 = arith.constant 10 : i32
      %823 = arith.subi %c14_i32, %c10_i32_298 : i32
      %c1_i32_299 = arith.constant 1 : i32
      %824 = arith.subi %823, %c1_i32_299 : i32
      %825 = arith.index_cast %824 : i32 to index
      %c0_300 = arith.constant 0 : index
      %c0_301 = arith.constant 0 : index
      %826 = vector.load %arg8[%825, %c0_300, %c0_301] : memref<16x2x32xf32, #tpu.memory_space<vmem>>, vector<1x2x32xf32>
      tpu.vector_store %arg8[%825, %c0_300, %c0_301], %822 {strides = array<i32>} : memref<16x2x32xf32, #tpu.memory_space<vmem>>, vector<1x2x32xf32>,
    } else {
    }
    %c15_i32 = arith.constant 15 : i32
    %c0_159 = arith.constant 0 : index
    %c0_160 = arith.constant 0 : index
    %442 = vector.load %arg6[%c0_159, %c0_160] : memref<2x32xf32, #tpu.memory_space<vmem>>, vector<2x32xf32>
    %443 = tpu.concatenate %438, %442 in 1 : vector<2x32xf32>, vector<2x32xf32> -> vector<2x64xf32>
    %cst_161 = arith.constant dense<0.000000e+00> : vector<2x256xf32>
    %444 = tpu.matmul %443, %4, %cst_161 {dimension_numbers = #tpu.dot_dimension_numbers<[1], [0], [0], [1], [0, 0, 1, 1], [], []>} : vector<2x64xf32>, vector<64x256xf32>, vector<2x256xf32> -> vector<2x256xf32>
    %445 = arith.index_cast %c15_i32 : i32 to index
    %c0_162 = arith.constant 0 : index
    %c0_163 = arith.constant 0 : index
    %446 = vector.load %arg0[%445, %c0_162, %c0_163] : memref<26x2x128xf32, #tpu.memory_space<vmem>>, vector<1x2x128xf32>
    %447 = vector.shape_cast %446 : vector<1x2x128xf32> to vector<2x128xf32>
    %448 = vector.extract_strided_slice %444 {offsets = [0, 0], sizes = [2, 128], strides = [1, 1]} : vector<2x256xf32> to vector<2x128xf32>
    %449 = arith.addf %447, %448 : vector<2x128xf32>
    %450 = arith.negf %449 : vector<2x128xf32>
    %451 = math.exp %450 : vector<2x128xf32>
    %cst_164 = arith.constant 1.000000e+00 : f32
    %452 = vector.broadcast %cst_164 : f32 to vector<2x128xf32>
    %453 = arith.addf %452, %451 : vector<2x128xf32>
    %454 = arith.divf %452, %453 : vector<2x128xf32>
    %455 = vector.extract_strided_slice %454 {offsets = [0, 0], sizes = [2, 32], strides = [1, 1]} : vector<2x128xf32> to vector<2x32xf32>
    %cst_165 = arith.constant 2.000000e+00 : f32
    %456 = vector.broadcast %cst_165 : f32 to vector<2x32xf32>
    %457 = arith.mulf %456, %455 : vector<2x32xf32>
    %cst_166 = arith.constant 1.000000e+00 : f32
    %458 = vector.broadcast %cst_166 : f32 to vector<2x32xf32>
    %459 = arith.subf %457, %458 : vector<2x32xf32>
    %460 = vector.extract_strided_slice %454 {offsets = [0, 32], sizes = [2, 32], strides = [1, 1]} : vector<2x128xf32> to vector<2x32xf32>
    %461 = arith.mulf %460, %435 : vector<2x32xf32>
    %462 = vector.extract_strided_slice %454 {offsets = [0, 64], sizes = [2, 32], strides = [1, 1]} : vector<2x128xf32> to vector<2x32xf32>
    %463 = arith.mulf %462, %459 : vector<2x32xf32>
    %464 = arith.addf %461, %463 : vector<2x32xf32>
    %465 = vector.extract_strided_slice %454 {offsets = [0, 96], sizes = [2, 32], strides = [1, 1]} : vector<2x128xf32> to vector<2x32xf32>
    %466 = math.tanh %464 : vector<2x32xf32>
    %467 = arith.mulf %465, %466 : vector<2x32xf32>
    %c11_i32_167 = arith.constant 11 : i32
    %468 = arith.cmpi sge, %c15_i32, %c11_i32_167 : i32
    %469 = arith.extui %468 : i1 to i32
    %c0_i32_168 = arith.constant 0 : i32
    %470 = arith.cmpi ne, %469, %c0_i32_168 : i32
    scf.if %470 {
      %798 = vector.extract_strided_slice %444 {offsets = [0, 128], sizes = [2, 128], strides = [1, 1]} : vector<2x256xf32> to vector<2x128xf32>
      %799 = vector.broadcast %5 : vector<1x128xf32> to vector<2x128xf32>
      %800 = arith.addf %798, %799 : vector<2x128xf32>
      %c0_289 = arith.constant 0 : index
      %c0_290 = arith.constant 0 : index
      %801 = vector.load %arg7[%c0_289, %c0_290] : memref<2x32xf32, #tpu.memory_space<vmem>>, vector<2x32xf32>
      %802 = arith.negf %800 : vector<2x128xf32>
      %803 = math.exp %802 : vector<2x128xf32>
      %cst_291 = arith.constant 1.000000e+00 : f32
      %804 = vector.broadcast %cst_291 : f32 to vector<2x128xf32>
      %805 = arith.addf %804, %803 : vector<2x128xf32>
      %806 = arith.divf %804, %805 : vector<2x128xf32>
      %807 = vector.extract_strided_slice %806 {offsets = [0, 0], sizes = [2, 32], strides = [1, 1]} : vector<2x128xf32> to vector<2x32xf32>
      %cst_292 = arith.constant 2.000000e+00 : f32
      %808 = vector.broadcast %cst_292 : f32 to vector<2x32xf32>
      %809 = arith.mulf %808, %807 : vector<2x32xf32>
      %cst_293 = arith.constant 1.000000e+00 : f32
      %810 = vector.broadcast %cst_293 : f32 to vector<2x32xf32>
      %811 = arith.subf %809, %810 : vector<2x32xf32>
      %812 = vector.extract_strided_slice %806 {offsets = [0, 32], sizes = [2, 32], strides = [1, 1]} : vector<2x128xf32> to vector<2x32xf32>
      %813 = arith.mulf %812, %801 : vector<2x32xf32>
      %814 = vector.extract_strided_slice %806 {offsets = [0, 64], sizes = [2, 32], strides = [1, 1]} : vector<2x128xf32> to vector<2x32xf32>
      %815 = arith.mulf %814, %811 : vector<2x32xf32>
      %816 = arith.addf %813, %815 : vector<2x32xf32>
      %817 = vector.extract_strided_slice %806 {offsets = [0, 96], sizes = [2, 32], strides = [1, 1]} : vector<2x128xf32> to vector<2x32xf32>
      %818 = math.tanh %816 : vector<2x32xf32>
      %819 = arith.mulf %817, %818 : vector<2x32xf32>
      %c0_294 = arith.constant 0 : index
      %c0_295 = arith.constant 0 : index
      %820 = vector.load %arg6[%c0_294, %c0_295] : memref<2x32xf32, #tpu.memory_space<vmem>>, vector<2x32xf32>
      tpu.vector_store %arg6[%c0_294, %c0_295], %819 {strides = array<i32>} : memref<2x32xf32, #tpu.memory_space<vmem>>, vector<2x32xf32>,
      %c0_296 = arith.constant 0 : index
      %c0_297 = arith.constant 0 : index
      %821 = vector.load %arg7[%c0_296, %c0_297] : memref<2x32xf32, #tpu.memory_space<vmem>>, vector<2x32xf32>
      tpu.vector_store %arg7[%c0_296, %c0_297], %816 {strides = array<i32>} : memref<2x32xf32, #tpu.memory_space<vmem>>, vector<2x32xf32>,
      %822 = vector.shape_cast %819 : vector<2x32xf32> to vector<1x2x32xf32>
      %c10_i32_298 = arith.constant 10 : i32
      %823 = arith.subi %c15_i32, %c10_i32_298 : i32
      %c1_i32_299 = arith.constant 1 : i32
      %824 = arith.subi %823, %c1_i32_299 : i32
      %825 = arith.index_cast %824 : i32 to index
      %c0_300 = arith.constant 0 : index
      %c0_301 = arith.constant 0 : index
      %826 = vector.load %arg8[%825, %c0_300, %c0_301] : memref<16x2x32xf32, #tpu.memory_space<vmem>>, vector<1x2x32xf32>
      tpu.vector_store %arg8[%825, %c0_300, %c0_301], %822 {strides = array<i32>} : memref<16x2x32xf32, #tpu.memory_space<vmem>>, vector<1x2x32xf32>,
    } else {
    }
    %c16_i32 = arith.constant 16 : i32
    %c0_169 = arith.constant 0 : index
    %c0_170 = arith.constant 0 : index
    %471 = vector.load %arg6[%c0_169, %c0_170] : memref<2x32xf32, #tpu.memory_space<vmem>>, vector<2x32xf32>
    %472 = tpu.concatenate %467, %471 in 1 : vector<2x32xf32>, vector<2x32xf32> -> vector<2x64xf32>
    %cst_171 = arith.constant dense<0.000000e+00> : vector<2x256xf32>
    %473 = tpu.matmul %472, %4, %cst_171 {dimension_numbers = #tpu.dot_dimension_numbers<[1], [0], [0], [1], [0, 0, 1, 1], [], []>} : vector<2x64xf32>, vector<64x256xf32>, vector<2x256xf32> -> vector<2x256xf32>
    %474 = arith.index_cast %c16_i32 : i32 to index
    %c0_172 = arith.constant 0 : index
    %c0_173 = arith.constant 0 : index
    %475 = vector.load %arg0[%474, %c0_172, %c0_173] : memref<26x2x128xf32, #tpu.memory_space<vmem>>, vector<1x2x128xf32>
    %476 = vector.shape_cast %475 : vector<1x2x128xf32> to vector<2x128xf32>
    %477 = vector.extract_strided_slice %473 {offsets = [0, 0], sizes = [2, 128], strides = [1, 1]} : vector<2x256xf32> to vector<2x128xf32>
    %478 = arith.addf %476, %477 : vector<2x128xf32>
    %479 = arith.negf %478 : vector<2x128xf32>
    %480 = math.exp %479 : vector<2x128xf32>
    %cst_174 = arith.constant 1.000000e+00 : f32
    %481 = vector.broadcast %cst_174 : f32 to vector<2x128xf32>
    %482 = arith.addf %481, %480 : vector<2x128xf32>
    %483 = arith.divf %481, %482 : vector<2x128xf32>
    %484 = vector.extract_strided_slice %483 {offsets = [0, 0], sizes = [2, 32], strides = [1, 1]} : vector<2x128xf32> to vector<2x32xf32>
    %cst_175 = arith.constant 2.000000e+00 : f32
    %485 = vector.broadcast %cst_175 : f32 to vector<2x32xf32>
    %486 = arith.mulf %485, %484 : vector<2x32xf32>
    %cst_176 = arith.constant 1.000000e+00 : f32
    %487 = vector.broadcast %cst_176 : f32 to vector<2x32xf32>
    %488 = arith.subf %486, %487 : vector<2x32xf32>
    %489 = vector.extract_strided_slice %483 {offsets = [0, 32], sizes = [2, 32], strides = [1, 1]} : vector<2x128xf32> to vector<2x32xf32>
    %490 = arith.mulf %489, %464 : vector<2x32xf32>
    %491 = vector.extract_strided_slice %483 {offsets = [0, 64], sizes = [2, 32], strides = [1, 1]} : vector<2x128xf32> to vector<2x32xf32>
    %492 = arith.mulf %491, %488 : vector<2x32xf32>
    %493 = arith.addf %490, %492 : vector<2x32xf32>
    %494 = vector.extract_strided_slice %483 {offsets = [0, 96], sizes = [2, 32], strides = [1, 1]} : vector<2x128xf32> to vector<2x32xf32>
    %495 = math.tanh %493 : vector<2x32xf32>
    %496 = arith.mulf %494, %495 : vector<2x32xf32>
    %c11_i32_177 = arith.constant 11 : i32
    %497 = arith.cmpi sge, %c16_i32, %c11_i32_177 : i32
    %498 = arith.extui %497 : i1 to i32
    %c0_i32_178 = arith.constant 0 : i32
    %499 = arith.cmpi ne, %498, %c0_i32_178 : i32
    scf.if %499 {
      %798 = vector.extract_strided_slice %473 {offsets = [0, 128], sizes = [2, 128], strides = [1, 1]} : vector<2x256xf32> to vector<2x128xf32>
      %799 = vector.broadcast %5 : vector<1x128xf32> to vector<2x128xf32>
      %800 = arith.addf %798, %799 : vector<2x128xf32>
      %c0_289 = arith.constant 0 : index
      %c0_290 = arith.constant 0 : index
      %801 = vector.load %arg7[%c0_289, %c0_290] : memref<2x32xf32, #tpu.memory_space<vmem>>, vector<2x32xf32>
      %802 = arith.negf %800 : vector<2x128xf32>
      %803 = math.exp %802 : vector<2x128xf32>
      %cst_291 = arith.constant 1.000000e+00 : f32
      %804 = vector.broadcast %cst_291 : f32 to vector<2x128xf32>
      %805 = arith.addf %804, %803 : vector<2x128xf32>
      %806 = arith.divf %804, %805 : vector<2x128xf32>
      %807 = vector.extract_strided_slice %806 {offsets = [0, 0], sizes = [2, 32], strides = [1, 1]} : vector<2x128xf32> to vector<2x32xf32>
      %cst_292 = arith.constant 2.000000e+00 : f32
      %808 = vector.broadcast %cst_292 : f32 to vector<2x32xf32>
      %809 = arith.mulf %808, %807 : vector<2x32xf32>
      %cst_293 = arith.constant 1.000000e+00 : f32
      %810 = vector.broadcast %cst_293 : f32 to vector<2x32xf32>
      %811 = arith.subf %809, %810 : vector<2x32xf32>
      %812 = vector.extract_strided_slice %806 {offsets = [0, 32], sizes = [2, 32], strides = [1, 1]} : vector<2x128xf32> to vector<2x32xf32>
      %813 = arith.mulf %812, %801 : vector<2x32xf32>
      %814 = vector.extract_strided_slice %806 {offsets = [0, 64], sizes = [2, 32], strides = [1, 1]} : vector<2x128xf32> to vector<2x32xf32>
      %815 = arith.mulf %814, %811 : vector<2x32xf32>
      %816 = arith.addf %813, %815 : vector<2x32xf32>
      %817 = vector.extract_strided_slice %806 {offsets = [0, 96], sizes = [2, 32], strides = [1, 1]} : vector<2x128xf32> to vector<2x32xf32>
      %818 = math.tanh %816 : vector<2x32xf32>
      %819 = arith.mulf %817, %818 : vector<2x32xf32>
      %c0_294 = arith.constant 0 : index
      %c0_295 = arith.constant 0 : index
      %820 = vector.load %arg6[%c0_294, %c0_295] : memref<2x32xf32, #tpu.memory_space<vmem>>, vector<2x32xf32>
      tpu.vector_store %arg6[%c0_294, %c0_295], %819 {strides = array<i32>} : memref<2x32xf32, #tpu.memory_space<vmem>>, vector<2x32xf32>,
      %c0_296 = arith.constant 0 : index
      %c0_297 = arith.constant 0 : index
      %821 = vector.load %arg7[%c0_296, %c0_297] : memref<2x32xf32, #tpu.memory_space<vmem>>, vector<2x32xf32>
      tpu.vector_store %arg7[%c0_296, %c0_297], %816 {strides = array<i32>} : memref<2x32xf32, #tpu.memory_space<vmem>>, vector<2x32xf32>,
      %822 = vector.shape_cast %819 : vector<2x32xf32> to vector<1x2x32xf32>
      %c10_i32_298 = arith.constant 10 : i32
      %823 = arith.subi %c16_i32, %c10_i32_298 : i32
      %c1_i32_299 = arith.constant 1 : i32
      %824 = arith.subi %823, %c1_i32_299 : i32
      %825 = arith.index_cast %824 : i32 to index
      %c0_300 = arith.constant 0 : index
      %c0_301 = arith.constant 0 : index
      %826 = vector.load %arg8[%825, %c0_300, %c0_301] : memref<16x2x32xf32, #tpu.memory_space<vmem>>, vector<1x2x32xf32>
      tpu.vector_store %arg8[%825, %c0_300, %c0_301], %822 {strides = array<i32>} : memref<16x2x32xf32, #tpu.memory_space<vmem>>, vector<1x2x32xf32>,
    } else {
    }
    %c17_i32 = arith.constant 17 : i32
    %c0_179 = arith.constant 0 : index
    %c0_180 = arith.constant 0 : index
    %500 = vector.load %arg6[%c0_179, %c0_180] : memref<2x32xf32, #tpu.memory_space<vmem>>, vector<2x32xf32>
    %501 = tpu.concatenate %496, %500 in 1 : vector<2x32xf32>, vector<2x32xf32> -> vector<2x64xf32>
    %cst_181 = arith.constant dense<0.000000e+00> : vector<2x256xf32>
    %502 = tpu.matmul %501, %4, %cst_181 {dimension_numbers = #tpu.dot_dimension_numbers<[1], [0], [0], [1], [0, 0, 1, 1], [], []>} : vector<2x64xf32>, vector<64x256xf32>, vector<2x256xf32> -> vector<2x256xf32>
    %503 = arith.index_cast %c17_i32 : i32 to index
    %c0_182 = arith.constant 0 : index
    %c0_183 = arith.constant 0 : index
    %504 = vector.load %arg0[%503, %c0_182, %c0_183] : memref<26x2x128xf32, #tpu.memory_space<vmem>>, vector<1x2x128xf32>
    %505 = vector.shape_cast %504 : vector<1x2x128xf32> to vector<2x128xf32>
    %506 = vector.extract_strided_slice %502 {offsets = [0, 0], sizes = [2, 128], strides = [1, 1]} : vector<2x256xf32> to vector<2x128xf32>
    %507 = arith.addf %505, %506 : vector<2x128xf32>
    %508 = arith.negf %507 : vector<2x128xf32>
    %509 = math.exp %508 : vector<2x128xf32>
    %cst_184 = arith.constant 1.000000e+00 : f32
    %510 = vector.broadcast %cst_184 : f32 to vector<2x128xf32>
    %511 = arith.addf %510, %509 : vector<2x128xf32>
    %512 = arith.divf %510, %511 : vector<2x128xf32>
    %513 = vector.extract_strided_slice %512 {offsets = [0, 0], sizes = [2, 32], strides = [1, 1]} : vector<2x128xf32> to vector<2x32xf32>
    %cst_185 = arith.constant 2.000000e+00 : f32
    %514 = vector.broadcast %cst_185 : f32 to vector<2x32xf32>
    %515 = arith.mulf %514, %513 : vector<2x32xf32>
    %cst_186 = arith.constant 1.000000e+00 : f32
    %516 = vector.broadcast %cst_186 : f32 to vector<2x32xf32>
    %517 = arith.subf %515, %516 : vector<2x32xf32>
    %518 = vector.extract_strided_slice %512 {offsets = [0, 32], sizes = [2, 32], strides = [1, 1]} : vector<2x128xf32> to vector<2x32xf32>
    %519 = arith.mulf %518, %493 : vector<2x32xf32>
    %520 = vector.extract_strided_slice %512 {offsets = [0, 64], sizes = [2, 32], strides = [1, 1]} : vector<2x128xf32> to vector<2x32xf32>
    %521 = arith.mulf %520, %517 : vector<2x32xf32>
    %522 = arith.addf %519, %521 : vector<2x32xf32>
    %523 = vector.extract_strided_slice %512 {offsets = [0, 96], sizes = [2, 32], strides = [1, 1]} : vector<2x128xf32> to vector<2x32xf32>
    %524 = math.tanh %522 : vector<2x32xf32>
    %525 = arith.mulf %523, %524 : vector<2x32xf32>
    %c11_i32_187 = arith.constant 11 : i32
    %526 = arith.cmpi sge, %c17_i32, %c11_i32_187 : i32
    %527 = arith.extui %526 : i1 to i32
    %c0_i32_188 = arith.constant 0 : i32
    %528 = arith.cmpi ne, %527, %c0_i32_188 : i32
    scf.if %528 {
      %798 = vector.extract_strided_slice %502 {offsets = [0, 128], sizes = [2, 128], strides = [1, 1]} : vector<2x256xf32> to vector<2x128xf32>
      %799 = vector.broadcast %5 : vector<1x128xf32> to vector<2x128xf32>
      %800 = arith.addf %798, %799 : vector<2x128xf32>
      %c0_289 = arith.constant 0 : index
      %c0_290 = arith.constant 0 : index
      %801 = vector.load %arg7[%c0_289, %c0_290] : memref<2x32xf32, #tpu.memory_space<vmem>>, vector<2x32xf32>
      %802 = arith.negf %800 : vector<2x128xf32>
      %803 = math.exp %802 : vector<2x128xf32>
      %cst_291 = arith.constant 1.000000e+00 : f32
      %804 = vector.broadcast %cst_291 : f32 to vector<2x128xf32>
      %805 = arith.addf %804, %803 : vector<2x128xf32>
      %806 = arith.divf %804, %805 : vector<2x128xf32>
      %807 = vector.extract_strided_slice %806 {offsets = [0, 0], sizes = [2, 32], strides = [1, 1]} : vector<2x128xf32> to vector<2x32xf32>
      %cst_292 = arith.constant 2.000000e+00 : f32
      %808 = vector.broadcast %cst_292 : f32 to vector<2x32xf32>
      %809 = arith.mulf %808, %807 : vector<2x32xf32>
      %cst_293 = arith.constant 1.000000e+00 : f32
      %810 = vector.broadcast %cst_293 : f32 to vector<2x32xf32>
      %811 = arith.subf %809, %810 : vector<2x32xf32>
      %812 = vector.extract_strided_slice %806 {offsets = [0, 32], sizes = [2, 32], strides = [1, 1]} : vector<2x128xf32> to vector<2x32xf32>
      %813 = arith.mulf %812, %801 : vector<2x32xf32>
      %814 = vector.extract_strided_slice %806 {offsets = [0, 64], sizes = [2, 32], strides = [1, 1]} : vector<2x128xf32> to vector<2x32xf32>
      %815 = arith.mulf %814, %811 : vector<2x32xf32>
      %816 = arith.addf %813, %815 : vector<2x32xf32>
      %817 = vector.extract_strided_slice %806 {offsets = [0, 96], sizes = [2, 32], strides = [1, 1]} : vector<2x128xf32> to vector<2x32xf32>
      %818 = math.tanh %816 : vector<2x32xf32>
      %819 = arith.mulf %817, %818 : vector<2x32xf32>
      %c0_294 = arith.constant 0 : index
      %c0_295 = arith.constant 0 : index
      %820 = vector.load %arg6[%c0_294, %c0_295] : memref<2x32xf32, #tpu.memory_space<vmem>>, vector<2x32xf32>
      tpu.vector_store %arg6[%c0_294, %c0_295], %819 {strides = array<i32>} : memref<2x32xf32, #tpu.memory_space<vmem>>, vector<2x32xf32>,
      %c0_296 = arith.constant 0 : index
      %c0_297 = arith.constant 0 : index
      %821 = vector.load %arg7[%c0_296, %c0_297] : memref<2x32xf32, #tpu.memory_space<vmem>>, vector<2x32xf32>
      tpu.vector_store %arg7[%c0_296, %c0_297], %816 {strides = array<i32>} : memref<2x32xf32, #tpu.memory_space<vmem>>, vector<2x32xf32>,
      %822 = vector.shape_cast %819 : vector<2x32xf32> to vector<1x2x32xf32>
      %c10_i32_298 = arith.constant 10 : i32
      %823 = arith.subi %c17_i32, %c10_i32_298 : i32
      %c1_i32_299 = arith.constant 1 : i32
      %824 = arith.subi %823, %c1_i32_299 : i32
      %825 = arith.index_cast %824 : i32 to index
      %c0_300 = arith.constant 0 : index
      %c0_301 = arith.constant 0 : index
      %826 = vector.load %arg8[%825, %c0_300, %c0_301] : memref<16x2x32xf32, #tpu.memory_space<vmem>>, vector<1x2x32xf32>
      tpu.vector_store %arg8[%825, %c0_300, %c0_301], %822 {strides = array<i32>} : memref<16x2x32xf32, #tpu.memory_space<vmem>>, vector<1x2x32xf32>,
    } else {
    }
    %c18_i32 = arith.constant 18 : i32
    %c0_189 = arith.constant 0 : index
    %c0_190 = arith.constant 0 : index
    %529 = vector.load %arg6[%c0_189, %c0_190] : memref<2x32xf32, #tpu.memory_space<vmem>>, vector<2x32xf32>
    %530 = tpu.concatenate %525, %529 in 1 : vector<2x32xf32>, vector<2x32xf32> -> vector<2x64xf32>
    %cst_191 = arith.constant dense<0.000000e+00> : vector<2x256xf32>
    %531 = tpu.matmul %530, %4, %cst_191 {dimension_numbers = #tpu.dot_dimension_numbers<[1], [0], [0], [1], [0, 0, 1, 1], [], []>} : vector<2x64xf32>, vector<64x256xf32>, vector<2x256xf32> -> vector<2x256xf32>
    %532 = arith.index_cast %c18_i32 : i32 to index
    %c0_192 = arith.constant 0 : index
    %c0_193 = arith.constant 0 : index
    %533 = vector.load %arg0[%532, %c0_192, %c0_193] : memref<26x2x128xf32, #tpu.memory_space<vmem>>, vector<1x2x128xf32>
    %534 = vector.shape_cast %533 : vector<1x2x128xf32> to vector<2x128xf32>
    %535 = vector.extract_strided_slice %531 {offsets = [0, 0], sizes = [2, 128], strides = [1, 1]} : vector<2x256xf32> to vector<2x128xf32>
    %536 = arith.addf %534, %535 : vector<2x128xf32>
    %537 = arith.negf %536 : vector<2x128xf32>
    %538 = math.exp %537 : vector<2x128xf32>
    %cst_194 = arith.constant 1.000000e+00 : f32
    %539 = vector.broadcast %cst_194 : f32 to vector<2x128xf32>
    %540 = arith.addf %539, %538 : vector<2x128xf32>
    %541 = arith.divf %539, %540 : vector<2x128xf32>
    %542 = vector.extract_strided_slice %541 {offsets = [0, 0], sizes = [2, 32], strides = [1, 1]} : vector<2x128xf32> to vector<2x32xf32>
    %cst_195 = arith.constant 2.000000e+00 : f32
    %543 = vector.broadcast %cst_195 : f32 to vector<2x32xf32>
    %544 = arith.mulf %543, %542 : vector<2x32xf32>
    %cst_196 = arith.constant 1.000000e+00 : f32
    %545 = vector.broadcast %cst_196 : f32 to vector<2x32xf32>
    %546 = arith.subf %544, %545 : vector<2x32xf32>
    %547 = vector.extract_strided_slice %541 {offsets = [0, 32], sizes = [2, 32], strides = [1, 1]} : vector<2x128xf32> to vector<2x32xf32>
    %548 = arith.mulf %547, %522 : vector<2x32xf32>
    %549 = vector.extract_strided_slice %541 {offsets = [0, 64], sizes = [2, 32], strides = [1, 1]} : vector<2x128xf32> to vector<2x32xf32>
    %550 = arith.mulf %549, %546 : vector<2x32xf32>
    %551 = arith.addf %548, %550 : vector<2x32xf32>
    %552 = vector.extract_strided_slice %541 {offsets = [0, 96], sizes = [2, 32], strides = [1, 1]} : vector<2x128xf32> to vector<2x32xf32>
    %553 = math.tanh %551 : vector<2x32xf32>
    %554 = arith.mulf %552, %553 : vector<2x32xf32>
    %c11_i32_197 = arith.constant 11 : i32
    %555 = arith.cmpi sge, %c18_i32, %c11_i32_197 : i32
    %556 = arith.extui %555 : i1 to i32
    %c0_i32_198 = arith.constant 0 : i32
    %557 = arith.cmpi ne, %556, %c0_i32_198 : i32
    scf.if %557 {
      %798 = vector.extract_strided_slice %531 {offsets = [0, 128], sizes = [2, 128], strides = [1, 1]} : vector<2x256xf32> to vector<2x128xf32>
      %799 = vector.broadcast %5 : vector<1x128xf32> to vector<2x128xf32>
      %800 = arith.addf %798, %799 : vector<2x128xf32>
      %c0_289 = arith.constant 0 : index
      %c0_290 = arith.constant 0 : index
      %801 = vector.load %arg7[%c0_289, %c0_290] : memref<2x32xf32, #tpu.memory_space<vmem>>, vector<2x32xf32>
      %802 = arith.negf %800 : vector<2x128xf32>
      %803 = math.exp %802 : vector<2x128xf32>
      %cst_291 = arith.constant 1.000000e+00 : f32
      %804 = vector.broadcast %cst_291 : f32 to vector<2x128xf32>
      %805 = arith.addf %804, %803 : vector<2x128xf32>
      %806 = arith.divf %804, %805 : vector<2x128xf32>
      %807 = vector.extract_strided_slice %806 {offsets = [0, 0], sizes = [2, 32], strides = [1, 1]} : vector<2x128xf32> to vector<2x32xf32>
      %cst_292 = arith.constant 2.000000e+00 : f32
      %808 = vector.broadcast %cst_292 : f32 to vector<2x32xf32>
      %809 = arith.mulf %808, %807 : vector<2x32xf32>
      %cst_293 = arith.constant 1.000000e+00 : f32
      %810 = vector.broadcast %cst_293 : f32 to vector<2x32xf32>
      %811 = arith.subf %809, %810 : vector<2x32xf32>
      %812 = vector.extract_strided_slice %806 {offsets = [0, 32], sizes = [2, 32], strides = [1, 1]} : vector<2x128xf32> to vector<2x32xf32>
      %813 = arith.mulf %812, %801 : vector<2x32xf32>
      %814 = vector.extract_strided_slice %806 {offsets = [0, 64], sizes = [2, 32], strides = [1, 1]} : vector<2x128xf32> to vector<2x32xf32>
      %815 = arith.mulf %814, %811 : vector<2x32xf32>
      %816 = arith.addf %813, %815 : vector<2x32xf32>
      %817 = vector.extract_strided_slice %806 {offsets = [0, 96], sizes = [2, 32], strides = [1, 1]} : vector<2x128xf32> to vector<2x32xf32>
      %818 = math.tanh %816 : vector<2x32xf32>
      %819 = arith.mulf %817, %818 : vector<2x32xf32>
      %c0_294 = arith.constant 0 : index
      %c0_295 = arith.constant 0 : index
      %820 = vector.load %arg6[%c0_294, %c0_295] : memref<2x32xf32, #tpu.memory_space<vmem>>, vector<2x32xf32>
      tpu.vector_store %arg6[%c0_294, %c0_295], %819 {strides = array<i32>} : memref<2x32xf32, #tpu.memory_space<vmem>>, vector<2x32xf32>,
      %c0_296 = arith.constant 0 : index
      %c0_297 = arith.constant 0 : index
      %821 = vector.load %arg7[%c0_296, %c0_297] : memref<2x32xf32, #tpu.memory_space<vmem>>, vector<2x32xf32>
      tpu.vector_store %arg7[%c0_296, %c0_297], %816 {strides = array<i32>} : memref<2x32xf32, #tpu.memory_space<vmem>>, vector<2x32xf32>,
      %822 = vector.shape_cast %819 : vector<2x32xf32> to vector<1x2x32xf32>
      %c10_i32_298 = arith.constant 10 : i32
      %823 = arith.subi %c18_i32, %c10_i32_298 : i32
      %c1_i32_299 = arith.constant 1 : i32
      %824 = arith.subi %823, %c1_i32_299 : i32
      %825 = arith.index_cast %824 : i32 to index
      %c0_300 = arith.constant 0 : index
      %c0_301 = arith.constant 0 : index
      %826 = vector.load %arg8[%825, %c0_300, %c0_301] : memref<16x2x32xf32, #tpu.memory_space<vmem>>, vector<1x2x32xf32>
      tpu.vector_store %arg8[%825, %c0_300, %c0_301], %822 {strides = array<i32>} : memref<16x2x32xf32, #tpu.memory_space<vmem>>, vector<1x2x32xf32>,
    } else {
    }
    %c19_i32 = arith.constant 19 : i32
    %c0_199 = arith.constant 0 : index
    %c0_200 = arith.constant 0 : index
    %558 = vector.load %arg6[%c0_199, %c0_200] : memref<2x32xf32, #tpu.memory_space<vmem>>, vector<2x32xf32>
    %559 = tpu.concatenate %554, %558 in 1 : vector<2x32xf32>, vector<2x32xf32> -> vector<2x64xf32>
    %cst_201 = arith.constant dense<0.000000e+00> : vector<2x256xf32>
    %560 = tpu.matmul %559, %4, %cst_201 {dimension_numbers = #tpu.dot_dimension_numbers<[1], [0], [0], [1], [0, 0, 1, 1], [], []>} : vector<2x64xf32>, vector<64x256xf32>, vector<2x256xf32> -> vector<2x256xf32>
    %561 = arith.index_cast %c19_i32 : i32 to index
    %c0_202 = arith.constant 0 : index
    %c0_203 = arith.constant 0 : index
    %562 = vector.load %arg0[%561, %c0_202, %c0_203] : memref<26x2x128xf32, #tpu.memory_space<vmem>>, vector<1x2x128xf32>
    %563 = vector.shape_cast %562 : vector<1x2x128xf32> to vector<2x128xf32>
    %564 = vector.extract_strided_slice %560 {offsets = [0, 0], sizes = [2, 128], strides = [1, 1]} : vector<2x256xf32> to vector<2x128xf32>
    %565 = arith.addf %563, %564 : vector<2x128xf32>
    %566 = arith.negf %565 : vector<2x128xf32>
    %567 = math.exp %566 : vector<2x128xf32>
    %cst_204 = arith.constant 1.000000e+00 : f32
    %568 = vector.broadcast %cst_204 : f32 to vector<2x128xf32>
    %569 = arith.addf %568, %567 : vector<2x128xf32>
    %570 = arith.divf %568, %569 : vector<2x128xf32>
    %571 = vector.extract_strided_slice %570 {offsets = [0, 0], sizes = [2, 32], strides = [1, 1]} : vector<2x128xf32> to vector<2x32xf32>
    %cst_205 = arith.constant 2.000000e+00 : f32
    %572 = vector.broadcast %cst_205 : f32 to vector<2x32xf32>
    %573 = arith.mulf %572, %571 : vector<2x32xf32>
    %cst_206 = arith.constant 1.000000e+00 : f32
    %574 = vector.broadcast %cst_206 : f32 to vector<2x32xf32>
    %575 = arith.subf %573, %574 : vector<2x32xf32>
    %576 = vector.extract_strided_slice %570 {offsets = [0, 32], sizes = [2, 32], strides = [1, 1]} : vector<2x128xf32> to vector<2x32xf32>
    %577 = arith.mulf %576, %551 : vector<2x32xf32>
    %578 = vector.extract_strided_slice %570 {offsets = [0, 64], sizes = [2, 32], strides = [1, 1]} : vector<2x128xf32> to vector<2x32xf32>
    %579 = arith.mulf %578, %575 : vector<2x32xf32>
    %580 = arith.addf %577, %579 : vector<2x32xf32>
    %581 = vector.extract_strided_slice %570 {offsets = [0, 96], sizes = [2, 32], strides = [1, 1]} : vector<2x128xf32> to vector<2x32xf32>
    %582 = math.tanh %580 : vector<2x32xf32>
    %583 = arith.mulf %581, %582 : vector<2x32xf32>
    %c11_i32_207 = arith.constant 11 : i32
    %584 = arith.cmpi sge, %c19_i32, %c11_i32_207 : i32
    %585 = arith.extui %584 : i1 to i32
    %c0_i32_208 = arith.constant 0 : i32
    %586 = arith.cmpi ne, %585, %c0_i32_208 : i32
    scf.if %586 {
      %798 = vector.extract_strided_slice %560 {offsets = [0, 128], sizes = [2, 128], strides = [1, 1]} : vector<2x256xf32> to vector<2x128xf32>
      %799 = vector.broadcast %5 : vector<1x128xf32> to vector<2x128xf32>
      %800 = arith.addf %798, %799 : vector<2x128xf32>
      %c0_289 = arith.constant 0 : index
      %c0_290 = arith.constant 0 : index
      %801 = vector.load %arg7[%c0_289, %c0_290] : memref<2x32xf32, #tpu.memory_space<vmem>>, vector<2x32xf32>
      %802 = arith.negf %800 : vector<2x128xf32>
      %803 = math.exp %802 : vector<2x128xf32>
      %cst_291 = arith.constant 1.000000e+00 : f32
      %804 = vector.broadcast %cst_291 : f32 to vector<2x128xf32>
      %805 = arith.addf %804, %803 : vector<2x128xf32>
      %806 = arith.divf %804, %805 : vector<2x128xf32>
      %807 = vector.extract_strided_slice %806 {offsets = [0, 0], sizes = [2, 32], strides = [1, 1]} : vector<2x128xf32> to vector<2x32xf32>
      %cst_292 = arith.constant 2.000000e+00 : f32
      %808 = vector.broadcast %cst_292 : f32 to vector<2x32xf32>
      %809 = arith.mulf %808, %807 : vector<2x32xf32>
      %cst_293 = arith.constant 1.000000e+00 : f32
      %810 = vector.broadcast %cst_293 : f32 to vector<2x32xf32>
      %811 = arith.subf %809, %810 : vector<2x32xf32>
      %812 = vector.extract_strided_slice %806 {offsets = [0, 32], sizes = [2, 32], strides = [1, 1]} : vector<2x128xf32> to vector<2x32xf32>
      %813 = arith.mulf %812, %801 : vector<2x32xf32>
      %814 = vector.extract_strided_slice %806 {offsets = [0, 64], sizes = [2, 32], strides = [1, 1]} : vector<2x128xf32> to vector<2x32xf32>
      %815 = arith.mulf %814, %811 : vector<2x32xf32>
      %816 = arith.addf %813, %815 : vector<2x32xf32>
      %817 = vector.extract_strided_slice %806 {offsets = [0, 96], sizes = [2, 32], strides = [1, 1]} : vector<2x128xf32> to vector<2x32xf32>
      %818 = math.tanh %816 : vector<2x32xf32>
      %819 = arith.mulf %817, %818 : vector<2x32xf32>
      %c0_294 = arith.constant 0 : index
      %c0_295 = arith.constant 0 : index
      %820 = vector.load %arg6[%c0_294, %c0_295] : memref<2x32xf32, #tpu.memory_space<vmem>>, vector<2x32xf32>
      tpu.vector_store %arg6[%c0_294, %c0_295], %819 {strides = array<i32>} : memref<2x32xf32, #tpu.memory_space<vmem>>, vector<2x32xf32>,
      %c0_296 = arith.constant 0 : index
      %c0_297 = arith.constant 0 : index
      %821 = vector.load %arg7[%c0_296, %c0_297] : memref<2x32xf32, #tpu.memory_space<vmem>>, vector<2x32xf32>
      tpu.vector_store %arg7[%c0_296, %c0_297], %816 {strides = array<i32>} : memref<2x32xf32, #tpu.memory_space<vmem>>, vector<2x32xf32>,
      %822 = vector.shape_cast %819 : vector<2x32xf32> to vector<1x2x32xf32>
      %c10_i32_298 = arith.constant 10 : i32
      %823 = arith.subi %c19_i32, %c10_i32_298 : i32
      %c1_i32_299 = arith.constant 1 : i32
      %824 = arith.subi %823, %c1_i32_299 : i32
      %825 = arith.index_cast %824 : i32 to index
      %c0_300 = arith.constant 0 : index
      %c0_301 = arith.constant 0 : index
      %826 = vector.load %arg8[%825, %c0_300, %c0_301] : memref<16x2x32xf32, #tpu.memory_space<vmem>>, vector<1x2x32xf32>
      tpu.vector_store %arg8[%825, %c0_300, %c0_301], %822 {strides = array<i32>} : memref<16x2x32xf32, #tpu.memory_space<vmem>>, vector<1x2x32xf32>,
    } else {
    }
    %c20_i32 = arith.constant 20 : i32
    %c0_209 = arith.constant 0 : index
    %c0_210 = arith.constant 0 : index
    %587 = vector.load %arg6[%c0_209, %c0_210] : memref<2x32xf32, #tpu.memory_space<vmem>>, vector<2x32xf32>
    %588 = tpu.concatenate %583, %587 in 1 : vector<2x32xf32>, vector<2x32xf32> -> vector<2x64xf32>
    %cst_211 = arith.constant dense<0.000000e+00> : vector<2x256xf32>
    %589 = tpu.matmul %588, %4, %cst_211 {dimension_numbers = #tpu.dot_dimension_numbers<[1], [0], [0], [1], [0, 0, 1, 1], [], []>} : vector<2x64xf32>, vector<64x256xf32>, vector<2x256xf32> -> vector<2x256xf32>
    %590 = arith.index_cast %c20_i32 : i32 to index
    %c0_212 = arith.constant 0 : index
    %c0_213 = arith.constant 0 : index
    %591 = vector.load %arg0[%590, %c0_212, %c0_213] : memref<26x2x128xf32, #tpu.memory_space<vmem>>, vector<1x2x128xf32>
    %592 = vector.shape_cast %591 : vector<1x2x128xf32> to vector<2x128xf32>
    %593 = vector.extract_strided_slice %589 {offsets = [0, 0], sizes = [2, 128], strides = [1, 1]} : vector<2x256xf32> to vector<2x128xf32>
    %594 = arith.addf %592, %593 : vector<2x128xf32>
    %595 = arith.negf %594 : vector<2x128xf32>
    %596 = math.exp %595 : vector<2x128xf32>
    %cst_214 = arith.constant 1.000000e+00 : f32
    %597 = vector.broadcast %cst_214 : f32 to vector<2x128xf32>
    %598 = arith.addf %597, %596 : vector<2x128xf32>
    %599 = arith.divf %597, %598 : vector<2x128xf32>
    %600 = vector.extract_strided_slice %599 {offsets = [0, 0], sizes = [2, 32], strides = [1, 1]} : vector<2x128xf32> to vector<2x32xf32>
    %cst_215 = arith.constant 2.000000e+00 : f32
    %601 = vector.broadcast %cst_215 : f32 to vector<2x32xf32>
    %602 = arith.mulf %601, %600 : vector<2x32xf32>
    %cst_216 = arith.constant 1.000000e+00 : f32
    %603 = vector.broadcast %cst_216 : f32 to vector<2x32xf32>
    %604 = arith.subf %602, %603 : vector<2x32xf32>
    %605 = vector.extract_strided_slice %599 {offsets = [0, 32], sizes = [2, 32], strides = [1, 1]} : vector<2x128xf32> to vector<2x32xf32>
    %606 = arith.mulf %605, %580 : vector<2x32xf32>
    %607 = vector.extract_strided_slice %599 {offsets = [0, 64], sizes = [2, 32], strides = [1, 1]} : vector<2x128xf32> to vector<2x32xf32>
    %608 = arith.mulf %607, %604 : vector<2x32xf32>
    %609 = arith.addf %606, %608 : vector<2x32xf32>
    %610 = vector.extract_strided_slice %599 {offsets = [0, 96], sizes = [2, 32], strides = [1, 1]} : vector<2x128xf32> to vector<2x32xf32>
    %611 = math.tanh %609 : vector<2x32xf32>
    %612 = arith.mulf %610, %611 : vector<2x32xf32>
    %c11_i32_217 = arith.constant 11 : i32
    %613 = arith.cmpi sge, %c20_i32, %c11_i32_217 : i32
    %614 = arith.extui %613 : i1 to i32
    %c0_i32_218 = arith.constant 0 : i32
    %615 = arith.cmpi ne, %614, %c0_i32_218 : i32
    scf.if %615 {
      %798 = vector.extract_strided_slice %589 {offsets = [0, 128], sizes = [2, 128], strides = [1, 1]} : vector<2x256xf32> to vector<2x128xf32>
      %799 = vector.broadcast %5 : vector<1x128xf32> to vector<2x128xf32>
      %800 = arith.addf %798, %799 : vector<2x128xf32>
      %c0_289 = arith.constant 0 : index
      %c0_290 = arith.constant 0 : index
      %801 = vector.load %arg7[%c0_289, %c0_290] : memref<2x32xf32, #tpu.memory_space<vmem>>, vector<2x32xf32>
      %802 = arith.negf %800 : vector<2x128xf32>
      %803 = math.exp %802 : vector<2x128xf32>
      %cst_291 = arith.constant 1.000000e+00 : f32
      %804 = vector.broadcast %cst_291 : f32 to vector<2x128xf32>
      %805 = arith.addf %804, %803 : vector<2x128xf32>
      %806 = arith.divf %804, %805 : vector<2x128xf32>
      %807 = vector.extract_strided_slice %806 {offsets = [0, 0], sizes = [2, 32], strides = [1, 1]} : vector<2x128xf32> to vector<2x32xf32>
      %cst_292 = arith.constant 2.000000e+00 : f32
      %808 = vector.broadcast %cst_292 : f32 to vector<2x32xf32>
      %809 = arith.mulf %808, %807 : vector<2x32xf32>
      %cst_293 = arith.constant 1.000000e+00 : f32
      %810 = vector.broadcast %cst_293 : f32 to vector<2x32xf32>
      %811 = arith.subf %809, %810 : vector<2x32xf32>
      %812 = vector.extract_strided_slice %806 {offsets = [0, 32], sizes = [2, 32], strides = [1, 1]} : vector<2x128xf32> to vector<2x32xf32>
      %813 = arith.mulf %812, %801 : vector<2x32xf32>
      %814 = vector.extract_strided_slice %806 {offsets = [0, 64], sizes = [2, 32], strides = [1, 1]} : vector<2x128xf32> to vector<2x32xf32>
      %815 = arith.mulf %814, %811 : vector<2x32xf32>
      %816 = arith.addf %813, %815 : vector<2x32xf32>
      %817 = vector.extract_strided_slice %806 {offsets = [0, 96], sizes = [2, 32], strides = [1, 1]} : vector<2x128xf32> to vector<2x32xf32>
      %818 = math.tanh %816 : vector<2x32xf32>
      %819 = arith.mulf %817, %818 : vector<2x32xf32>
      %c0_294 = arith.constant 0 : index
      %c0_295 = arith.constant 0 : index
      %820 = vector.load %arg6[%c0_294, %c0_295] : memref<2x32xf32, #tpu.memory_space<vmem>>, vector<2x32xf32>
      tpu.vector_store %arg6[%c0_294, %c0_295], %819 {strides = array<i32>} : memref<2x32xf32, #tpu.memory_space<vmem>>, vector<2x32xf32>,
      %c0_296 = arith.constant 0 : index
      %c0_297 = arith.constant 0 : index
      %821 = vector.load %arg7[%c0_296, %c0_297] : memref<2x32xf32, #tpu.memory_space<vmem>>, vector<2x32xf32>
      tpu.vector_store %arg7[%c0_296, %c0_297], %816 {strides = array<i32>} : memref<2x32xf32, #tpu.memory_space<vmem>>, vector<2x32xf32>,
      %822 = vector.shape_cast %819 : vector<2x32xf32> to vector<1x2x32xf32>
      %c10_i32_298 = arith.constant 10 : i32
      %823 = arith.subi %c20_i32, %c10_i32_298 : i32
      %c1_i32_299 = arith.constant 1 : i32
      %824 = arith.subi %823, %c1_i32_299 : i32
      %825 = arith.index_cast %824 : i32 to index
      %c0_300 = arith.constant 0 : index
      %c0_301 = arith.constant 0 : index
      %826 = vector.load %arg8[%825, %c0_300, %c0_301] : memref<16x2x32xf32, #tpu.memory_space<vmem>>, vector<1x2x32xf32>
      tpu.vector_store %arg8[%825, %c0_300, %c0_301], %822 {strides = array<i32>} : memref<16x2x32xf32, #tpu.memory_space<vmem>>, vector<1x2x32xf32>,
    } else {
    }
    %c21_i32 = arith.constant 21 : i32
    %c0_219 = arith.constant 0 : index
    %c0_220 = arith.constant 0 : index
    %616 = vector.load %arg6[%c0_219, %c0_220] : memref<2x32xf32, #tpu.memory_space<vmem>>, vector<2x32xf32>
    %617 = tpu.concatenate %612, %616 in 1 : vector<2x32xf32>, vector<2x32xf32> -> vector<2x64xf32>
    %cst_221 = arith.constant dense<0.000000e+00> : vector<2x256xf32>
    %618 = tpu.matmul %617, %4, %cst_221 {dimension_numbers = #tpu.dot_dimension_numbers<[1], [0], [0], [1], [0, 0, 1, 1], [], []>} : vector<2x64xf32>, vector<64x256xf32>, vector<2x256xf32> -> vector<2x256xf32>
    %619 = arith.index_cast %c21_i32 : i32 to index
    %c0_222 = arith.constant 0 : index
    %c0_223 = arith.constant 0 : index
    %620 = vector.load %arg0[%619, %c0_222, %c0_223] : memref<26x2x128xf32, #tpu.memory_space<vmem>>, vector<1x2x128xf32>
    %621 = vector.shape_cast %620 : vector<1x2x128xf32> to vector<2x128xf32>
    %622 = vector.extract_strided_slice %618 {offsets = [0, 0], sizes = [2, 128], strides = [1, 1]} : vector<2x256xf32> to vector<2x128xf32>
    %623 = arith.addf %621, %622 : vector<2x128xf32>
    %624 = arith.negf %623 : vector<2x128xf32>
    %625 = math.exp %624 : vector<2x128xf32>
    %cst_224 = arith.constant 1.000000e+00 : f32
    %626 = vector.broadcast %cst_224 : f32 to vector<2x128xf32>
    %627 = arith.addf %626, %625 : vector<2x128xf32>
    %628 = arith.divf %626, %627 : vector<2x128xf32>
    %629 = vector.extract_strided_slice %628 {offsets = [0, 0], sizes = [2, 32], strides = [1, 1]} : vector<2x128xf32> to vector<2x32xf32>
    %cst_225 = arith.constant 2.000000e+00 : f32
    %630 = vector.broadcast %cst_225 : f32 to vector<2x32xf32>
    %631 = arith.mulf %630, %629 : vector<2x32xf32>
    %cst_226 = arith.constant 1.000000e+00 : f32
    %632 = vector.broadcast %cst_226 : f32 to vector<2x32xf32>
    %633 = arith.subf %631, %632 : vector<2x32xf32>
    %634 = vector.extract_strided_slice %628 {offsets = [0, 32], sizes = [2, 32], strides = [1, 1]} : vector<2x128xf32> to vector<2x32xf32>
    %635 = arith.mulf %634, %609 : vector<2x32xf32>
    %636 = vector.extract_strided_slice %628 {offsets = [0, 64], sizes = [2, 32], strides = [1, 1]} : vector<2x128xf32> to vector<2x32xf32>
    %637 = arith.mulf %636, %633 : vector<2x32xf32>
    %638 = arith.addf %635, %637 : vector<2x32xf32>
    %639 = vector.extract_strided_slice %628 {offsets = [0, 96], sizes = [2, 32], strides = [1, 1]} : vector<2x128xf32> to vector<2x32xf32>
    %640 = math.tanh %638 : vector<2x32xf32>
    %641 = arith.mulf %639, %640 : vector<2x32xf32>
    %c11_i32_227 = arith.constant 11 : i32
    %642 = arith.cmpi sge, %c21_i32, %c11_i32_227 : i32
    %643 = arith.extui %642 : i1 to i32
    %c0_i32_228 = arith.constant 0 : i32
    %644 = arith.cmpi ne, %643, %c0_i32_228 : i32
    scf.if %644 {
      %798 = vector.extract_strided_slice %618 {offsets = [0, 128], sizes = [2, 128], strides = [1, 1]} : vector<2x256xf32> to vector<2x128xf32>
      %799 = vector.broadcast %5 : vector<1x128xf32> to vector<2x128xf32>
      %800 = arith.addf %798, %799 : vector<2x128xf32>
      %c0_289 = arith.constant 0 : index
      %c0_290 = arith.constant 0 : index
      %801 = vector.load %arg7[%c0_289, %c0_290] : memref<2x32xf32, #tpu.memory_space<vmem>>, vector<2x32xf32>
      %802 = arith.negf %800 : vector<2x128xf32>
      %803 = math.exp %802 : vector<2x128xf32>
      %cst_291 = arith.constant 1.000000e+00 : f32
      %804 = vector.broadcast %cst_291 : f32 to vector<2x128xf32>
      %805 = arith.addf %804, %803 : vector<2x128xf32>
      %806 = arith.divf %804, %805 : vector<2x128xf32>
      %807 = vector.extract_strided_slice %806 {offsets = [0, 0], sizes = [2, 32], strides = [1, 1]} : vector<2x128xf32> to vector<2x32xf32>
      %cst_292 = arith.constant 2.000000e+00 : f32
      %808 = vector.broadcast %cst_292 : f32 to vector<2x32xf32>
      %809 = arith.mulf %808, %807 : vector<2x32xf32>
      %cst_293 = arith.constant 1.000000e+00 : f32
      %810 = vector.broadcast %cst_293 : f32 to vector<2x32xf32>
      %811 = arith.subf %809, %810 : vector<2x32xf32>
      %812 = vector.extract_strided_slice %806 {offsets = [0, 32], sizes = [2, 32], strides = [1, 1]} : vector<2x128xf32> to vector<2x32xf32>
      %813 = arith.mulf %812, %801 : vector<2x32xf32>
      %814 = vector.extract_strided_slice %806 {offsets = [0, 64], sizes = [2, 32], strides = [1, 1]} : vector<2x128xf32> to vector<2x32xf32>
      %815 = arith.mulf %814, %811 : vector<2x32xf32>
      %816 = arith.addf %813, %815 : vector<2x32xf32>
      %817 = vector.extract_strided_slice %806 {offsets = [0, 96], sizes = [2, 32], strides = [1, 1]} : vector<2x128xf32> to vector<2x32xf32>
      %818 = math.tanh %816 : vector<2x32xf32>
      %819 = arith.mulf %817, %818 : vector<2x32xf32>
      %c0_294 = arith.constant 0 : index
      %c0_295 = arith.constant 0 : index
      %820 = vector.load %arg6[%c0_294, %c0_295] : memref<2x32xf32, #tpu.memory_space<vmem>>, vector<2x32xf32>
      tpu.vector_store %arg6[%c0_294, %c0_295], %819 {strides = array<i32>} : memref<2x32xf32, #tpu.memory_space<vmem>>, vector<2x32xf32>,
      %c0_296 = arith.constant 0 : index
      %c0_297 = arith.constant 0 : index
      %821 = vector.load %arg7[%c0_296, %c0_297] : memref<2x32xf32, #tpu.memory_space<vmem>>, vector<2x32xf32>
      tpu.vector_store %arg7[%c0_296, %c0_297], %816 {strides = array<i32>} : memref<2x32xf32, #tpu.memory_space<vmem>>, vector<2x32xf32>,
      %822 = vector.shape_cast %819 : vector<2x32xf32> to vector<1x2x32xf32>
      %c10_i32_298 = arith.constant 10 : i32
      %823 = arith.subi %c21_i32, %c10_i32_298 : i32
      %c1_i32_299 = arith.constant 1 : i32
      %824 = arith.subi %823, %c1_i32_299 : i32
      %825 = arith.index_cast %824 : i32 to index
      %c0_300 = arith.constant 0 : index
      %c0_301 = arith.constant 0 : index
      %826 = vector.load %arg8[%825, %c0_300, %c0_301] : memref<16x2x32xf32, #tpu.memory_space<vmem>>, vector<1x2x32xf32>
      tpu.vector_store %arg8[%825, %c0_300, %c0_301], %822 {strides = array<i32>} : memref<16x2x32xf32, #tpu.memory_space<vmem>>, vector<1x2x32xf32>,
    } else {
    }
    %c22_i32 = arith.constant 22 : i32
    %c0_229 = arith.constant 0 : index
    %c0_230 = arith.constant 0 : index
    %645 = vector.load %arg6[%c0_229, %c0_230] : memref<2x32xf32, #tpu.memory_space<vmem>>, vector<2x32xf32>
    %646 = tpu.concatenate %641, %645 in 1 : vector<2x32xf32>, vector<2x32xf32> -> vector<2x64xf32>
    %cst_231 = arith.constant dense<0.000000e+00> : vector<2x256xf32>
    %647 = tpu.matmul %646, %4, %cst_231 {dimension_numbers = #tpu.dot_dimension_numbers<[1], [0], [0], [1], [0, 0, 1, 1], [], []>} : vector<2x64xf32>, vector<64x256xf32>, vector<2x256xf32> -> vector<2x256xf32>
    %648 = arith.index_cast %c22_i32 : i32 to index
    %c0_232 = arith.constant 0 : index
    %c0_233 = arith.constant 0 : index
    %649 = vector.load %arg0[%648, %c0_232, %c0_233] : memref<26x2x128xf32, #tpu.memory_space<vmem>>, vector<1x2x128xf32>
    %650 = vector.shape_cast %649 : vector<1x2x128xf32> to vector<2x128xf32>
    %651 = vector.extract_strided_slice %647 {offsets = [0, 0], sizes = [2, 128], strides = [1, 1]} : vector<2x256xf32> to vector<2x128xf32>
    %652 = arith.addf %650, %651 : vector<2x128xf32>
    %653 = arith.negf %652 : vector<2x128xf32>
    %654 = math.exp %653 : vector<2x128xf32>
    %cst_234 = arith.constant 1.000000e+00 : f32
    %655 = vector.broadcast %cst_234 : f32 to vector<2x128xf32>
    %656 = arith.addf %655, %654 : vector<2x128xf32>
    %657 = arith.divf %655, %656 : vector<2x128xf32>
    %658 = vector.extract_strided_slice %657 {offsets = [0, 0], sizes = [2, 32], strides = [1, 1]} : vector<2x128xf32> to vector<2x32xf32>
    %cst_235 = arith.constant 2.000000e+00 : f32
    %659 = vector.broadcast %cst_235 : f32 to vector<2x32xf32>
    %660 = arith.mulf %659, %658 : vector<2x32xf32>
    %cst_236 = arith.constant 1.000000e+00 : f32
    %661 = vector.broadcast %cst_236 : f32 to vector<2x32xf32>
    %662 = arith.subf %660, %661 : vector<2x32xf32>
    %663 = vector.extract_strided_slice %657 {offsets = [0, 32], sizes = [2, 32], strides = [1, 1]} : vector<2x128xf32> to vector<2x32xf32>
    %664 = arith.mulf %663, %638 : vector<2x32xf32>
    %665 = vector.extract_strided_slice %657 {offsets = [0, 64], sizes = [2, 32], strides = [1, 1]} : vector<2x128xf32> to vector<2x32xf32>
    %666 = arith.mulf %665, %662 : vector<2x32xf32>
    %667 = arith.addf %664, %666 : vector<2x32xf32>
    %668 = vector.extract_strided_slice %657 {offsets = [0, 96], sizes = [2, 32], strides = [1, 1]} : vector<2x128xf32> to vector<2x32xf32>
    %669 = math.tanh %667 : vector<2x32xf32>
    %670 = arith.mulf %668, %669 : vector<2x32xf32>
    %c11_i32_237 = arith.constant 11 : i32
    %671 = arith.cmpi sge, %c22_i32, %c11_i32_237 : i32
    %672 = arith.extui %671 : i1 to i32
    %c0_i32_238 = arith.constant 0 : i32
    %673 = arith.cmpi ne, %672, %c0_i32_238 : i32
    scf.if %673 {
      %798 = vector.extract_strided_slice %647 {offsets = [0, 128], sizes = [2, 128], strides = [1, 1]} : vector<2x256xf32> to vector<2x128xf32>
      %799 = vector.broadcast %5 : vector<1x128xf32> to vector<2x128xf32>
      %800 = arith.addf %798, %799 : vector<2x128xf32>
      %c0_289 = arith.constant 0 : index
      %c0_290 = arith.constant 0 : index
      %801 = vector.load %arg7[%c0_289, %c0_290] : memref<2x32xf32, #tpu.memory_space<vmem>>, vector<2x32xf32>
      %802 = arith.negf %800 : vector<2x128xf32>
      %803 = math.exp %802 : vector<2x128xf32>
      %cst_291 = arith.constant 1.000000e+00 : f32
      %804 = vector.broadcast %cst_291 : f32 to vector<2x128xf32>
      %805 = arith.addf %804, %803 : vector<2x128xf32>
      %806 = arith.divf %804, %805 : vector<2x128xf32>
      %807 = vector.extract_strided_slice %806 {offsets = [0, 0], sizes = [2, 32], strides = [1, 1]} : vector<2x128xf32> to vector<2x32xf32>
      %cst_292 = arith.constant 2.000000e+00 : f32
      %808 = vector.broadcast %cst_292 : f32 to vector<2x32xf32>
      %809 = arith.mulf %808, %807 : vector<2x32xf32>
      %cst_293 = arith.constant 1.000000e+00 : f32
      %810 = vector.broadcast %cst_293 : f32 to vector<2x32xf32>
      %811 = arith.subf %809, %810 : vector<2x32xf32>
      %812 = vector.extract_strided_slice %806 {offsets = [0, 32], sizes = [2, 32], strides = [1, 1]} : vector<2x128xf32> to vector<2x32xf32>
      %813 = arith.mulf %812, %801 : vector<2x32xf32>
      %814 = vector.extract_strided_slice %806 {offsets = [0, 64], sizes = [2, 32], strides = [1, 1]} : vector<2x128xf32> to vector<2x32xf32>
      %815 = arith.mulf %814, %811 : vector<2x32xf32>
      %816 = arith.addf %813, %815 : vector<2x32xf32>
      %817 = vector.extract_strided_slice %806 {offsets = [0, 96], sizes = [2, 32], strides = [1, 1]} : vector<2x128xf32> to vector<2x32xf32>
      %818 = math.tanh %816 : vector<2x32xf32>
      %819 = arith.mulf %817, %818 : vector<2x32xf32>
      %c0_294 = arith.constant 0 : index
      %c0_295 = arith.constant 0 : index
      %820 = vector.load %arg6[%c0_294, %c0_295] : memref<2x32xf32, #tpu.memory_space<vmem>>, vector<2x32xf32>
      tpu.vector_store %arg6[%c0_294, %c0_295], %819 {strides = array<i32>} : memref<2x32xf32, #tpu.memory_space<vmem>>, vector<2x32xf32>,
      %c0_296 = arith.constant 0 : index
      %c0_297 = arith.constant 0 : index
      %821 = vector.load %arg7[%c0_296, %c0_297] : memref<2x32xf32, #tpu.memory_space<vmem>>, vector<2x32xf32>
      tpu.vector_store %arg7[%c0_296, %c0_297], %816 {strides = array<i32>} : memref<2x32xf32, #tpu.memory_space<vmem>>, vector<2x32xf32>,
      %822 = vector.shape_cast %819 : vector<2x32xf32> to vector<1x2x32xf32>
      %c10_i32_298 = arith.constant 10 : i32
      %823 = arith.subi %c22_i32, %c10_i32_298 : i32
      %c1_i32_299 = arith.constant 1 : i32
      %824 = arith.subi %823, %c1_i32_299 : i32
      %825 = arith.index_cast %824 : i32 to index
      %c0_300 = arith.constant 0 : index
      %c0_301 = arith.constant 0 : index
      %826 = vector.load %arg8[%825, %c0_300, %c0_301] : memref<16x2x32xf32, #tpu.memory_space<vmem>>, vector<1x2x32xf32>
      tpu.vector_store %arg8[%825, %c0_300, %c0_301], %822 {strides = array<i32>} : memref<16x2x32xf32, #tpu.memory_space<vmem>>, vector<1x2x32xf32>,
    } else {
    }
    %c23_i32 = arith.constant 23 : i32
    %c0_239 = arith.constant 0 : index
    %c0_240 = arith.constant 0 : index
    %674 = vector.load %arg6[%c0_239, %c0_240] : memref<2x32xf32, #tpu.memory_space<vmem>>, vector<2x32xf32>
    %675 = tpu.concatenate %670, %674 in 1 : vector<2x32xf32>, vector<2x32xf32> -> vector<2x64xf32>
    %cst_241 = arith.constant dense<0.000000e+00> : vector<2x256xf32>
    %676 = tpu.matmul %675, %4, %cst_241 {dimension_numbers = #tpu.dot_dimension_numbers<[1], [0], [0], [1], [0, 0, 1, 1], [], []>} : vector<2x64xf32>, vector<64x256xf32>, vector<2x256xf32> -> vector<2x256xf32>
    %677 = arith.index_cast %c23_i32 : i32 to index
    %c0_242 = arith.constant 0 : index
    %c0_243 = arith.constant 0 : index
    %678 = vector.load %arg0[%677, %c0_242, %c0_243] : memref<26x2x128xf32, #tpu.memory_space<vmem>>, vector<1x2x128xf32>
    %679 = vector.shape_cast %678 : vector<1x2x128xf32> to vector<2x128xf32>
    %680 = vector.extract_strided_slice %676 {offsets = [0, 0], sizes = [2, 128], strides = [1, 1]} : vector<2x256xf32> to vector<2x128xf32>
    %681 = arith.addf %679, %680 : vector<2x128xf32>
    %682 = arith.negf %681 : vector<2x128xf32>
    %683 = math.exp %682 : vector<2x128xf32>
    %cst_244 = arith.constant 1.000000e+00 : f32
    %684 = vector.broadcast %cst_244 : f32 to vector<2x128xf32>
    %685 = arith.addf %684, %683 : vector<2x128xf32>
    %686 = arith.divf %684, %685 : vector<2x128xf32>
    %687 = vector.extract_strided_slice %686 {offsets = [0, 0], sizes = [2, 32], strides = [1, 1]} : vector<2x128xf32> to vector<2x32xf32>
    %cst_245 = arith.constant 2.000000e+00 : f32
    %688 = vector.broadcast %cst_245 : f32 to vector<2x32xf32>
    %689 = arith.mulf %688, %687 : vector<2x32xf32>
    %cst_246 = arith.constant 1.000000e+00 : f32
    %690 = vector.broadcast %cst_246 : f32 to vector<2x32xf32>
    %691 = arith.subf %689, %690 : vector<2x32xf32>
    %692 = vector.extract_strided_slice %686 {offsets = [0, 32], sizes = [2, 32], strides = [1, 1]} : vector<2x128xf32> to vector<2x32xf32>
    %693 = arith.mulf %692, %667 : vector<2x32xf32>
    %694 = vector.extract_strided_slice %686 {offsets = [0, 64], sizes = [2, 32], strides = [1, 1]} : vector<2x128xf32> to vector<2x32xf32>
    %695 = arith.mulf %694, %691 : vector<2x32xf32>
    %696 = arith.addf %693, %695 : vector<2x32xf32>
    %697 = vector.extract_strided_slice %686 {offsets = [0, 96], sizes = [2, 32], strides = [1, 1]} : vector<2x128xf32> to vector<2x32xf32>
    %698 = math.tanh %696 : vector<2x32xf32>
    %699 = arith.mulf %697, %698 : vector<2x32xf32>
    %c11_i32_247 = arith.constant 11 : i32
    %700 = arith.cmpi sge, %c23_i32, %c11_i32_247 : i32
    %701 = arith.extui %700 : i1 to i32
    %c0_i32_248 = arith.constant 0 : i32
    %702 = arith.cmpi ne, %701, %c0_i32_248 : i32
    scf.if %702 {
      %798 = vector.extract_strided_slice %676 {offsets = [0, 128], sizes = [2, 128], strides = [1, 1]} : vector<2x256xf32> to vector<2x128xf32>
      %799 = vector.broadcast %5 : vector<1x128xf32> to vector<2x128xf32>
      %800 = arith.addf %798, %799 : vector<2x128xf32>
      %c0_289 = arith.constant 0 : index
      %c0_290 = arith.constant 0 : index
      %801 = vector.load %arg7[%c0_289, %c0_290] : memref<2x32xf32, #tpu.memory_space<vmem>>, vector<2x32xf32>
      %802 = arith.negf %800 : vector<2x128xf32>
      %803 = math.exp %802 : vector<2x128xf32>
      %cst_291 = arith.constant 1.000000e+00 : f32
      %804 = vector.broadcast %cst_291 : f32 to vector<2x128xf32>
      %805 = arith.addf %804, %803 : vector<2x128xf32>
      %806 = arith.divf %804, %805 : vector<2x128xf32>
      %807 = vector.extract_strided_slice %806 {offsets = [0, 0], sizes = [2, 32], strides = [1, 1]} : vector<2x128xf32> to vector<2x32xf32>
      %cst_292 = arith.constant 2.000000e+00 : f32
      %808 = vector.broadcast %cst_292 : f32 to vector<2x32xf32>
      %809 = arith.mulf %808, %807 : vector<2x32xf32>
      %cst_293 = arith.constant 1.000000e+00 : f32
      %810 = vector.broadcast %cst_293 : f32 to vector<2x32xf32>
      %811 = arith.subf %809, %810 : vector<2x32xf32>
      %812 = vector.extract_strided_slice %806 {offsets = [0, 32], sizes = [2, 32], strides = [1, 1]} : vector<2x128xf32> to vector<2x32xf32>
      %813 = arith.mulf %812, %801 : vector<2x32xf32>
      %814 = vector.extract_strided_slice %806 {offsets = [0, 64], sizes = [2, 32], strides = [1, 1]} : vector<2x128xf32> to vector<2x32xf32>
      %815 = arith.mulf %814, %811 : vector<2x32xf32>
      %816 = arith.addf %813, %815 : vector<2x32xf32>
      %817 = vector.extract_strided_slice %806 {offsets = [0, 96], sizes = [2, 32], strides = [1, 1]} : vector<2x128xf32> to vector<2x32xf32>
      %818 = math.tanh %816 : vector<2x32xf32>
      %819 = arith.mulf %817, %818 : vector<2x32xf32>
      %c0_294 = arith.constant 0 : index
      %c0_295 = arith.constant 0 : index
      %820 = vector.load %arg6[%c0_294, %c0_295] : memref<2x32xf32, #tpu.memory_space<vmem>>, vector<2x32xf32>
      tpu.vector_store %arg6[%c0_294, %c0_295], %819 {strides = array<i32>} : memref<2x32xf32, #tpu.memory_space<vmem>>, vector<2x32xf32>,
      %c0_296 = arith.constant 0 : index
      %c0_297 = arith.constant 0 : index
      %821 = vector.load %arg7[%c0_296, %c0_297] : memref<2x32xf32, #tpu.memory_space<vmem>>, vector<2x32xf32>
      tpu.vector_store %arg7[%c0_296, %c0_297], %816 {strides = array<i32>} : memref<2x32xf32, #tpu.memory_space<vmem>>, vector<2x32xf32>,
      %822 = vector.shape_cast %819 : vector<2x32xf32> to vector<1x2x32xf32>
      %c10_i32_298 = arith.constant 10 : i32
      %823 = arith.subi %c23_i32, %c10_i32_298 : i32
      %c1_i32_299 = arith.constant 1 : i32
      %824 = arith.subi %823, %c1_i32_299 : i32
      %825 = arith.index_cast %824 : i32 to index
      %c0_300 = arith.constant 0 : index
      %c0_301 = arith.constant 0 : index
      %826 = vector.load %arg8[%825, %c0_300, %c0_301] : memref<16x2x32xf32, #tpu.memory_space<vmem>>, vector<1x2x32xf32>
      tpu.vector_store %arg8[%825, %c0_300, %c0_301], %822 {strides = array<i32>} : memref<16x2x32xf32, #tpu.memory_space<vmem>>, vector<1x2x32xf32>,
    } else {
    }
    %c24_i32 = arith.constant 24 : i32
    %c0_249 = arith.constant 0 : index
    %c0_250 = arith.constant 0 : index
    %703 = vector.load %arg6[%c0_249, %c0_250] : memref<2x32xf32, #tpu.memory_space<vmem>>, vector<2x32xf32>
    %704 = tpu.concatenate %699, %703 in 1 : vector<2x32xf32>, vector<2x32xf32> -> vector<2x64xf32>
    %cst_251 = arith.constant dense<0.000000e+00> : vector<2x256xf32>
    %705 = tpu.matmul %704, %4, %cst_251 {dimension_numbers = #tpu.dot_dimension_numbers<[1], [0], [0], [1], [0, 0, 1, 1], [], []>} : vector<2x64xf32>, vector<64x256xf32>, vector<2x256xf32> -> vector<2x256xf32>
    %706 = arith.index_cast %c24_i32 : i32 to index
    %c0_252 = arith.constant 0 : index
    %c0_253 = arith.constant 0 : index
    %707 = vector.load %arg0[%706, %c0_252, %c0_253] : memref<26x2x128xf32, #tpu.memory_space<vmem>>, vector<1x2x128xf32>
    %708 = vector.shape_cast %707 : vector<1x2x128xf32> to vector<2x128xf32>
    %709 = vector.extract_strided_slice %705 {offsets = [0, 0], sizes = [2, 128], strides = [1, 1]} : vector<2x256xf32> to vector<2x128xf32>
    %710 = arith.addf %708, %709 : vector<2x128xf32>
    %711 = arith.negf %710 : vector<2x128xf32>
    %712 = math.exp %711 : vector<2x128xf32>
    %cst_254 = arith.constant 1.000000e+00 : f32
    %713 = vector.broadcast %cst_254 : f32 to vector<2x128xf32>
    %714 = arith.addf %713, %712 : vector<2x128xf32>
    %715 = arith.divf %713, %714 : vector<2x128xf32>
    %716 = vector.extract_strided_slice %715 {offsets = [0, 0], sizes = [2, 32], strides = [1, 1]} : vector<2x128xf32> to vector<2x32xf32>
    %cst_255 = arith.constant 2.000000e+00 : f32
    %717 = vector.broadcast %cst_255 : f32 to vector<2x32xf32>
    %718 = arith.mulf %717, %716 : vector<2x32xf32>
    %cst_256 = arith.constant 1.000000e+00 : f32
    %719 = vector.broadcast %cst_256 : f32 to vector<2x32xf32>
    %720 = arith.subf %718, %719 : vector<2x32xf32>
    %721 = vector.extract_strided_slice %715 {offsets = [0, 32], sizes = [2, 32], strides = [1, 1]} : vector<2x128xf32> to vector<2x32xf32>
    %722 = arith.mulf %721, %696 : vector<2x32xf32>
    %723 = vector.extract_strided_slice %715 {offsets = [0, 64], sizes = [2, 32], strides = [1, 1]} : vector<2x128xf32> to vector<2x32xf32>
    %724 = arith.mulf %723, %720 : vector<2x32xf32>
    %725 = arith.addf %722, %724 : vector<2x32xf32>
    %726 = vector.extract_strided_slice %715 {offsets = [0, 96], sizes = [2, 32], strides = [1, 1]} : vector<2x128xf32> to vector<2x32xf32>
    %727 = math.tanh %725 : vector<2x32xf32>
    %728 = arith.mulf %726, %727 : vector<2x32xf32>
    %c11_i32_257 = arith.constant 11 : i32
    %729 = arith.cmpi sge, %c24_i32, %c11_i32_257 : i32
    %730 = arith.extui %729 : i1 to i32
    %c0_i32_258 = arith.constant 0 : i32
    %731 = arith.cmpi ne, %730, %c0_i32_258 : i32
    scf.if %731 {
      %798 = vector.extract_strided_slice %705 {offsets = [0, 128], sizes = [2, 128], strides = [1, 1]} : vector<2x256xf32> to vector<2x128xf32>
      %799 = vector.broadcast %5 : vector<1x128xf32> to vector<2x128xf32>
      %800 = arith.addf %798, %799 : vector<2x128xf32>
      %c0_289 = arith.constant 0 : index
      %c0_290 = arith.constant 0 : index
      %801 = vector.load %arg7[%c0_289, %c0_290] : memref<2x32xf32, #tpu.memory_space<vmem>>, vector<2x32xf32>
      %802 = arith.negf %800 : vector<2x128xf32>
      %803 = math.exp %802 : vector<2x128xf32>
      %cst_291 = arith.constant 1.000000e+00 : f32
      %804 = vector.broadcast %cst_291 : f32 to vector<2x128xf32>
      %805 = arith.addf %804, %803 : vector<2x128xf32>
      %806 = arith.divf %804, %805 : vector<2x128xf32>
      %807 = vector.extract_strided_slice %806 {offsets = [0, 0], sizes = [2, 32], strides = [1, 1]} : vector<2x128xf32> to vector<2x32xf32>
      %cst_292 = arith.constant 2.000000e+00 : f32
      %808 = vector.broadcast %cst_292 : f32 to vector<2x32xf32>
      %809 = arith.mulf %808, %807 : vector<2x32xf32>
      %cst_293 = arith.constant 1.000000e+00 : f32
      %810 = vector.broadcast %cst_293 : f32 to vector<2x32xf32>
      %811 = arith.subf %809, %810 : vector<2x32xf32>
      %812 = vector.extract_strided_slice %806 {offsets = [0, 32], sizes = [2, 32], strides = [1, 1]} : vector<2x128xf32> to vector<2x32xf32>
      %813 = arith.mulf %812, %801 : vector<2x32xf32>
      %814 = vector.extract_strided_slice %806 {offsets = [0, 64], sizes = [2, 32], strides = [1, 1]} : vector<2x128xf32> to vector<2x32xf32>
      %815 = arith.mulf %814, %811 : vector<2x32xf32>
      %816 = arith.addf %813, %815 : vector<2x32xf32>
      %817 = vector.extract_strided_slice %806 {offsets = [0, 96], sizes = [2, 32], strides = [1, 1]} : vector<2x128xf32> to vector<2x32xf32>
      %818 = math.tanh %816 : vector<2x32xf32>
      %819 = arith.mulf %817, %818 : vector<2x32xf32>
      %c0_294 = arith.constant 0 : index
      %c0_295 = arith.constant 0 : index
      %820 = vector.load %arg6[%c0_294, %c0_295] : memref<2x32xf32, #tpu.memory_space<vmem>>, vector<2x32xf32>
      tpu.vector_store %arg6[%c0_294, %c0_295], %819 {strides = array<i32>} : memref<2x32xf32, #tpu.memory_space<vmem>>, vector<2x32xf32>,
      %c0_296 = arith.constant 0 : index
      %c0_297 = arith.constant 0 : index
      %821 = vector.load %arg7[%c0_296, %c0_297] : memref<2x32xf32, #tpu.memory_space<vmem>>, vector<2x32xf32>
      tpu.vector_store %arg7[%c0_296, %c0_297], %816 {strides = array<i32>} : memref<2x32xf32, #tpu.memory_space<vmem>>, vector<2x32xf32>,
      %822 = vector.shape_cast %819 : vector<2x32xf32> to vector<1x2x32xf32>
      %c10_i32_298 = arith.constant 10 : i32
      %823 = arith.subi %c24_i32, %c10_i32_298 : i32
      %c1_i32_299 = arith.constant 1 : i32
      %824 = arith.subi %823, %c1_i32_299 : i32
      %825 = arith.index_cast %824 : i32 to index
      %c0_300 = arith.constant 0 : index
      %c0_301 = arith.constant 0 : index
      %826 = vector.load %arg8[%825, %c0_300, %c0_301] : memref<16x2x32xf32, #tpu.memory_space<vmem>>, vector<1x2x32xf32>
      tpu.vector_store %arg8[%825, %c0_300, %c0_301], %822 {strides = array<i32>} : memref<16x2x32xf32, #tpu.memory_space<vmem>>, vector<1x2x32xf32>,
    } else {
    }
    %c25_i32 = arith.constant 25 : i32
    %c0_259 = arith.constant 0 : index
    %c0_260 = arith.constant 0 : index
    %732 = vector.load %arg6[%c0_259, %c0_260] : memref<2x32xf32, #tpu.memory_space<vmem>>, vector<2x32xf32>
    %733 = tpu.concatenate %728, %732 in 1 : vector<2x32xf32>, vector<2x32xf32> -> vector<2x64xf32>
    %cst_261 = arith.constant dense<0.000000e+00> : vector<2x256xf32>
    %734 = tpu.matmul %733, %4, %cst_261 {dimension_numbers = #tpu.dot_dimension_numbers<[1], [0], [0], [1], [0, 0, 1, 1], [], []>} : vector<2x64xf32>, vector<64x256xf32>, vector<2x256xf32> -> vector<2x256xf32>
    %735 = arith.index_cast %c25_i32 : i32 to index
    %c0_262 = arith.constant 0 : index
    %c0_263 = arith.constant 0 : index
    %736 = vector.load %arg0[%735, %c0_262, %c0_263] : memref<26x2x128xf32, #tpu.memory_space<vmem>>, vector<1x2x128xf32>
    %737 = vector.shape_cast %736 : vector<1x2x128xf32> to vector<2x128xf32>
    %738 = vector.extract_strided_slice %734 {offsets = [0, 0], sizes = [2, 128], strides = [1, 1]} : vector<2x256xf32> to vector<2x128xf32>
    %739 = arith.addf %737, %738 : vector<2x128xf32>
    %740 = arith.negf %739 : vector<2x128xf32>
    %741 = math.exp %740 : vector<2x128xf32>
    %cst_264 = arith.constant 1.000000e+00 : f32
    %742 = vector.broadcast %cst_264 : f32 to vector<2x128xf32>
    %743 = arith.addf %742, %741 : vector<2x128xf32>
    %744 = arith.divf %742, %743 : vector<2x128xf32>
    %745 = vector.extract_strided_slice %744 {offsets = [0, 0], sizes = [2, 32], strides = [1, 1]} : vector<2x128xf32> to vector<2x32xf32>
    %cst_265 = arith.constant 2.000000e+00 : f32
    %746 = vector.broadcast %cst_265 : f32 to vector<2x32xf32>
    %747 = arith.mulf %746, %745 : vector<2x32xf32>
    %cst_266 = arith.constant 1.000000e+00 : f32
    %748 = vector.broadcast %cst_266 : f32 to vector<2x32xf32>
    %749 = arith.subf %747, %748 : vector<2x32xf32>
    %750 = vector.extract_strided_slice %744 {offsets = [0, 32], sizes = [2, 32], strides = [1, 1]} : vector<2x128xf32> to vector<2x32xf32>
    %751 = arith.mulf %750, %725 : vector<2x32xf32>
    %752 = vector.extract_strided_slice %744 {offsets = [0, 64], sizes = [2, 32], strides = [1, 1]} : vector<2x128xf32> to vector<2x32xf32>
    %753 = arith.mulf %752, %749 : vector<2x32xf32>
    %754 = arith.addf %751, %753 : vector<2x32xf32>
    %755 = vector.extract_strided_slice %744 {offsets = [0, 96], sizes = [2, 32], strides = [1, 1]} : vector<2x128xf32> to vector<2x32xf32>
    %756 = math.tanh %754 : vector<2x32xf32>
    %757 = arith.mulf %755, %756 : vector<2x32xf32>
    %c11_i32_267 = arith.constant 11 : i32
    %758 = arith.cmpi sge, %c25_i32, %c11_i32_267 : i32
    %759 = arith.extui %758 : i1 to i32
    %c0_i32_268 = arith.constant 0 : i32
    %760 = arith.cmpi ne, %759, %c0_i32_268 : i32
    scf.if %760 {
      %798 = vector.extract_strided_slice %734 {offsets = [0, 128], sizes = [2, 128], strides = [1, 1]} : vector<2x256xf32> to vector<2x128xf32>
      %799 = vector.broadcast %5 : vector<1x128xf32> to vector<2x128xf32>
      %800 = arith.addf %798, %799 : vector<2x128xf32>
      %c0_289 = arith.constant 0 : index
      %c0_290 = arith.constant 0 : index
      %801 = vector.load %arg7[%c0_289, %c0_290] : memref<2x32xf32, #tpu.memory_space<vmem>>, vector<2x32xf32>
      %802 = arith.negf %800 : vector<2x128xf32>
      %803 = math.exp %802 : vector<2x128xf32>
      %cst_291 = arith.constant 1.000000e+00 : f32
      %804 = vector.broadcast %cst_291 : f32 to vector<2x128xf32>
      %805 = arith.addf %804, %803 : vector<2x128xf32>
      %806 = arith.divf %804, %805 : vector<2x128xf32>
      %807 = vector.extract_strided_slice %806 {offsets = [0, 0], sizes = [2, 32], strides = [1, 1]} : vector<2x128xf32> to vector<2x32xf32>
      %cst_292 = arith.constant 2.000000e+00 : f32
      %808 = vector.broadcast %cst_292 : f32 to vector<2x32xf32>
      %809 = arith.mulf %808, %807 : vector<2x32xf32>
      %cst_293 = arith.constant 1.000000e+00 : f32
      %810 = vector.broadcast %cst_293 : f32 to vector<2x32xf32>
      %811 = arith.subf %809, %810 : vector<2x32xf32>
      %812 = vector.extract_strided_slice %806 {offsets = [0, 32], sizes = [2, 32], strides = [1, 1]} : vector<2x128xf32> to vector<2x32xf32>
      %813 = arith.mulf %812, %801 : vector<2x32xf32>
      %814 = vector.extract_strided_slice %806 {offsets = [0, 64], sizes = [2, 32], strides = [1, 1]} : vector<2x128xf32> to vector<2x32xf32>
      %815 = arith.mulf %814, %811 : vector<2x32xf32>
      %816 = arith.addf %813, %815 : vector<2x32xf32>
      %817 = vector.extract_strided_slice %806 {offsets = [0, 96], sizes = [2, 32], strides = [1, 1]} : vector<2x128xf32> to vector<2x32xf32>
      %818 = math.tanh %816 : vector<2x32xf32>
      %819 = arith.mulf %817, %818 : vector<2x32xf32>
      %c0_294 = arith.constant 0 : index
      %c0_295 = arith.constant 0 : index
      %820 = vector.load %arg6[%c0_294, %c0_295] : memref<2x32xf32, #tpu.memory_space<vmem>>, vector<2x32xf32>
      tpu.vector_store %arg6[%c0_294, %c0_295], %819 {strides = array<i32>} : memref<2x32xf32, #tpu.memory_space<vmem>>, vector<2x32xf32>,
      %c0_296 = arith.constant 0 : index
      %c0_297 = arith.constant 0 : index
      %821 = vector.load %arg7[%c0_296, %c0_297] : memref<2x32xf32, #tpu.memory_space<vmem>>, vector<2x32xf32>
      tpu.vector_store %arg7[%c0_296, %c0_297], %816 {strides = array<i32>} : memref<2x32xf32, #tpu.memory_space<vmem>>, vector<2x32xf32>,
      %822 = vector.shape_cast %819 : vector<2x32xf32> to vector<1x2x32xf32>
      %c10_i32_298 = arith.constant 10 : i32
      %823 = arith.subi %c25_i32, %c10_i32_298 : i32
      %c1_i32_299 = arith.constant 1 : i32
      %824 = arith.subi %823, %c1_i32_299 : i32
      %825 = arith.index_cast %824 : i32 to index
      %c0_300 = arith.constant 0 : index
      %c0_301 = arith.constant 0 : index
      %826 = vector.load %arg8[%825, %c0_300, %c0_301] : memref<16x2x32xf32, #tpu.memory_space<vmem>>, vector<1x2x32xf32>
      tpu.vector_store %arg8[%825, %c0_300, %c0_301], %822 {strides = array<i32>} : memref<16x2x32xf32, #tpu.memory_space<vmem>>, vector<1x2x32xf32>,
    } else {
    }
    %c26_i32 = arith.constant 26 : i32
    %c0_269 = arith.constant 0 : index
    %c0_270 = arith.constant 0 : index
    %761 = vector.load %arg6[%c0_269, %c0_270] : memref<2x32xf32, #tpu.memory_space<vmem>>, vector<2x32xf32>
    %762 = tpu.concatenate %757, %761 in 1 : vector<2x32xf32>, vector<2x32xf32> -> vector<2x64xf32>
    %cst_271 = arith.constant dense<0.000000e+00> : vector<2x256xf32>
    %763 = tpu.matmul %762, %4, %cst_271 {dimension_numbers = #tpu.dot_dimension_numbers<[1], [0], [0], [1], [0, 0, 1, 1], [], []>} : vector<2x64xf32>, vector<64x256xf32>, vector<2x256xf32> -> vector<2x256xf32>
    %764 = vector.extract_strided_slice %763 {offsets = [0, 128], sizes = [2, 128], strides = [1, 1]} : vector<2x256xf32> to vector<2x128xf32>
    %765 = vector.broadcast %5 : vector<1x128xf32> to vector<2x128xf32>
    %766 = arith.addf %764, %765 : vector<2x128xf32>
    %c0_272 = arith.constant 0 : index
    %c0_273 = arith.constant 0 : index
    %767 = vector.load %arg7[%c0_272, %c0_273] : memref<2x32xf32, #tpu.memory_space<vmem>>, vector<2x32xf32>
    %768 = arith.negf %766 : vector<2x128xf32>
    %769 = math.exp %768 : vector<2x128xf32>
    %cst_274 = arith.constant 1.000000e+00 : f32
    %770 = vector.broadcast %cst_274 : f32 to vector<2x128xf32>
    %771 = arith.addf %770, %769 : vector<2x128xf32>
    %772 = arith.divf %770, %771 : vector<2x128xf32>
    %773 = vector.extract_strided_slice %772 {offsets = [0, 0], sizes = [2, 32], strides = [1, 1]} : vector<2x128xf32> to vector<2x32xf32>
    %cst_275 = arith.constant 2.000000e+00 : f32
    %774 = vector.broadcast %cst_275 : f32 to vector<2x32xf32>
    %775 = arith.mulf %774, %773 : vector<2x32xf32>
    %cst_276 = arith.constant 1.000000e+00 : f32
    %776 = vector.broadcast %cst_276 : f32 to vector<2x32xf32>
    %777 = arith.subf %775, %776 : vector<2x32xf32>
    %778 = vector.extract_strided_slice %772 {offsets = [0, 32], sizes = [2, 32], strides = [1, 1]} : vector<2x128xf32> to vector<2x32xf32>
    %779 = arith.mulf %778, %767 : vector<2x32xf32>
    %780 = vector.extract_strided_slice %772 {offsets = [0, 64], sizes = [2, 32], strides = [1, 1]} : vector<2x128xf32> to vector<2x32xf32>
    %781 = arith.mulf %780, %777 : vector<2x32xf32>
    %782 = arith.addf %779, %781 : vector<2x32xf32>
    %783 = vector.extract_strided_slice %772 {offsets = [0, 96], sizes = [2, 32], strides = [1, 1]} : vector<2x128xf32> to vector<2x32xf32>
    %784 = math.tanh %782 : vector<2x32xf32>
    %785 = arith.mulf %783, %784 : vector<2x32xf32>
    %786 = vector.shape_cast %785 : vector<2x32xf32> to vector<1x2x32xf32>
    %c15 = arith.constant 15 : index
    %c0_277 = arith.constant 0 : index
    %c0_278 = arith.constant 0 : index
    %787 = vector.load %arg8[%c15, %c0_277, %c0_278] : memref<16x2x32xf32, #tpu.memory_space<vmem>>, vector<1x2x32xf32>
    tpu.vector_store %arg8[%c15, %c0_277, %c0_278], %786 {strides = array<i32>} : memref<16x2x32xf32, #tpu.memory_space<vmem>>, vector<1x2x32xf32>,
    %c0_279 = arith.constant 0 : index
    %c0_280 = arith.constant 0 : index
    %c0_281 = arith.constant 0 : index
    %788 = vector.load %arg8[%c0_279, %c0_280, %c0_281] : memref<16x2x32xf32, #tpu.memory_space<vmem>>, vector<16x2x32xf32>
    %c0_282 = arith.constant 0 : index
    %c0_283 = arith.constant 0 : index
    %789 = vector.load %arg3[%c0_282, %c0_283] : memref<1x32xf32, #tpu.memory_space<vmem>>, vector<1x32xf32>
    %790 = vector.shape_cast %789 : vector<1x32xf32> to vector<1x1x32xf32>
    %791 = vector.broadcast %790 : vector<1x1x32xf32> to vector<16x2x32xf32>
    %792 = arith.mulf %788, %791 : vector<16x2x32xf32>
    %cst_284 = arith.constant dense<0.000000e+00> : vector<16x2xf32>
    %793 = vector.multi_reduction <add>, %792, %cst_284 [2] : vector<16x2x32xf32> to vector<16x2xf32>
    %c0_285 = arith.constant 0 : index
    %c0_286 = arith.constant 0 : index
    %794 = vector.load %arg4[%c0_285, %c0_286] : memref<1x1xf32, #tpu.memory_space<vmem>>, vector<1x1xf32>
    %795 = vector.broadcast %794 : vector<1x1xf32> to vector<16x2xf32>
    %796 = arith.addf %793, %795 : vector<16x2xf32>
    %c0_287 = arith.constant 0 : index
    %c0_288 = arith.constant 0 : index
    %797 = vector.load %arg5[%c0_287, %c0_288] : memref<16x2xf32, #tpu.memory_space<vmem>>, vector<16x2xf32>
    tpu.vector_store %arg5[%c0_287, %c0_288], %796 {strides = array<i32>} : memref<16x2xf32, #tpu.memory_space<vmem>>, vector<16x2xf32>,
    return
  }
}

</mosaic_0001>

<llo_original>
// kernel: tpu_custom_call.1
$region0: #{tpu_custom_call.1}
  #allocation0 [shape = 'u32[]', space=smem, size = 0x4, offset = 0x4, fixed_abs, tag = 'smem constant byte address 0x4 - core index']
  #allocation1 [shape = 'u32[144,128]{1,0:T(1,128)}', space=vmem, size = 0x12000, scoped, tag = 'internal scratch']
  #allocation2 [shape = 'f32[2,32]{1,0:T(2,128)}', space=vmem, size = 0x400, scoped, tag = 'scratch operand']
  #allocation3 [shape = 'f32[2,32]{1,0:T(2,128)}', space=vmem, size = 0x400, scoped, tag = 'scratch operand']
  #allocation4 [shape = 'f32[16,2,32]{2,1,0:T(2,128)}', space=vmem, size = 0x4000, scoped, tag = 'scratch operand']
  #allocation5 [shape = 'f32[1,1]{1,0:T(1,128)S(1)}', space=vmem, size = 0x200, scoped, tag = 'scoped memory for tpu_custom_call.1']
  %s0 = inlined_call_operand.hbm [shape: f32[26,2,128], index: 0, kind: input, shape index: {}]
  %s1 = inlined_call_operand.hbm [shape: f32[64,256], index: 1, kind: input, shape index: {}]
  %s2 = inlined_call_operand.vmem [shape: f32[1,128], index: 2, kind: input, shape index: {}]
  %s3 = inlined_call_operand.vmem [shape: f32[1,32], index: 3, kind: input, shape index: {}]
  %s4 = inlined_call_operand.<no memory space> [shape: f32[1,1], index: 4, kind: input, shape index: {}]
  %s5 = inlined_call_operand.vmem [shape: f32[16,2], index: 5, kind: output, shape index: {}]
  %s6 = sld [smem:[#allocation0]]
  $region38: #{tpu_custom_call.1} parent=0
    _
  %s8 = ssub.s32 1, %s6
  %s9 = scalar_select 0, %s8, %s6
  %v10 = vstv %s4
  %11 = vst [vmem:[#allocation5] sm:$0x1] %v10
  $region1: #{tpu_custom_call.1} parent=0
    #allocation6 [shape = 'u8[26624]{0}', space=vmem, size = 0x6800, scoped, tag = 'input window, operand 0, single buffered']
    #allocation7 [shape = 's32[1]{0}', space=sflag, size = 0x4, scoped, tag = 'scoped memory for tpu_custom_call.1']
    #allocation8 [shape = 'u8[65536]{0}', space=vmem, size = 0x10000, scoped, tag = 'input window, operand 1, single buffered']
    #allocation9 [shape = 's32[1]{0}', space=sflag, size = 0x4, scoped, tag = 'scoped memory for tpu_custom_call.1']
    %12 = vsyncpa [#allocation7], 0
    %13 = vsyncpa [#allocation9], 0
    // Predicated region
    $region2: #{tpu_custom_call.1} parent=1 // pred_check
      _
    $region3: #{tpu_custom_call.1} parent=1 // pred_check_branch
      %15 = sbr.rel (0) target = $region5
    $region4: #{tpu_custom_call.1} parent=1 // pred_region
      %s17 = ssub.s32 832, 832
      %18 = vsyncadd [#allocation7], %s17
      %s19 = sshll.u32 [#allocation6], 4
      %s20 = int_to_ptr.vmem [resolvable:$true] %s19
      %25 = dma.hbm_to_vmem [thread:$0]  %s0, 832, %s20, [#allocation7], 32, 32, 2
    $region5: #{tpu_custom_call.1} parent=1 // pred_fallthru
      _
    // Predicated region
    $region6: #{tpu_custom_call.1} parent=1 // pred_check
      _
    $region7: #{tpu_custom_call.1} parent=1 // pred_check_branch
      %27 = sbr.rel (0) target = $region9
    $region8: #{tpu_custom_call.1} parent=1 // pred_region
      %s29 = ssub.s32 2048, 2048
      %30 = vsyncadd [#allocation9], %s29
      %s31 = sshll.u32 [#allocation8], 4
      %s32 = int_to_ptr.vmem [resolvable:$true] %s31
      %37 = dma.hbm_to_vmem [thread:$0]  %s1, 2048, %s32, [#allocation9], 256, 256, 16
    $region9: #{tpu_custom_call.1} parent=1 // pred_fallthru
      _
    // Predicated region
    $region10: #{tpu_custom_call.1} parent=1 // pred_check
      _
    $region11: #{tpu_custom_call.1} parent=1 // pred_check_branch
      %39 = sbr.rel (0) target = $region13
    $region12: #{tpu_custom_call.1} parent=1 // pred_region
      _
    $region13: #{tpu_custom_call.1} parent=1 // pred_fallthru
      _
    // Predicated region
    $region14: #{tpu_custom_call.1} parent=1 // pred_check
      _
    $region15: #{tpu_custom_call.1} parent=1 // pred_check_branch
      %41 = sbr.rel (0) target = $region17
    $region16: #{tpu_custom_call.1} parent=1 // pred_region
      _
    $region17: #{tpu_custom_call.1} parent=1 // pred_fallthru
      _
    // Predicated region
    $region18: #{tpu_custom_call.1} parent=1 // pred_check
      _
    $region19: #{tpu_custom_call.1} parent=1 // pred_check_branch
      %43 = sbr.rel (0) target = $region21
    $region20: #{tpu_custom_call.1} parent=1 // pred_region
      _
    $region21: #{tpu_custom_call.1} parent=1 // pred_fallthru
      _
    // Predicated region
    $region22: #{tpu_custom_call.1} parent=1 // pred_check
      _
    $region23: #{tpu_custom_call.1} parent=1 // pred_check_branch
      %45 = sbr.rel (0) target = $region25
    $region24: #{tpu_custom_call.1} parent=1 // pred_region
      %46 = dma.done [#allocation7], 832
    $region25: #{tpu_custom_call.1} parent=1 // pred_fallthru
      _
    // Predicated region
    $region26: #{tpu_custom_call.1} parent=1 // pred_check
      _
    $region27: #{tpu_custom_call.1} parent=1 // pred_check_branch
      %48 = sbr.rel (0) target = $region29
    $region28: #{tpu_custom_call.1} parent=1 // pred_region
      %49 = dma.done [#allocation9], 2048
    $region29: #{tpu_custom_call.1} parent=1 // pred_fallthru
      _
    %vm50 = vcmask 254976
    %51 = vst.msk [vmem:[#allocation2] sm:$0x3] %vm50, 0.0
    %52 = vst.msk [vmem:[#allocation3] sm:$0x3] %vm50, 0.0
    %v53 = vld [vmem:[#allocation8] sm:$0xff]
    %v54 = vld [vmem:[#allocation8 + $0x8] sm:$0xff]
    %v55 = vld [vmem:[#allocation8 + $0x10] sm:$0xff]
    %v56 = vld [vmem:[#allocation8 + $0x18] sm:$0xff]
    %v57 = vld [vmem:[#allocation8 + $0x20] sm:$0xff]
    %v58 = vld [vmem:[#allocation8 + $0x28] sm:$0xff]
    %v59 = vld [vmem:[#allocation8 + $0x30] sm:$0xff]
    %v60 = vld [vmem:[#allocation8 + $0x38] sm:$0xff]
    %v61 = vld [vmem:[#allocation8 + $0x40] sm:$0xff]
    %v62 = vld [vmem:[#allocation8 + $0x48] sm:$0xff]
    %v63 = vld [vmem:[#allocation8 + $0x50] sm:$0xff]
    %v64 = vld [vmem:[#allocation8 + $0x58] sm:$0xff]
    %v65 = vld [vmem:[#allocation8 + $0x60] sm:$0xff]
    %v66 = vld [vmem:[#allocation8 + $0x68] sm:$0xff]
    %v67 = vld [vmem:[#allocation8 + $0x70] sm:$0xff]
    %v68 = vld [vmem:[#allocation8 + $0x78] sm:$0xff]
    %v69 = vld [vmem:[%s2] sm:$0x1]
    %v70 = vld [vmem:[#allocation2] sm:$0x3]
    %72 = vrot.lane.b32.xlu0 %v70, 32
    %v73 = vpop.permute.xlu0 %72
    %vm75 = vcmask 261120
    %v76 = vsel %vm75, 0.0, %v73
    %vm77 = vcmask 523264
    %v79 = vsel %vm77, %v76, 0
    %81 = vmatprep.subr.mxu0 0.0
    %82 = vmatpush1.msra.mxu0 0.0
    %83 = vmatprep.subr.mxu0 0.0
    %84 = vmatpush1.msra.mxu0 0.0
    %85 = vmatprep.subr.mxu0 0.0
    %86 = vmatpush1.msra.mxu0 0.0
    %87 = vmatprep.subr.mxu0 0.0
    %88 = vmatpush1.msra.mxu0 0.0
    %89 = vmatprep.subr.mxu0 0.0
    %90 = vmatpush1.msra.mxu0 0.0
    %91 = vmatprep.subr.mxu0 0.0
    %92 = vmatpush1.msra.mxu0 0.0
    %93 = vmatprep.subr.mxu0 0.0
    %94 = vmatpush1.msra.mxu0 0.0
    %95 = vmatprep.subr.mxu0 0.0
    %96 = vmatpush1.msra.mxu0 0.0
    %97 = vmatprep.subr.mxu0 %v68
    %98 = vmatpush1.msra.mxu0 %v67
    %99 = vmatprep.subr.mxu0 %v66
    %100 = vmatpush1.msra.mxu0 %v65
    %101 = vmatprep.subr.mxu0 %v64
    %102 = vmatpush1.msra.mxu0 %v63
    %103 = vmatprep.subr.mxu0 %v62
    %104 = vmatpush1.msra.mxu0 %v61
    %105 = vmatprep.subr.mxu0 %v60
    %106 = vmatpush1.msra.mxu0 %v59
    %107 = vmatprep.subr.mxu0 %v58
    %108 = vmatpush1.msra.mxu0 %v57
    %109 = vmatprep.subr.mxu0 %v56
    %110 = vmatpush1.msra.mxu0 %v55
    %111 = vmatprep.subr.mxu0 %v54
    %112 = vmatpush1.msra.mxu0 %v53
    %113 = vmatprep.subr.mxu0 0.0
    %114 = vmatpush2.msra.mxu0 0.0
    %115 = vmatprep.subr.mxu0 0.0
    %116 = vmatpush2.msra.mxu0 0.0
    %117 = vmatprep.subr.mxu0 0.0
    %118 = vmatpush2.msra.mxu0 0.0
    %119 = vmatprep.subr.mxu0 0.0
    %120 = vmatpush2.msra.mxu0 0.0
    %121 = vmatprep.subr.mxu0 0.0
    %122 = vmatpush2.msra.mxu0 0.0
    %123 = vmatprep.subr.mxu0 0.0
    %124 = vmatpush2.msra.mxu0 0.0
    %125 = vmatprep.subr.mxu0 0.0
    %126 = vmatpush2.msra.mxu0 0.0
    %127 = vmatprep.subr.mxu0 0.0
    %128 = vmatpush2.msra.mxu0 0.0
    %129 = vmatprep.subr.mxu0 0.0
    %130 = vmatpush2.msra.mxu0 0.0
    %131 = vmatprep.subr.mxu0 0.0
    %132 = vmatpush2.msra.mxu0 0.0
    %133 = vmatprep.subr.mxu0 0.0
    %134 = vmatpush2.msra.mxu0 0.0
    %135 = vmatprep.subr.mxu0 0.0
    %136 = vmatpush2.msra.mxu0 0.0
    %137 = vmatprep.subr.mxu0 0.0
    %138 = vmatpush2.msra.mxu0 0.0
    %139 = vmatprep.subr.mxu0 0.0
    %140 = vmatpush2.msra.mxu0 0.0
    %141 = vmatprep.subr.mxu0 0.0
    %142 = vmatpush2.msra.mxu0 0.0
    %143 = vmatprep.subr.mxu0 0.0
    %144 = vmatpush2.msra.mxu0 0.0
    %145 = vmatprep.mubr.f32.mxu0 0.0
    %146 = vmatmul.mubr.f32.gmra.mxu0 %v79
    %v147 = vpop.f32.mrf.mxu0
    %v148 = vadd.f32 0.0, %v147
    %v149 = vpop.f32.mrf.mxu0
    %150 = vdwg.mxu0
    %v151 = vld [vmem:[#allocation6] sm:$0x3]
    %v152 = vadd.f32 %v151, %v148
    %v153 = vxor.u32 %v152, 2147483648
    %v154 = vmul.f32 %v153, 1.442695
    %v155 = vpow.pop %v154
    %v156 = vadd.f32 %v155, 1.0
    %v157 = vrcp.pop %v156
    %v158 = vmul.f32 1.0, %v157
    %v159 = vmul.f32 %v158, 2.0
    %v160 = vsub.f32 %v159, 1.0
    %v161 = vmul.f32 %v158, 0.0
    %163 = vrot.lane.b32.xlu0 %v160, 64
    %v164 = vpop.permute.xlu0 %163
    %v166 = vmul.f32 %v158, %v164
    %168 = vrot.lane.b32.xlu0 %v166, 96
    %v169 = vpop.permute.xlu0 %168
    %v171 = vadd.f32 %v161, %v169
    %v172 = vtanh.pop %v171
    %174 = vrot.lane.b32.xlu0 %v172, 64
    %v175 = vpop.permute.xlu0 %174
    %v177 = vmul.f32 %v158, %v175
    %179 = vrot.lane.b32.xlu0 %v177, 32
    %v180 = vpop.permute.xlu0 %179
    %v182 = vsel %vm75, %v180, %v73
    %v184 = vsel %vm77, %v182, 0
    %186 = vmatprep.subr.mxu0 0.0
    %187 = vmatpush1.msra.mxu0 0.0
    %188 = vmatprep.subr.mxu0 0.0
    %189 = vmatpush1.msra.mxu0 0.0
    %190 = vmatprep.subr.mxu0 0.0
    %191 = vmatpush1.msra.mxu0 0.0
    %192 = vmatprep.subr.mxu0 0.0
    %193 = vmatpush1.msra.mxu0 0.0
    %194 = vmatprep.subr.mxu0 0.0
    %195 = vmatpush1.msra.mxu0 0.0
    %196 = vmatprep.subr.mxu0 0.0
    %197 = vmatpush1.msra.mxu0 0.0
    %198 = vmatprep.subr.mxu0 0.0
    %199 = vmatpush1.msra.mxu0 0.0
    %200 = vmatprep.subr.mxu0 0.0
    %201 = vmatpush1.msra.mxu0 0.0
    %202 = vmatprep.subr.mxu0 %v68
    %203 = vmatpush1.msra.mxu0 %v67
    %204 = vmatprep.subr.mxu0 %v66
    %205 = vmatpush1.msra.mxu0 %v65
    %206 = vmatprep.subr.mxu0 %v64
    %207 = vmatpush1.msra.mxu0 %v63
    %208 = vmatprep.subr.mxu0 %v62
    %209 = vmatpush1.msra.mxu0 %v61
    %210 = vmatprep.subr.mxu0 %v60
    %211 = vmatpush1.msra.mxu0 %v59
    %212 = vmatprep.subr.mxu0 %v58
    %213 = vmatpush1.msra.mxu0 %v57
    %214 = vmatprep.subr.mxu0 %v56
    %215 = vmatpush1.msra.mxu0 %v55
    %216 = vmatprep.subr.mxu0 %v54
    %217 = vmatpush1.msra.mxu0 %v53
    %218 = vmatprep.subr.mxu0 0.0
    %219 = vmatpush2.msra.mxu0 0.0
    %220 = vmatprep.subr.mxu0 0.0
    %221 = vmatpush2.msra.mxu0 0.0
    %222 = vmatprep.subr.mxu0 0.0
    %223 = vmatpush2.msra.mxu0 0.0
    %224 = vmatprep.subr.mxu0 0.0
    %225 = vmatpush2.msra.mxu0 0.0
    %226 = vmatprep.subr.mxu0 0.0
    %227 = vmatpush2.msra.mxu0 0.0
    %228 = vmatprep.subr.mxu0 0.0
    %229 = vmatpush2.msra.mxu0 0.0
    %230 = vmatprep.subr.mxu0 0.0
    %231 = vmatpush2.msra.mxu0 0.0
    %232 = vmatprep.subr.mxu0 0.0
    %233 = vmatpush2.msra.mxu0 0.0
    %234 = vmatprep.subr.mxu0 0.0
    %235 = vmatpush2.msra.mxu0 0.0
    %236 = vmatprep.subr.mxu0 0.0
    %237 = vmatpush2.msra.mxu0 0.0
    %238 = vmatprep.subr.mxu0 0.0
    %239 = vmatpush2.msra.mxu0 0.0
    %240 = vmatprep.subr.mxu0 0.0
    %241 = vmatpush2.msra.mxu0 0.0
    %242 = vmatprep.subr.mxu0 0.0
    %243 = vmatpush2.msra.mxu0 0.0
    %244 = vmatprep.subr.mxu0 0.0
    %245 = vmatpush2.msra.mxu0 0.0
    %246 = vmatprep.subr.mxu0 0.0
    %247 = vmatpush2.msra.mxu0 0.0
    %248 = vmatprep.subr.mxu0 0.0
    %249 = vmatpush2.msra.mxu0 0.0
    %250 = vmatprep.mubr.f32.mxu0 0.0
    %251 = vmatmul.mubr.f32.gmra.mxu0 %v184
    %v252 = vpop.f32.mrf.mxu0
    %v253 = vadd.f32 0.0, %v252
    %v254 = vpop.f32.mrf.mxu0
    %255 = vdwg.mxu0
    %s256 = scalar_lea.vmem [#allocation6], 2
    %v257 = vld [vmem:[%s256] sm:$0x3]
    %v258 = vadd.f32 %v257, %v253
    %v259 = vxor.u32 %v258, 2147483648
    %v260 = vmul.f32 %v259, 1.442695
    %v261 = vpow.pop %v260
    %v262 = vadd.f32 %v261, 1.0
    %v263 = vrcp.pop %v262
    %v264 = vmul.f32 1.0, %v263
    %v265 = vmul.f32 %v264, 2.0
    %v266 = vsub.f32 %v265, 1.0
    %v267 = vmul.f32 %v264, %v171
    %269 = vrot.lane.b32.xlu0 %v266, 64
    %v270 = vpop.permute.xlu0 %269
    %v272 = vmul.f32 %v264, %v270
    %274 = vrot.lane.b32.xlu0 %v272, 96
    %v275 = vpop.permute.xlu0 %274
    %v277 = vadd.f32 %v267, %v275
    %v278 = vtanh.pop %v277
    %280 = vrot.lane.b32.xlu0 %v278, 64
    %v281 = vpop.permute.xlu0 %280
    %v283 = vmul.f32 %v264, %v281
    %285 = vrot.lane.b32.xlu0 %v283, 32
    %v286 = vpop.permute.xlu0 %285
    %v288 = vsel %vm75, %v286, %v73
    %v290 = vsel %vm77, %v288, 0
    %292 = vmatprep.subr.mxu0 0.0
    %293 = vmatpush1.msra.mxu0 0.0
    %294 = vmatprep.subr.mxu0 0.0
    %295 = vmatpush1.msra.mxu0 0.0
    %296 = vmatprep.subr.mxu0 0.0
    %297 = vmatpush1.msra.mxu0 0.0
    %298 = vmatprep.subr.mxu0 0.0
    %299 = vmatpush1.msra.mxu0 0.0
    %300 = vmatprep.subr.mxu0 0.0
    %301 = vmatpush1.msra.mxu0 0.0
    %302 = vmatprep.subr.mxu0 0.0
    %303 = vmatpush1.msra.mxu0 0.0
    %304 = vmatprep.subr.mxu0 0.0
    %305 = vmatpush1.msra.mxu0 0.0
    %306 = vmatprep.subr.mxu0 0.0
    %307 = vmatpush1.msra.mxu0 0.0
    %308 = vmatprep.subr.mxu0 %v68
    %309 = vmatpush1.msra.mxu0 %v67
    %310 = vmatprep.subr.mxu0 %v66
    %311 = vmatpush1.msra.mxu0 %v65
    %312 = vmatprep.subr.mxu0 %v64
    %313 = vmatpush1.msra.mxu0 %v63
    %314 = vmatprep.subr.mxu0 %v62
    %315 = vmatpush1.msra.mxu0 %v61
    %316 = vmatprep.subr.mxu0 %v60
    %317 = vmatpush1.msra.mxu0 %v59
    %318 = vmatprep.subr.mxu0 %v58
    %319 = vmatpush1.msra.mxu0 %v57
    %320 = vmatprep.subr.mxu0 %v56
    %321 = vmatpush1.msra.mxu0 %v55
    %322 = vmatprep.subr.mxu0 %v54
    %323 = vmatpush1.msra.mxu0 %v53
    %324 = vmatprep.subr.mxu0 0.0
    %325 = vmatpush2.msra.mxu0 0.0
    %326 = vmatprep.subr.mxu0 0.0
    %327 = vmatpush2.msra.mxu0 0.0
    %328 = vmatprep.subr.mxu0 0.0
    %329 = vmatpush2.msra.mxu0 0.0
    %330 = vmatprep.subr.mxu0 0.0
    %331 = vmatpush2.msra.mxu0 0.0
    %332 = vmatprep.subr.mxu0 0.0
    %333 = vmatpush2.msra.mxu0 0.0
    %334 = vmatprep.subr.mxu0 0.0
    %335 = vmatpush2.msra.mxu0 0.0
    %336 = vmatprep.subr.mxu0 0.0
    %337 = vmatpush2.msra.mxu0 0.0
    %338 = vmatprep.subr.mxu0 0.0
    %339 = vmatpush2.msra.mxu0 0.0
    %340 = vmatprep.subr.mxu0 0.0
    %341 = vmatpush2.msra.mxu0 0.0
    %342 = vmatprep.subr.mxu0 0.0
    %343 = vmatpush2.msra.mxu0 0.0
    %344 = vmatprep.subr.mxu0 0.0
    %345 = vmatpush2.msra.mxu0 0.0
    %346 = vmatprep.subr.mxu0 0.0
    %347 = vmatpush2.msra.mxu0 0.0
    %348 = vmatprep.subr.mxu0 0.0
    %349 = vmatpush2.msra.mxu0 0.0
    %350 = vmatprep.subr.mxu0 0.0
    %351 = vmatpush2.msra.mxu0 0.0
    %352 = vmatprep.subr.mxu0 0.0
    %353 = vmatpush2.msra.mxu0 0.0
    %354 = vmatprep.subr.mxu0 0.0
    %355 = vmatpush2.msra.mxu0 0.0
    %356 = vmatprep.mubr.f32.mxu0 0.0
    %357 = vmatmul.mubr.f32.gmra.mxu0 %v290
    %v358 = vpop.f32.mrf.mxu0
    %v359 = vadd.f32 0.0, %v358
    %v360 = vpop.f32.mrf.mxu0
    %361 = vdwg.mxu0
    %s362 = scalar_lea.vmem [#allocation6], 4
    %v363 = vld [vmem:[%s362] sm:$0x3]
    %v364 = vadd.f32 %v363, %v359
    %v365 = vxor.u32 %v364, 2147483648
    %v366 = vmul.f32 %v365, 1.442695
    %v367 = vpow.pop %v366
    %v368 = vadd.f32 %v367, 1.0
    %v369 = vrcp.pop %v368
    %v370 = vmul.f32 1.0, %v369
    %v371 = vmul.f32 %v370, 2.0
    %v372 = vsub.f32 %v371, 1.0
    %v373 = vmul.f32 %v370, %v277
    %375 = vrot.lane.b32.xlu0 %v372, 64
    %v376 = vpop.permute.xlu0 %375
    %v378 = vmul.f32 %v370, %v376
    %380 = vrot.lane.b32.xlu0 %v378, 96
    %v381 = vpop.permute.xlu0 %380
    %v383 = vadd.f32 %v373, %v381
    %v384 = vtanh.pop %v383
    %386 = vrot.lane.b32.xlu0 %v384, 64
    %v387 = vpop.permute.xlu0 %386
    %v389 = vmul.f32 %v370, %v387
    %391 = vrot.lane.b32.xlu0 %v389, 32
    %v392 = vpop.permute.xlu0 %391
    %v394 = vsel %vm75, %v392, %v73
    %v396 = vsel %vm77, %v394, 0
    %398 = vmatprep.subr.mxu0 0.0
    %399 = vmatpush1.msra.mxu0 0.0
    %400 = vmatprep.subr.mxu0 0.0
    %401 = vmatpush1.msra.mxu0 0.0
    %402 = vmatprep.subr.mxu0 0.0
    %403 = vmatpush1.msra.mxu0 0.0
    %404 = vmatprep.subr.mxu0 0.0
    %405 = vmatpush1.msra.mxu0 0.0
    %406 = vmatprep.subr.mxu0 0.0
    %407 = vmatpush1.msra.mxu0 0.0
    %408 = vmatprep.subr.mxu0 0.0
    %409 = vmatpush1.msra.mxu0 0.0
    %410 = vmatprep.subr.mxu0 0.0
    %411 = vmatpush1.msra.mxu0 0.0
    %412 = vmatprep.subr.mxu0 0.0
    %413 = vmatpush1.msra.mxu0 0.0
    %414 = vmatprep.subr.mxu0 %v68
    %415 = vmatpush1.msra.mxu0 %v67
    %416 = vmatprep.subr.mxu0 %v66
    %417 = vmatpush1.msra.mxu0 %v65
    %418 = vmatprep.subr.mxu0 %v64
    %419 = vmatpush1.msra.mxu0 %v63
    %420 = vmatprep.subr.mxu0 %v62
    %421 = vmatpush1.msra.mxu0 %v61
    %422 = vmatprep.subr.mxu0 %v60
    %423 = vmatpush1.msra.mxu0 %v59
    %424 = vmatprep.subr.mxu0 %v58
    %425 = vmatpush1.msra.mxu0 %v57
    %426 = vmatprep.subr.mxu0 %v56
    %427 = vmatpush1.msra.mxu0 %v55
    %428 = vmatprep.subr.mxu0 %v54
    %429 = vmatpush1.msra.mxu0 %v53
    %430 = vmatprep.subr.mxu0 0.0
    %431 = vmatpush2.msra.mxu0 0.0
    %432 = vmatprep.subr.mxu0 0.0
    %433 = vmatpush2.msra.mxu0 0.0
    %434 = vmatprep.subr.mxu0 0.0
    %435 = vmatpush2.msra.mxu0 0.0
    %436 = vmatprep.subr.mxu0 0.0
    %437 = vmatpush2.msra.mxu0 0.0
    %438 = vmatprep.subr.mxu0 0.0
    %439 = vmatpush2.msra.mxu0 0.0
    %440 = vmatprep.subr.mxu0 0.0
    %441 = vmatpush2.msra.mxu0 0.0
    %442 = vmatprep.subr.mxu0 0.0
    %443 = vmatpush2.msra.mxu0 0.0
    %444 = vmatprep.subr.mxu0 0.0
    %445 = vmatpush2.msra.mxu0 0.0
    %446 = vmatprep.subr.mxu0 0.0
    %447 = vmatpush2.msra.mxu0 0.0
    %448 = vmatprep.subr.mxu0 0.0
    %449 = vmatpush2.msra.mxu0 0.0
    %450 = vmatprep.subr.mxu0 0.0
    %451 = vmatpush2.msra.mxu0 0.0
    %452 = vmatprep.subr.mxu0 0.0
    %453 = vmatpush2.msra.mxu0 0.0
    %454 = vmatprep.subr.mxu0 0.0
    %455 = vmatpush2.msra.mxu0 0.0
    %456 = vmatprep.subr.mxu0 0.0
    %457 = vmatpush2.msra.mxu0 0.0
    %458 = vmatprep.subr.mxu0 0.0
    %459 = vmatpush2.msra.mxu0 0.0
    %460 = vmatprep.subr.mxu0 0.0
    %461 = vmatpush2.msra.mxu0 0.0
    %462 = vmatprep.mubr.f32.mxu0 0.0
    %463 = vmatmul.mubr.f32.gmra.mxu0 %v396
    %v464 = vpop.f32.mrf.mxu0
    %v465 = vadd.f32 0.0, %v464
    %v466 = vpop.f32.mrf.mxu0
    %467 = vdwg.mxu0
    %s468 = scalar_lea.vmem [#allocation6], 6
    %v469 = vld [vmem:[%s468] sm:$0x3]
    %v470 = vadd.f32 %v469, %v465
    %v471 = vxor.u32 %v470, 2147483648
    %v472 = vmul.f32 %v471, 1.442695
    %v473 = vpow.pop %v472
    %v474 = vadd.f32 %v473, 1.0
    %v475 = vrcp.pop %v474
    %v476 = vmul.f32 1.0, %v475
    %v477 = vmul.f32 %v476, 2.0
    %v478 = vsub.f32 %v477, 1.0
    %v479 = vmul.f32 %v476, %v383
    %481 = vrot.lane.b32.xlu0 %v478, 64
    %v482 = vpop.permute.xlu0 %481
    %v484 = vmul.f32 %v476, %v482
    %486 = vrot.lane.b32.xlu0 %v484, 96
    %v487 = vpop.permute.xlu0 %486
    %v489 = vadd.f32 %v479, %v487
    %v490 = vtanh.pop %v489
    %492 = vrot.lane.b32.xlu0 %v490, 64
    %v493 = vpop.permute.xlu0 %492
    %v495 = vmul.f32 %v476, %v493
    %497 = vrot.lane.b32.xlu0 %v495, 32
    %v498 = vpop.permute.xlu0 %497
    %v500 = vsel %vm75, %v498, %v73
    %v502 = vsel %vm77, %v500, 0
    %504 = vmatprep.subr.mxu0 0.0
    %505 = vmatpush1.msra.mxu0 0.0
    %506 = vmatprep.subr.mxu0 0.0
    %507 = vmatpush1.msra.mxu0 0.0
    %508 = vmatprep.subr.mxu0 0.0
    %509 = vmatpush1.msra.mxu0 0.0
    %510 = vmatprep.subr.mxu0 0.0
    %511 = vmatpush1.msra.mxu0 0.0
    %512 = vmatprep.subr.mxu0 0.0
    %513 = vmatpush1.msra.mxu0 0.0
    %514 = vmatprep.subr.mxu0 0.0
    %515 = vmatpush1.msra.mxu0 0.0
    %516 = vmatprep.subr.mxu0 0.0
    %517 = vmatpush1.msra.mxu0 0.0
    %518 = vmatprep.subr.mxu0 0.0
    %519 = vmatpush1.msra.mxu0 0.0
    %520 = vmatprep.subr.mxu0 %v68
    %521 = vmatpush1.msra.mxu0 %v67
    %522 = vmatprep.subr.mxu0 %v66
    %523 = vmatpush1.msra.mxu0 %v65
    %524 = vmatprep.subr.mxu0 %v64
    %525 = vmatpush1.msra.mxu0 %v63
    %526 = vmatprep.subr.mxu0 %v62
    %527 = vmatpush1.msra.mxu0 %v61
    %528 = vmatprep.subr.mxu0 %v60
    %529 = vmatpush1.msra.mxu0 %v59
    %530 = vmatprep.subr.mxu0 %v58
    %531 = vmatpush1.msra.mxu0 %v57
    %532 = vmatprep.subr.mxu0 %v56
    %533 = vmatpush1.msra.mxu0 %v55
    %534 = vmatprep.subr.mxu0 %v54
    %535 = vmatpush1.msra.mxu0 %v53
    %536 = vmatprep.subr.mxu0 0.0
    %537 = vmatpush2.msra.mxu0 0.0
    %538 = vmatprep.subr.mxu0 0.0
    %539 = vmatpush2.msra.mxu0 0.0
    %540 = vmatprep.subr.mxu0 0.0
    %541 = vmatpush2.msra.mxu0 0.0
    %542 = vmatprep.subr.mxu0 0.0
    %543 = vmatpush2.msra.mxu0 0.0
    %544 = vmatprep.subr.mxu0 0.0
    %545 = vmatpush2.msra.mxu0 0.0
    %546 = vmatprep.subr.mxu0 0.0
    %547 = vmatpush2.msra.mxu0 0.0
    %548 = vmatprep.subr.mxu0 0.0
    %549 = vmatpush2.msra.mxu0 0.0
    %550 = vmatprep.subr.mxu0 0.0
    %551 = vmatpush2.msra.mxu0 0.0
    %552 = vmatprep.subr.mxu0 0.0
    %553 = vmatpush2.msra.mxu0 0.0
    %554 = vmatprep.subr.mxu0 0.0
    %555 = vmatpush2.msra.mxu0 0.0
    %556 = vmatprep.subr.mxu0 0.0
    %557 = vmatpush2.msra.mxu0 0.0
    %558 = vmatprep.subr.mxu0 0.0
    %559 = vmatpush2.msra.mxu0 0.0
    %560 = vmatprep.subr.mxu0 0.0
    %561 = vmatpush2.msra.mxu0 0.0
    %562 = vmatprep.subr.mxu0 0.0
    %563 = vmatpush2.msra.mxu0 0.0
    %564 = vmatprep.subr.mxu0 0.0
    %565 = vmatpush2.msra.mxu0 0.0
    %566 = vmatprep.subr.mxu0 0.0
    %567 = vmatpush2.msra.mxu0 0.0
    %568 = vmatprep.mubr.f32.mxu0 0.0
    %569 = vmatmul.mubr.f32.gmra.mxu0 %v502
    %v570 = vpop.f32.mrf.mxu0
    %v571 = vadd.f32 0.0, %v570
    %v572 = vpop.f32.mrf.mxu0
    %573 = vdwg.mxu0
    %s574 = scalar_lea.vmem [#allocation6], 8
    %v575 = vld [vmem:[%s574] sm:$0x3]
    %v576 = vadd.f32 %v575, %v571
    %v577 = vxor.u32 %v576, 2147483648
    %v578 = vmul.f32 %v577, 1.442695
    %v579 = vpow.pop %v578
    %v580 = vadd.f32 %v579, 1.0
    %v581 = vrcp.pop %v580
    %v582 = vmul.f32 1.0, %v581
    %v583 = vmul.f32 %v582, 2.0
    %v584 = vsub.f32 %v583, 1.0
    %v585 = vmul.f32 %v582, %v489
    %587 = vrot.lane.b32.xlu0 %v584, 64
    %v588 = vpop.permute.xlu0 %587
    %v590 = vmul.f32 %v582, %v588
    %592 = vrot.lane.b32.xlu0 %v590, 96
    %v593 = vpop.permute.xlu0 %592
    %v595 = vadd.f32 %v585, %v593
    %v596 = vtanh.pop %v595
    %598 = vrot.lane.b32.xlu0 %v596, 64
    %v599 = vpop.permute.xlu0 %598
    %v601 = vmul.f32 %v582, %v599
    %603 = vrot.lane.b32.xlu0 %v601, 32
    %v604 = vpop.permute.xlu0 %603
    %v606 = vsel %vm75, %v604, %v73
    %v608 = vsel %vm77, %v606, 0
    %610 = vmatprep.subr.mxu0 0.0
    %611 = vmatpush1.msra.mxu0 0.0
    %612 = vmatprep.subr.mxu0 0.0
    %613 = vmatpush1.msra.mxu0 0.0
    %614 = vmatprep.subr.mxu0 0.0
    %615 = vmatpush1.msra.mxu0 0.0
    %616 = vmatprep.subr.mxu0 0.0
    %617 = vmatpush1.msra.mxu0 0.0
    %618 = vmatprep.subr.mxu0 0.0
    %619 = vmatpush1.msra.mxu0 0.0
    %620 = vmatprep.subr.mxu0 0.0
    %621 = vmatpush1.msra.mxu0 0.0
    %622 = vmatprep.subr.mxu0 0.0
    %623 = vmatpush1.msra.mxu0 0.0
    %624 = vmatprep.subr.mxu0 0.0
    %625 = vmatpush1.msra.mxu0 0.0
    %626 = vmatprep.subr.mxu0 %v68
    %627 = vmatpush1.msra.mxu0 %v67
    %628 = vmatprep.subr.mxu0 %v66
    %629 = vmatpush1.msra.mxu0 %v65
    %630 = vmatprep.subr.mxu0 %v64
    %631 = vmatpush1.msra.mxu0 %v63
    %632 = vmatprep.subr.mxu0 %v62
    %633 = vmatpush1.msra.mxu0 %v61
    %634 = vmatprep.subr.mxu0 %v60
    %635 = vmatpush1.msra.mxu0 %v59
    %636 = vmatprep.subr.mxu0 %v58
    %637 = vmatpush1.msra.mxu0 %v57
    %638 = vmatprep.subr.mxu0 %v56
    %639 = vmatpush1.msra.mxu0 %v55
    %640 = vmatprep.subr.mxu0 %v54
    %641 = vmatpush1.msra.mxu0 %v53
    %642 = vmatprep.subr.mxu0 0.0
    %643 = vmatpush2.msra.mxu0 0.0
    %644 = vmatprep.subr.mxu0 0.0
    %645 = vmatpush2.msra.mxu0 0.0
    %646 = vmatprep.subr.mxu0 0.0
    %647 = vmatpush2.msra.mxu0 0.0
    %648 = vmatprep.subr.mxu0 0.0
    %649 = vmatpush2.msra.mxu0 0.0
    %650 = vmatprep.subr.mxu0 0.0
    %651 = vmatpush2.msra.mxu0 0.0
    %652 = vmatprep.subr.mxu0 0.0
    %653 = vmatpush2.msra.mxu0 0.0
    %654 = vmatprep.subr.mxu0 0.0
    %655 = vmatpush2.msra.mxu0 0.0
    %656 = vmatprep.subr.mxu0 0.0
    %657 = vmatpush2.msra.mxu0 0.0
    %658 = vmatprep.subr.mxu0 0.0
    %659 = vmatpush2.msra.mxu0 0.0
    %660 = vmatprep.subr.mxu0 0.0
    %661 = vmatpush2.msra.mxu0 0.0
    %662 = vmatprep.subr.mxu0 0.0
    %663 = vmatpush2.msra.mxu0 0.0
    %664 = vmatprep.subr.mxu0 0.0
    %665 = vmatpush2.msra.mxu0 0.0
    %666 = vmatprep.subr.mxu0 0.0
    %667 = vmatpush2.msra.mxu0 0.0
    %668 = vmatprep.subr.mxu0 0.0
    %669 = vmatpush2.msra.mxu0 0.0
    %670 = vmatprep.subr.mxu0 0.0
    %671 = vmatpush2.msra.mxu0 0.0
    %672 = vmatprep.subr.mxu0 0.0
    %673 = vmatpush2.msra.mxu0 0.0
    %674 = vmatprep.mubr.f32.mxu0 0.0
    %675 = vmatmul.mubr.f32.gmra.mxu0 %v608
    %v676 = vpop.f32.mrf.mxu0
    %v677 = vadd.f32 0.0, %v676
    %v678 = vpop.f32.mrf.mxu0
    %679 = vdwg.mxu0
    %s680 = scalar_lea.vmem [#allocation6], 10
    %v681 = vld [vmem:[%s680] sm:$0x3]
    %v682 = vadd.f32 %v681, %v677
    %v683 = vxor.u32 %v682, 2147483648
    %v684 = vmul.f32 %v683, 1.442695
    %v685 = vpow.pop %v684
    %v686 = vadd.f32 %v685, 1.0
    %v687 = vrcp.pop %v686
    %v688 = vmul.f32 1.0, %v687
    %v689 = vmul.f32 %v688, 2.0
    %v690 = vsub.f32 %v689, 1.0
    %v691 = vmul.f32 %v688, %v595
    %693 = vrot.lane.b32.xlu0 %v690, 64
    %v694 = vpop.permute.xlu0 %693
    %v696 = vmul.f32 %v688, %v694
    %698 = vrot.lane.b32.xlu0 %v696, 96
    %v699 = vpop.permute.xlu0 %698
    %v701 = vadd.f32 %v691, %v699
    %v702 = vtanh.pop %v701
    %704 = vrot.lane.b32.xlu0 %v702, 64
    %v705 = vpop.permute.xlu0 %704
    %v707 = vmul.f32 %v688, %v705
    %709 = vrot.lane.b32.xlu0 %v707, 32
    %v710 = vpop.permute.xlu0 %709
    %v712 = vsel %vm75, %v710, %v73
    %v714 = vsel %vm77, %v712, 0
    %716 = vmatprep.subr.mxu0 0.0
    %717 = vmatpush1.msra.mxu0 0.0
    %718 = vmatprep.subr.mxu0 0.0
    %719 = vmatpush1.msra.mxu0 0.0
    %720 = vmatprep.subr.mxu0 0.0
    %721 = vmatpush1.msra.mxu0 0.0
    %722 = vmatprep.subr.mxu0 0.0
    %723 = vmatpush1.msra.mxu0 0.0
    %724 = vmatprep.subr.mxu0 0.0
    %725 = vmatpush1.msra.mxu0 0.0
    %726 = vmatprep.subr.mxu0 0.0
    %727 = vmatpush1.msra.mxu0 0.0
    %728 = vmatprep.subr.mxu0 0.0
    %729 = vmatpush1.msra.mxu0 0.0
    %730 = vmatprep.subr.mxu0 0.0
    %731 = vmatpush1.msra.mxu0 0.0
    %732 = vmatprep.subr.mxu0 %v68
    %733 = vmatpush1.msra.mxu0 %v67
    %734 = vmatprep.subr.mxu0 %v66
    %735 = vmatpush1.msra.mxu0 %v65
    %736 = vmatprep.subr.mxu0 %v64
    %737 = vmatpush1.msra.mxu0 %v63
    %738 = vmatprep.subr.mxu0 %v62
    %739 = vmatpush1.msra.mxu0 %v61
    %740 = vmatprep.subr.mxu0 %v60
    %741 = vmatpush1.msra.mxu0 %v59
    %742 = vmatprep.subr.mxu0 %v58
    %743 = vmatpush1.msra.mxu0 %v57
    %744 = vmatprep.subr.mxu0 %v56
    %745 = vmatpush1.msra.mxu0 %v55
    %746 = vmatprep.subr.mxu0 %v54
    %747 = vmatpush1.msra.mxu0 %v53
    %748 = vmatprep.subr.mxu0 0.0
    %749 = vmatpush2.msra.mxu0 0.0
    %750 = vmatprep.subr.mxu0 0.0
    %751 = vmatpush2.msra.mxu0 0.0
    %752 = vmatprep.subr.mxu0 0.0
    %753 = vmatpush2.msra.mxu0 0.0
    %754 = vmatprep.subr.mxu0 0.0
    %755 = vmatpush2.msra.mxu0 0.0
    %756 = vmatprep.subr.mxu0 0.0
    %757 = vmatpush2.msra.mxu0 0.0
    %758 = vmatprep.subr.mxu0 0.0
    %759 = vmatpush2.msra.mxu0 0.0
    %760 = vmatprep.subr.mxu0 0.0
    %761 = vmatpush2.msra.mxu0 0.0
    %762 = vmatprep.subr.mxu0 0.0
    %763 = vmatpush2.msra.mxu0 0.0
    %764 = vmatprep.subr.mxu0 0.0
    %765 = vmatpush2.msra.mxu0 0.0
    %766 = vmatprep.subr.mxu0 0.0
    %767 = vmatpush2.msra.mxu0 0.0
    %768 = vmatprep.subr.mxu0 0.0
    %769 = vmatpush2.msra.mxu0 0.0
    %770 = vmatprep.subr.mxu0 0.0
    %771 = vmatpush2.msra.mxu0 0.0
    %772 = vmatprep.subr.mxu0 0.0
    %773 = vmatpush2.msra.mxu0 0.0
    %774 = vmatprep.subr.mxu0 0.0
    %775 = vmatpush2.msra.mxu0 0.0
    %776 = vmatprep.subr.mxu0 0.0
    %777 = vmatpush2.msra.mxu0 0.0
    %778 = vmatprep.subr.mxu0 0.0
    %779 = vmatpush2.msra.mxu0 0.0
    %780 = vmatprep.mubr.f32.mxu0 0.0
    %781 = vmatmul.mubr.f32.gmra.mxu0 %v714
    %v782 = vpop.f32.mrf.mxu0
    %v783 = vadd.f32 0.0, %v782
    %v784 = vpop.f32.mrf.mxu0
    %785 = vdwg.mxu0
    %s786 = scalar_lea.vmem [#allocation6], 12
    %v787 = vld [vmem:[%s786] sm:$0x3]
    %v788 = vadd.f32 %v787, %v783
    %v789 = vxor.u32 %v788, 2147483648
    %v790 = vmul.f32 %v789, 1.442695
    %v791 = vpow.pop %v790
    %v792 = vadd.f32 %v791, 1.0
    %v793 = vrcp.pop %v792
    %v794 = vmul.f32 1.0, %v793
    %v795 = vmul.f32 %v794, 2.0
    %v796 = vsub.f32 %v795, 1.0
    %v797 = vmul.f32 %v794, %v701
    %799 = vrot.lane.b32.xlu0 %v796, 64
    %v800 = vpop.permute.xlu0 %799
    %v802 = vmul.f32 %v794, %v800
    %804 = vrot.lane.b32.xlu0 %v802, 96
    %v805 = vpop.permute.xlu0 %804
    %v807 = vadd.f32 %v797, %v805
    %v808 = vtanh.pop %v807
    %810 = vrot.lane.b32.xlu0 %v808, 64
    %v811 = vpop.permute.xlu0 %810
    %v813 = vmul.f32 %v794, %v811
    %815 = vrot.lane.b32.xlu0 %v813, 32
    %v816 = vpop.permute.xlu0 %815
    %v818 = vsel %vm75, %v816, %v73
    %v820 = vsel %vm77, %v818, 0
    %822 = vmatprep.subr.mxu0 0.0
    %823 = vmatpush1.msra.mxu0 0.0
    %824 = vmatprep.subr.mxu0 0.0
    %825 = vmatpush1.msra.mxu0 0.0
    %826 = vmatprep.subr.mxu0 0.0
    %827 = vmatpush1.msra.mxu0 0.0
    %828 = vmatprep.subr.mxu0 0.0
    %829 = vmatpush1.msra.mxu0 0.0
    %830 = vmatprep.subr.mxu0 0.0
    %831 = vmatpush1.msra.mxu0 0.0
    %832 = vmatprep.subr.mxu0 0.0
    %833 = vmatpush1.msra.mxu0 0.0
    %834 = vmatprep.subr.mxu0 0.0
    %835 = vmatpush1.msra.mxu0 0.0
    %836 = vmatprep.subr.mxu0 0.0
    %837 = vmatpush1.msra.mxu0 0.0
    %838 = vmatprep.subr.mxu0 %v68
    %839 = vmatpush1.msra.mxu0 %v67
    %840 = vmatprep.subr.mxu0 %v66
    %841 = vmatpush1.msra.mxu0 %v65
    %842 = vmatprep.subr.mxu0 %v64
    %843 = vmatpush1.msra.mxu0 %v63
    %844 = vmatprep.subr.mxu0 %v62
    %845 = vmatpush1.msra.mxu0 %v61
    %846 = vmatprep.subr.mxu0 %v60
    %847 = vmatpush1.msra.mxu0 %v59
    %848 = vmatprep.subr.mxu0 %v58
    %849 = vmatpush1.msra.mxu0 %v57
    %850 = vmatprep.subr.mxu0 %v56
    %851 = vmatpush1.msra.mxu0 %v55
    %852 = vmatprep.subr.mxu0 %v54
    %853 = vmatpush1.msra.mxu0 %v53
    %854 = vmatprep.subr.mxu0 0.0
    %855 = vmatpush2.msra.mxu0 0.0
    %856 = vmatprep.subr.mxu0 0.0
    %857 = vmatpush2.msra.mxu0 0.0
    %858 = vmatprep.subr.mxu0 0.0
    %859 = vmatpush2.msra.mxu0 0.0
    %860 = vmatprep.subr.mxu0 0.0
    %861 = vmatpush2.msra.mxu0 0.0
    %862 = vmatprep.subr.mxu0 0.0
    %863 = vmatpush2.msra.mxu0 0.0
    %864 = vmatprep.subr.mxu0 0.0
    %865 = vmatpush2.msra.mxu0 0.0
    %866 = vmatprep.subr.mxu0 0.0
    %867 = vmatpush2.msra.mxu0 0.0
    %868 = vmatprep.subr.mxu0 0.0
    %869 = vmatpush2.msra.mxu0 0.0
    %870 = vmatprep.subr.mxu0 0.0
    %871 = vmatpush2.msra.mxu0 0.0
    %872 = vmatprep.subr.mxu0 0.0
    %873 = vmatpush2.msra.mxu0 0.0
    %874 = vmatprep.subr.mxu0 0.0
    %875 = vmatpush2.msra.mxu0 0.0
    %876 = vmatprep.subr.mxu0 0.0
    %877 = vmatpush2.msra.mxu0 0.0
    %878 = vmatprep.subr.mxu0 0.0
    %879 = vmatpush2.msra.mxu0 0.0
    %880 = vmatprep.subr.mxu0 0.0
    %881 = vmatpush2.msra.mxu0 0.0
    %882 = vmatprep.subr.mxu0 0.0
    %883 = vmatpush2.msra.mxu0 0.0
    %884 = vmatprep.subr.mxu0 0.0
    %885 = vmatpush2.msra.mxu0 0.0
    %886 = vmatprep.mubr.f32.mxu0 0.0
    %887 = vmatmul.mubr.f32.gmra.mxu0 %v820
    %v888 = vpop.f32.mrf.mxu0
    %v889 = vadd.f32 0.0, %v888
    %v890 = vpop.f32.mrf.mxu0
    %891 = vdwg.mxu0
    %s892 = scalar_lea.vmem [#allocation6], 14
    %v893 = vld [vmem:[%s892] sm:$0x3]
    %v894 = vadd.f32 %v893, %v889
    %v895 = vxor.u32 %v894, 2147483648
    %v896 = vmul.f32 %v895, 1.442695
    %v897 = vpow.pop %v896
    %v898 = vadd.f32 %v897, 1.0
    %v899 = vrcp.pop %v898
    %v900 = vmul.f32 1.0, %v899
    %v901 = vmul.f32 %v900, 2.0
    %v902 = vsub.f32 %v901, 1.0
    %v903 = vmul.f32 %v900, %v807
    %905 = vrot.lane.b32.xlu0 %v902, 64
    %v906 = vpop.permute.xlu0 %905
    %v908 = vmul.f32 %v900, %v906
    %910 = vrot.lane.b32.xlu0 %v908, 96
    %v911 = vpop.permute.xlu0 %910
    %v913 = vadd.f32 %v903, %v911
    %v914 = vtanh.pop %v913
    %916 = vrot.lane.b32.xlu0 %v914, 64
    %v917 = vpop.permute.xlu0 %916
    %v919 = vmul.f32 %v900, %v917
    %921 = vrot.lane.b32.xlu0 %v919, 32
    %v922 = vpop.permute.xlu0 %921
    %v924 = vsel %vm75, %v922, %v73
    %v926 = vsel %vm77, %v924, 0
    %928 = vmatprep.subr.mxu0 0.0
    %929 = vmatpush1.msra.mxu0 0.0
    %930 = vmatprep.subr.mxu0 0.0
    %931 = vmatpush1.msra.mxu0 0.0
    %932 = vmatprep.subr.mxu0 0.0
    %933 = vmatpush1.msra.mxu0 0.0
    %934 = vmatprep.subr.mxu0 0.0
    %935 = vmatpush1.msra.mxu0 0.0
    %936 = vmatprep.subr.mxu0 0.0
    %937 = vmatpush1.msra.mxu0 0.0
    %938 = vmatprep.subr.mxu0 0.0
    %939 = vmatpush1.msra.mxu0 0.0
    %940 = vmatprep.subr.mxu0 0.0
    %941 = vmatpush1.msra.mxu0 0.0
    %942 = vmatprep.subr.mxu0 0.0
    %943 = vmatpush1.msra.mxu0 0.0
    %944 = vmatprep.subr.mxu0 %v68
    %945 = vmatpush1.msra.mxu0 %v67
    %946 = vmatprep.subr.mxu0 %v66
    %947 = vmatpush1.msra.mxu0 %v65
    %948 = vmatprep.subr.mxu0 %v64
    %949 = vmatpush1.msra.mxu0 %v63
    %950 = vmatprep.subr.mxu0 %v62
    %951 = vmatpush1.msra.mxu0 %v61
    %952 = vmatprep.subr.mxu0 %v60
    %953 = vmatpush1.msra.mxu0 %v59
    %954 = vmatprep.subr.mxu0 %v58
    %955 = vmatpush1.msra.mxu0 %v57
    %956 = vmatprep.subr.mxu0 %v56
    %957 = vmatpush1.msra.mxu0 %v55
    %958 = vmatprep.subr.mxu0 %v54
    %959 = vmatpush1.msra.mxu0 %v53
    %960 = vmatprep.subr.mxu0 0.0
    %961 = vmatpush2.msra.mxu0 0.0
    %962 = vmatprep.subr.mxu0 0.0
    %963 = vmatpush2.msra.mxu0 0.0
    %964 = vmatprep.subr.mxu0 0.0
    %965 = vmatpush2.msra.mxu0 0.0
    %966 = vmatprep.subr.mxu0 0.0
    %967 = vmatpush2.msra.mxu0 0.0
    %968 = vmatprep.subr.mxu0 0.0
    %969 = vmatpush2.msra.mxu0 0.0
    %970 = vmatprep.subr.mxu0 0.0
    %971 = vmatpush2.msra.mxu0 0.0
    %972 = vmatprep.subr.mxu0 0.0
    %973 = vmatpush2.msra.mxu0 0.0
    %974 = vmatprep.subr.mxu0 0.0
    %975 = vmatpush2.msra.mxu0 0.0
    %976 = vmatprep.subr.mxu0 0.0
    %977 = vmatpush2.msra.mxu0 0.0
    %978 = vmatprep.subr.mxu0 0.0
    %979 = vmatpush2.msra.mxu0 0.0
    %980 = vmatprep.subr.mxu0 0.0
    %981 = vmatpush2.msra.mxu0 0.0
    %982 = vmatprep.subr.mxu0 0.0
    %983 = vmatpush2.msra.mxu0 0.0
    %984 = vmatprep.subr.mxu0 0.0
    %985 = vmatpush2.msra.mxu0 0.0
    %986 = vmatprep.subr.mxu0 0.0
    %987 = vmatpush2.msra.mxu0 0.0
    %988 = vmatprep.subr.mxu0 0.0
    %989 = vmatpush2.msra.mxu0 0.0
    %990 = vmatprep.subr.mxu0 0.0
    %991 = vmatpush2.msra.mxu0 0.0
    %992 = vmatprep.mubr.f32.mxu0 0.0
    %993 = vmatmul.mubr.f32.gmra.mxu0 %v926
    %v994 = vpop.f32.mrf.mxu0
    %v995 = vadd.f32 0.0, %v994
    %v996 = vpop.f32.mrf.mxu0
    %997 = vdwg.mxu0
    %s998 = scalar_lea.vmem [#allocation6], 16
    %v999 = vld [vmem:[%s998] sm:$0x3]
    %v1000 = vadd.f32 %v999, %v995
    %v1001 = vxor.u32 %v1000, 2147483648
    %v1002 = vmul.f32 %v1001, 1.442695
    %v1003 = vpow.pop %v1002
    %v1004 = vadd.f32 %v1003, 1.0
    %v1005 = vrcp.pop %v1004
    %v1006 = vmul.f32 1.0, %v1005
    %v1007 = vmul.f32 %v1006, 2.0
    %v1008 = vsub.f32 %v1007, 1.0
    %v1009 = vmul.f32 %v1006, %v913
    %1011 = vrot.lane.b32.xlu0 %v1008, 64
    %v1012 = vpop.permute.xlu0 %1011
    %v1014 = vmul.f32 %v1006, %v1012
    %1016 = vrot.lane.b32.xlu0 %v1014, 96
    %v1017 = vpop.permute.xlu0 %1016
    %v1019 = vadd.f32 %v1009, %v1017
    %v1020 = vtanh.pop %v1019
    %1022 = vrot.lane.b32.xlu0 %v1020, 64
    %v1023 = vpop.permute.xlu0 %1022
    %v1025 = vmul.f32 %v1006, %v1023
    %1027 = vrot.lane.b32.xlu0 %v1025, 32
    %v1028 = vpop.permute.xlu0 %1027
    %v1030 = vsel %vm75, %v1028, %v73
    %v1032 = vsel %vm77, %v1030, 0
    %1034 = vmatprep.subr.mxu0 0.0
    %1035 = vmatpush1.msra.mxu0 0.0
    %1036 = vmatprep.subr.mxu0 0.0
    %1037 = vmatpush1.msra.mxu0 0.0
    %1038 = vmatprep.subr.mxu0 0.0
    %1039 = vmatpush1.msra.mxu0 0.0
    %1040 = vmatprep.subr.mxu0 0.0
    %1041 = vmatpush1.msra.mxu0 0.0
    %1042 = vmatprep.subr.mxu0 0.0
    %1043 = vmatpush1.msra.mxu0 0.0
    %1044 = vmatprep.subr.mxu0 0.0
    %1045 = vmatpush1.msra.mxu0 0.0
    %1046 = vmatprep.subr.mxu0 0.0
    %1047 = vmatpush1.msra.mxu0 0.0
    %1048 = vmatprep.subr.mxu0 0.0
    %1049 = vmatpush1.msra.mxu0 0.0
    %1050 = vmatprep.subr.mxu0 %v68
    %1051 = vmatpush1.msra.mxu0 %v67
    %1052 = vmatprep.subr.mxu0 %v66
    %1053 = vmatpush1.msra.mxu0 %v65
    %1054 = vmatprep.subr.mxu0 %v64
    %1055 = vmatpush1.msra.mxu0 %v63
    %1056 = vmatprep.subr.mxu0 %v62
    %1057 = vmatpush1.msra.mxu0 %v61
    %1058 = vmatprep.subr.mxu0 %v60
    %1059 = vmatpush1.msra.mxu0 %v59
    %1060 = vmatprep.subr.mxu0 %v58
    %1061 = vmatpush1.msra.mxu0 %v57
    %1062 = vmatprep.subr.mxu0 %v56
    %1063 = vmatpush1.msra.mxu0 %v55
    %1064 = vmatprep.subr.mxu0 %v54
    %1065 = vmatpush1.msra.mxu0 %v53
    %1066 = vmatprep.subr.mxu0 0.0
    %1067 = vmatpush2.msra.mxu0 0.0
    %1068 = vmatprep.subr.mxu0 0.0
    %1069 = vmatpush2.msra.mxu0 0.0
    %1070 = vmatprep.subr.mxu0 0.0
    %1071 = vmatpush2.msra.mxu0 0.0
    %1072 = vmatprep.subr.mxu0 0.0
    %1073 = vmatpush2.msra.mxu0 0.0
    %1074 = vmatprep.subr.mxu0 0.0
    %1075 = vmatpush2.msra.mxu0 0.0
    %1076 = vmatprep.subr.mxu0 0.0
    %1077 = vmatpush2.msra.mxu0 0.0
    %1078 = vmatprep.subr.mxu0 0.0
    %1079 = vmatpush2.msra.mxu0 0.0
    %1080 = vmatprep.subr.mxu0 0.0
    %1081 = vmatpush2.msra.mxu0 0.0
    %1082 = vmatprep.subr.mxu0 0.0
    %1083 = vmatpush2.msra.mxu0 0.0
    %1084 = vmatprep.subr.mxu0 0.0
    %1085 = vmatpush2.msra.mxu0 0.0
    %1086 = vmatprep.subr.mxu0 0.0
    %1087 = vmatpush2.msra.mxu0 0.0
    %1088 = vmatprep.subr.mxu0 0.0
    %1089 = vmatpush2.msra.mxu0 0.0
    %1090 = vmatprep.subr.mxu0 0.0
    %1091 = vmatpush2.msra.mxu0 0.0
    %1092 = vmatprep.subr.mxu0 0.0
    %1093 = vmatpush2.msra.mxu0 0.0
    %1094 = vmatprep.subr.mxu0 0.0
    %1095 = vmatpush2.msra.mxu0 0.0
    %1096 = vmatprep.subr.mxu0 0.0
    %1097 = vmatpush2.msra.mxu0 0.0
    %1098 = vmatprep.mubr.f32.mxu0 0.0
    %1099 = vmatmul.mubr.f32.gmra.mxu0 %v1032
    %v1100 = vpop.f32.mrf.mxu0
    %v1101 = vadd.f32 0.0, %v1100
    %v1102 = vpop.f32.mrf.mxu0
    %1103 = vdwg.mxu0
    %s1104 = scalar_lea.vmem [#allocation6], 18
    %v1105 = vld [vmem:[%s1104] sm:$0x3]
    %v1106 = vadd.f32 %v1105, %v1101
    %v1107 = vxor.u32 %v1106, 2147483648
    %v1108 = vmul.f32 %v1107, 1.442695
    %v1109 = vpow.pop %v1108
    %v1110 = vadd.f32 %v1109, 1.0
    %v1111 = vrcp.pop %v1110
    %v1112 = vmul.f32 1.0, %v1111
    %v1113 = vmul.f32 %v1112, 2.0
    %v1114 = vsub.f32 %v1113, 1.0
    %v1115 = vmul.f32 %v1112, %v1019
    %1117 = vrot.lane.b32.xlu0 %v1114, 64
    %v1118 = vpop.permute.xlu0 %1117
    %v1120 = vmul.f32 %v1112, %v1118
    %1122 = vrot.lane.b32.xlu0 %v1120, 96
    %v1123 = vpop.permute.xlu0 %1122
    %v1125 = vadd.f32 %v1115, %v1123
    %v1126 = vtanh.pop %v1125
    %1128 = vrot.lane.b32.xlu0 %v1126, 64
    %v1129 = vpop.permute.xlu0 %1128
    %v1131 = vmul.f32 %v1112, %v1129
    %1133 = vrot.lane.b32.xlu0 %v1131, 32
    %v1134 = vpop.permute.xlu0 %1133
    %v1136 = vsel %vm75, %v1134, %v73
    %v1138 = vsel %vm77, %v1136, 0
    %1140 = vmatprep.subr.mxu0 0.0
    %1141 = vmatpush1.msra.mxu0 0.0
    %1142 = vmatprep.subr.mxu0 0.0
    %1143 = vmatpush1.msra.mxu0 0.0
    %1144 = vmatprep.subr.mxu0 0.0
    %1145 = vmatpush1.msra.mxu0 0.0
    %1146 = vmatprep.subr.mxu0 0.0
    %1147 = vmatpush1.msra.mxu0 0.0
    %1148 = vmatprep.subr.mxu0 0.0
    %1149 = vmatpush1.msra.mxu0 0.0
    %1150 = vmatprep.subr.mxu0 0.0
    %1151 = vmatpush1.msra.mxu0 0.0
    %1152 = vmatprep.subr.mxu0 0.0
    %1153 = vmatpush1.msra.mxu0 0.0
    %1154 = vmatprep.subr.mxu0 0.0
    %1155 = vmatpush1.msra.mxu0 0.0
    %1156 = vmatprep.subr.mxu0 %v68
    %1157 = vmatpush1.msra.mxu0 %v67
    %1158 = vmatprep.subr.mxu0 %v66
    %1159 = vmatpush1.msra.mxu0 %v65
    %1160 = vmatprep.subr.mxu0 %v64
    %1161 = vmatpush1.msra.mxu0 %v63
    %1162 = vmatprep.subr.mxu0 %v62
    %1163 = vmatpush1.msra.mxu0 %v61
    %1164 = vmatprep.subr.mxu0 %v60
    %1165 = vmatpush1.msra.mxu0 %v59
    %1166 = vmatprep.subr.mxu0 %v58
    %1167 = vmatpush1.msra.mxu0 %v57
    %1168 = vmatprep.subr.mxu0 %v56
    %1169 = vmatpush1.msra.mxu0 %v55
    %1170 = vmatprep.subr.mxu0 %v54
    %1171 = vmatpush1.msra.mxu0 %v53
    %1172 = vmatprep.subr.mxu0 0.0
    %1173 = vmatpush2.msra.mxu0 0.0
    %1174 = vmatprep.subr.mxu0 0.0
    %1175 = vmatpush2.msra.mxu0 0.0
    %1176 = vmatprep.subr.mxu0 0.0
    %1177 = vmatpush2.msra.mxu0 0.0
    %1178 = vmatprep.subr.mxu0 0.0
    %1179 = vmatpush2.msra.mxu0 0.0
    %1180 = vmatprep.subr.mxu0 0.0
    %1181 = vmatpush2.msra.mxu0 0.0
    %1182 = vmatprep.subr.mxu0 0.0
    %1183 = vmatpush2.msra.mxu0 0.0
    %1184 = vmatprep.subr.mxu0 0.0
    %1185 = vmatpush2.msra.mxu0 0.0
    %1186 = vmatprep.subr.mxu0 0.0
    %1187 = vmatpush2.msra.mxu0 0.0
    %1188 = vmatprep.subr.mxu0 0.0
    %1189 = vmatpush2.msra.mxu0 0.0
    %1190 = vmatprep.subr.mxu0 0.0
    %1191 = vmatpush2.msra.mxu0 0.0
    %1192 = vmatprep.subr.mxu0 0.0
    %1193 = vmatpush2.msra.mxu0 0.0
    %1194 = vmatprep.subr.mxu0 0.0
    %1195 = vmatpush2.msra.mxu0 0.0
    %1196 = vmatprep.subr.mxu0 0.0
    %1197 = vmatpush2.msra.mxu0 0.0
    %1198 = vmatprep.subr.mxu0 0.0
    %1199 = vmatpush2.msra.mxu0 0.0
    %1200 = vmatprep.subr.mxu0 0.0
    %1201 = vmatpush2.msra.mxu0 0.0
    %1202 = vmatprep.subr.mxu0 0.0
    %1203 = vmatpush2.msra.mxu0 0.0
    %1204 = vmatprep.mubr.f32.mxu0 0.0
    %1205 = vmatmul.mubr.f32.gmra.mxu0 %v1138
    %v1206 = vpop.f32.mrf.mxu0
    %v1207 = vadd.f32 0.0, %v1206
    %v1208 = vpop.f32.mrf.mxu0
    %1209 = vdwg.mxu0
    %s1210 = scalar_lea.vmem [#allocation6], 20
    %v1211 = vld [vmem:[%s1210] sm:$0x3]
    %v1212 = vadd.f32 %v1211, %v1207
    %v1213 = vxor.u32 %v1212, 2147483648
    %v1214 = vmul.f32 %v1213, 1.442695
    %v1215 = vpow.pop %v1214
    %v1216 = vadd.f32 %v1215, 1.0
    %v1217 = vrcp.pop %v1216
    %v1218 = vmul.f32 1.0, %v1217
    %v1219 = vmul.f32 %v1218, 2.0
    %v1220 = vsub.f32 %v1219, 1.0
    %v1221 = vmul.f32 %v1218, %v1125
    %1223 = vrot.lane.b32.xlu0 %v1220, 64
    %v1224 = vpop.permute.xlu0 %1223
    %v1226 = vmul.f32 %v1218, %v1224
    %1228 = vrot.lane.b32.xlu0 %v1226, 96
    %v1229 = vpop.permute.xlu0 %1228
    %v1231 = vadd.f32 %v1221, %v1229
    %v1232 = vtanh.pop %v1231
    %1234 = vrot.lane.b32.xlu0 %v1232, 64
    %v1235 = vpop.permute.xlu0 %1234
    %v1237 = vmul.f32 %v1218, %v1235
    %1239 = vrot.lane.b32.xlu0 %v1237, 32
    %v1240 = vpop.permute.xlu0 %1239
    %v1242 = vsel %vm75, %v1240, %v73
    %v1244 = vsel %vm77, %v1242, 0
    %1246 = vmatprep.subr.mxu0 0.0
    %1247 = vmatpush1.msra.mxu0 0.0
    %1248 = vmatprep.subr.mxu0 0.0
    %1249 = vmatpush1.msra.mxu0 0.0
    %1250 = vmatprep.subr.mxu0 0.0
    %1251 = vmatpush1.msra.mxu0 0.0
    %1252 = vmatprep.subr.mxu0 0.0
    %1253 = vmatpush1.msra.mxu0 0.0
    %1254 = vmatprep.subr.mxu0 0.0
    %1255 = vmatpush1.msra.mxu0 0.0
    %1256 = vmatprep.subr.mxu0 0.0
    %1257 = vmatpush1.msra.mxu0 0.0
    %1258 = vmatprep.subr.mxu0 0.0
    %1259 = vmatpush1.msra.mxu0 0.0
    %1260 = vmatprep.subr.mxu0 0.0
    %1261 = vmatpush1.msra.mxu0 0.0
    %1262 = vmatprep.subr.mxu0 %v68
    %1263 = vmatpush1.msra.mxu0 %v67
    %1264 = vmatprep.subr.mxu0 %v66
    %1265 = vmatpush1.msra.mxu0 %v65
    %1266 = vmatprep.subr.mxu0 %v64
    %1267 = vmatpush1.msra.mxu0 %v63
    %1268 = vmatprep.subr.mxu0 %v62
    %1269 = vmatpush1.msra.mxu0 %v61
    %1270 = vmatprep.subr.mxu0 %v60
    %1271 = vmatpush1.msra.mxu0 %v59
    %1272 = vmatprep.subr.mxu0 %v58
    %1273 = vmatpush1.msra.mxu0 %v57
    %1274 = vmatprep.subr.mxu0 %v56
    %1275 = vmatpush1.msra.mxu0 %v55
    %1276 = vmatprep.subr.mxu0 %v54
    %1277 = vmatpush1.msra.mxu0 %v53
    %1278 = vmatprep.subr.mxu0 0.0
    %1279 = vmatpush2.msra.mxu0 0.0
    %1280 = vmatprep.subr.mxu0 0.0
    %1281 = vmatpush2.msra.mxu0 0.0
    %1282 = vmatprep.subr.mxu0 0.0
    %1283 = vmatpush2.msra.mxu0 0.0
    %1284 = vmatprep.subr.mxu0 0.0
    %1285 = vmatpush2.msra.mxu0 0.0
    %1286 = vmatprep.subr.mxu0 0.0
    %1287 = vmatpush2.msra.mxu0 0.0
    %1288 = vmatprep.subr.mxu0 0.0
    %1289 = vmatpush2.msra.mxu0 0.0
    %1290 = vmatprep.subr.mxu0 0.0
    %1291 = vmatpush2.msra.mxu0 0.0
    %1292 = vmatprep.subr.mxu0 0.0
    %1293 = vmatpush2.msra.mxu0 0.0
    %1294 = vmatprep.subr.mxu0 0.0
    %1295 = vmatpush2.msra.mxu0 0.0
    %1296 = vmatprep.subr.mxu0 0.0
    %1297 = vmatpush2.msra.mxu0 0.0
    %1298 = vmatprep.subr.mxu0 0.0
    %1299 = vmatpush2.msra.mxu0 0.0
    %1300 = vmatprep.subr.mxu0 0.0
    %1301 = vmatpush2.msra.mxu0 0.0
    %1302 = vmatprep.subr.mxu0 0.0
    %1303 = vmatpush2.msra.mxu0 0.0
    %1304 = vmatprep.subr.mxu0 0.0
    %1305 = vmatpush2.msra.mxu0 0.0
    %1306 = vmatprep.subr.mxu0 0.0
    %1307 = vmatpush2.msra.mxu0 0.0
    %1308 = vmatprep.subr.mxu0 0.0
    %1309 = vmatpush2.msra.mxu0 0.0
    %1310 = vmatprep.mubr.f32.mxu0 0.0
    %1311 = vmatmul.mubr.f32.gmra.mxu0 %v1244
    %v1312 = vpop.f32.mrf.mxu0
    %v1313 = vadd.f32 0.0, %v1312
    %v1314 = vpop.f32.mrf.mxu0
    %v1315 = vadd.f32 0.0, %v1314
    %1316 = vdwg.mxu0
    %s1317 = scalar_lea.vmem [#allocation6], 22
    %v1318 = vld [vmem:[%s1317] sm:$0x3]
    %v1319 = vadd.f32 %v1318, %v1313
    %v1320 = vxor.u32 %v1319, 2147483648
    %v1321 = vmul.f32 %v1320, 1.442695
    %v1322 = vpow.pop %v1321
    %v1323 = vadd.f32 %v1322, 1.0
    %v1324 = vrcp.pop %v1323
    %v1325 = vmul.f32 1.0, %v1324
    %v1326 = vmul.f32 %v1325, 2.0
    %v1327 = vsub.f32 %v1326, 1.0
    %v1328 = vmul.f32 %v1325, %v1231
    %1330 = vrot.lane.b32.xlu0 %v1327, 64
    %v1331 = vpop.permute.xlu0 %1330
    %v1333 = vmul.f32 %v1325, %v1331
    %1335 = vrot.lane.b32.xlu0 %v1333, 96
    %v1336 = vpop.permute.xlu0 %1335
    %v1338 = vadd.f32 %v1328, %v1336
    %v1339 = vtanh.pop %v1338
    %1341 = vrot.lane.b32.xlu0 %v1339, 64
    %v1342 = vpop.permute.xlu0 %1341
    %v1344 = vmul.f32 %v1325, %v1342
    %v1346 = vlaneseq
    %v1347 = vshrl.u32 %v1346, 7
    %v1348 = vsub.s32 0, %v1347
    %v1349 = vrot.slane %v69, %v1348
    %v1351 = vadd.f32 %v1315, %v1349
    %v1352 = vld [vmem:[#allocation3] sm:$0x3]
    %v1353 = vxor.u32 %v1351, 2147483648
    %v1354 = vmul.f32 %v1353, 1.442695
    %v1355 = vpow.pop %v1354
    %v1356 = vadd.f32 %v1355, 1.0
    %v1357 = vrcp.pop %v1356
    %v1358 = vmul.f32 1.0, %v1357
    %v1359 = vmul.f32 %v1358, 2.0
    %v1360 = vsub.f32 %v1359, 1.0
    %1362 = vrot.lane.b32.xlu0 %v1352, 32
    %v1363 = vpop.permute.xlu0 %1362
    %v1365 = vmul.f32 %v1358, %v1363
    %1367 = vrot.lane.b32.xlu0 %v1360, 64
    %v1368 = vpop.permute.xlu0 %1367
    %v1370 = vmul.f32 %v1358, %v1368
    %1372 = vrot.lane.b32.xlu0 %v1370, 96
    %v1373 = vpop.permute.xlu0 %1372
    %v1375 = vadd.f32 %v1365, %v1373
    %v1376 = vtanh.pop %v1375
    %1378 = vrot.lane.b32.xlu0 %v1376, 64
    %v1379 = vpop.permute.xlu0 %1378
    %v1381 = vmul.f32 %v1358, %v1379
    %1383 = vrot.lane.b32.xlu0 %v1381, 32
    %v1384 = vpop.permute.xlu0 %1383
    %1386 = vst.msk [vmem:[#allocation2] sm:$0x3] %vm50, %v1384
    %1388 = vrot.lane.b32.xlu0 %v1375, 96
    %v1389 = vpop.permute.xlu0 %1388
    %1391 = vst.msk [vmem:[#allocation3] sm:$0x3] %vm50, %v1389
    %1392 = vst.msk [vmem:[#allocation4] sm:$0x3] %vm50, %v1384
    %v1393 = vld [vmem:[#allocation2] sm:$0x3]
    %1395 = vrot.lane.b32.xlu0 %v1344, 32
    %v1396 = vpop.permute.xlu0 %1395
    %1399 = vrot.lane.b32.xlu0 %v1393, 32
    %v1400 = vpop.permute.xlu0 %1399
    %v1402 = vsel %vm75, %v1396, %v1400
    %v1404 = vsel %vm77, %v1402, 0
    %1406 = vmatprep.subr.mxu0 0.0
    %1407 = vmatpush1.msra.mxu0 0.0
    %1408 = vmatprep.subr.mxu0 0.0
    %1409 = vmatpush1.msra.mxu0 0.0
    %1410 = vmatprep.subr.mxu0 0.0
    %1411 = vmatpush1.msra.mxu0 0.0
    %1412 = vmatprep.subr.mxu0 0.0
    %1413 = vmatpush1.msra.mxu0 0.0
    %1414 = vmatprep.subr.mxu0 0.0
    %1415 = vmatpush1.msra.mxu0 0.0
    %1416 = vmatprep.subr.mxu0 0.0
    %1417 = vmatpush1.msra.mxu0 0.0
    %1418 = vmatprep.subr.mxu0 0.0
    %1419 = vmatpush1.msra.mxu0 0.0
    %1420 = vmatprep.subr.mxu0 0.0
    %1421 = vmatpush1.msra.mxu0 0.0
    %1422 = vmatprep.subr.mxu0 %v68
    %1423 = vmatpush1.msra.mxu0 %v67
    %1424 = vmatprep.subr.mxu0 %v66
    %1425 = vmatpush1.msra.mxu0 %v65
    %1426 = vmatprep.subr.mxu0 %v64
    %1427 = vmatpush1.msra.mxu0 %v63
    %1428 = vmatprep.subr.mxu0 %v62
    %1429 = vmatpush1.msra.mxu0 %v61
    %1430 = vmatprep.subr.mxu0 %v60
    %1431 = vmatpush1.msra.mxu0 %v59
    %1432 = vmatprep.subr.mxu0 %v58
    %1433 = vmatpush1.msra.mxu0 %v57
    %1434 = vmatprep.subr.mxu0 %v56
    %1435 = vmatpush1.msra.mxu0 %v55
    %1436 = vmatprep.subr.mxu0 %v54
    %1437 = vmatpush1.msra.mxu0 %v53
    %1438 = vmatprep.subr.mxu0 0.0
    %1439 = vmatpush2.msra.mxu0 0.0
    %1440 = vmatprep.subr.mxu0 0.0
    %1441 = vmatpush2.msra.mxu0 0.0
    %1442 = vmatprep.subr.mxu0 0.0
    %1443 = vmatpush2.msra.mxu0 0.0
    %1444 = vmatprep.subr.mxu0 0.0
    %1445 = vmatpush2.msra.mxu0 0.0
    %1446 = vmatprep.subr.mxu0 0.0
    %1447 = vmatpush2.msra.mxu0 0.0
    %1448 = vmatprep.subr.mxu0 0.0
    %1449 = vmatpush2.msra.mxu0 0.0
    %1450 = vmatprep.subr.mxu0 0.0
    %1451 = vmatpush2.msra.mxu0 0.0
    %1452 = vmatprep.subr.mxu0 0.0
    %1453 = vmatpush2.msra.mxu0 0.0
    %1454 = vmatprep.subr.mxu0 0.0
    %1455 = vmatpush2.msra.mxu0 0.0
    %1456 = vmatprep.subr.mxu0 0.0
    %1457 = vmatpush2.msra.mxu0 0.0
    %1458 = vmatprep.subr.mxu0 0.0
    %1459 = vmatpush2.msra.mxu0 0.0
    %1460 = vmatprep.subr.mxu0 0.0
    %1461 = vmatpush2.msra.mxu0 0.0
    %1462 = vmatprep.subr.mxu0 0.0
    %1463 = vmatpush2.msra.mxu0 0.0
    %1464 = vmatprep.subr.mxu0 0.0
    %1465 = vmatpush2.msra.mxu0 0.0
    %1466 = vmatprep.subr.mxu0 0.0
    %1467 = vmatpush2.msra.mxu0 0.0
    %1468 = vmatprep.subr.mxu0 0.0
    %1469 = vmatpush2.msra.mxu0 0.0
    %1470 = vmatprep.mubr.f32.mxu0 0.0
    %1471 = vmatmul.mubr.f32.gmra.mxu0 %v1404
    %v1472 = vpop.f32.mrf.mxu0
    %v1473 = vadd.f32 0.0, %v1472
    %v1474 = vpop.f32.mrf.mxu0
    %v1475 = vadd.f32 0.0, %v1474
    %1476 = vdwg.mxu0
    %s1477 = scalar_lea.vmem [#allocation6], 24
    %v1478 = vld [vmem:[%s1477] sm:$0x3]
    %v1479 = vadd.f32 %v1478, %v1473
    %v1480 = vxor.u32 %v1479, 2147483648
    %v1481 = vmul.f32 %v1480, 1.442695
    %v1482 = vpow.pop %v1481
    %v1483 = vadd.f32 %v1482, 1.0
    %v1484 = vrcp.pop %v1483
    %v1485 = vmul.f32 1.0, %v1484
    %v1486 = vmul.f32 %v1485, 2.0
    %v1487 = vsub.f32 %v1486, 1.0
    %v1488 = vmul.f32 %v1485, %v1338
    %1490 = vrot.lane.b32.xlu0 %v1487, 64
    %v1491 = vpop.permute.xlu0 %1490
    %v1493 = vmul.f32 %v1485, %v1491
    %1495 = vrot.lane.b32.xlu0 %v1493, 96
    %v1496 = vpop.permute.xlu0 %1495
    %v1498 = vadd.f32 %v1488, %v1496
    %v1499 = vtanh.pop %v1498
    %1501 = vrot.lane.b32.xlu0 %v1499, 64
    %v1502 = vpop.permute.xlu0 %1501
    %v1504 = vmul.f32 %v1485, %v1502
    %v1505 = vadd.f32 %v1475, %v1349
    %v1506 = vld [vmem:[#allocation3] sm:$0x3]
    %v1507 = vxor.u32 %v1505, 2147483648
    %v1508 = vmul.f32 %v1507, 1.442695
    %v1509 = vpow.pop %v1508
    %v1510 = vadd.f32 %v1509, 1.0
    %v1511 = vrcp.pop %v1510
    %v1512 = vmul.f32 1.0, %v1511
    %v1513 = vmul.f32 %v1512, 2.0
    %v1514 = vsub.f32 %v1513, 1.0
    %1516 = vrot.lane.b32.xlu0 %v1506, 32
    %v1517 = vpop.permute.xlu0 %1516
    %v1519 = vmul.f32 %v1512, %v1517
    %1521 = vrot.lane.b32.xlu0 %v1514, 64
    %v1522 = vpop.permute.xlu0 %1521
    %v1524 = vmul.f32 %v1512, %v1522
    %1526 = vrot.lane.b32.xlu0 %v1524, 96
    %v1527 = vpop.permute.xlu0 %1526
    %v1529 = vadd.f32 %v1519, %v1527
    %v1530 = vtanh.pop %v1529
    %1532 = vrot.lane.b32.xlu0 %v1530, 64
    %v1533 = vpop.permute.xlu0 %1532
    %v1535 = vmul.f32 %v1512, %v1533
    %1537 = vrot.lane.b32.xlu0 %v1535, 32
    %v1538 = vpop.permute.xlu0 %1537
    %1540 = vst.msk [vmem:[#allocation2] sm:$0x3] %vm50, %v1538
    %1542 = vrot.lane.b32.xlu0 %v1529, 96
    %v1543 = vpop.permute.xlu0 %1542
    %1545 = vst.msk [vmem:[#allocation3] sm:$0x3] %vm50, %v1543
    %s1546 = scalar_lea.vmem [#allocation4], 2
    %1547 = vst.msk [vmem:[%s1546] sm:$0x3] %vm50, %v1538
    %v1548 = vld [vmem:[#allocation2] sm:$0x3]
    %1550 = vrot.lane.b32.xlu0 %v1504, 32
    %v1551 = vpop.permute.xlu0 %1550
    %1554 = vrot.lane.b32.xlu0 %v1548, 32
    %v1555 = vpop.permute.xlu0 %1554
    %v1557 = vsel %vm75, %v1551, %v1555
    %v1559 = vsel %vm77, %v1557, 0
    %1561 = vmatprep.subr.mxu0 0.0
    %1562 = vmatpush1.msra.mxu0 0.0
    %1563 = vmatprep.subr.mxu0 0.0
    %1564 = vmatpush1.msra.mxu0 0.0
    %1565 = vmatprep.subr.mxu0 0.0
    %1566 = vmatpush1.msra.mxu0 0.0
    %1567 = vmatprep.subr.mxu0 0.0
    %1568 = vmatpush1.msra.mxu0 0.0
    %1569 = vmatprep.subr.mxu0 0.0
    %1570 = vmatpush1.msra.mxu0 0.0
    %1571 = vmatprep.subr.mxu0 0.0
    %1572 = vmatpush1.msra.mxu0 0.0
    %1573 = vmatprep.subr.mxu0 0.0
    %1574 = vmatpush1.msra.mxu0 0.0
    %1575 = vmatprep.subr.mxu0 0.0
    %1576 = vmatpush1.msra.mxu0 0.0
    %1577 = vmatprep.subr.mxu0 %v68
    %1578 = vmatpush1.msra.mxu0 %v67
    %1579 = vmatprep.subr.mxu0 %v66
    %1580 = vmatpush1.msra.mxu0 %v65
    %1581 = vmatprep.subr.mxu0 %v64
    %1582 = vmatpush1.msra.mxu0 %v63
    %1583 = vmatprep.subr.mxu0 %v62
    %1584 = vmatpush1.msra.mxu0 %v61
    %1585 = vmatprep.subr.mxu0 %v60
    %1586 = vmatpush1.msra.mxu0 %v59
    %1587 = vmatprep.subr.mxu0 %v58
    %1588 = vmatpush1.msra.mxu0 %v57
    %1589 = vmatprep.subr.mxu0 %v56
    %1590 = vmatpush1.msra.mxu0 %v55
    %1591 = vmatprep.subr.mxu0 %v54
    %1592 = vmatpush1.msra.mxu0 %v53
    %1593 = vmatprep.subr.mxu0 0.0
    %1594 = vmatpush2.msra.mxu0 0.0
    %1595 = vmatprep.subr.mxu0 0.0
    %1596 = vmatpush2.msra.mxu0 0.0
    %1597 = vmatprep.subr.mxu0 0.0
    %1598 = vmatpush2.msra.mxu0 0.0
    %1599 = vmatprep.subr.mxu0 0.0
    %1600 = vmatpush2.msra.mxu0 0.0
    %1601 = vmatprep.subr.mxu0 0.0
    %1602 = vmatpush2.msra.mxu0 0.0
    %1603 = vmatprep.subr.mxu0 0.0
    %1604 = vmatpush2.msra.mxu0 0.0
    %1605 = vmatprep.subr.mxu0 0.0
    %1606 = vmatpush2.msra.mxu0 0.0
    %1607 = vmatprep.subr.mxu0 0.0
    %1608 = vmatpush2.msra.mxu0 0.0
    %1609 = vmatprep.subr.mxu0 0.0
    %1610 = vmatpush2.msra.mxu0 0.0
    %1611 = vmatprep.subr.mxu0 0.0
    %1612 = vmatpush2.msra.mxu0 0.0
    %1613 = vmatprep.subr.mxu0 0.0
    %1614 = vmatpush2.msra.mxu0 0.0
    %1615 = vmatprep.subr.mxu0 0.0
    %1616 = vmatpush2.msra.mxu0 0.0
    %1617 = vmatprep.subr.mxu0 0.0
    %1618 = vmatpush2.msra.mxu0 0.0
    %1619 = vmatprep.subr.mxu0 0.0
    %1620 = vmatpush2.msra.mxu0 0.0
    %1621 = vmatprep.subr.mxu0 0.0
    %1622 = vmatpush2.msra.mxu0 0.0
    %1623 = vmatprep.subr.mxu0 0.0
    %1624 = vmatpush2.msra.mxu0 0.0
    %1625 = vmatprep.mubr.f32.mxu0 0.0
    %1626 = vmatmul.mubr.f32.gmra.mxu0 %v1559
    %v1627 = vpop.f32.mrf.mxu0
    %v1628 = vadd.f32 0.0, %v1627
    %v1629 = vpop.f32.mrf.mxu0
    %v1630 = vadd.f32 0.0, %v1629
    %1631 = vdwg.mxu0
    %s1632 = scalar_lea.vmem [#allocation6], 26
    %v1633 = vld [vmem:[%s1632] sm:$0x3]
    %v1634 = vadd.f32 %v1633, %v1628
    %v1635 = vxor.u32 %v1634, 2147483648
    %v1636 = vmul.f32 %v1635, 1.442695
    %v1637 = vpow.pop %v1636
    %v1638 = vadd.f32 %v1637, 1.0
    %v1639 = vrcp.pop %v1638
    %v1640 = vmul.f32 1.0, %v1639
    %v1641 = vmul.f32 %v1640, 2.0
    %v1642 = vsub.f32 %v1641, 1.0
    %v1643 = vmul.f32 %v1640, %v1498
    %1645 = vrot.lane.b32.xlu0 %v1642, 64
    %v1646 = vpop.permute.xlu0 %1645
    %v1648 = vmul.f32 %v1640, %v1646
    %1650 = vrot.lane.b32.xlu0 %v1648, 96
    %v1651 = vpop.permute.xlu0 %1650
    %v1653 = vadd.f32 %v1643, %v1651
    %v1654 = vtanh.pop %v1653
    %1656 = vrot.lane.b32.xlu0 %v1654, 64
    %v1657 = vpop.permute.xlu0 %1656
    %v1659 = vmul.f32 %v1640, %v1657
    %v1660 = vadd.f32 %v1630, %v1349
    %v1661 = vld [vmem:[#allocation3] sm:$0x3]
    %v1662 = vxor.u32 %v1660, 2147483648
    %v1663 = vmul.f32 %v1662, 1.442695
    %v1664 = vpow.pop %v1663
    %v1665 = vadd.f32 %v1664, 1.0
    %v1666 = vrcp.pop %v1665
    %v1667 = vmul.f32 1.0, %v1666
    %v1668 = vmul.f32 %v1667, 2.0
    %v1669 = vsub.f32 %v1668, 1.0
    %1671 = vrot.lane.b32.xlu0 %v1661, 32
    %v1672 = vpop.permute.xlu0 %1671
    %v1674 = vmul.f32 %v1667, %v1672
    %1676 = vrot.lane.b32.xlu0 %v1669, 64
    %v1677 = vpop.permute.xlu0 %1676
    %v1679 = vmul.f32 %v1667, %v1677
    %1681 = vrot.lane.b32.xlu0 %v1679, 96
    %v1682 = vpop.permute.xlu0 %1681
    %v1684 = vadd.f32 %v1674, %v1682
    %v1685 = vtanh.pop %v1684
    %1687 = vrot.lane.b32.xlu0 %v1685, 64
    %v1688 = vpop.permute.xlu0 %1687
    %v1690 = vmul.f32 %v1667, %v1688
    %1692 = vrot.lane.b32.xlu0 %v1690, 32
    %v1693 = vpop.permute.xlu0 %1692
    %1695 = vst.msk [vmem:[#allocation2] sm:$0x3] %vm50, %v1693
    %1697 = vrot.lane.b32.xlu0 %v1684, 96
    %v1698 = vpop.permute.xlu0 %1697
    %1700 = vst.msk [vmem:[#allocation3] sm:$0x3] %vm50, %v1698
    %s1701 = scalar_lea.vmem [#allocation4], 4
    %1702 = vst.msk [vmem:[%s1701] sm:$0x3] %vm50, %v1693
    %v1703 = vld [vmem:[#allocation2] sm:$0x3]
    %1705 = vrot.lane.b32.xlu0 %v1659, 32
    %v1706 = vpop.permute.xlu0 %1705
    %1709 = vrot.lane.b32.xlu0 %v1703, 32
    %v1710 = vpop.permute.xlu0 %1709
    %v1712 = vsel %vm75, %v1706, %v1710
    %v1714 = vsel %vm77, %v1712, 0
    %1716 = vmatprep.subr.mxu0 0.0
    %1717 = vmatpush1.msra.mxu0 0.0
    %1718 = vmatprep.subr.mxu0 0.0
    %1719 = vmatpush1.msra.mxu0 0.0
    %1720 = vmatprep.subr.mxu0 0.0
    %1721 = vmatpush1.msra.mxu0 0.0
    %1722 = vmatprep.subr.mxu0 0.0
    %1723 = vmatpush1.msra.mxu0 0.0
    %1724 = vmatprep.subr.mxu0 0.0
    %1725 = vmatpush1.msra.mxu0 0.0
    %1726 = vmatprep.subr.mxu0 0.0
    %1727 = vmatpush1.msra.mxu0 0.0
    %1728 = vmatprep.subr.mxu0 0.0
    %1729 = vmatpush1.msra.mxu0 0.0
    %1730 = vmatprep.subr.mxu0 0.0
    %1731 = vmatpush1.msra.mxu0 0.0
    %1732 = vmatprep.subr.mxu0 %v68
    %1733 = vmatpush1.msra.mxu0 %v67
    %1734 = vmatprep.subr.mxu0 %v66
    %1735 = vmatpush1.msra.mxu0 %v65
    %1736 = vmatprep.subr.mxu0 %v64
    %1737 = vmatpush1.msra.mxu0 %v63
    %1738 = vmatprep.subr.mxu0 %v62
    %1739 = vmatpush1.msra.mxu0 %v61
    %1740 = vmatprep.subr.mxu0 %v60
    %1741 = vmatpush1.msra.mxu0 %v59
    %1742 = vmatprep.subr.mxu0 %v58
    %1743 = vmatpush1.msra.mxu0 %v57
    %1744 = vmatprep.subr.mxu0 %v56
    %1745 = vmatpush1.msra.mxu0 %v55
    %1746 = vmatprep.subr.mxu0 %v54
    %1747 = vmatpush1.msra.mxu0 %v53
    %1748 = vmatprep.subr.mxu0 0.0
    %1749 = vmatpush2.msra.mxu0 0.0
    %1750 = vmatprep.subr.mxu0 0.0
    %1751 = vmatpush2.msra.mxu0 0.0
    %1752 = vmatprep.subr.mxu0 0.0
    %1753 = vmatpush2.msra.mxu0 0.0
    %1754 = vmatprep.subr.mxu0 0.0
    %1755 = vmatpush2.msra.mxu0 0.0
    %1756 = vmatprep.subr.mxu0 0.0
    %1757 = vmatpush2.msra.mxu0 0.0
    %1758 = vmatprep.subr.mxu0 0.0
    %1759 = vmatpush2.msra.mxu0 0.0
    %1760 = vmatprep.subr.mxu0 0.0
    %1761 = vmatpush2.msra.mxu0 0.0
    %1762 = vmatprep.subr.mxu0 0.0
    %1763 = vmatpush2.msra.mxu0 0.0
    %1764 = vmatprep.subr.mxu0 0.0
    %1765 = vmatpush2.msra.mxu0 0.0
    %1766 = vmatprep.subr.mxu0 0.0
    %1767 = vmatpush2.msra.mxu0 0.0
    %1768 = vmatprep.subr.mxu0 0.0
    %1769 = vmatpush2.msra.mxu0 0.0
    %1770 = vmatprep.subr.mxu0 0.0
    %1771 = vmatpush2.msra.mxu0 0.0
    %1772 = vmatprep.subr.mxu0 0.0
    %1773 = vmatpush2.msra.mxu0 0.0
    %1774 = vmatprep.subr.mxu0 0.0
    %1775 = vmatpush2.msra.mxu0 0.0
    %1776 = vmatprep.subr.mxu0 0.0
    %1777 = vmatpush2.msra.mxu0 0.0
    %1778 = vmatprep.subr.mxu0 0.0
    %1779 = vmatpush2.msra.mxu0 0.0
    %1780 = vmatprep.mubr.f32.mxu0 0.0
    %1781 = vmatmul.mubr.f32.gmra.mxu0 %v1714
    %v1782 = vpop.f32.mrf.mxu0
    %v1783 = vadd.f32 0.0, %v1782
    %v1784 = vpop.f32.mrf.mxu0
    %v1785 = vadd.f32 0.0, %v1784
    %1786 = vdwg.mxu0
    %s1787 = scalar_lea.vmem [#allocation6], 28
    %v1788 = vld [vmem:[%s1787] sm:$0x3]
    %v1789 = vadd.f32 %v1788, %v1783
    %v1790 = vxor.u32 %v1789, 2147483648
    %v1791 = vmul.f32 %v1790, 1.442695
    %v1792 = vpow.pop %v1791
    %v1793 = vadd.f32 %v1792, 1.0
    %v1794 = vrcp.pop %v1793
    %v1795 = vmul.f32 1.0, %v1794
    %v1796 = vmul.f32 %v1795, 2.0
    %v1797 = vsub.f32 %v1796, 1.0
    %v1798 = vmul.f32 %v1795, %v1653
    %1800 = vrot.lane.b32.xlu0 %v1797, 64
    %v1801 = vpop.permute.xlu0 %1800
    %v1803 = vmul.f32 %v1795, %v1801
    %1805 = vrot.lane.b32.xlu0 %v1803, 96
    %v1806 = vpop.permute.xlu0 %1805
    %v1808 = vadd.f32 %v1798, %v1806
    %v1809 = vtanh.pop %v1808
    %1811 = vrot.lane.b32.xlu0 %v1809, 64
    %v1812 = vpop.permute.xlu0 %1811
    %v1814 = vmul.f32 %v1795, %v1812
    %v1815 = vadd.f32 %v1785, %v1349
    %v1816 = vld [vmem:[#allocation3] sm:$0x3]
    %v1817 = vxor.u32 %v1815, 2147483648
    %v1818 = vmul.f32 %v1817, 1.442695
    %v1819 = vpow.pop %v1818
    %v1820 = vadd.f32 %v1819, 1.0
    %v1821 = vrcp.pop %v1820
    %v1822 = vmul.f32 1.0, %v1821
    %v1823 = vmul.f32 %v1822, 2.0
    %v1824 = vsub.f32 %v1823, 1.0
    %1826 = vrot.lane.b32.xlu0 %v1816, 32
    %v1827 = vpop.permute.xlu0 %1826
    %v1829 = vmul.f32 %v1822, %v1827
    %1831 = vrot.lane.b32.xlu0 %v1824, 64
    %v1832 = vpop.permute.xlu0 %1831
    %v1834 = vmul.f32 %v1822, %v1832
    %1836 = vrot.lane.b32.xlu0 %v1834, 96
    %v1837 = vpop.permute.xlu0 %1836
    %v1839 = vadd.f32 %v1829, %v1837
    %v1840 = vtanh.pop %v1839
    %1842 = vrot.lane.b32.xlu0 %v1840, 64
    %v1843 = vpop.permute.xlu0 %1842
    %v1845 = vmul.f32 %v1822, %v1843
    %1847 = vrot.lane.b32.xlu0 %v1845, 32
    %v1848 = vpop.permute.xlu0 %1847
    %1850 = vst.msk [vmem:[#allocation2] sm:$0x3] %vm50, %v1848
    %1852 = vrot.lane.b32.xlu0 %v1839, 96
    %v1853 = vpop.permute.xlu0 %1852
    %1855 = vst.msk [vmem:[#allocation3] sm:$0x3] %vm50, %v1853
    %s1856 = scalar_lea.vmem [#allocation4], 6
    %1857 = vst.msk [vmem:[%s1856] sm:$0x3] %vm50, %v1848
    %v1858 = vld [vmem:[#allocation2] sm:$0x3]
    %1860 = vrot.lane.b32.xlu0 %v1814, 32
    %v1861 = vpop.permute.xlu0 %1860
    %1864 = vrot.lane.b32.xlu0 %v1858, 32
    %v1865 = vpop.permute.xlu0 %1864
    %v1867 = vsel %vm75, %v1861, %v1865
    %v1869 = vsel %vm77, %v1867, 0
    %1871 = vmatprep.subr.mxu0 0.0
    %1872 = vmatpush1.msra.mxu0 0.0
    %1873 = vmatprep.subr.mxu0 0.0
    %1874 = vmatpush1.msra.mxu0 0.0
    %1875 = vmatprep.subr.mxu0 0.0
    %1876 = vmatpush1.msra.mxu0 0.0
    %1877 = vmatprep.subr.mxu0 0.0
    %1878 = vmatpush1.msra.mxu0 0.0
    %1879 = vmatprep.subr.mxu0 0.0
    %1880 = vmatpush1.msra.mxu0 0.0
    %1881 = vmatprep.subr.mxu0 0.0
    %1882 = vmatpush1.msra.mxu0 0.0
    %1883 = vmatprep.subr.mxu0 0.0
    %1884 = vmatpush1.msra.mxu0 0.0
    %1885 = vmatprep.subr.mxu0 0.0
    %1886 = vmatpush1.msra.mxu0 0.0
    %1887 = vmatprep.subr.mxu0 %v68
    %1888 = vmatpush1.msra.mxu0 %v67
    %1889 = vmatprep.subr.mxu0 %v66
    %1890 = vmatpush1.msra.mxu0 %v65
    %1891 = vmatprep.subr.mxu0 %v64
    %1892 = vmatpush1.msra.mxu0 %v63
    %1893 = vmatprep.subr.mxu0 %v62
    %1894 = vmatpush1.msra.mxu0 %v61
    %1895 = vmatprep.subr.mxu0 %v60
    %1896 = vmatpush1.msra.mxu0 %v59
    %1897 = vmatprep.subr.mxu0 %v58
    %1898 = vmatpush1.msra.mxu0 %v57
    %1899 = vmatprep.subr.mxu0 %v56
    %1900 = vmatpush1.msra.mxu0 %v55
    %1901 = vmatprep.subr.mxu0 %v54
    %1902 = vmatpush1.msra.mxu0 %v53
    %1903 = vmatprep.subr.mxu0 0.0
    %1904 = vmatpush2.msra.mxu0 0.0
    %1905 = vmatprep.subr.mxu0 0.0
    %1906 = vmatpush2.msra.mxu0 0.0
    %1907 = vmatprep.subr.mxu0 0.0
    %1908 = vmatpush2.msra.mxu0 0.0
    %1909 = vmatprep.subr.mxu0 0.0
    %1910 = vmatpush2.msra.mxu0 0.0
    %1911 = vmatprep.subr.mxu0 0.0
    %1912 = vmatpush2.msra.mxu0 0.0
    %1913 = vmatprep.subr.mxu0 0.0
    %1914 = vmatpush2.msra.mxu0 0.0
    %1915 = vmatprep.subr.mxu0 0.0
    %1916 = vmatpush2.msra.mxu0 0.0
    %1917 = vmatprep.subr.mxu0 0.0
    %1918 = vmatpush2.msra.mxu0 0.0
    %1919 = vmatprep.subr.mxu0 0.0
    %1920 = vmatpush2.msra.mxu0 0.0
    %1921 = vmatprep.subr.mxu0 0.0
    %1922 = vmatpush2.msra.mxu0 0.0
    %1923 = vmatprep.subr.mxu0 0.0
    %1924 = vmatpush2.msra.mxu0 0.0
    %1925 = vmatprep.subr.mxu0 0.0
    %1926 = vmatpush2.msra.mxu0 0.0
    %1927 = vmatprep.subr.mxu0 0.0
    %1928 = vmatpush2.msra.mxu0 0.0
    %1929 = vmatprep.subr.mxu0 0.0
    %1930 = vmatpush2.msra.mxu0 0.0
    %1931 = vmatprep.subr.mxu0 0.0
    %1932 = vmatpush2.msra.mxu0 0.0
    %1933 = vmatprep.subr.mxu0 0.0
    %1934 = vmatpush2.msra.mxu0 0.0
    %1935 = vmatprep.mubr.f32.mxu0 0.0
    %1936 = vmatmul.mubr.f32.gmra.mxu0 %v1869
    %v1937 = vpop.f32.mrf.mxu0
    %v1938 = vadd.f32 0.0, %v1937
    %v1939 = vpop.f32.mrf.mxu0
    %v1940 = vadd.f32 0.0, %v1939
    %1941 = vdwg.mxu0
    %s1942 = scalar_lea.vmem [#allocation6], 30
    %v1943 = vld [vmem:[%s1942] sm:$0x3]
    %v1944 = vadd.f32 %v1943, %v1938
    %v1945 = vxor.u32 %v1944, 2147483648
    %v1946 = vmul.f32 %v1945, 1.442695
    %v1947 = vpow.pop %v1946
    %v1948 = vadd.f32 %v1947, 1.0
    %v1949 = vrcp.pop %v1948
    %v1950 = vmul.f32 1.0, %v1949
    %v1951 = vmul.f32 %v1950, 2.0
    %v1952 = vsub.f32 %v1951, 1.0
    %v1953 = vmul.f32 %v1950, %v1808
    %1955 = vrot.lane.b32.xlu0 %v1952, 64
    %v1956 = vpop.permute.xlu0 %1955
    %v1958 = vmul.f32 %v1950, %v1956
    %1960 = vrot.lane.b32.xlu0 %v1958, 96
    %v1961 = vpop.permute.xlu0 %1960
    %v1963 = vadd.f32 %v1953, %v1961
    %v1964 = vtanh.pop %v1963
    %1966 = vrot.lane.b32.xlu0 %v1964, 64
    %v1967 = vpop.permute.xlu0 %1966
    %v1969 = vmul.f32 %v1950, %v1967
    %v1970 = vadd.f32 %v1940, %v1349
    %v1971 = vld [vmem:[#allocation3] sm:$0x3]
    %v1972 = vxor.u32 %v1970, 2147483648
    %v1973 = vmul.f32 %v1972, 1.442695
    %v1974 = vpow.pop %v1973
    %v1975 = vadd.f32 %v1974, 1.0
    %v1976 = vrcp.pop %v1975
    %v1977 = vmul.f32 1.0, %v1976
    %v1978 = vmul.f32 %v1977, 2.0
    %v1979 = vsub.f32 %v1978, 1.0
    %1981 = vrot.lane.b32.xlu0 %v1971, 32
    %v1982 = vpop.permute.xlu0 %1981
    %v1984 = vmul.f32 %v1977, %v1982
    %1986 = vrot.lane.b32.xlu0 %v1979, 64
    %v1987 = vpop.permute.xlu0 %1986
    %v1989 = vmul.f32 %v1977, %v1987
    %1991 = vrot.lane.b32.xlu0 %v1989, 96
    %v1992 = vpop.permute.xlu0 %1991
    %v1994 = vadd.f32 %v1984, %v1992
    %v1995 = vtanh.pop %v1994
    %1997 = vrot.lane.b32.xlu0 %v1995, 64
    %v1998 = vpop.permute.xlu0 %1997
    %v2000 = vmul.f32 %v1977, %v1998
    %2002 = vrot.lane.b32.xlu0 %v2000, 32
    %v2003 = vpop.permute.xlu0 %2002
    %2005 = vst.msk [vmem:[#allocation2] sm:$0x3] %vm50, %v2003
    %2007 = vrot.lane.b32.xlu0 %v1994, 96
    %v2008 = vpop.permute.xlu0 %2007
    %2010 = vst.msk [vmem:[#allocation3] sm:$0x3] %vm50, %v2008
    %s2011 = scalar_lea.vmem [#allocation4], 8
    %2012 = vst.msk [vmem:[%s2011] sm:$0x3] %vm50, %v2003
    %v2013 = vld [vmem:[#allocation2] sm:$0x3]
    %2015 = vrot.lane.b32.xlu0 %v1969, 32
    %v2016 = vpop.permute.xlu0 %2015
    %2019 = vrot.lane.b32.xlu0 %v2013, 32
    %v2020 = vpop.permute.xlu0 %2019
    %v2022 = vsel %vm75, %v2016, %v2020
    %v2024 = vsel %vm77, %v2022, 0
    %2026 = vmatprep.subr.mxu0 0.0
    %2027 = vmatpush1.msra.mxu0 0.0
    %2028 = vmatprep.subr.mxu0 0.0
    %2029 = vmatpush1.msra.mxu0 0.0
    %2030 = vmatprep.subr.mxu0 0.0
    %2031 = vmatpush1.msra.mxu0 0.0
    %2032 = vmatprep.subr.mxu0 0.0
    %2033 = vmatpush1.msra.mxu0 0.0
    %2034 = vmatprep.subr.mxu0 0.0
    %2035 = vmatpush1.msra.mxu0 0.0
    %2036 = vmatprep.subr.mxu0 0.0
    %2037 = vmatpush1.msra.mxu0 0.0
    %2038 = vmatprep.subr.mxu0 0.0
    %2039 = vmatpush1.msra.mxu0 0.0
    %2040 = vmatprep.subr.mxu0 0.0
    %2041 = vmatpush1.msra.mxu0 0.0
    %2042 = vmatprep.subr.mxu0 %v68
    %2043 = vmatpush1.msra.mxu0 %v67
    %2044 = vmatprep.subr.mxu0 %v66
    %2045 = vmatpush1.msra.mxu0 %v65
    %2046 = vmatprep.subr.mxu0 %v64
    %2047 = vmatpush1.msra.mxu0 %v63
    %2048 = vmatprep.subr.mxu0 %v62
    %2049 = vmatpush1.msra.mxu0 %v61
    %2050 = vmatprep.subr.mxu0 %v60
    %2051 = vmatpush1.msra.mxu0 %v59
    %2052 = vmatprep.subr.mxu0 %v58
    %2053 = vmatpush1.msra.mxu0 %v57
    %2054 = vmatprep.subr.mxu0 %v56
    %2055 = vmatpush1.msra.mxu0 %v55
    %2056 = vmatprep.subr.mxu0 %v54
    %2057 = vmatpush1.msra.mxu0 %v53
    %2058 = vmatprep.subr.mxu0 0.0
    %2059 = vmatpush2.msra.mxu0 0.0
    %2060 = vmatprep.subr.mxu0 0.0
    %2061 = vmatpush2.msra.mxu0 0.0
    %2062 = vmatprep.subr.mxu0 0.0
    %2063 = vmatpush2.msra.mxu0 0.0
    %2064 = vmatprep.subr.mxu0 0.0
    %2065 = vmatpush2.msra.mxu0 0.0
    %2066 = vmatprep.subr.mxu0 0.0
    %2067 = vmatpush2.msra.mxu0 0.0
    %2068 = vmatprep.subr.mxu0 0.0
    %2069 = vmatpush2.msra.mxu0 0.0
    %2070 = vmatprep.subr.mxu0 0.0
    %2071 = vmatpush2.msra.mxu0 0.0
    %2072 = vmatprep.subr.mxu0 0.0
    %2073 = vmatpush2.msra.mxu0 0.0
    %2074 = vmatprep.subr.mxu0 0.0
    %2075 = vmatpush2.msra.mxu0 0.0
    %2076 = vmatprep.subr.mxu0 0.0
    %2077 = vmatpush2.msra.mxu0 0.0
    %2078 = vmatprep.subr.mxu0 0.0
    %2079 = vmatpush2.msra.mxu0 0.0
    %2080 = vmatprep.subr.mxu0 0.0
    %2081 = vmatpush2.msra.mxu0 0.0
    %2082 = vmatprep.subr.mxu0 0.0
    %2083 = vmatpush2.msra.mxu0 0.0
    %2084 = vmatprep.subr.mxu0 0.0
    %2085 = vmatpush2.msra.mxu0 0.0
    %2086 = vmatprep.subr.mxu0 0.0
    %2087 = vmatpush2.msra.mxu0 0.0
    %2088 = vmatprep.subr.mxu0 0.0
    %2089 = vmatpush2.msra.mxu0 0.0
    %2090 = vmatprep.mubr.f32.mxu0 0.0
    %2091 = vmatmul.mubr.f32.gmra.mxu0 %v2024
    %v2092 = vpop.f32.mrf.mxu0
    %v2093 = vadd.f32 0.0, %v2092
    %v2094 = vpop.f32.mrf.mxu0
    %v2095 = vadd.f32 0.0, %v2094
    %2096 = vdwg.mxu0
    %s2097 = scalar_lea.vmem [#allocation6], 32
    %v2098 = vld [vmem:[%s2097] sm:$0x3]
    %v2099 = vadd.f32 %v2098, %v2093
    %v2100 = vxor.u32 %v2099, 2147483648
    %v2101 = vmul.f32 %v2100, 1.442695
    %v2102 = vpow.pop %v2101
    %v2103 = vadd.f32 %v2102, 1.0
    %v2104 = vrcp.pop %v2103
    %v2105 = vmul.f32 1.0, %v2104
    %v2106 = vmul.f32 %v2105, 2.0
    %v2107 = vsub.f32 %v2106, 1.0
    %v2108 = vmul.f32 %v2105, %v1963
    %2110 = vrot.lane.b32.xlu0 %v2107, 64
    %v2111 = vpop.permute.xlu0 %2110
    %v2113 = vmul.f32 %v2105, %v2111
    %2115 = vrot.lane.b32.xlu0 %v2113, 96
    %v2116 = vpop.permute.xlu0 %2115
    %v2118 = vadd.f32 %v2108, %v2116
    %v2119 = vtanh.pop %v2118
    %2121 = vrot.lane.b32.xlu0 %v2119, 64
    %v2122 = vpop.permute.xlu0 %2121
    %v2124 = vmul.f32 %v2105, %v2122
    %v2125 = vadd.f32 %v2095, %v1349
    %v2126 = vld [vmem:[#allocation3] sm:$0x3]
    %v2127 = vxor.u32 %v2125, 2147483648
    %v2128 = vmul.f32 %v2127, 1.442695
    %v2129 = vpow.pop %v2128
    %v2130 = vadd.f32 %v2129, 1.0
    %v2131 = vrcp.pop %v2130
    %v2132 = vmul.f32 1.0, %v2131
    %v2133 = vmul.f32 %v2132, 2.0
    %v2134 = vsub.f32 %v2133, 1.0
    %2136 = vrot.lane.b32.xlu0 %v2126, 32
    %v2137 = vpop.permute.xlu0 %2136
    %v2139 = vmul.f32 %v2132, %v2137
    %2141 = vrot.lane.b32.xlu0 %v2134, 64
    %v2142 = vpop.permute.xlu0 %2141
    %v2144 = vmul.f32 %v2132, %v2142
    %2146 = vrot.lane.b32.xlu0 %v2144, 96
    %v2147 = vpop.permute.xlu0 %2146
    %v2149 = vadd.f32 %v2139, %v2147
    %v2150 = vtanh.pop %v2149
    %2152 = vrot.lane.b32.xlu0 %v2150, 64
    %v2153 = vpop.permute.xlu0 %2152
    %v2155 = vmul.f32 %v2132, %v2153
    %2157 = vrot.lane.b32.xlu0 %v2155, 32
    %v2158 = vpop.permute.xlu0 %2157
    %2160 = vst.msk [vmem:[#allocation2] sm:$0x3] %vm50, %v2158
    %2162 = vrot.lane.b32.xlu0 %v2149, 96
    %v2163 = vpop.permute.xlu0 %2162
    %2165 = vst.msk [vmem:[#allocation3] sm:$0x3] %vm50, %v2163
    %s2166 = scalar_lea.vmem [#allocation4], 10
    %2167 = vst.msk [vmem:[%s2166] sm:$0x3] %vm50, %v2158
    %v2168 = vld [vmem:[#allocation2] sm:$0x3]
    %2170 = vrot.lane.b32.xlu0 %v2124, 32
    %v2171 = vpop.permute.xlu0 %2170
    %2174 = vrot.lane.b32.xlu0 %v2168, 32
    %v2175 = vpop.permute.xlu0 %2174
    %v2177 = vsel %vm75, %v2171, %v2175
    %v2179 = vsel %vm77, %v2177, 0
    %2181 = vmatprep.subr.mxu0 0.0
    %2182 = vmatpush1.msra.mxu0 0.0
    %2183 = vmatprep.subr.mxu0 0.0
    %2184 = vmatpush1.msra.mxu0 0.0
    %2185 = vmatprep.subr.mxu0 0.0
    %2186 = vmatpush1.msra.mxu0 0.0
    %2187 = vmatprep.subr.mxu0 0.0
    %2188 = vmatpush1.msra.mxu0 0.0
    %2189 = vmatprep.subr.mxu0 0.0
    %2190 = vmatpush1.msra.mxu0 0.0
    %2191 = vmatprep.subr.mxu0 0.0
    %2192 = vmatpush1.msra.mxu0 0.0
    %2193 = vmatprep.subr.mxu0 0.0
    %2194 = vmatpush1.msra.mxu0 0.0
    %2195 = vmatprep.subr.mxu0 0.0
    %2196 = vmatpush1.msra.mxu0 0.0
    %2197 = vmatprep.subr.mxu0 %v68
    %2198 = vmatpush1.msra.mxu0 %v67
    %2199 = vmatprep.subr.mxu0 %v66
    %2200 = vmatpush1.msra.mxu0 %v65
    %2201 = vmatprep.subr.mxu0 %v64
    %2202 = vmatpush1.msra.mxu0 %v63
    %2203 = vmatprep.subr.mxu0 %v62
    %2204 = vmatpush1.msra.mxu0 %v61
    %2205 = vmatprep.subr.mxu0 %v60
    %2206 = vmatpush1.msra.mxu0 %v59
    %2207 = vmatprep.subr.mxu0 %v58
    %2208 = vmatpush1.msra.mxu0 %v57
    %2209 = vmatprep.subr.mxu0 %v56
    %2210 = vmatpush1.msra.mxu0 %v55
    %2211 = vmatprep.subr.mxu0 %v54
    %2212 = vmatpush1.msra.mxu0 %v53
    %2213 = vmatprep.subr.mxu0 0.0
    %2214 = vmatpush2.msra.mxu0 0.0
    %2215 = vmatprep.subr.mxu0 0.0
    %2216 = vmatpush2.msra.mxu0 0.0
    %2217 = vmatprep.subr.mxu0 0.0
    %2218 = vmatpush2.msra.mxu0 0.0
    %2219 = vmatprep.subr.mxu0 0.0
    %2220 = vmatpush2.msra.mxu0 0.0
    %2221 = vmatprep.subr.mxu0 0.0
    %2222 = vmatpush2.msra.mxu0 0.0
    %2223 = vmatprep.subr.mxu0 0.0
    %2224 = vmatpush2.msra.mxu0 0.0
    %2225 = vmatprep.subr.mxu0 0.0
    %2226 = vmatpush2.msra.mxu0 0.0
    %2227 = vmatprep.subr.mxu0 0.0
    %2228 = vmatpush2.msra.mxu0 0.0
    %2229 = vmatprep.subr.mxu0 0.0
    %2230 = vmatpush2.msra.mxu0 0.0
    %2231 = vmatprep.subr.mxu0 0.0
    %2232 = vmatpush2.msra.mxu0 0.0
    %2233 = vmatprep.subr.mxu0 0.0
    %2234 = vmatpush2.msra.mxu0 0.0
    %2235 = vmatprep.subr.mxu0 0.0
    %2236 = vmatpush2.msra.mxu0 0.0
    %2237 = vmatprep.subr.mxu0 0.0
    %2238 = vmatpush2.msra.mxu0 0.0
    %2239 = vmatprep.subr.mxu0 0.0
    %2240 = vmatpush2.msra.mxu0 0.0
    %2241 = vmatprep.subr.mxu0 0.0
    %2242 = vmatpush2.msra.mxu0 0.0
    %2243 = vmatprep.subr.mxu0 0.0
    %2244 = vmatpush2.msra.mxu0 0.0
    %2245 = vmatprep.mubr.f32.mxu0 0.0
    %2246 = vmatmul.mubr.f32.gmra.mxu0 %v2179
    %v2247 = vpop.f32.mrf.mxu0
    %v2248 = vadd.f32 0.0, %v2247
    %v2249 = vpop.f32.mrf.mxu0
    %v2250 = vadd.f32 0.0, %v2249
    %2251 = vdwg.mxu0
    %s2252 = scalar_lea.vmem [#allocation6], 34
    %v2253 = vld [vmem:[%s2252] sm:$0x3]
    %v2254 = vadd.f32 %v2253, %v2248
    %v2255 = vxor.u32 %v2254, 2147483648
    %v2256 = vmul.f32 %v2255, 1.442695
    %v2257 = vpow.pop %v2256
    %v2258 = vadd.f32 %v2257, 1.0
    %v2259 = vrcp.pop %v2258
    %v2260 = vmul.f32 1.0, %v2259
    %v2261 = vmul.f32 %v2260, 2.0
    %v2262 = vsub.f32 %v2261, 1.0
    %v2263 = vmul.f32 %v2260, %v2118
    %2265 = vrot.lane.b32.xlu0 %v2262, 64
    %v2266 = vpop.permute.xlu0 %2265
    %v2268 = vmul.f32 %v2260, %v2266
    %2270 = vrot.lane.b32.xlu0 %v2268, 96
    %v2271 = vpop.permute.xlu0 %2270
    %v2273 = vadd.f32 %v2263, %v2271
    %v2274 = vtanh.pop %v2273
    %2276 = vrot.lane.b32.xlu0 %v2274, 64
    %v2277 = vpop.permute.xlu0 %2276
    %v2279 = vmul.f32 %v2260, %v2277
    %v2280 = vadd.f32 %v2250, %v1349
    %v2281 = vld [vmem:[#allocation3] sm:$0x3]
    %v2282 = vxor.u32 %v2280, 2147483648
    %v2283 = vmul.f32 %v2282, 1.442695
    %v2284 = vpow.pop %v2283
    %v2285 = vadd.f32 %v2284, 1.0
    %v2286 = vrcp.pop %v2285
    %v2287 = vmul.f32 1.0, %v2286
    %v2288 = vmul.f32 %v2287, 2.0
    %v2289 = vsub.f32 %v2288, 1.0
    %2291 = vrot.lane.b32.xlu0 %v2281, 32
    %v2292 = vpop.permute.xlu0 %2291
    %v2294 = vmul.f32 %v2287, %v2292
    %2296 = vrot.lane.b32.xlu0 %v2289, 64
    %v2297 = vpop.permute.xlu0 %2296
    %v2299 = vmul.f32 %v2287, %v2297
    %2301 = vrot.lane.b32.xlu0 %v2299, 96
    %v2302 = vpop.permute.xlu0 %2301
    %v2304 = vadd.f32 %v2294, %v2302
    %v2305 = vtanh.pop %v2304
    %2307 = vrot.lane.b32.xlu0 %v2305, 64
    %v2308 = vpop.permute.xlu0 %2307
    %v2310 = vmul.f32 %v2287, %v2308
    %2312 = vrot.lane.b32.xlu0 %v2310, 32
    %v2313 = vpop.permute.xlu0 %2312
    %2315 = vst.msk [vmem:[#allocation2] sm:$0x3] %vm50, %v2313
    %2317 = vrot.lane.b32.xlu0 %v2304, 96
    %v2318 = vpop.permute.xlu0 %2317
    %2320 = vst.msk [vmem:[#allocation3] sm:$0x3] %vm50, %v2318
    %s2321 = scalar_lea.vmem [#allocation4], 12
    %2322 = vst.msk [vmem:[%s2321] sm:$0x3] %vm50, %v2313
    %v2323 = vld [vmem:[#allocation2] sm:$0x3]
    %2325 = vrot.lane.b32.xlu0 %v2279, 32
    %v2326 = vpop.permute.xlu0 %2325
    %2329 = vrot.lane.b32.xlu0 %v2323, 32
    %v2330 = vpop.permute.xlu0 %2329
    %v2332 = vsel %vm75, %v2326, %v2330
    %v2334 = vsel %vm77, %v2332, 0
    %2336 = vmatprep.subr.mxu0 0.0
    %2337 = vmatpush1.msra.mxu0 0.0
    %2338 = vmatprep.subr.mxu0 0.0
    %2339 = vmatpush1.msra.mxu0 0.0
    %2340 = vmatprep.subr.mxu0 0.0
    %2341 = vmatpush1.msra.mxu0 0.0
    %2342 = vmatprep.subr.mxu0 0.0
    %2343 = vmatpush1.msra.mxu0 0.0
    %2344 = vmatprep.subr.mxu0 0.0
    %2345 = vmatpush1.msra.mxu0 0.0
    %2346 = vmatprep.subr.mxu0 0.0
    %2347 = vmatpush1.msra.mxu0 0.0
    %2348 = vmatprep.subr.mxu0 0.0
    %2349 = vmatpush1.msra.mxu0 0.0
    %2350 = vmatprep.subr.mxu0 0.0
    %2351 = vmatpush1.msra.mxu0 0.0
    %2352 = vmatprep.subr.mxu0 %v68
    %2353 = vmatpush1.msra.mxu0 %v67
    %2354 = vmatprep.subr.mxu0 %v66
    %2355 = vmatpush1.msra.mxu0 %v65
    %2356 = vmatprep.subr.mxu0 %v64
    %2357 = vmatpush1.msra.mxu0 %v63
    %2358 = vmatprep.subr.mxu0 %v62
    %2359 = vmatpush1.msra.mxu0 %v61
    %2360 = vmatprep.subr.mxu0 %v60
    %2361 = vmatpush1.msra.mxu0 %v59
    %2362 = vmatprep.subr.mxu0 %v58
    %2363 = vmatpush1.msra.mxu0 %v57
    %2364 = vmatprep.subr.mxu0 %v56
    %2365 = vmatpush1.msra.mxu0 %v55
    %2366 = vmatprep.subr.mxu0 %v54
    %2367 = vmatpush1.msra.mxu0 %v53
    %2368 = vmatprep.subr.mxu0 0.0
    %2369 = vmatpush2.msra.mxu0 0.0
    %2370 = vmatprep.subr.mxu0 0.0
    %2371 = vmatpush2.msra.mxu0 0.0
    %2372 = vmatprep.subr.mxu0 0.0
    %2373 = vmatpush2.msra.mxu0 0.0
    %2374 = vmatprep.subr.mxu0 0.0
    %2375 = vmatpush2.msra.mxu0 0.0
    %2376 = vmatprep.subr.mxu0 0.0
    %2377 = vmatpush2.msra.mxu0 0.0
    %2378 = vmatprep.subr.mxu0 0.0
    %2379 = vmatpush2.msra.mxu0 0.0
    %2380 = vmatprep.subr.mxu0 0.0
    %2381 = vmatpush2.msra.mxu0 0.0
    %2382 = vmatprep.subr.mxu0 0.0
    %2383 = vmatpush2.msra.mxu0 0.0
    %2384 = vmatprep.subr.mxu0 0.0
    %2385 = vmatpush2.msra.mxu0 0.0
    %2386 = vmatprep.subr.mxu0 0.0
    %2387 = vmatpush2.msra.mxu0 0.0
    %2388 = vmatprep.subr.mxu0 0.0
    %2389 = vmatpush2.msra.mxu0 0.0
    %2390 = vmatprep.subr.mxu0 0.0
    %2391 = vmatpush2.msra.mxu0 0.0
    %2392 = vmatprep.subr.mxu0 0.0
    %2393 = vmatpush2.msra.mxu0 0.0
    %2394 = vmatprep.subr.mxu0 0.0
    %2395 = vmatpush2.msra.mxu0 0.0
    %2396 = vmatprep.subr.mxu0 0.0
    %2397 = vmatpush2.msra.mxu0 0.0
    %2398 = vmatprep.subr.mxu0 0.0
    %2399 = vmatpush2.msra.mxu0 0.0
    %2400 = vmatprep.mubr.f32.mxu0 0.0
    %2401 = vmatmul.mubr.f32.gmra.mxu0 %v2334
    %v2402 = vpop.f32.mrf.mxu0
    %v2403 = vadd.f32 0.0, %v2402
    %v2404 = vpop.f32.mrf.mxu0
    %v2405 = vadd.f32 0.0, %v2404
    %2406 = vdwg.mxu0
    %s2407 = scalar_lea.vmem [#allocation6], 36
    %v2408 = vld [vmem:[%s2407] sm:$0x3]
    %v2409 = vadd.f32 %v2408, %v2403
    %v2410 = vxor.u32 %v2409, 2147483648
    %v2411 = vmul.f32 %v2410, 1.442695
    %v2412 = vpow.pop %v2411
    %v2413 = vadd.f32 %v2412, 1.0
    %v2414 = vrcp.pop %v2413
    %v2415 = vmul.f32 1.0, %v2414
    %v2416 = vmul.f32 %v2415, 2.0
    %v2417 = vsub.f32 %v2416, 1.0
    %v2418 = vmul.f32 %v2415, %v2273
    %2420 = vrot.lane.b32.xlu0 %v2417, 64
    %v2421 = vpop.permute.xlu0 %2420
    %v2423 = vmul.f32 %v2415, %v2421
    %2425 = vrot.lane.b32.xlu0 %v2423, 96
    %v2426 = vpop.permute.xlu0 %2425
    %v2428 = vadd.f32 %v2418, %v2426
    %v2429 = vtanh.pop %v2428
    %2431 = vrot.lane.b32.xlu0 %v2429, 64
    %v2432 = vpop.permute.xlu0 %2431
    %v2434 = vmul.f32 %v2415, %v2432
    %v2435 = vadd.f32 %v2405, %v1349
    %v2436 = vld [vmem:[#allocation3] sm:$0x3]
    %v2437 = vxor.u32 %v2435, 2147483648
    %v2438 = vmul.f32 %v2437, 1.442695
    %v2439 = vpow.pop %v2438
    %v2440 = vadd.f32 %v2439, 1.0
    %v2441 = vrcp.pop %v2440
    %v2442 = vmul.f32 1.0, %v2441
    %v2443 = vmul.f32 %v2442, 2.0
    %v2444 = vsub.f32 %v2443, 1.0
    %2446 = vrot.lane.b32.xlu0 %v2436, 32
    %v2447 = vpop.permute.xlu0 %2446
    %v2449 = vmul.f32 %v2442, %v2447
    %2451 = vrot.lane.b32.xlu0 %v2444, 64
    %v2452 = vpop.permute.xlu0 %2451
    %v2454 = vmul.f32 %v2442, %v2452
    %2456 = vrot.lane.b32.xlu0 %v2454, 96
    %v2457 = vpop.permute.xlu0 %2456
    %v2459 = vadd.f32 %v2449, %v2457
    %v2460 = vtanh.pop %v2459
    %2462 = vrot.lane.b32.xlu0 %v2460, 64
    %v2463 = vpop.permute.xlu0 %2462
    %v2465 = vmul.f32 %v2442, %v2463
    %2467 = vrot.lane.b32.xlu0 %v2465, 32
    %v2468 = vpop.permute.xlu0 %2467
    %2470 = vst.msk [vmem:[#allocation2] sm:$0x3] %vm50, %v2468
    %2472 = vrot.lane.b32.xlu0 %v2459, 96
    %v2473 = vpop.permute.xlu0 %2472
    %2475 = vst.msk [vmem:[#allocation3] sm:$0x3] %vm50, %v2473
    %s2476 = scalar_lea.vmem [#allocation4], 14
    %2477 = vst.msk [vmem:[%s2476] sm:$0x3] %vm50, %v2468
    %v2478 = vld [vmem:[#allocation2] sm:$0x3]
    %2480 = vrot.lane.b32.xlu0 %v2434, 32
    %v2481 = vpop.permute.xlu0 %2480
    %2484 = vrot.lane.b32.xlu0 %v2478, 32
    %v2485 = vpop.permute.xlu0 %2484
    %v2487 = vsel %vm75, %v2481, %v2485
    %v2489 = vsel %vm77, %v2487, 0
    %2491 = vmatprep.subr.mxu0 0.0
    %2492 = vmatpush1.msra.mxu0 0.0
    %2493 = vmatprep.subr.mxu0 0.0
    %2494 = vmatpush1.msra.mxu0 0.0
    %2495 = vmatprep.subr.mxu0 0.0
    %2496 = vmatpush1.msra.mxu0 0.0
    %2497 = vmatprep.subr.mxu0 0.0
    %2498 = vmatpush1.msra.mxu0 0.0
    %2499 = vmatprep.subr.mxu0 0.0
    %2500 = vmatpush1.msra.mxu0 0.0
    %2501 = vmatprep.subr.mxu0 0.0
    %2502 = vmatpush1.msra.mxu0 0.0
    %2503 = vmatprep.subr.mxu0 0.0
    %2504 = vmatpush1.msra.mxu0 0.0
    %2505 = vmatprep.subr.mxu0 0.0
    %2506 = vmatpush1.msra.mxu0 0.0
    %2507 = vmatprep.subr.mxu0 %v68
    %2508 = vmatpush1.msra.mxu0 %v67
    %2509 = vmatprep.subr.mxu0 %v66
    %2510 = vmatpush1.msra.mxu0 %v65
    %2511 = vmatprep.subr.mxu0 %v64
    %2512 = vmatpush1.msra.mxu0 %v63
    %2513 = vmatprep.subr.mxu0 %v62
    %2514 = vmatpush1.msra.mxu0 %v61
    %2515 = vmatprep.subr.mxu0 %v60
    %2516 = vmatpush1.msra.mxu0 %v59
    %2517 = vmatprep.subr.mxu0 %v58
    %2518 = vmatpush1.msra.mxu0 %v57
    %2519 = vmatprep.subr.mxu0 %v56
    %2520 = vmatpush1.msra.mxu0 %v55
    %2521 = vmatprep.subr.mxu0 %v54
    %2522 = vmatpush1.msra.mxu0 %v53
    %2523 = vmatprep.subr.mxu0 0.0
    %2524 = vmatpush2.msra.mxu0 0.0
    %2525 = vmatprep.subr.mxu0 0.0
    %2526 = vmatpush2.msra.mxu0 0.0
    %2527 = vmatprep.subr.mxu0 0.0
    %2528 = vmatpush2.msra.mxu0 0.0
    %2529 = vmatprep.subr.mxu0 0.0
    %2530 = vmatpush2.msra.mxu0 0.0
    %2531 = vmatprep.subr.mxu0 0.0
    %2532 = vmatpush2.msra.mxu0 0.0
    %2533 = vmatprep.subr.mxu0 0.0
    %2534 = vmatpush2.msra.mxu0 0.0
    %2535 = vmatprep.subr.mxu0 0.0
    %2536 = vmatpush2.msra.mxu0 0.0
    %2537 = vmatprep.subr.mxu0 0.0
    %2538 = vmatpush2.msra.mxu0 0.0
    %2539 = vmatprep.subr.mxu0 0.0
    %2540 = vmatpush2.msra.mxu0 0.0
    %2541 = vmatprep.subr.mxu0 0.0
    %2542 = vmatpush2.msra.mxu0 0.0
    %2543 = vmatprep.subr.mxu0 0.0
    %2544 = vmatpush2.msra.mxu0 0.0
    %2545 = vmatprep.subr.mxu0 0.0
    %2546 = vmatpush2.msra.mxu0 0.0
    %2547 = vmatprep.subr.mxu0 0.0
    %2548 = vmatpush2.msra.mxu0 0.0
    %2549 = vmatprep.subr.mxu0 0.0
    %2550 = vmatpush2.msra.mxu0 0.0
    %2551 = vmatprep.subr.mxu0 0.0
    %2552 = vmatpush2.msra.mxu0 0.0
    %2553 = vmatprep.subr.mxu0 0.0
    %2554 = vmatpush2.msra.mxu0 0.0
    %2555 = vmatprep.mubr.f32.mxu0 0.0
    %2556 = vmatmul.mubr.f32.gmra.mxu0 %v2489
    %v2557 = vpop.f32.mrf.mxu0
    %v2558 = vadd.f32 0.0, %v2557
    %v2559 = vpop.f32.mrf.mxu0
    %v2560 = vadd.f32 0.0, %v2559
    %2561 = vdwg.mxu0
    %s2562 = scalar_lea.vmem [#allocation6], 38
    %v2563 = vld [vmem:[%s2562] sm:$0x3]
    %v2564 = vadd.f32 %v2563, %v2558
    %v2565 = vxor.u32 %v2564, 2147483648
    %v2566 = vmul.f32 %v2565, 1.442695
    %v2567 = vpow.pop %v2566
    %v2568 = vadd.f32 %v2567, 1.0
    %v2569 = vrcp.pop %v2568
    %v2570 = vmul.f32 1.0, %v2569
    %v2571 = vmul.f32 %v2570, 2.0
    %v2572 = vsub.f32 %v2571, 1.0
    %v2573 = vmul.f32 %v2570, %v2428
    %2575 = vrot.lane.b32.xlu0 %v2572, 64
    %v2576 = vpop.permute.xlu0 %2575
    %v2578 = vmul.f32 %v2570, %v2576
    %2580 = vrot.lane.b32.xlu0 %v2578, 96
    %v2581 = vpop.permute.xlu0 %2580
    %v2583 = vadd.f32 %v2573, %v2581
    %v2584 = vtanh.pop %v2583
    %2586 = vrot.lane.b32.xlu0 %v2584, 64
    %v2587 = vpop.permute.xlu0 %2586
    %v2589 = vmul.f32 %v2570, %v2587
    %v2590 = vadd.f32 %v2560, %v1349
    %v2591 = vld [vmem:[#allocation3] sm:$0x3]
    %v2592 = vxor.u32 %v2590, 2147483648
    %v2593 = vmul.f32 %v2592, 1.442695
    %v2594 = vpow.pop %v2593
    %v2595 = vadd.f32 %v2594, 1.0
    %v2596 = vrcp.pop %v2595
    %v2597 = vmul.f32 1.0, %v2596
    %v2598 = vmul.f32 %v2597, 2.0
    %v2599 = vsub.f32 %v2598, 1.0
    %2601 = vrot.lane.b32.xlu0 %v2591, 32
    %v2602 = vpop.permute.xlu0 %2601
    %v2604 = vmul.f32 %v2597, %v2602
    %2606 = vrot.lane.b32.xlu0 %v2599, 64
    %v2607 = vpop.permute.xlu0 %2606
    %v2609 = vmul.f32 %v2597, %v2607
    %2611 = vrot.lane.b32.xlu0 %v2609, 96
    %v2612 = vpop.permute.xlu0 %2611
    %v2614 = vadd.f32 %v2604, %v2612
    %v2615 = vtanh.pop %v2614
    %2617 = vrot.lane.b32.xlu0 %v2615, 64
    %v2618 = vpop.permute.xlu0 %2617
    %v2620 = vmul.f32 %v2597, %v2618
    %2622 = vrot.lane.b32.xlu0 %v2620, 32
    %v2623 = vpop.permute.xlu0 %2622
    %2625 = vst.msk [vmem:[#allocation2] sm:$0x3] %vm50, %v2623
    %2627 = vrot.lane.b32.xlu0 %v2614, 96
    %v2628 = vpop.permute.xlu0 %2627
    %2630 = vst.msk [vmem:[#allocation3] sm:$0x3] %vm50, %v2628
    %s2631 = scalar_lea.vmem [#allocation4], 16
    %2632 = vst.msk [vmem:[%s2631] sm:$0x3] %vm50, %v2623
    %v2633 = vld [vmem:[#allocation2] sm:$0x3]
    %2635 = vrot.lane.b32.xlu0 %v2589, 32
    %v2636 = vpop.permute.xlu0 %2635
    %2639 = vrot.lane.b32.xlu0 %v2633, 32
    %v2640 = vpop.permute.xlu0 %2639
    %v2642 = vsel %vm75, %v2636, %v2640
    %v2644 = vsel %vm77, %v2642, 0
    %2646 = vmatprep.subr.mxu0 0.0
    %2647 = vmatpush1.msra.mxu0 0.0
    %2648 = vmatprep.subr.mxu0 0.0
    %2649 = vmatpush1.msra.mxu0 0.0
    %2650 = vmatprep.subr.mxu0 0.0
    %2651 = vmatpush1.msra.mxu0 0.0
    %2652 = vmatprep.subr.mxu0 0.0
    %2653 = vmatpush1.msra.mxu0 0.0
    %2654 = vmatprep.subr.mxu0 0.0
    %2655 = vmatpush1.msra.mxu0 0.0
    %2656 = vmatprep.subr.mxu0 0.0
    %2657 = vmatpush1.msra.mxu0 0.0
    %2658 = vmatprep.subr.mxu0 0.0
    %2659 = vmatpush1.msra.mxu0 0.0
    %2660 = vmatprep.subr.mxu0 0.0
    %2661 = vmatpush1.msra.mxu0 0.0
    %2662 = vmatprep.subr.mxu0 %v68
    %2663 = vmatpush1.msra.mxu0 %v67
    %2664 = vmatprep.subr.mxu0 %v66
    %2665 = vmatpush1.msra.mxu0 %v65
    %2666 = vmatprep.subr.mxu0 %v64
    %2667 = vmatpush1.msra.mxu0 %v63
    %2668 = vmatprep.subr.mxu0 %v62
    %2669 = vmatpush1.msra.mxu0 %v61
    %2670 = vmatprep.subr.mxu0 %v60
    %2671 = vmatpush1.msra.mxu0 %v59
    %2672 = vmatprep.subr.mxu0 %v58
    %2673 = vmatpush1.msra.mxu0 %v57
    %2674 = vmatprep.subr.mxu0 %v56
    %2675 = vmatpush1.msra.mxu0 %v55
    %2676 = vmatprep.subr.mxu0 %v54
    %2677 = vmatpush1.msra.mxu0 %v53
    %2678 = vmatprep.subr.mxu0 0.0
    %2679 = vmatpush2.msra.mxu0 0.0
    %2680 = vmatprep.subr.mxu0 0.0
    %2681 = vmatpush2.msra.mxu0 0.0
    %2682 = vmatprep.subr.mxu0 0.0
    %2683 = vmatpush2.msra.mxu0 0.0
    %2684 = vmatprep.subr.mxu0 0.0
    %2685 = vmatpush2.msra.mxu0 0.0
    %2686 = vmatprep.subr.mxu0 0.0
    %2687 = vmatpush2.msra.mxu0 0.0
    %2688 = vmatprep.subr.mxu0 0.0
    %2689 = vmatpush2.msra.mxu0 0.0
    %2690 = vmatprep.subr.mxu0 0.0
    %2691 = vmatpush2.msra.mxu0 0.0
    %2692 = vmatprep.subr.mxu0 0.0
    %2693 = vmatpush2.msra.mxu0 0.0
    %2694 = vmatprep.subr.mxu0 0.0
    %2695 = vmatpush2.msra.mxu0 0.0
    %2696 = vmatprep.subr.mxu0 0.0
    %2697 = vmatpush2.msra.mxu0 0.0
    %2698 = vmatprep.subr.mxu0 0.0
    %2699 = vmatpush2.msra.mxu0 0.0
    %2700 = vmatprep.subr.mxu0 0.0
    %2701 = vmatpush2.msra.mxu0 0.0
    %2702 = vmatprep.subr.mxu0 0.0
    %2703 = vmatpush2.msra.mxu0 0.0
    %2704 = vmatprep.subr.mxu0 0.0
    %2705 = vmatpush2.msra.mxu0 0.0
    %2706 = vmatprep.subr.mxu0 0.0
    %2707 = vmatpush2.msra.mxu0 0.0
    %2708 = vmatprep.subr.mxu0 0.0
    %2709 = vmatpush2.msra.mxu0 0.0
    %2710 = vmatprep.mubr.f32.mxu0 0.0
    %2711 = vmatmul.mubr.f32.gmra.mxu0 %v2644
    %v2712 = vpop.f32.mrf.mxu0
    %v2713 = vadd.f32 0.0, %v2712
    %v2714 = vpop.f32.mrf.mxu0
    %v2715 = vadd.f32 0.0, %v2714
    %2716 = vdwg.mxu0
    %s2717 = scalar_lea.vmem [#allocation6], 40
    %v2718 = vld [vmem:[%s2717] sm:$0x3]
    %v2719 = vadd.f32 %v2718, %v2713
    %v2720 = vxor.u32 %v2719, 2147483648
    %v2721 = vmul.f32 %v2720, 1.442695
    %v2722 = vpow.pop %v2721
    %v2723 = vadd.f32 %v2722, 1.0
    %v2724 = vrcp.pop %v2723
    %v2725 = vmul.f32 1.0, %v2724
    %v2726 = vmul.f32 %v2725, 2.0
    %v2727 = vsub.f32 %v2726, 1.0
    %v2728 = vmul.f32 %v2725, %v2583
    %2730 = vrot.lane.b32.xlu0 %v2727, 64
    %v2731 = vpop.permute.xlu0 %2730
    %v2733 = vmul.f32 %v2725, %v2731
    %2735 = vrot.lane.b32.xlu0 %v2733, 96
    %v2736 = vpop.permute.xlu0 %2735
    %v2738 = vadd.f32 %v2728, %v2736
    %v2739 = vtanh.pop %v2738
    %2741 = vrot.lane.b32.xlu0 %v2739, 64
    %v2742 = vpop.permute.xlu0 %2741
    %v2744 = vmul.f32 %v2725, %v2742
    %v2745 = vadd.f32 %v2715, %v1349
    %v2746 = vld [vmem:[#allocation3] sm:$0x3]
    %v2747 = vxor.u32 %v2745, 2147483648
    %v2748 = vmul.f32 %v2747, 1.442695
    %v2749 = vpow.pop %v2748
    %v2750 = vadd.f32 %v2749, 1.0
    %v2751 = vrcp.pop %v2750
    %v2752 = vmul.f32 1.0, %v2751
    %v2753 = vmul.f32 %v2752, 2.0
    %v2754 = vsub.f32 %v2753, 1.0
    %2756 = vrot.lane.b32.xlu0 %v2746, 32
    %v2757 = vpop.permute.xlu0 %2756
    %v2759 = vmul.f32 %v2752, %v2757
    %2761 = vrot.lane.b32.xlu0 %v2754, 64
    %v2762 = vpop.permute.xlu0 %2761
    %v2764 = vmul.f32 %v2752, %v2762
    %2766 = vrot.lane.b32.xlu0 %v2764, 96
    %v2767 = vpop.permute.xlu0 %2766
    %v2769 = vadd.f32 %v2759, %v2767
    %v2770 = vtanh.pop %v2769
    %2772 = vrot.lane.b32.xlu0 %v2770, 64
    %v2773 = vpop.permute.xlu0 %2772
    %v2775 = vmul.f32 %v2752, %v2773
    %2777 = vrot.lane.b32.xlu0 %v2775, 32
    %v2778 = vpop.permute.xlu0 %2777
    %2780 = vst.msk [vmem:[#allocation2] sm:$0x3] %vm50, %v2778
    %2782 = vrot.lane.b32.xlu0 %v2769, 96
    %v2783 = vpop.permute.xlu0 %2782
    %2785 = vst.msk [vmem:[#allocation3] sm:$0x3] %vm50, %v2783
    %s2786 = scalar_lea.vmem [#allocation4], 18
    %2787 = vst.msk [vmem:[%s2786] sm:$0x3] %vm50, %v2778
    %v2788 = vld [vmem:[#allocation2] sm:$0x3]
    %2790 = vrot.lane.b32.xlu0 %v2744, 32
    %v2791 = vpop.permute.xlu0 %2790
    %2794 = vrot.lane.b32.xlu0 %v2788, 32
    %v2795 = vpop.permute.xlu0 %2794
    %v2797 = vsel %vm75, %v2791, %v2795
    %v2799 = vsel %vm77, %v2797, 0
    %2801 = vmatprep.subr.mxu0 0.0
    %2802 = vmatpush1.msra.mxu0 0.0
    %2803 = vmatprep.subr.mxu0 0.0
    %2804 = vmatpush1.msra.mxu0 0.0
    %2805 = vmatprep.subr.mxu0 0.0
    %2806 = vmatpush1.msra.mxu0 0.0
    %2807 = vmatprep.subr.mxu0 0.0
    %2808 = vmatpush1.msra.mxu0 0.0
    %2809 = vmatprep.subr.mxu0 0.0
    %2810 = vmatpush1.msra.mxu0 0.0
    %2811 = vmatprep.subr.mxu0 0.0
    %2812 = vmatpush1.msra.mxu0 0.0
    %2813 = vmatprep.subr.mxu0 0.0
    %2814 = vmatpush1.msra.mxu0 0.0
    %2815 = vmatprep.subr.mxu0 0.0
    %2816 = vmatpush1.msra.mxu0 0.0
    %2817 = vmatprep.subr.mxu0 %v68
    %2818 = vmatpush1.msra.mxu0 %v67
    %2819 = vmatprep.subr.mxu0 %v66
    %2820 = vmatpush1.msra.mxu0 %v65
    %2821 = vmatprep.subr.mxu0 %v64
    %2822 = vmatpush1.msra.mxu0 %v63
    %2823 = vmatprep.subr.mxu0 %v62
    %2824 = vmatpush1.msra.mxu0 %v61
    %2825 = vmatprep.subr.mxu0 %v60
    %2826 = vmatpush1.msra.mxu0 %v59
    %2827 = vmatprep.subr.mxu0 %v58
    %2828 = vmatpush1.msra.mxu0 %v57
    %2829 = vmatprep.subr.mxu0 %v56
    %2830 = vmatpush1.msra.mxu0 %v55
    %2831 = vmatprep.subr.mxu0 %v54
    %2832 = vmatpush1.msra.mxu0 %v53
    %2833 = vmatprep.subr.mxu0 0.0
    %2834 = vmatpush2.msra.mxu0 0.0
    %2835 = vmatprep.subr.mxu0 0.0
    %2836 = vmatpush2.msra.mxu0 0.0
    %2837 = vmatprep.subr.mxu0 0.0
    %2838 = vmatpush2.msra.mxu0 0.0
    %2839 = vmatprep.subr.mxu0 0.0
    %2840 = vmatpush2.msra.mxu0 0.0
    %2841 = vmatprep.subr.mxu0 0.0
    %2842 = vmatpush2.msra.mxu0 0.0
    %2843 = vmatprep.subr.mxu0 0.0
    %2844 = vmatpush2.msra.mxu0 0.0
    %2845 = vmatprep.subr.mxu0 0.0
    %2846 = vmatpush2.msra.mxu0 0.0
    %2847 = vmatprep.subr.mxu0 0.0
    %2848 = vmatpush2.msra.mxu0 0.0
    %2849 = vmatprep.subr.mxu0 0.0
    %2850 = vmatpush2.msra.mxu0 0.0
    %2851 = vmatprep.subr.mxu0 0.0
    %2852 = vmatpush2.msra.mxu0 0.0
    %2853 = vmatprep.subr.mxu0 0.0
    %2854 = vmatpush2.msra.mxu0 0.0
    %2855 = vmatprep.subr.mxu0 0.0
    %2856 = vmatpush2.msra.mxu0 0.0
    %2857 = vmatprep.subr.mxu0 0.0
    %2858 = vmatpush2.msra.mxu0 0.0
    %2859 = vmatprep.subr.mxu0 0.0
    %2860 = vmatpush2.msra.mxu0 0.0
    %2861 = vmatprep.subr.mxu0 0.0
    %2862 = vmatpush2.msra.mxu0 0.0
    %2863 = vmatprep.subr.mxu0 0.0
    %2864 = vmatpush2.msra.mxu0 0.0
    %2865 = vmatprep.mubr.f32.mxu0 0.0
    %2866 = vmatmul.mubr.f32.gmra.mxu0 %v2799
    %v2867 = vpop.f32.mrf.mxu0
    %v2868 = vadd.f32 0.0, %v2867
    %v2869 = vpop.f32.mrf.mxu0
    %v2870 = vadd.f32 0.0, %v2869
    %2871 = vdwg.mxu0
    %s2872 = scalar_lea.vmem [#allocation6], 42
    %v2873 = vld [vmem:[%s2872] sm:$0x3]
    %v2874 = vadd.f32 %v2873, %v2868
    %v2875 = vxor.u32 %v2874, 2147483648
    %v2876 = vmul.f32 %v2875, 1.442695
    %v2877 = vpow.pop %v2876
    %v2878 = vadd.f32 %v2877, 1.0
    %v2879 = vrcp.pop %v2878
    %v2880 = vmul.f32 1.0, %v2879
    %v2881 = vmul.f32 %v2880, 2.0
    %v2882 = vsub.f32 %v2881, 1.0
    %v2883 = vmul.f32 %v2880, %v2738
    %2885 = vrot.lane.b32.xlu0 %v2882, 64
    %v2886 = vpop.permute.xlu0 %2885
    %v2888 = vmul.f32 %v2880, %v2886
    %2890 = vrot.lane.b32.xlu0 %v2888, 96
    %v2891 = vpop.permute.xlu0 %2890
    %v2893 = vadd.f32 %v2883, %v2891
    %v2894 = vtanh.pop %v2893
    %2896 = vrot.lane.b32.xlu0 %v2894, 64
    %v2897 = vpop.permute.xlu0 %2896
    %v2899 = vmul.f32 %v2880, %v2897
    %v2900 = vadd.f32 %v2870, %v1349
    %v2901 = vld [vmem:[#allocation3] sm:$0x3]
    %v2902 = vxor.u32 %v2900, 2147483648
    %v2903 = vmul.f32 %v2902, 1.442695
    %v2904 = vpow.pop %v2903
    %v2905 = vadd.f32 %v2904, 1.0
    %v2906 = vrcp.pop %v2905
    %v2907 = vmul.f32 1.0, %v2906
    %v2908 = vmul.f32 %v2907, 2.0
    %v2909 = vsub.f32 %v2908, 1.0
    %2911 = vrot.lane.b32.xlu0 %v2901, 32
    %v2912 = vpop.permute.xlu0 %2911
    %v2914 = vmul.f32 %v2907, %v2912
    %2916 = vrot.lane.b32.xlu0 %v2909, 64
    %v2917 = vpop.permute.xlu0 %2916
    %v2919 = vmul.f32 %v2907, %v2917
    %2921 = vrot.lane.b32.xlu0 %v2919, 96
    %v2922 = vpop.permute.xlu0 %2921
    %v2924 = vadd.f32 %v2914, %v2922
    %v2925 = vtanh.pop %v2924
    %2927 = vrot.lane.b32.xlu0 %v2925, 64
    %v2928 = vpop.permute.xlu0 %2927
    %v2930 = vmul.f32 %v2907, %v2928
    %2932 = vrot.lane.b32.xlu0 %v2930, 32
    %v2933 = vpop.permute.xlu0 %2932
    %2935 = vst.msk [vmem:[#allocation2] sm:$0x3] %vm50, %v2933
    %2937 = vrot.lane.b32.xlu0 %v2924, 96
    %v2938 = vpop.permute.xlu0 %2937
    %2940 = vst.msk [vmem:[#allocation3] sm:$0x3] %vm50, %v2938
    %s2941 = scalar_lea.vmem [#allocation4], 20
    %2942 = vst.msk [vmem:[%s2941] sm:$0x3] %vm50, %v2933
    %v2943 = vld [vmem:[#allocation2] sm:$0x3]
    %2945 = vrot.lane.b32.xlu0 %v2899, 32
    %v2946 = vpop.permute.xlu0 %2945
    %2949 = vrot.lane.b32.xlu0 %v2943, 32
    %v2950 = vpop.permute.xlu0 %2949
    %v2952 = vsel %vm75, %v2946, %v2950
    %v2954 = vsel %vm77, %v2952, 0
    %2956 = vmatprep.subr.mxu0 0.0
    %2957 = vmatpush1.msra.mxu0 0.0
    %2958 = vmatprep.subr.mxu0 0.0
    %2959 = vmatpush1.msra.mxu0 0.0
    %2960 = vmatprep.subr.mxu0 0.0
    %2961 = vmatpush1.msra.mxu0 0.0
    %2962 = vmatprep.subr.mxu0 0.0
    %2963 = vmatpush1.msra.mxu0 0.0
    %2964 = vmatprep.subr.mxu0 0.0
    %2965 = vmatpush1.msra.mxu0 0.0
    %2966 = vmatprep.subr.mxu0 0.0
    %2967 = vmatpush1.msra.mxu0 0.0
    %2968 = vmatprep.subr.mxu0 0.0
    %2969 = vmatpush1.msra.mxu0 0.0
    %2970 = vmatprep.subr.mxu0 0.0
    %2971 = vmatpush1.msra.mxu0 0.0
    %2972 = vmatprep.subr.mxu0 %v68
    %2973 = vmatpush1.msra.mxu0 %v67
    %2974 = vmatprep.subr.mxu0 %v66
    %2975 = vmatpush1.msra.mxu0 %v65
    %2976 = vmatprep.subr.mxu0 %v64
    %2977 = vmatpush1.msra.mxu0 %v63
    %2978 = vmatprep.subr.mxu0 %v62
    %2979 = vmatpush1.msra.mxu0 %v61
    %2980 = vmatprep.subr.mxu0 %v60
    %2981 = vmatpush1.msra.mxu0 %v59
    %2982 = vmatprep.subr.mxu0 %v58
    %2983 = vmatpush1.msra.mxu0 %v57
    %2984 = vmatprep.subr.mxu0 %v56
    %2985 = vmatpush1.msra.mxu0 %v55
    %2986 = vmatprep.subr.mxu0 %v54
    %2987 = vmatpush1.msra.mxu0 %v53
    %2988 = vmatprep.subr.mxu0 0.0
    %2989 = vmatpush2.msra.mxu0 0.0
    %2990 = vmatprep.subr.mxu0 0.0
    %2991 = vmatpush2.msra.mxu0 0.0
    %2992 = vmatprep.subr.mxu0 0.0
    %2993 = vmatpush2.msra.mxu0 0.0
    %2994 = vmatprep.subr.mxu0 0.0
    %2995 = vmatpush2.msra.mxu0 0.0
    %2996 = vmatprep.subr.mxu0 0.0
    %2997 = vmatpush2.msra.mxu0 0.0
    %2998 = vmatprep.subr.mxu0 0.0
    %2999 = vmatpush2.msra.mxu0 0.0
    %3000 = vmatprep.subr.mxu0 0.0
    %3001 = vmatpush2.msra.mxu0 0.0
    %3002 = vmatprep.subr.mxu0 0.0
    %3003 = vmatpush2.msra.mxu0 0.0
    %3004 = vmatprep.subr.mxu0 0.0
    %3005 = vmatpush2.msra.mxu0 0.0
    %3006 = vmatprep.subr.mxu0 0.0
    %3007 = vmatpush2.msra.mxu0 0.0
    %3008 = vmatprep.subr.mxu0 0.0
    %3009 = vmatpush2.msra.mxu0 0.0
    %3010 = vmatprep.subr.mxu0 0.0
    %3011 = vmatpush2.msra.mxu0 0.0
    %3012 = vmatprep.subr.mxu0 0.0
    %3013 = vmatpush2.msra.mxu0 0.0
    %3014 = vmatprep.subr.mxu0 0.0
    %3015 = vmatpush2.msra.mxu0 0.0
    %3016 = vmatprep.subr.mxu0 0.0
    %3017 = vmatpush2.msra.mxu0 0.0
    %3018 = vmatprep.subr.mxu0 0.0
    %3019 = vmatpush2.msra.mxu0 0.0
    %3020 = vmatprep.mubr.f32.mxu0 0.0
    %3021 = vmatmul.mubr.f32.gmra.mxu0 %v2954
    %v3022 = vpop.f32.mrf.mxu0
    %v3023 = vadd.f32 0.0, %v3022
    %v3024 = vpop.f32.mrf.mxu0
    %v3025 = vadd.f32 0.0, %v3024
    %3026 = vdwg.mxu0
    %s3027 = scalar_lea.vmem [#allocation6], 44
    %v3028 = vld [vmem:[%s3027] sm:$0x3]
    %v3029 = vadd.f32 %v3028, %v3023
    %v3030 = vxor.u32 %v3029, 2147483648
    %v3031 = vmul.f32 %v3030, 1.442695
    %v3032 = vpow.pop %v3031
    %v3033 = vadd.f32 %v3032, 1.0
    %v3034 = vrcp.pop %v3033
    %v3035 = vmul.f32 1.0, %v3034
    %v3036 = vmul.f32 %v3035, 2.0
    %v3037 = vsub.f32 %v3036, 1.0
    %v3038 = vmul.f32 %v3035, %v2893
    %3040 = vrot.lane.b32.xlu0 %v3037, 64
    %v3041 = vpop.permute.xlu0 %3040
    %v3043 = vmul.f32 %v3035, %v3041
    %3045 = vrot.lane.b32.xlu0 %v3043, 96
    %v3046 = vpop.permute.xlu0 %3045
    %v3048 = vadd.f32 %v3038, %v3046
    %v3049 = vtanh.pop %v3048
    %3051 = vrot.lane.b32.xlu0 %v3049, 64
    %v3052 = vpop.permute.xlu0 %3051
    %v3054 = vmul.f32 %v3035, %v3052
    %v3055 = vadd.f32 %v3025, %v1349
    %v3056 = vld [vmem:[#allocation3] sm:$0x3]
    %v3057 = vxor.u32 %v3055, 2147483648
    %v3058 = vmul.f32 %v3057, 1.442695
    %v3059 = vpow.pop %v3058
    %v3060 = vadd.f32 %v3059, 1.0
    %v3061 = vrcp.pop %v3060
    %v3062 = vmul.f32 1.0, %v3061
    %v3063 = vmul.f32 %v3062, 2.0
    %v3064 = vsub.f32 %v3063, 1.0
    %3066 = vrot.lane.b32.xlu0 %v3056, 32
    %v3067 = vpop.permute.xlu0 %3066
    %v3069 = vmul.f32 %v3062, %v3067
    %3071 = vrot.lane.b32.xlu0 %v3064, 64
    %v3072 = vpop.permute.xlu0 %3071
    %v3074 = vmul.f32 %v3062, %v3072
    %3076 = vrot.lane.b32.xlu0 %v3074, 96
    %v3077 = vpop.permute.xlu0 %3076
    %v3079 = vadd.f32 %v3069, %v3077
    %v3080 = vtanh.pop %v3079
    %3082 = vrot.lane.b32.xlu0 %v3080, 64
    %v3083 = vpop.permute.xlu0 %3082
    %v3085 = vmul.f32 %v3062, %v3083
    %3087 = vrot.lane.b32.xlu0 %v3085, 32
    %v3088 = vpop.permute.xlu0 %3087
    %3090 = vst.msk [vmem:[#allocation2] sm:$0x3] %vm50, %v3088
    %3092 = vrot.lane.b32.xlu0 %v3079, 96
    %v3093 = vpop.permute.xlu0 %3092
    %3095 = vst.msk [vmem:[#allocation3] sm:$0x3] %vm50, %v3093
    %s3096 = scalar_lea.vmem [#allocation4], 22
    %3097 = vst.msk [vmem:[%s3096] sm:$0x3] %vm50, %v3088
    %v3098 = vld [vmem:[#allocation2] sm:$0x3]
    %3100 = vrot.lane.b32.xlu0 %v3054, 32
    %v3101 = vpop.permute.xlu0 %3100
    %3104 = vrot.lane.b32.xlu0 %v3098, 32
    %v3105 = vpop.permute.xlu0 %3104
    %v3107 = vsel %vm75, %v3101, %v3105
    %v3109 = vsel %vm77, %v3107, 0
    %3111 = vmatprep.subr.mxu0 0.0
    %3112 = vmatpush1.msra.mxu0 0.0
    %3113 = vmatprep.subr.mxu0 0.0
    %3114 = vmatpush1.msra.mxu0 0.0
    %3115 = vmatprep.subr.mxu0 0.0
    %3116 = vmatpush1.msra.mxu0 0.0
    %3117 = vmatprep.subr.mxu0 0.0
    %3118 = vmatpush1.msra.mxu0 0.0
    %3119 = vmatprep.subr.mxu0 0.0
    %3120 = vmatpush1.msra.mxu0 0.0
    %3121 = vmatprep.subr.mxu0 0.0
    %3122 = vmatpush1.msra.mxu0 0.0
    %3123 = vmatprep.subr.mxu0 0.0
    %3124 = vmatpush1.msra.mxu0 0.0
    %3125 = vmatprep.subr.mxu0 0.0
    %3126 = vmatpush1.msra.mxu0 0.0
    %3127 = vmatprep.subr.mxu0 %v68
    %3128 = vmatpush1.msra.mxu0 %v67
    %3129 = vmatprep.subr.mxu0 %v66
    %3130 = vmatpush1.msra.mxu0 %v65
    %3131 = vmatprep.subr.mxu0 %v64
    %3132 = vmatpush1.msra.mxu0 %v63
    %3133 = vmatprep.subr.mxu0 %v62
    %3134 = vmatpush1.msra.mxu0 %v61
    %3135 = vmatprep.subr.mxu0 %v60
    %3136 = vmatpush1.msra.mxu0 %v59
    %3137 = vmatprep.subr.mxu0 %v58
    %3138 = vmatpush1.msra.mxu0 %v57
    %3139 = vmatprep.subr.mxu0 %v56
    %3140 = vmatpush1.msra.mxu0 %v55
    %3141 = vmatprep.subr.mxu0 %v54
    %3142 = vmatpush1.msra.mxu0 %v53
    %3143 = vmatprep.subr.mxu0 0.0
    %3144 = vmatpush2.msra.mxu0 0.0
    %3145 = vmatprep.subr.mxu0 0.0
    %3146 = vmatpush2.msra.mxu0 0.0
    %3147 = vmatprep.subr.mxu0 0.0
    %3148 = vmatpush2.msra.mxu0 0.0
    %3149 = vmatprep.subr.mxu0 0.0
    %3150 = vmatpush2.msra.mxu0 0.0
    %3151 = vmatprep.subr.mxu0 0.0
    %3152 = vmatpush2.msra.mxu0 0.0
    %3153 = vmatprep.subr.mxu0 0.0
    %3154 = vmatpush2.msra.mxu0 0.0
    %3155 = vmatprep.subr.mxu0 0.0
    %3156 = vmatpush2.msra.mxu0 0.0
    %3157 = vmatprep.subr.mxu0 0.0
    %3158 = vmatpush2.msra.mxu0 0.0
    %3159 = vmatprep.subr.mxu0 0.0
    %3160 = vmatpush2.msra.mxu0 0.0
    %3161 = vmatprep.subr.mxu0 0.0
    %3162 = vmatpush2.msra.mxu0 0.0
    %3163 = vmatprep.subr.mxu0 0.0
    %3164 = vmatpush2.msra.mxu0 0.0
    %3165 = vmatprep.subr.mxu0 0.0
    %3166 = vmatpush2.msra.mxu0 0.0
    %3167 = vmatprep.subr.mxu0 0.0
    %3168 = vmatpush2.msra.mxu0 0.0
    %3169 = vmatprep.subr.mxu0 0.0
    %3170 = vmatpush2.msra.mxu0 0.0
    %3171 = vmatprep.subr.mxu0 0.0
    %3172 = vmatpush2.msra.mxu0 0.0
    %3173 = vmatprep.subr.mxu0 0.0
    %3174 = vmatpush2.msra.mxu0 0.0
    %3175 = vmatprep.mubr.f32.mxu0 0.0
    %3176 = vmatmul.mubr.f32.gmra.mxu0 %v3109
    %v3177 = vpop.f32.mrf.mxu0
    %v3178 = vadd.f32 0.0, %v3177
    %v3179 = vpop.f32.mrf.mxu0
    %v3180 = vadd.f32 0.0, %v3179
    %3181 = vdwg.mxu0
    %s3182 = scalar_lea.vmem [#allocation6], 46
    %v3183 = vld [vmem:[%s3182] sm:$0x3]
    %v3184 = vadd.f32 %v3183, %v3178
    %v3185 = vxor.u32 %v3184, 2147483648
    %v3186 = vmul.f32 %v3185, 1.442695
    %v3187 = vpow.pop %v3186
    %v3188 = vadd.f32 %v3187, 1.0
    %v3189 = vrcp.pop %v3188
    %v3190 = vmul.f32 1.0, %v3189
    %v3191 = vmul.f32 %v3190, 2.0
    %v3192 = vsub.f32 %v3191, 1.0
    %v3193 = vmul.f32 %v3190, %v3048
    %3195 = vrot.lane.b32.xlu0 %v3192, 64
    %v3196 = vpop.permute.xlu0 %3195
    %v3198 = vmul.f32 %v3190, %v3196
    %3200 = vrot.lane.b32.xlu0 %v3198, 96
    %v3201 = vpop.permute.xlu0 %3200
    %v3203 = vadd.f32 %v3193, %v3201
    %v3204 = vtanh.pop %v3203
    %3206 = vrot.lane.b32.xlu0 %v3204, 64
    %v3207 = vpop.permute.xlu0 %3206
    %v3209 = vmul.f32 %v3190, %v3207
    %v3210 = vadd.f32 %v3180, %v1349
    %v3211 = vld [vmem:[#allocation3] sm:$0x3]
    %v3212 = vxor.u32 %v3210, 2147483648
    %v3213 = vmul.f32 %v3212, 1.442695
    %v3214 = vpow.pop %v3213
    %v3215 = vadd.f32 %v3214, 1.0
    %v3216 = vrcp.pop %v3215
    %v3217 = vmul.f32 1.0, %v3216
    %v3218 = vmul.f32 %v3217, 2.0
    %v3219 = vsub.f32 %v3218, 1.0
    %3221 = vrot.lane.b32.xlu0 %v3211, 32
    %v3222 = vpop.permute.xlu0 %3221
    %v3224 = vmul.f32 %v3217, %v3222
    %3226 = vrot.lane.b32.xlu0 %v3219, 64
    %v3227 = vpop.permute.xlu0 %3226
    %v3229 = vmul.f32 %v3217, %v3227
    %3231 = vrot.lane.b32.xlu0 %v3229, 96
    %v3232 = vpop.permute.xlu0 %3231
    %v3234 = vadd.f32 %v3224, %v3232
    %v3235 = vtanh.pop %v3234
    %3237 = vrot.lane.b32.xlu0 %v3235, 64
    %v3238 = vpop.permute.xlu0 %3237
    %v3240 = vmul.f32 %v3217, %v3238
    %3242 = vrot.lane.b32.xlu0 %v3240, 32
    %v3243 = vpop.permute.xlu0 %3242
    %3245 = vst.msk [vmem:[#allocation2] sm:$0x3] %vm50, %v3243
    %3247 = vrot.lane.b32.xlu0 %v3234, 96
    %v3248 = vpop.permute.xlu0 %3247
    %3250 = vst.msk [vmem:[#allocation3] sm:$0x3] %vm50, %v3248
    %s3251 = scalar_lea.vmem [#allocation4], 24
    %3252 = vst.msk [vmem:[%s3251] sm:$0x3] %vm50, %v3243
    %v3253 = vld [vmem:[#allocation2] sm:$0x3]
    %3255 = vrot.lane.b32.xlu0 %v3209, 32
    %v3256 = vpop.permute.xlu0 %3255
    %3259 = vrot.lane.b32.xlu0 %v3253, 32
    %v3260 = vpop.permute.xlu0 %3259
    %v3262 = vsel %vm75, %v3256, %v3260
    %v3264 = vsel %vm77, %v3262, 0
    %3266 = vmatprep.subr.mxu0 0.0
    %3267 = vmatpush1.msra.mxu0 0.0
    %3268 = vmatprep.subr.mxu0 0.0
    %3269 = vmatpush1.msra.mxu0 0.0
    %3270 = vmatprep.subr.mxu0 0.0
    %3271 = vmatpush1.msra.mxu0 0.0
    %3272 = vmatprep.subr.mxu0 0.0
    %3273 = vmatpush1.msra.mxu0 0.0
    %3274 = vmatprep.subr.mxu0 0.0
    %3275 = vmatpush1.msra.mxu0 0.0
    %3276 = vmatprep.subr.mxu0 0.0
    %3277 = vmatpush1.msra.mxu0 0.0
    %3278 = vmatprep.subr.mxu0 0.0
    %3279 = vmatpush1.msra.mxu0 0.0
    %3280 = vmatprep.subr.mxu0 0.0
    %3281 = vmatpush1.msra.mxu0 0.0
    %3282 = vmatprep.subr.mxu0 %v68
    %3283 = vmatpush1.msra.mxu0 %v67
    %3284 = vmatprep.subr.mxu0 %v66
    %3285 = vmatpush1.msra.mxu0 %v65
    %3286 = vmatprep.subr.mxu0 %v64
    %3287 = vmatpush1.msra.mxu0 %v63
    %3288 = vmatprep.subr.mxu0 %v62
    %3289 = vmatpush1.msra.mxu0 %v61
    %3290 = vmatprep.subr.mxu0 %v60
    %3291 = vmatpush1.msra.mxu0 %v59
    %3292 = vmatprep.subr.mxu0 %v58
    %3293 = vmatpush1.msra.mxu0 %v57
    %3294 = vmatprep.subr.mxu0 %v56
    %3295 = vmatpush1.msra.mxu0 %v55
    %3296 = vmatprep.subr.mxu0 %v54
    %3297 = vmatpush1.msra.mxu0 %v53
    %3298 = vmatprep.subr.mxu0 0.0
    %3299 = vmatpush2.msra.mxu0 0.0
    %3300 = vmatprep.subr.mxu0 0.0
    %3301 = vmatpush2.msra.mxu0 0.0
    %3302 = vmatprep.subr.mxu0 0.0
    %3303 = vmatpush2.msra.mxu0 0.0
    %3304 = vmatprep.subr.mxu0 0.0
    %3305 = vmatpush2.msra.mxu0 0.0
    %3306 = vmatprep.subr.mxu0 0.0
    %3307 = vmatpush2.msra.mxu0 0.0
    %3308 = vmatprep.subr.mxu0 0.0
    %3309 = vmatpush2.msra.mxu0 0.0
    %3310 = vmatprep.subr.mxu0 0.0
    %3311 = vmatpush2.msra.mxu0 0.0
    %3312 = vmatprep.subr.mxu0 0.0
    %3313 = vmatpush2.msra.mxu0 0.0
    %3314 = vmatprep.subr.mxu0 0.0
    %3315 = vmatpush2.msra.mxu0 0.0
    %3316 = vmatprep.subr.mxu0 0.0
    %3317 = vmatpush2.msra.mxu0 0.0
    %3318 = vmatprep.subr.mxu0 0.0
    %3319 = vmatpush2.msra.mxu0 0.0
    %3320 = vmatprep.subr.mxu0 0.0
    %3321 = vmatpush2.msra.mxu0 0.0
    %3322 = vmatprep.subr.mxu0 0.0
    %3323 = vmatpush2.msra.mxu0 0.0
    %3324 = vmatprep.subr.mxu0 0.0
    %3325 = vmatpush2.msra.mxu0 0.0
    %3326 = vmatprep.subr.mxu0 0.0
    %3327 = vmatpush2.msra.mxu0 0.0
    %3328 = vmatprep.subr.mxu0 0.0
    %3329 = vmatpush2.msra.mxu0 0.0
    %3330 = vmatprep.mubr.f32.mxu0 0.0
    %3331 = vmatmul.mubr.f32.gmra.mxu0 %v3264
    %v3332 = vpop.f32.mrf.mxu0
    %v3333 = vadd.f32 0.0, %v3332
    %v3334 = vpop.f32.mrf.mxu0
    %v3335 = vadd.f32 0.0, %v3334
    %3336 = vdwg.mxu0
    %s3337 = scalar_lea.vmem [#allocation6], 48
    %v3338 = vld [vmem:[%s3337] sm:$0x3]
    %v3339 = vadd.f32 %v3338, %v3333
    %v3340 = vxor.u32 %v3339, 2147483648
    %v3341 = vmul.f32 %v3340, 1.442695
    %v3342 = vpow.pop %v3341
    %v3343 = vadd.f32 %v3342, 1.0
    %v3344 = vrcp.pop %v3343
    %v3345 = vmul.f32 1.0, %v3344
    %v3346 = vmul.f32 %v3345, 2.0
    %v3347 = vsub.f32 %v3346, 1.0
    %v3348 = vmul.f32 %v3345, %v3203
    %3350 = vrot.lane.b32.xlu0 %v3347, 64
    %v3351 = vpop.permute.xlu0 %3350
    %v3353 = vmul.f32 %v3345, %v3351
    %3355 = vrot.lane.b32.xlu0 %v3353, 96
    %v3356 = vpop.permute.xlu0 %3355
    %v3358 = vadd.f32 %v3348, %v3356
    %v3359 = vtanh.pop %v3358
    %3361 = vrot.lane.b32.xlu0 %v3359, 64
    %v3362 = vpop.permute.xlu0 %3361
    %v3364 = vmul.f32 %v3345, %v3362
    %v3365 = vadd.f32 %v3335, %v1349
    %v3366 = vld [vmem:[#allocation3] sm:$0x3]
    %v3367 = vxor.u32 %v3365, 2147483648
    %v3368 = vmul.f32 %v3367, 1.442695
    %v3369 = vpow.pop %v3368
    %v3370 = vadd.f32 %v3369, 1.0
    %v3371 = vrcp.pop %v3370
    %v3372 = vmul.f32 1.0, %v3371
    %v3373 = vmul.f32 %v3372, 2.0
    %v3374 = vsub.f32 %v3373, 1.0
    %3376 = vrot.lane.b32.xlu0 %v3366, 32
    %v3377 = vpop.permute.xlu0 %3376
    %v3379 = vmul.f32 %v3372, %v3377
    %3381 = vrot.lane.b32.xlu0 %v3374, 64
    %v3382 = vpop.permute.xlu0 %3381
    %v3384 = vmul.f32 %v3372, %v3382
    %3386 = vrot.lane.b32.xlu0 %v3384, 96
    %v3387 = vpop.permute.xlu0 %3386
    %v3389 = vadd.f32 %v3379, %v3387
    %v3390 = vtanh.pop %v3389
    %3392 = vrot.lane.b32.xlu0 %v3390, 64
    %v3393 = vpop.permute.xlu0 %3392
    %v3395 = vmul.f32 %v3372, %v3393
    %3397 = vrot.lane.b32.xlu0 %v3395, 32
    %v3398 = vpop.permute.xlu0 %3397
    %3400 = vst.msk [vmem:[#allocation2] sm:$0x3] %vm50, %v3398
    %3402 = vrot.lane.b32.xlu0 %v3389, 96
    %v3403 = vpop.permute.xlu0 %3402
    %3405 = vst.msk [vmem:[#allocation3] sm:$0x3] %vm50, %v3403
    %s3406 = scalar_lea.vmem [#allocation4], 26
    %3407 = vst.msk [vmem:[%s3406] sm:$0x3] %vm50, %v3398
    %v3408 = vld [vmem:[#allocation2] sm:$0x3]
    %3410 = vrot.lane.b32.xlu0 %v3364, 32
    %v3411 = vpop.permute.xlu0 %3410
    %3414 = vrot.lane.b32.xlu0 %v3408, 32
    %v3415 = vpop.permute.xlu0 %3414
    %v3417 = vsel %vm75, %v3411, %v3415
    %v3419 = vsel %vm77, %v3417, 0
    %3421 = vmatprep.subr.mxu0 0.0
    %3422 = vmatpush1.msra.mxu0 0.0
    %3423 = vmatprep.subr.mxu0 0.0
    %3424 = vmatpush1.msra.mxu0 0.0
    %3425 = vmatprep.subr.mxu0 0.0
    %3426 = vmatpush1.msra.mxu0 0.0
    %3427 = vmatprep.subr.mxu0 0.0
    %3428 = vmatpush1.msra.mxu0 0.0
    %3429 = vmatprep.subr.mxu0 0.0
    %3430 = vmatpush1.msra.mxu0 0.0
    %3431 = vmatprep.subr.mxu0 0.0
    %3432 = vmatpush1.msra.mxu0 0.0
    %3433 = vmatprep.subr.mxu0 0.0
    %3434 = vmatpush1.msra.mxu0 0.0
    %3435 = vmatprep.subr.mxu0 0.0
    %3436 = vmatpush1.msra.mxu0 0.0
    %3437 = vmatprep.subr.mxu0 %v68
    %3438 = vmatpush1.msra.mxu0 %v67
    %3439 = vmatprep.subr.mxu0 %v66
    %3440 = vmatpush1.msra.mxu0 %v65
    %3441 = vmatprep.subr.mxu0 %v64
    %3442 = vmatpush1.msra.mxu0 %v63
    %3443 = vmatprep.subr.mxu0 %v62
    %3444 = vmatpush1.msra.mxu0 %v61
    %3445 = vmatprep.subr.mxu0 %v60
    %3446 = vmatpush1.msra.mxu0 %v59
    %3447 = vmatprep.subr.mxu0 %v58
    %3448 = vmatpush1.msra.mxu0 %v57
    %3449 = vmatprep.subr.mxu0 %v56
    %3450 = vmatpush1.msra.mxu0 %v55
    %3451 = vmatprep.subr.mxu0 %v54
    %3452 = vmatpush1.msra.mxu0 %v53
    %3453 = vmatprep.subr.mxu0 0.0
    %3454 = vmatpush2.msra.mxu0 0.0
    %3455 = vmatprep.subr.mxu0 0.0
    %3456 = vmatpush2.msra.mxu0 0.0
    %3457 = vmatprep.subr.mxu0 0.0
    %3458 = vmatpush2.msra.mxu0 0.0
    %3459 = vmatprep.subr.mxu0 0.0
    %3460 = vmatpush2.msra.mxu0 0.0
    %3461 = vmatprep.subr.mxu0 0.0
    %3462 = vmatpush2.msra.mxu0 0.0
    %3463 = vmatprep.subr.mxu0 0.0
    %3464 = vmatpush2.msra.mxu0 0.0
    %3465 = vmatprep.subr.mxu0 0.0
    %3466 = vmatpush2.msra.mxu0 0.0
    %3467 = vmatprep.subr.mxu0 0.0
    %3468 = vmatpush2.msra.mxu0 0.0
    %3469 = vmatprep.subr.mxu0 0.0
    %3470 = vmatpush2.msra.mxu0 0.0
    %3471 = vmatprep.subr.mxu0 0.0
    %3472 = vmatpush2.msra.mxu0 0.0
    %3473 = vmatprep.subr.mxu0 0.0
    %3474 = vmatpush2.msra.mxu0 0.0
    %3475 = vmatprep.subr.mxu0 0.0
    %3476 = vmatpush2.msra.mxu0 0.0
    %3477 = vmatprep.subr.mxu0 0.0
    %3478 = vmatpush2.msra.mxu0 0.0
    %3479 = vmatprep.subr.mxu0 0.0
    %3480 = vmatpush2.msra.mxu0 0.0
    %3481 = vmatprep.subr.mxu0 0.0
    %3482 = vmatpush2.msra.mxu0 0.0
    %3483 = vmatprep.subr.mxu0 0.0
    %3484 = vmatpush2.msra.mxu0 0.0
    %3485 = vmatprep.mubr.f32.mxu0 0.0
    %3486 = vmatmul.mubr.f32.gmra.mxu0 %v3419
    %v3487 = vpop.f32.mrf.mxu0
    %v3488 = vadd.f32 0.0, %v3487
    %v3489 = vpop.f32.mrf.mxu0
    %v3490 = vadd.f32 0.0, %v3489
    %3491 = vdwg.mxu0
    %s3492 = scalar_lea.vmem [#allocation6], 50
    %v3493 = vld [vmem:[%s3492] sm:$0x3]
    %v3494 = vadd.f32 %v3493, %v3488
    %v3495 = vxor.u32 %v3494, 2147483648
    %v3496 = vmul.f32 %v3495, 1.442695
    %v3497 = vpow.pop %v3496
    %v3498 = vadd.f32 %v3497, 1.0
    %v3499 = vrcp.pop %v3498
    %v3500 = vmul.f32 1.0, %v3499
    %v3501 = vmul.f32 %v3500, 2.0
    %v3502 = vsub.f32 %v3501, 1.0
    %v3503 = vmul.f32 %v3500, %v3358
    %3505 = vrot.lane.b32.xlu0 %v3502, 64
    %v3506 = vpop.permute.xlu0 %3505
    %v3508 = vmul.f32 %v3500, %v3506
    %3510 = vrot.lane.b32.xlu0 %v3508, 96
    %v3511 = vpop.permute.xlu0 %3510
    %v3513 = vadd.f32 %v3503, %v3511
    %v3514 = vtanh.pop %v3513
    %3516 = vrot.lane.b32.xlu0 %v3514, 64
    %v3517 = vpop.permute.xlu0 %3516
    %v3519 = vmul.f32 %v3500, %v3517
    %v3520 = vadd.f32 %v3490, %v1349
    %v3521 = vld [vmem:[#allocation3] sm:$0x3]
    %v3522 = vxor.u32 %v3520, 2147483648
    %v3523 = vmul.f32 %v3522, 1.442695
    %v3524 = vpow.pop %v3523
    %v3525 = vadd.f32 %v3524, 1.0
    %v3526 = vrcp.pop %v3525
    %v3527 = vmul.f32 1.0, %v3526
    %v3528 = vmul.f32 %v3527, 2.0
    %v3529 = vsub.f32 %v3528, 1.0
    %3531 = vrot.lane.b32.xlu0 %v3521, 32
    %v3532 = vpop.permute.xlu0 %3531
    %v3534 = vmul.f32 %v3527, %v3532
    %3536 = vrot.lane.b32.xlu0 %v3529, 64
    %v3537 = vpop.permute.xlu0 %3536
    %v3539 = vmul.f32 %v3527, %v3537
    %3541 = vrot.lane.b32.xlu0 %v3539, 96
    %v3542 = vpop.permute.xlu0 %3541
    %v3544 = vadd.f32 %v3534, %v3542
    %v3545 = vtanh.pop %v3544
    %3547 = vrot.lane.b32.xlu0 %v3545, 64
    %v3548 = vpop.permute.xlu0 %3547
    %v3550 = vmul.f32 %v3527, %v3548
    %3552 = vrot.lane.b32.xlu0 %v3550, 32
    %v3553 = vpop.permute.xlu0 %3552
    %3555 = vst.msk [vmem:[#allocation2] sm:$0x3] %vm50, %v3553
    %3557 = vrot.lane.b32.xlu0 %v3544, 96
    %v3558 = vpop.permute.xlu0 %3557
    %3560 = vst.msk [vmem:[#allocation3] sm:$0x3] %vm50, %v3558
    %s3561 = scalar_lea.vmem [#allocation4], 28
    %3562 = vst.msk [vmem:[%s3561] sm:$0x3] %vm50, %v3553
    %v3563 = vld [vmem:[#allocation2] sm:$0x3]
    %3565 = vrot.lane.b32.xlu0 %v3519, 32
    %v3566 = vpop.permute.xlu0 %3565
    %3569 = vrot.lane.b32.xlu0 %v3563, 32
    %v3570 = vpop.permute.xlu0 %3569
    %v3572 = vsel %vm75, %v3566, %v3570
    %v3574 = vsel %vm77, %v3572, 0
    %3576 = vmatprep.subr.mxu0 0.0
    %3577 = vmatpush1.msra.mxu0 0.0
    %3578 = vmatprep.subr.mxu0 0.0
    %3579 = vmatpush1.msra.mxu0 0.0
    %3580 = vmatprep.subr.mxu0 0.0
    %3581 = vmatpush1.msra.mxu0 0.0
    %3582 = vmatprep.subr.mxu0 0.0
    %3583 = vmatpush1.msra.mxu0 0.0
    %3584 = vmatprep.subr.mxu0 0.0
    %3585 = vmatpush1.msra.mxu0 0.0
    %3586 = vmatprep.subr.mxu0 0.0
    %3587 = vmatpush1.msra.mxu0 0.0
    %3588 = vmatprep.subr.mxu0 0.0
    %3589 = vmatpush1.msra.mxu0 0.0
    %3590 = vmatprep.subr.mxu0 0.0
    %3591 = vmatpush1.msra.mxu0 0.0
    %3592 = vmatprep.subr.mxu0 %v68
    %3593 = vmatpush1.msra.mxu0 %v67
    %3594 = vmatprep.subr.mxu0 %v66
    %3595 = vmatpush1.msra.mxu0 %v65
    %3596 = vmatprep.subr.mxu0 %v64
    %3597 = vmatpush1.msra.mxu0 %v63
    %3598 = vmatprep.subr.mxu0 %v62
    %3599 = vmatpush1.msra.mxu0 %v61
    %3600 = vmatprep.subr.mxu0 %v60
    %3601 = vmatpush1.msra.mxu0 %v59
    %3602 = vmatprep.subr.mxu0 %v58
    %3603 = vmatpush1.msra.mxu0 %v57
    %3604 = vmatprep.subr.mxu0 %v56
    %3605 = vmatpush1.msra.mxu0 %v55
    %3606 = vmatprep.subr.mxu0 %v54
    %3607 = vmatpush1.msra.mxu0 %v53
    %3608 = vmatprep.subr.mxu0 0.0
    %3609 = vmatpush2.msra.mxu0 0.0
    %3610 = vmatprep.subr.mxu0 0.0
    %3611 = vmatpush2.msra.mxu0 0.0
    %3612 = vmatprep.subr.mxu0 0.0
    %3613 = vmatpush2.msra.mxu0 0.0
    %3614 = vmatprep.subr.mxu0 0.0
    %3615 = vmatpush2.msra.mxu0 0.0
    %3616 = vmatprep.subr.mxu0 0.0
    %3617 = vmatpush2.msra.mxu0 0.0
    %3618 = vmatprep.subr.mxu0 0.0
    %3619 = vmatpush2.msra.mxu0 0.0
    %3620 = vmatprep.subr.mxu0 0.0
    %3621 = vmatpush2.msra.mxu0 0.0
    %3622 = vmatprep.subr.mxu0 0.0
    %3623 = vmatpush2.msra.mxu0 0.0
    %3624 = vmatprep.subr.mxu0 0.0
    %3625 = vmatpush2.msra.mxu0 0.0
    %3626 = vmatprep.subr.mxu0 0.0
    %3627 = vmatpush2.msra.mxu0 0.0
    %3628 = vmatprep.subr.mxu0 0.0
    %3629 = vmatpush2.msra.mxu0 0.0
    %3630 = vmatprep.subr.mxu0 0.0
    %3631 = vmatpush2.msra.mxu0 0.0
    %3632 = vmatprep.subr.mxu0 0.0
    %3633 = vmatpush2.msra.mxu0 0.0
    %3634 = vmatprep.subr.mxu0 0.0
    %3635 = vmatpush2.msra.mxu0 0.0
    %3636 = vmatprep.subr.mxu0 0.0
    %3637 = vmatpush2.msra.mxu0 0.0
    %3638 = vmatprep.subr.mxu0 0.0
    %3639 = vmatpush2.msra.mxu0 0.0
    %3640 = vmatprep.mubr.f32.mxu0 0.0
    %3641 = vmatmul.mubr.f32.gmra.mxu0 %v3574
    %v3642 = vpop.f32.mrf.mxu0
    %v3643 = vpop.f32.mrf.mxu0
    %v3644 = vadd.f32 0.0, %v3643
    %3645 = vdwg.mxu0
    %v3646 = vadd.f32 %v3644, %v1349
    %v3647 = vld [vmem:[#allocation3] sm:$0x3]
    %v3648 = vxor.u32 %v3646, 2147483648
    %v3649 = vmul.f32 %v3648, 1.442695
    %v3650 = vpow.pop %v3649
    %v3651 = vadd.f32 %v3650, 1.0
    %v3652 = vrcp.pop %v3651
    %v3653 = vmul.f32 1.0, %v3652
    %v3654 = vmul.f32 %v3653, 2.0
    %v3655 = vsub.f32 %v3654, 1.0
    %3657 = vrot.lane.b32.xlu0 %v3647, 32
    %v3658 = vpop.permute.xlu0 %3657
    %v3660 = vmul.f32 %v3653, %v3658
    %3662 = vrot.lane.b32.xlu0 %v3655, 64
    %v3663 = vpop.permute.xlu0 %3662
    %v3665 = vmul.f32 %v3653, %v3663
    %3667 = vrot.lane.b32.xlu0 %v3665, 96
    %v3668 = vpop.permute.xlu0 %3667
    %v3670 = vadd.f32 %v3660, %v3668
    %v3671 = vtanh.pop %v3670
    %3673 = vrot.lane.b32.xlu0 %v3671, 64
    %v3674 = vpop.permute.xlu0 %3673
    %v3676 = vmul.f32 %v3653, %v3674
    %3678 = vrot.lane.b32.xlu0 %v3676, 32
    %v3679 = vpop.permute.xlu0 %3678
    %s3681 = scalar_lea.vmem [#allocation4], 30
    %3682 = vst.msk [vmem:[%s3681] sm:$0x3] %vm50, %v3679
    %v3683 = vld [vmem:[#allocation4] sm:$0x3]
    %v3684 = vld [vmem:[#allocation4 + $0x2] sm:$0x3]
    %v3685 = vld [vmem:[#allocation4 + $0x4] sm:$0x3]
    %v3686 = vld [vmem:[#allocation4 + $0x6] sm:$0x3]
    %v3687 = vld [vmem:[#allocation4 + $0x8] sm:$0x3]
    %v3688 = vld [vmem:[#allocation4 + $0xa] sm:$0x3]
    %v3689 = vld [vmem:[#allocation4 + $0xc] sm:$0x3]
    %v3690 = vld [vmem:[#allocation4 + $0xe] sm:$0x3]
    %v3691 = vld [vmem:[#allocation4 + $0x10] sm:$0x3]
    %v3692 = vld [vmem:[#allocation4 + $0x12] sm:$0x3]
    %v3693 = vld [vmem:[#allocation4 + $0x14] sm:$0x3]
    %v3694 = vld [vmem:[#allocation4 + $0x16] sm:$0x3]
    %v3695 = vld [vmem:[#allocation4 + $0x18] sm:$0x3]
    %v3696 = vld [vmem:[#allocation4 + $0x1a] sm:$0x3]
    %v3697 = vld [vmem:[#allocation4 + $0x1c] sm:$0x3]
    %v3698 = vld [vmem:[#allocation4 + $0x1e] sm:$0x3]
    %v3699 = vld [vmem:[%s3] sm:$0x1]
    %v3701 = vlaneseq
    %v3702 = vshrl.u32 %v3701, 7
    %v3703 = vsub.s32 0, %v3702
    %v3704 = vrot.slane %v3699, %v3703
    %v3706 = vmul.f32 %v3683, %v3704
    %v3707 = vmul.f32 %v3684, %v3704
    %v3708 = vmul.f32 %v3685, %v3704
    %v3709 = vmul.f32 %v3686, %v3704
    %v3710 = vmul.f32 %v3687, %v3704
    %v3711 = vmul.f32 %v3688, %v3704
    %v3712 = vmul.f32 %v3689, %v3704
    %v3713 = vmul.f32 %v3690, %v3704
    %v3714 = vmul.f32 %v3691, %v3704
    %v3715 = vmul.f32 %v3692, %v3704
    %v3716 = vmul.f32 %v3693, %v3704
    %v3717 = vmul.f32 %v3694, %v3704
    %v3718 = vmul.f32 %v3695, %v3704
    %v3719 = vmul.f32 %v3696, %v3704
    %v3720 = vmul.f32 %v3697, %v3704
    %v3721 = vmul.f32 %v3698, %v3704
    %v3722 = vsel %vm50, %v3706, 0.0
    %3723 = vadd.xlane.f32.xlu0 %v3722
    %v3724 = vpop.xlane.xlu0 %3723
    %v3725 = vsel %vm50, %v3707, 0.0
    %3726 = vadd.xlane.f32.xlu0 %v3725
    %v3727 = vpop.xlane.xlu0 %3726
    %v3728 = vsel %vm50, %v3708, 0.0
    %3729 = vadd.xlane.f32.xlu0 %v3728
    %v3730 = vpop.xlane.xlu0 %3729
    %v3731 = vsel %vm50, %v3709, 0.0
    %3732 = vadd.xlane.f32.xlu0 %v3731
    %v3733 = vpop.xlane.xlu0 %3732
    %v3734 = vsel %vm50, %v3710, 0.0
    %3735 = vadd.xlane.f32.xlu0 %v3734
    %v3736 = vpop.xlane.xlu0 %3735
    %v3737 = vsel %vm50, %v3711, 0.0
    %3738 = vadd.xlane.f32.xlu0 %v3737
    %v3739 = vpop.xlane.xlu0 %3738
    %v3740 = vsel %vm50, %v3712, 0.0
    %3741 = vadd.xlane.f32.xlu0 %v3740
    %v3742 = vpop.xlane.xlu0 %3741
    %v3743 = vsel %vm50, %v3713, 0.0
    %3744 = vadd.xlane.f32.xlu0 %v3743
    %v3745 = vpop.xlane.xlu0 %3744
    %v3746 = vsel %vm50, %v3714, 0.0
    %3747 = vadd.xlane.f32.xlu0 %v3746
    %v3748 = vpop.xlane.xlu0 %3747
    %v3749 = vsel %vm50, %v3715, 0.0
    %3750 = vadd.xlane.f32.xlu0 %v3749
    %v3751 = vpop.xlane.xlu0 %3750
    %v3752 = vsel %vm50, %v3716, 0.0
    %3753 = vadd.xlane.f32.xlu0 %v3752
    %v3754 = vpop.xlane.xlu0 %3753
    %v3755 = vsel %vm50, %v3717, 0.0
    %3756 = vadd.xlane.f32.xlu0 %v3755
    %v3757 = vpop.xlane.xlu0 %3756
    %v3758 = vsel %vm50, %v3718, 0.0
    %3759 = vadd.xlane.f32.xlu0 %v3758
    %v3760 = vpop.xlane.xlu0 %3759
    %v3761 = vsel %vm50, %v3719, 0.0
    %3762 = vadd.xlane.f32.xlu0 %v3761
    %v3763 = vpop.xlane.xlu0 %3762
    %v3764 = vsel %vm50, %v3720, 0.0
    %3765 = vadd.xlane.f32.xlu0 %v3764
    %v3766 = vpop.xlane.xlu0 %3765
    %v3767 = vsel %vm50, %v3721, 0.0
    %3768 = vadd.xlane.f32.xlu0 %v3767
    %v3769 = vpop.xlane.xlu0 %3768
    %v3770 = vld [vmem:[#allocation5] sm:$0x1]
    %v3772 = vlaneseq
    %v3773 = vshrl.u32 %v3772, 7
    %v3774 = vsub.s32 0, %v3773
    %v3775 = vrot.slane %v3770, %v3774
    %3776 = vset.pattern.permute.xlu0 0
    %3777 = vperm.xlu0 %3776, %v3775
    %v3778 = vpop.permute.xlu0 %3777
    %v3780 = vadd.f32 %v3724, %v3778
    %v3781 = vadd.f32 %v3727, %v3778
    %v3782 = vadd.f32 %v3730, %v3778
    %v3783 = vadd.f32 %v3733, %v3778
    %v3784 = vadd.f32 %v3736, %v3778
    %v3785 = vadd.f32 %v3739, %v3778
    %v3786 = vadd.f32 %v3742, %v3778
    %v3787 = vadd.f32 %v3745, %v3778
    %v3788 = vadd.f32 %v3748, %v3778
    %v3789 = vadd.f32 %v3751, %v3778
    %v3790 = vadd.f32 %v3754, %v3778
    %v3791 = vadd.f32 %v3757, %v3778
    %v3792 = vadd.f32 %v3760, %v3778
    %v3793 = vadd.f32 %v3763, %v3778
    %v3794 = vadd.f32 %v3766, %v3778
    %v3795 = vadd.f32 %v3769, %v3778
    %v3812 = vlaneseq
    %v3813 = vand.u32 %v3812, 127
    %v3814 = vlaneseq
    %v3815 = vshrl.u32 %v3814, 7
    %v3816 = vsub.s32 %v3813, %v3815
    %v3817 = vrot.slane %v3780, %v3816
    %v3818 = vlaneseq
    %v3819 = vshrl.u32 %v3818, 7
    %v3820 = vsub.s32 %v3813, %v3819
    %v3821 = vrot.slane %v3781, %v3820
    %v3822 = vlaneseq
    %v3823 = vshrl.u32 %v3822, 7
    %v3824 = vsub.s32 %v3813, %v3823
    %v3825 = vrot.slane %v3782, %v3824
    %v3826 = vlaneseq
    %v3827 = vshrl.u32 %v3826, 7
    %v3828 = vsub.s32 %v3813, %v3827
    %v3829 = vrot.slane %v3783, %v3828
    %v3830 = vlaneseq
    %v3831 = vshrl.u32 %v3830, 7
    %v3832 = vsub.s32 %v3813, %v3831
    %v3833 = vrot.slane %v3784, %v3832
    %v3834 = vlaneseq
    %v3835 = vshrl.u32 %v3834, 7
    %v3836 = vsub.s32 %v3813, %v3835
    %v3837 = vrot.slane %v3785, %v3836
    %v3838 = vlaneseq
    %v3839 = vshrl.u32 %v3838, 7
    %v3840 = vsub.s32 %v3813, %v3839
    %v3841 = vrot.slane %v3786, %v3840
    %v3842 = vlaneseq
    %v3843 = vshrl.u32 %v3842, 7
    %v3844 = vsub.s32 %v3813, %v3843
    %v3845 = vrot.slane %v3787, %v3844
    %v3846 = vlaneseq
    %v3847 = vshrl.u32 %v3846, 7
    %v3848 = vsub.s32 %v3813, %v3847
    %v3849 = vrot.slane %v3788, %v3848
    %v3850 = vlaneseq
    %v3851 = vshrl.u32 %v3850, 7
    %v3852 = vsub.s32 %v3813, %v3851
    %v3853 = vrot.slane %v3789, %v3852
    %v3854 = vlaneseq
    %v3855 = vshrl.u32 %v3854, 7
    %v3856 = vsub.s32 %v3813, %v3855
    %v3857 = vrot.slane %v3790, %v3856
    %v3858 = vlaneseq
    %v3859 = vshrl.u32 %v3858, 7
    %v3860 = vsub.s32 %v3813, %v3859
    %v3861 = vrot.slane %v3791, %v3860
    %v3862 = vlaneseq
    %v3863 = vshrl.u32 %v3862, 7
    %v3864 = vsub.s32 %v3813, %v3863
    %v3865 = vrot.slane %v3792, %v3864
    %v3866 = vlaneseq
    %v3867 = vshrl.u32 %v3866, 7
    %v3868 = vsub.s32 %v3813, %v3867
    %v3869 = vrot.slane %v3793, %v3868
    %v3870 = vlaneseq
    %v3871 = vshrl.u32 %v3870, 7
    %v3872 = vsub.s32 %v3813, %v3871
    %v3873 = vrot.slane %v3794, %v3872
    %v3874 = vlaneseq
    %v3875 = vshrl.u32 %v3874, 7
    %v3876 = vsub.s32 %v3813, %v3875
    %v3877 = vrot.slane %v3795, %v3876
    %vm3878 = vcmask 1041409
    %v3879 = vsel %vm3878, %v3821, %v3817
    %vm3880 = vcmask 1042434
    %v3881 = vsel %vm3880, %v3825, %v3879
    %vm3882 = vcmask 1043459
    %v3883 = vsel %vm3882, %v3829, %v3881
    %vm3884 = vcmask 1044484
    %v3885 = vsel %vm3884, %v3833, %v3883
    %vm3886 = vcmask 1045509
    %v3887 = vsel %vm3886, %v3837, %v3885
    %vm3888 = vcmask 1046534
    %v3889 = vsel %vm3888, %v3841, %v3887
    %vm3890 = vcmask 1047559
    %v3891 = vsel %vm3890, %v3845, %v3889
    %v3892 = vsel %vm3878, %v3853, %v3849
    %v3893 = vsel %vm3880, %v3857, %v3892
    %v3894 = vsel %vm3882, %v3861, %v3893
    %v3895 = vsel %vm3884, %v3865, %v3894
    %v3896 = vsel %vm3886, %v3869, %v3895
    %v3897 = vsel %vm3888, %v3873, %v3896
    %v3898 = vsel %vm3890, %v3877, %v3897
    %vm3901 = vcmask 15360
    %3902 = vst.msk [vmem:[%s5] sm:$0xff] %vm3901, %v3891
    %3903 = vst.msk [vmem:[%s5 + $0x8] sm:$0xff] %vm3901, %v3898
    // Predicated region
    $region30: #{tpu_custom_call.1} parent=1 // pred_check
      _
    $region31: #{tpu_custom_call.1} parent=1 // pred_check_branch
      %3905 = sbr.rel (0) target = $region33
    $region32: #{tpu_custom_call.1} parent=1 // pred_region
      _
    $region33: #{tpu_custom_call.1} parent=1 // pred_fallthru
      _
    // Predicated region
    $region34: #{tpu_custom_call.1} parent=1 // pred_check
      _
    $region35: #{tpu_custom_call.1} parent=1 // pred_check_branch
      %3907 = sbr.rel (0) target = $region37
    $region36: #{tpu_custom_call.1} parent=1 // pred_region
      _
    $region37: #{tpu_custom_call.1} parent=1 // pred_fallthru
      _
    %3908 = vsyncpa [#allocation7], 1
    %3909 = vsyncpa [#allocation9], 1

</llo_original>
